<compile_context>
chip_gen: v5e
topology: v5e:2x2
jax: 0.10.0
libtpu: 0.0.40
codegen_flags: <defaults>
</compile_context>

<pallas_src>
import functools
import math
from functools import partial

import numpy as np

import jax
import jax.numpy as jnp
from jax.experimental import pallas as pl
from jax.experimental.pallas import tpu as pltpu

C_EMBED = 32  # AdapterDecoder_Layer(32) => MoE hidden_dim must be 32


def _round_up(v, m):
    return ((v + m - 1) // m) * m


# ----------------- static spatial operator tables (trace-time, cached) ------------------

def _np_interp_weights(out_pos, in_pos, out_n, in_n):
    """F.interpolate linear weights (align_corners=False) as a dense (O, I) matrix (numpy)."""
    out_f = float(max(out_n, 1))
    in_f = float(max(in_n, 1))
    src = np.maximum((out_pos.astype(np.float32) + 0.5) * (in_f / out_f) - 0.5, 0.0)
    i0 = np.floor(src)
    i1 = np.minimum(i0 + 1.0, in_f - 1.0)
    frac = src - i0
    ip = in_pos.astype(np.float32)[None, :]
    return ((ip == i0[:, None]).astype(np.float32) * (1.0 - frac)[:, None]
            + (ip == i1[:, None]).astype(np.float32) * frac[:, None]).astype(np.float32)


def _build_spatial_tables(s_max, s2p, so2p, od2p):
    """For every possible image side s in [0, s_max]: conv/deconv tap gathers + resize-back."""
    n_s = s_max + 1
    g1 = np.zeros((n_s, 9 * so2p, s2p), np.float32)    # conv 3x3 s2 p1 tap gathers (tap-major rows)
    g2 = np.zeros((n_s, 16 * od2p, so2p), np.float32)  # deconv 4x4 s2 p1 tap gathers (flipped kernel)
    kb = np.zeros((n_s, s2p, od2p), np.float32)        # bilinear (od,od)->(s,s) resize-back
    for s in range(1, n_s):
        s2 = s * s
        so = (s - 1) // 2 + 1
        so2 = so * so
        od = 2 * so
        od2 = od * od

        # Conv2d(k=3, stride=2, pad=1): out[oy,ox] gathers in[2oy+ky-1, 2ox+kx-1]
        q = np.arange(so2p)
        oy, ox = q // so, q % so
        j = np.arange(s2p)
        for t, (ky, kx) in enumerate([(a, b) for a in range(3) for b in range(3)]):
            iy = 2 * oy + ky - 1
            ix = 2 * ox + kx - 1
            ok = (q < so2) & (iy >= 0) & (iy < s) & (ix >= 0) & (ix < s)
            tgt = iy * s + ix
            g1[s, t * so2p:(t + 1) * so2p, :] = (
                ok[:, None] & (j[None, :] == tgt[:, None])).astype(np.float32)

        # ConvTranspose2d(k=4, stride=2, pad=1) as zero-dilated conv with flipped kernel:
        # out[y,x] tap ky' gathers in[(y+ky'-2)/2] when that index is a valid even offset.
        qd = np.arange(od2p)
        dy, dx = qd // od, qd % od
        qi = np.arange(so2p)
        for t, (ky, kx) in enumerate([(a, b) for a in range(4) for b in range(4)]):
            ay = dy + ky - 2
            ax = dx + kx - 2
            iy = ay // 2
            ix = ax // 2
            ok = ((qd < od2) & (ay >= 0) & (ax >= 0)
                  & (ay % 2 == 0) & (ax % 2 == 0) & (iy < so) & (ix < so))
            tgt = iy * so + ix
            g2[s, t * od2p:(t + 1) * od2p, :] = (
                ok[:, None] & (qi[None, :] == tgt[:, None])).astype(np.float32)

        # Separable bilinear resize (od,od)->(s,s); exact identity on valid region when od == s.
        jr = np.arange(s2p)
        py, px = jr // s, jr % s
        qy, qx = qd // od, qd % od
        k = _np_interp_weights(py, qy, s, od) * _np_interp_weights(px, qx, s, od)
        k = k * (jr < s2).astype(np.float32)[:, None] * (qd < od2).astype(np.float32)[None, :]
        kb[s] = k
    return g1, g2, kb


@functools.lru_cache(maxsize=None)
def _spatial_operator_tables(t_tok):
    s_max = math.isqrt(t_tok)
    s2p = max(_round_up(s_max * s_max, 8), 8)
    so_max = max((s_max - 1) // 2 + 1, 1)
    so2p = max(_round_up(so_max * so_max, 8), 8)
    od2p = max(_round_up((2 * so_max) ** 2, 8), 8)
    g1, g2, kb = _build_spatial_tables(s_max, s2p, so2p, od2p)
    # g1/g2 entries are exactly {0,1} => bf16 is bit-exact after f32-accumulating MXU matmuls.
    return (s2p, so2p, od2p,
            jnp.asarray(g1, jnp.bfloat16),
            jnp.asarray(g2, jnp.bfloat16),
            jnp.asarray(kb, jnp.float32))


# ------------------------- per-call routing operators (XLA, vmapped) --------------------

def _interp_weights(out_pos, in_pos, out_n, in_n):
    out_f = jnp.maximum(out_n, 1).astype(jnp.float32)
    in_f = jnp.maximum(in_n, 1).astype(jnp.float32)
    src = jnp.maximum((out_pos.astype(jnp.float32) + 0.5) * (in_f / out_f) - 0.5, 0.0)
    i0 = jnp.floor(src)
    i1 = jnp.minimum(i0 + 1.0, in_f - 1.0)
    frac = src - i0
    ip = in_pos.astype(jnp.float32)[None, :]
    return ((ip == i0[:, None]).astype(jnp.float32) * (1.0 - frac)[:, None]
            + (ip == i1[:, None]).astype(jnp.float32) * frac[:, None])


def _isqrt(n):
    s = jnp.floor(jnp.sqrt(n.astype(jnp.float32))).astype(jnp.int32)
    s = jnp.where((s + 1) * (s + 1) <= n, s + 1, s)
    s = jnp.where(s * s > n, s - 1, s)
    return jnp.maximum(s, 0)


def _build_expert_routing(top_w, top_i, e, *, t_tok, s2p):
    """Token dispatch + 1-D interp folded into a_op; interp-back + routing weight + scatter
    folded into b_op; plus the per-expert image side s for the table index_map."""
    f32 = jnp.float32
    top_k = top_i.shape[1]
    sel = (top_i == e)                                   # (T, K)
    flat = sel.T.reshape(-1)                             # k-major == torch.where row-major order
    n = jnp.sum(flat.astype(jnp.int32))                  # tokens routed to this expert
    keys = jnp.where(flat, jnp.arange(top_k * t_tok, dtype=jnp.int32),
                     jnp.int32(top_k * t_tok))
    order = jnp.argsort(keys)[:t_tok]
    valid = jnp.arange(t_tok, dtype=jnp.int32) < n
    k_idx = order // t_tok
    t_idx = order % t_tok
    rw = jnp.where(valid, top_w[t_idx, k_idx], 0.0)      # routing weight per routed position

    s = _isqrt(n)
    s2 = s * s

    jrow = jnp.arange(s2p, dtype=jnp.int32)              # image pixel (row-major y*s+x)
    ppos = jnp.arange(t_tok, dtype=jnp.int32)            # position within routed group
    disp = (valid[:, None] & (ppos[None, :] == t_idx[:, None])).astype(f32)   # (pos, token)

    # NOTE: padded image rows (jrow >= s^2) stay zero; rows LayerNorm later turns into `beta`
    # are killed again by the (jrow < s2) column mask in b_op — keep both masks in place.
    m_in = _interp_weights(jrow, ppos, s2, n)
    m_in = m_in * (jrow < s2).astype(f32)[:, None] * (ppos < n).astype(f32)[None, :]
    a_op = jnp.dot(m_in, disp)                           # (S2P, T)

    m_out = _interp_weights(ppos, jrow, n, s2)
    m_out = m_out * (ppos < n).astype(f32)[:, None] * (jrow < s2).astype(f32)[None, :]
    b_op = jnp.dot(disp.T, rw[:, None] * m_out)          # (T, S2P)

    # n == 0 expert: s == 0, a_op/b_op are all-zero => contributes nothing (matches torch
    # `continue`); the table row for s == 0 is also all-zero.
    return a_op, b_op, s


# ------------------------------ fused per-expert kernel ---------------------------------

def _make_expert_kernel(c, so2p, od2p):
    def kernel(sdim_ref, tok_ref, a_ref, b_ref, g1_ref, g2_ref, kb_ref,
               w1_ref, w2_ref, wc_ref, wd_ref, lng_ref, lnb_ref, o_ref):
        e = pl.program_id(0)

        @pl.when(e == 0)
        def _init():
            o_ref[...] = jnp.zeros_like(o_ref)

        f32 = jnp.float32
        s = sdim_ref[e]
        inv_s2 = 1.0 / jnp.maximum(s * s, 1).astype(f32)   # AdaptiveAvgPool2d(1) scale

        tokens = tok_ref[...]                                                    # (T, C)
        # token dispatch + bilinear interp (routed tokens -> s*s image), folded in a_op
        x_img = jnp.dot(a_ref[0], tokens, preferred_element_type=f32)            # (S2P, C)

        # SE channel attention; avg-pool applied as an in-kernel scalar (no W1 rebuild)
        smean = jnp.sum(x_img, axis=0, keepdims=True) * inv_s2                   # (1, C)
        hid = jnp.maximum(jnp.dot(smean, w1_ref[0], preferred_element_type=f32), 0.0)
        gate = jax.nn.sigmoid(jnp.dot(hid, w2_ref[0], preferred_element_type=f32))
        x_ch = x_img * gate

        # Conv2d(C,C,3,s=2,p=1,no bias) + ReLU: one big packed tap-gather matmul, then 9
        # accumulating per-tap weight matmuls on static sublane row slices (no masked stores).
        col1 = jnp.dot(g1_ref[0].astype(f32), x_ch, preferred_element_type=f32)  # (9*SO2P, C)
        acc1 = jnp.zeros((so2p, c), f32)
        for t in range(9):
            acc1 = acc1 + jnp.dot(col1[t * so2p:(t + 1) * so2p, :], wc_ref[0, t],
                                  preferred_element_type=f32)
        x_conv = jnp.maximum(acc1, 0.0)                                          # (SO2P, C)

        # ConvTranspose2d(C,C,4,s=2,p=1,no bias) + ReLU via flipped-kernel tap gathers
        col2 = jnp.dot(g2_ref[0].astype(f32), x_conv, preferred_element_type=f32)  # (16*OD2P, C)
        acc2 = jnp.zeros((od2p, c), f32)
        for t in range(16):
            acc2 = acc2 + jnp.dot(col2[t * od2p:(t + 1) * od2p, :], wd_ref[0, t],
                                  preferred_element_type=f32)
        x_dec = jnp.maximum(acc2, 0.0)                                           # (OD2P, C)

        # bilinear resize back to (s, s) (identity on the valid region when od == s)
        x_sp = jnp.dot(kb_ref[0], x_dec, preferred_element_type=f32)             # (S2P, C)

        # skip connection + LayerNorm(C)
        x = x_img + x_sp
        mu = jnp.mean(x, axis=-1, keepdims=True)
        var = jnp.mean((x - mu) ** 2, axis=-1, keepdims=True)
        x_ln = (x - mu) * jax.lax.rsqrt(var + 1e-5) * lng_ref[0] + lnb_ref[0]

        # interp back to routed tokens + routing weight + scatter (folded in b_op),
        # accumulated across experts in the VMEM-resident output block (== index_add_).
        o_ref[...] += jnp.dot(b_ref[0], x_ln, preferred_element_type=f32)        # (T, C)
    return kernel


def fused_experts(sdims, tokens, a_op, b_op, g1_tab, g2_tab, kb_tab,
                  w1_t, w2_t, wc_taps, wd_taps, ln_g, ln_b):
    num_e, s2p, t_tok = a_op.shape
    c = tokens.shape[1]
    so2p = g1_tab.shape[1] // 9
    od2p = g2_tab.shape[1] // 16
    kernel = _make_expert_kernel(c, so2p, od2p)
    return pl.pallas_call(
        kernel,
        out_shape=jax.ShapeDtypeStruct((t_tok, c), jnp.float32),
        grid_spec=pltpu.PrefetchScalarGridSpec(
            num_scalar_prefetch=1,                # per-expert image side s, in SMEM
            grid=(num_e,),
            in_specs=[
                pl.BlockSpec((t_tok, c), lambda e, sd: (0, 0)),                  # tokens (shared)
                pl.BlockSpec((1, s2p, t_tok), lambda e, sd: (e, 0, 0)),          # dispatch+interp-in
                pl.BlockSpec((1, t_tok, s2p), lambda e, sd: (e, 0, 0)),          # interp-out+rw+scatter
                pl.BlockSpec((1, 9 * so2p, s2p), lambda e, sd: (sd[e], 0, 0)),   # conv taps (table[s])
                pl.BlockSpec((1, 16 * od2p, so2p), lambda e, sd: (sd[e], 0, 0)), # deconv taps (table[s])
                pl.BlockSpec((1, s2p, od2p), lambda e, sd: (sd[e], 0, 0)),       # resize-back (table[s])
                pl.BlockSpec((1, c, c * c), lambda e, sd: (e, 0, 0)),            # SE W1 (unscaled)
                pl.BlockSpec((1, c * c, c), lambda e, sd: (e, 0, 0)),            # SE W2
                pl.BlockSpec((1, 9, c, c), lambda e, sd: (e, 0, 0, 0)),          # conv per-tap weights
                pl.BlockSpec((1, 16, c, c), lambda e, sd: (e, 0, 0, 0)),         # deconv per-tap weights
                pl.BlockSpec((1, 1, c), lambda e, sd: (e, 0, 0)),                # LN gamma
                pl.BlockSpec((1, 1, c), lambda e, sd: (e, 0, 0)),                # LN beta
            ],
            out_specs=pl.BlockSpec((t_tok, c), lambda e, sd: (0, 0)),            # accumulator
        ),
        compiler_params=pltpu.CompilerParams(
            dimension_semantics=("arbitrary",),   # output accumulates across the expert axis
            vmem_limit_bytes=32 * 1024 * 1024),
    )(sdims, tokens, a_op, b_op, g1_tab, g2_tab, kb_tab,
      w1_t, w2_t, wc_taps, wd_taps, ln_g, ln_b)


# ------------------------------------ MoE forward ----------------------------------------

def mixtral_sparse_moe_forward(x, params, top_k):
    b, c, h, w = x.shape
    tokens = jnp.transpose(x, (0, 2, 3, 1)).reshape(b * h * w, c)       # (T, C)
    t_tok = tokens.shape[0]
    num_e = params["gate_w_t"].shape[1]

    # router (plain jnp; XLA fuses the tiny matmul + softmax + top_k; jitter_noise == 0 path)
    logits = jnp.dot(tokens, params["gate_w_t"])
    probs = jax.nn.softmax(logits.astype(jnp.float32), axis=-1)
    top_w, top_i = jax.lax.top_k(probs, top_k)
    top_w = top_w / jnp.sum(top_w, axis=-1, keepdims=True)

    # static operator tables (built once at trace time, selected per expert in the kernel)
    s2p, _, _, g1_tab, g2_tab, kb_tab = _spatial_operator_tables(t_tok)

    build = jax.vmap(partial(_build_expert_routing, top_w, top_i, t_tok=t_tok, s2p=s2p))
    a_op, b_op, sdims = build(jnp.arange(num_e, dtype=jnp.int32))

    out_tokens = fused_experts(sdims, tokens, a_op, b_op, g1_tab, g2_tab, kb_tab,
                               params["w1_t"], params["w2_t"],
                               params["wc_taps"], params["wd_taps"],
                               params["ln_g"], params["ln_b"])          # (T, C), experts summed
    # torch reshapes (b*h*w, c) straight back to (b, c, h, w) without permuting — kept faithful
    return out_tokens.reshape(b, c, h, w)


# -------------------------------------- parameters ---------------------------------------

def init_params(key, num_experts, hidden_dim=C_EMBED):
    c = hidden_dim
    hid = c * c
    keys = jax.random.split(key, 2 + num_experts)
    gate_w = jax.random.normal(keys[0], (num_experts, c), jnp.float32) * 0.3
    w1_t, w2_t, wc_p, wd_p = [], [], [], []
    for e in range(num_experts):
        ek = jax.random.split(keys[2 + e], 4)
        w1 = jax.random.normal(ek[0], (hid, c), jnp.float32) * math.sqrt(2.0 / hid)
        w2 = jax.random.normal(ek[1], (c, hid), jnp.float32) * math.sqrt(2.0 / c)
        conv_w = jax.random.normal(ek[2], (c, c, 3, 3), jnp.float32) * math.sqrt(2.0 / (c * 9))
        deconv_w = jax.random.normal(ek[3], (c, c, 4, 4), jnp.float32) * math.sqrt(2.0 / (c * 16))
        w1_t.append(w1.T)                                              # (C, C*C)
        w2_t.append(w2.T)                                              # (C*C, C)
        # Conv2d weight (Cout, Cin, 3, 3) -> per-tap (Cin, Cout), tap = ky*3+kx
        wc_p.append(jnp.transpose(conv_w, (2, 3, 1, 0)).reshape(9, c, c))
        # ConvTranspose2d weight (Cin, Cout, 4, 4), spatially flipped -> per-tap (Cin, Cout)
        wflip = deconv_w[:, :, ::-1, ::-1]
        wd_p.append(jnp.transpose(wflip, (2, 3, 0, 1)).reshape(16, c, c))
    return {
        "gate_w_t": gate_w.T,                                          # (C, E)
        # out_gate exists in the torch module but is never used in forward
        "out_gate_w": jax.random.normal(keys[1], (c, num_experts), jnp.float32) * 0.3,
        "w1_t": jnp.stack(w1_t),
        "w2_t": jnp.stack(w2_t),
        "wc_taps": jnp.stack(wc_p),
        "wd_taps": jnp.stack(wd_p),
        "ln_g": jnp.ones((num_experts, 1, c), jnp.float32),
        "ln_b": jnp.zeros((num_experts, 1, c), jnp.float32),
    }


# ----------------------------------------- main -------------------------------------------

if __name__ == "__main__":
    key = jax.random.PRNGKey(0)
    k_x, k_p = jax.random.split(key)

    b, c, h, w = 2, 32, 8, 8          # hidden_dim must equal 32 (AdapterDecoder_Layer(32))
    num_experts, top_k = 4, 2         # router_jitter_noise = 0.0
    x = jax.random.normal(k_x, (b, c, h, w), jnp.float32)
    params = init_params(k_p, num_experts)

    fwd = jax.jit(mixtral_sparse_moe_forward, static_argnums=(2,))
    out = fwd(x, params, top_k)
    out = jax.block_until_ready(out)
    assert out.shape == (b, c, h, w)
    assert bool(jnp.all(jnp.isfinite(out)))
    print("KERNEL_OK")
</pallas_src>

<mosaic_0001>
module attributes {stable_mosaic.version = 11 : i64} {
  func.func @kernel(%arg0: i32, %arg1: memref<4xi32, #tpu.memory_space<smem>>, %arg2: memref<128x32xf32, #tpu.memory_space<vmem>>, %arg3: memref<1x128x128xf32, #tpu.memory_space<vmem>>, %arg4: memref<1x128x128xf32, #tpu.memory_space<vmem>>, %arg5: memref<1x360x128xbf16, #tpu.memory_space<vmem>>, %arg6: memref<1x2304x40xbf16, #tpu.memory_space<vmem>>, %arg7: memref<1x128x144xf32, #tpu.memory_space<vmem>>, %arg8: memref<1x32x1024xf32, #tpu.memory_space<vmem>>, %arg9: memref<1x1024x32xf32, #tpu.memory_space<vmem>>, %arg10: memref<1x9x32x32xf32, #tpu.memory_space<vmem>>, %arg11: memref<1x16x32x32xf32, #tpu.memory_space<vmem>>, %arg12: memref<1x1x32xf32, #tpu.memory_space<vmem>>, %arg13: memref<1x1x32xf32, #tpu.memory_space<vmem>>, %arg14: memref<128x32xf32, #tpu.memory_space<vmem>>) attributes {dimension_semantics = [#tpu.dimension_semantics<arbitrary>], iteration_bounds = array<i64: 4>, scalar_prefetch = 1 : i64, scratch_operands = 0 : i64, tpu.core_type = #tpu.core_type<tc>, window_params = [{pipeline_mode = #tpu.pipeline_mode<synchronous>, transform_indices = @transform_0, window_bounds = array<i64: 128, 32>}, {transform_indices = @transform_1, window_bounds = array<i64: 1, 128, 128>}, {transform_indices = @transform_2, window_bounds = array<i64: 1, 128, 128>}, {transform_indices = @transform_3, window_bounds = array<i64: 1, 360, 128>}, {transform_indices = @transform_4, window_bounds = array<i64: 1, 2304, 40>}, {transform_indices = @transform_5, window_bounds = array<i64: 1, 128, 144>}, {transform_indices = @transform_6, window_bounds = array<i64: 1, 32, 1024>}, {transform_indices = @transform_7, window_bounds = array<i64: 1, 1024, 32>}, {transform_indices = @transform_8, window_bounds = array<i64: 1, 9, 32, 32>}, {transform_indices = @transform_9, window_bounds = array<i64: 1, 16, 32, 32>}, {transform_indices = @transform_10, window_bounds = array<i64: 1, 1, 32>}, {transform_indices = @transform_11, window_bounds = array<i64: 1, 1, 32>}, {pipeline_mode = #tpu.pipeline_mode<synchronous>, transform_indices = @transform_12, window_bounds = array<i64: 128, 32>}]} {
    %c0_i32 = arith.constant 0 : i32
    %0 = arith.cmpi eq, %arg0, %c0_i32 : i32
    %1 = arith.extui %0 : i1 to i32
    %c0_i32_0 = arith.constant 0 : i32
    %2 = arith.cmpi ne, %1, %c0_i32_0 : i32
    scf.if %2 {
      %cst_162 = arith.constant 0.000000e+00 : f32
      %207 = vector.broadcast %cst_162 : f32 to vector<128x32xf32>
      %c0_163 = arith.constant 0 : index
      %c0_164 = arith.constant 0 : index
      %208 = vector.load %arg14[%c0_163, %c0_164] : memref<128x32xf32, #tpu.memory_space<vmem>>, vector<128x32xf32>
      tpu.vector_store %arg14[%c0_163, %c0_164], %207 {strides = array<i32>} : memref<128x32xf32, #tpu.memory_space<vmem>>, vector<128x32xf32>,
    } else {
    }
    %3 = arith.index_cast %arg0 : i32 to index
    %4 = memref.load %arg1[%3] : memref<4xi32, #tpu.memory_space<smem>>
    %5 = arith.muli %4, %4 : i32
    %c1_i32 = arith.constant 1 : i32
    %6 = arith.maxsi %5, %c1_i32 : i32
    %7 = arith.sitofp %6 : i32 to f32
    %cst = arith.constant 1.000000e+00 : f32
    %8 = arith.divf %cst, %7 : f32
    %c0 = arith.constant 0 : index
    %c0_1 = arith.constant 0 : index
    %9 = vector.load %arg2[%c0, %c0_1] : memref<128x32xf32, #tpu.memory_space<vmem>>, vector<128x32xf32>
    %c0_2 = arith.constant 0 : index
    %c0_3 = arith.constant 0 : index
    %c0_4 = arith.constant 0 : index
    %10 = vector.load %arg3[%c0_2, %c0_3, %c0_4] : memref<1x128x128xf32, #tpu.memory_space<vmem>>, vector<1x128x128xf32>
    %11 = vector.shape_cast %10 : vector<1x128x128xf32> to vector<128x128xf32>
    %cst_5 = arith.constant dense<0.000000e+00> : vector<128x32xf32>
    %12 = tpu.matmul %11, %9, %cst_5 {dimension_numbers = #tpu.dot_dimension_numbers<[1], [0], [0], [1], [0, 0, 1, 1], [], []>} : vector<128x128xf32>, vector<128x32xf32>, vector<128x32xf32> -> vector<128x32xf32>
    %cst_6 = arith.constant dense<0.000000e+00> : vector<32xf32>
    %13 = vector.multi_reduction <add>, %12, %cst_6 [0] : vector<128x32xf32> to vector<32xf32>
    %14 = vector.shape_cast %13 : vector<32xf32> to vector<1x32xf32>
    %15 = vector.broadcast %8 : f32 to vector<1x32xf32>
    %16 = arith.mulf %14, %15 : vector<1x32xf32>
    %c0_7 = arith.constant 0 : index
    %c0_8 = arith.constant 0 : index
    %c0_9 = arith.constant 0 : index
    %17 = vector.load %arg8[%c0_7, %c0_8, %c0_9] : memref<1x32x1024xf32, #tpu.memory_space<vmem>>, vector<1x32x1024xf32>
    %18 = vector.shape_cast %17 : vector<1x32x1024xf32> to vector<32x1024xf32>
    %cst_10 = arith.constant dense<0.000000e+00> : vector<1x1024xf32>
    %19 = tpu.matmul %16, %18, %cst_10 {dimension_numbers = #tpu.dot_dimension_numbers<[1], [0], [0], [1], [0, 0, 1, 1], [], []>} : vector<1x32xf32>, vector<32x1024xf32>, vector<1x1024xf32> -> vector<1x1024xf32>
    %cst_11 = arith.constant 0.000000e+00 : f32
    %20 = vector.broadcast %cst_11 : f32 to vector<1x1024xf32>
    %21 = arith.maximumf %19, %20 : vector<1x1024xf32>
    %c0_12 = arith.constant 0 : index
    %c0_13 = arith.constant 0 : index
    %c0_14 = arith.constant 0 : index
    %22 = vector.load %arg9[%c0_12, %c0_13, %c0_14] : memref<1x1024x32xf32, #tpu.memory_space<vmem>>, vector<1x1024x32xf32>
    %23 = vector.shape_cast %22 : vector<1x1024x32xf32> to vector<1024x32xf32>
    %cst_15 = arith.constant dense<0.000000e+00> : vector<1x32xf32>
    %24 = tpu.matmul %21, %23, %cst_15 {dimension_numbers = #tpu.dot_dimension_numbers<[1], [0], [0], [1], [0, 0, 1, 1], [], []>} : vector<1x1024xf32>, vector<1024x32xf32>, vector<1x32xf32> -> vector<1x32xf32>
    %25 = arith.negf %24 : vector<1x32xf32>
    %26 = math.exp %25 : vector<1x32xf32>
    %cst_16 = arith.constant 1.000000e+00 : f32
    %27 = vector.broadcast %cst_16 : f32 to vector<1x32xf32>
    %28 = arith.addf %27, %26 : vector<1x32xf32>
    %29 = arith.divf %27, %28 : vector<1x32xf32>
    %30 = vector.broadcast %29 : vector<1x32xf32> to vector<128x32xf32>
    %31 = arith.mulf %12, %30 : vector<128x32xf32>
    %c0_17 = arith.constant 0 : index
    %c0_18 = arith.constant 0 : index
    %c0_19 = arith.constant 0 : index
    %32 = vector.load %arg5[%c0_17, %c0_18, %c0_19] : memref<1x360x128xbf16, #tpu.memory_space<vmem>>, vector<1x360x128xbf16>
    %33 = vector.shape_cast %32 : vector<1x360x128xbf16> to vector<360x128xbf16>
    %34 = arith.extf %33 : vector<360x128xbf16> to vector<360x128xf32>
    %cst_20 = arith.constant dense<0.000000e+00> : vector<360x32xf32>
    %35 = tpu.matmul %34, %31, %cst_20 {dimension_numbers = #tpu.dot_dimension_numbers<[1], [0], [0], [1], [0, 0, 1, 1], [], []>} : vector<360x128xf32>, vector<128x32xf32>, vector<360x32xf32> -> vector<360x32xf32>
    %cst_21 = arith.constant 0.000000e+00 : f32
    %36 = vector.broadcast %cst_21 : f32 to vector<40x32xf32>
    %37 = vector.extract_strided_slice %35 {offsets = [0, 0], sizes = [40, 32], strides = [1, 1]} : vector<360x32xf32> to vector<40x32xf32>
    %c0_22 = arith.constant 0 : index
    %c0_23 = arith.constant 0 : index
    %c0_24 = arith.constant 0 : index
    %c0_25 = arith.constant 0 : index
    %38 = vector.load %arg10[%c0_22, %c0_23, %c0_24, %c0_25] : memref<1x9x32x32xf32, #tpu.memory_space<vmem>>, vector<1x1x32x32xf32>
    %39 = vector.shape_cast %38 : vector<1x1x32x32xf32> to vector<32x32xf32>
    %cst_26 = arith.constant dense<0.000000e+00> : vector<40x32xf32>
    %40 = tpu.matmul %37, %39, %cst_26 {dimension_numbers = #tpu.dot_dimension_numbers<[1], [0], [0], [1], [0, 0, 1, 1], [], []>} : vector<40x32xf32>, vector<32x32xf32>, vector<40x32xf32> -> vector<40x32xf32>
    %41 = arith.addf %36, %40 : vector<40x32xf32>
    %42 = vector.extract_strided_slice %35 {offsets = [40, 0], sizes = [40, 32], strides = [1, 1]} : vector<360x32xf32> to vector<40x32xf32>
    %c0_27 = arith.constant 0 : index
    %c1 = arith.constant 1 : index
    %c0_28 = arith.constant 0 : index
    %c0_29 = arith.constant 0 : index
    %43 = vector.load %arg10[%c0_27, %c1, %c0_28, %c0_29] : memref<1x9x32x32xf32, #tpu.memory_space<vmem>>, vector<1x1x32x32xf32>
    %44 = vector.shape_cast %43 : vector<1x1x32x32xf32> to vector<32x32xf32>
    %cst_30 = arith.constant dense<0.000000e+00> : vector<40x32xf32>
    %45 = tpu.matmul %42, %44, %cst_30 {dimension_numbers = #tpu.dot_dimension_numbers<[1], [0], [0], [1], [0, 0, 1, 1], [], []>} : vector<40x32xf32>, vector<32x32xf32>, vector<40x32xf32> -> vector<40x32xf32>
    %46 = arith.addf %41, %45 : vector<40x32xf32>
    %47 = vector.extract_strided_slice %35 {offsets = [80, 0], sizes = [40, 32], strides = [1, 1]} : vector<360x32xf32> to vector<40x32xf32>
    %c0_31 = arith.constant 0 : index
    %c2 = arith.constant 2 : index
    %c0_32 = arith.constant 0 : index
    %c0_33 = arith.constant 0 : index
    %48 = vector.load %arg10[%c0_31, %c2, %c0_32, %c0_33] : memref<1x9x32x32xf32, #tpu.memory_space<vmem>>, vector<1x1x32x32xf32>
    %49 = vector.shape_cast %48 : vector<1x1x32x32xf32> to vector<32x32xf32>
    %cst_34 = arith.constant dense<0.000000e+00> : vector<40x32xf32>
    %50 = tpu.matmul %47, %49, %cst_34 {dimension_numbers = #tpu.dot_dimension_numbers<[1], [0], [0], [1], [0, 0, 1, 1], [], []>} : vector<40x32xf32>, vector<32x32xf32>, vector<40x32xf32> -> vector<40x32xf32>
    %51 = arith.addf %46, %50 : vector<40x32xf32>
    %52 = vector.extract_strided_slice %35 {offsets = [120, 0], sizes = [40, 32], strides = [1, 1]} : vector<360x32xf32> to vector<40x32xf32>
    %c0_35 = arith.constant 0 : index
    %c3 = arith.constant 3 : index
    %c0_36 = arith.constant 0 : index
    %c0_37 = arith.constant 0 : index
    %53 = vector.load %arg10[%c0_35, %c3, %c0_36, %c0_37] : memref<1x9x32x32xf32, #tpu.memory_space<vmem>>, vector<1x1x32x32xf32>
    %54 = vector.shape_cast %53 : vector<1x1x32x32xf32> to vector<32x32xf32>
    %cst_38 = arith.constant dense<0.000000e+00> : vector<40x32xf32>
    %55 = tpu.matmul %52, %54, %cst_38 {dimension_numbers = #tpu.dot_dimension_numbers<[1], [0], [0], [1], [0, 0, 1, 1], [], []>} : vector<40x32xf32>, vector<32x32xf32>, vector<40x32xf32> -> vector<40x32xf32>
    %56 = arith.addf %51, %55 : vector<40x32xf32>
    %57 = vector.extract_strided_slice %35 {offsets = [160, 0], sizes = [40, 32], strides = [1, 1]} : vector<360x32xf32> to vector<40x32xf32>
    %c0_39 = arith.constant 0 : index
    %c4 = arith.constant 4 : index
    %c0_40 = arith.constant 0 : index
    %c0_41 = arith.constant 0 : index
    %58 = vector.load %arg10[%c0_39, %c4, %c0_40, %c0_41] : memref<1x9x32x32xf32, #tpu.memory_space<vmem>>, vector<1x1x32x32xf32>
    %59 = vector.shape_cast %58 : vector<1x1x32x32xf32> to vector<32x32xf32>
    %cst_42 = arith.constant dense<0.000000e+00> : vector<40x32xf32>
    %60 = tpu.matmul %57, %59, %cst_42 {dimension_numbers = #tpu.dot_dimension_numbers<[1], [0], [0], [1], [0, 0, 1, 1], [], []>} : vector<40x32xf32>, vector<32x32xf32>, vector<40x32xf32> -> vector<40x32xf32>
    %61 = arith.addf %56, %60 : vector<40x32xf32>
    %62 = vector.extract_strided_slice %35 {offsets = [200, 0], sizes = [40, 32], strides = [1, 1]} : vector<360x32xf32> to vector<40x32xf32>
    %c0_43 = arith.constant 0 : index
    %c5 = arith.constant 5 : index
    %c0_44 = arith.constant 0 : index
    %c0_45 = arith.constant 0 : index
    %63 = vector.load %arg10[%c0_43, %c5, %c0_44, %c0_45] : memref<1x9x32x32xf32, #tpu.memory_space<vmem>>, vector<1x1x32x32xf32>
    %64 = vector.shape_cast %63 : vector<1x1x32x32xf32> to vector<32x32xf32>
    %cst_46 = arith.constant dense<0.000000e+00> : vector<40x32xf32>
    %65 = tpu.matmul %62, %64, %cst_46 {dimension_numbers = #tpu.dot_dimension_numbers<[1], [0], [0], [1], [0, 0, 1, 1], [], []>} : vector<40x32xf32>, vector<32x32xf32>, vector<40x32xf32> -> vector<40x32xf32>
    %66 = arith.addf %61, %65 : vector<40x32xf32>
    %67 = vector.extract_strided_slice %35 {offsets = [240, 0], sizes = [40, 32], strides = [1, 1]} : vector<360x32xf32> to vector<40x32xf32>
    %c0_47 = arith.constant 0 : index
    %c6 = arith.constant 6 : index
    %c0_48 = arith.constant 0 : index
    %c0_49 = arith.constant 0 : index
    %68 = vector.load %arg10[%c0_47, %c6, %c0_48, %c0_49] : memref<1x9x32x32xf32, #tpu.memory_space<vmem>>, vector<1x1x32x32xf32>
    %69 = vector.shape_cast %68 : vector<1x1x32x32xf32> to vector<32x32xf32>
    %cst_50 = arith.constant dense<0.000000e+00> : vector<40x32xf32>
    %70 = tpu.matmul %67, %69, %cst_50 {dimension_numbers = #tpu.dot_dimension_numbers<[1], [0], [0], [1], [0, 0, 1, 1], [], []>} : vector<40x32xf32>, vector<32x32xf32>, vector<40x32xf32> -> vector<40x32xf32>
    %71 = arith.addf %66, %70 : vector<40x32xf32>
    %72 = vector.extract_strided_slice %35 {offsets = [280, 0], sizes = [40, 32], strides = [1, 1]} : vector<360x32xf32> to vector<40x32xf32>
    %c0_51 = arith.constant 0 : index
    %c7 = arith.constant 7 : index
    %c0_52 = arith.constant 0 : index
    %c0_53 = arith.constant 0 : index
    %73 = vector.load %arg10[%c0_51, %c7, %c0_52, %c0_53] : memref<1x9x32x32xf32, #tpu.memory_space<vmem>>, vector<1x1x32x32xf32>
    %74 = vector.shape_cast %73 : vector<1x1x32x32xf32> to vector<32x32xf32>
    %cst_54 = arith.constant dense<0.000000e+00> : vector<40x32xf32>
    %75 = tpu.matmul %72, %74, %cst_54 {dimension_numbers = #tpu.dot_dimension_numbers<[1], [0], [0], [1], [0, 0, 1, 1], [], []>} : vector<40x32xf32>, vector<32x32xf32>, vector<40x32xf32> -> vector<40x32xf32>
    %76 = arith.addf %71, %75 : vector<40x32xf32>
    %77 = vector.extract_strided_slice %35 {offsets = [320, 0], sizes = [40, 32], strides = [1, 1]} : vector<360x32xf32> to vector<40x32xf32>
    %c0_55 = arith.constant 0 : index
    %c8 = arith.constant 8 : index
    %c0_56 = arith.constant 0 : index
    %c0_57 = arith.constant 0 : index
    %78 = vector.load %arg10[%c0_55, %c8, %c0_56, %c0_57] : memref<1x9x32x32xf32, #tpu.memory_space<vmem>>, vector<1x1x32x32xf32>
    %79 = vector.shape_cast %78 : vector<1x1x32x32xf32> to vector<32x32xf32>
    %cst_58 = arith.constant dense<0.000000e+00> : vector<40x32xf32>
    %80 = tpu.matmul %77, %79, %cst_58 {dimension_numbers = #tpu.dot_dimension_numbers<[1], [0], [0], [1], [0, 0, 1, 1], [], []>} : vector<40x32xf32>, vector<32x32xf32>, vector<40x32xf32> -> vector<40x32xf32>
    %81 = arith.addf %76, %80 : vector<40x32xf32>
    %cst_59 = arith.constant 0.000000e+00 : f32
    %82 = vector.broadcast %cst_59 : f32 to vector<40x32xf32>
    %83 = arith.maximumf %81, %82 : vector<40x32xf32>
    %c0_60 = arith.constant 0 : index
    %c0_61 = arith.constant 0 : index
    %c0_62 = arith.constant 0 : index
    %84 = vector.load %arg6[%c0_60, %c0_61, %c0_62] : memref<1x2304x40xbf16, #tpu.memory_space<vmem>>, vector<1x2304x40xbf16>
    %85 = vector.shape_cast %84 : vector<1x2304x40xbf16> to vector<2304x40xbf16>
    %86 = arith.extf %85 : vector<2304x40xbf16> to vector<2304x40xf32>
    %cst_63 = arith.constant dense<0.000000e+00> : vector<2304x32xf32>
    %87 = tpu.matmul %86, %83, %cst_63 {dimension_numbers = #tpu.dot_dimension_numbers<[1], [0], [0], [1], [0, 0, 1, 1], [], []>} : vector<2304x40xf32>, vector<40x32xf32>, vector<2304x32xf32> -> vector<2304x32xf32>
    %cst_64 = arith.constant 0.000000e+00 : f32
    %88 = vector.broadcast %cst_64 : f32 to vector<144x32xf32>
    %89 = vector.extract_strided_slice %87 {offsets = [0, 0], sizes = [144, 32], strides = [1, 1]} : vector<2304x32xf32> to vector<144x32xf32>
    %c0_65 = arith.constant 0 : index
    %c0_66 = arith.constant 0 : index
    %c0_67 = arith.constant 0 : index
    %c0_68 = arith.constant 0 : index
    %90 = vector.load %arg11[%c0_65, %c0_66, %c0_67, %c0_68] : memref<1x16x32x32xf32, #tpu.memory_space<vmem>>, vector<1x1x32x32xf32>
    %91 = vector.shape_cast %90 : vector<1x1x32x32xf32> to vector<32x32xf32>
    %cst_69 = arith.constant dense<0.000000e+00> : vector<144x32xf32>
    %92 = tpu.matmul %89, %91, %cst_69 {dimension_numbers = #tpu.dot_dimension_numbers<[1], [0], [0], [1], [0, 0, 1, 1], [], []>} : vector<144x32xf32>, vector<32x32xf32>, vector<144x32xf32> -> vector<144x32xf32>
    %93 = arith.addf %88, %92 : vector<144x32xf32>
    %94 = vector.extract_strided_slice %87 {offsets = [144, 0], sizes = [144, 32], strides = [1, 1]} : vector<2304x32xf32> to vector<144x32xf32>
    %c0_70 = arith.constant 0 : index
    %c1_71 = arith.constant 1 : index
    %c0_72 = arith.constant 0 : index
    %c0_73 = arith.constant 0 : index
    %95 = vector.load %arg11[%c0_70, %c1_71, %c0_72, %c0_73] : memref<1x16x32x32xf32, #tpu.memory_space<vmem>>, vector<1x1x32x32xf32>
    %96 = vector.shape_cast %95 : vector<1x1x32x32xf32> to vector<32x32xf32>
    %cst_74 = arith.constant dense<0.000000e+00> : vector<144x32xf32>
    %97 = tpu.matmul %94, %96, %cst_74 {dimension_numbers = #tpu.dot_dimension_numbers<[1], [0], [0], [1], [0, 0, 1, 1], [], []>} : vector<144x32xf32>, vector<32x32xf32>, vector<144x32xf32> -> vector<144x32xf32>
    %98 = arith.addf %93, %97 : vector<144x32xf32>
    %99 = vector.extract_strided_slice %87 {offsets = [288, 0], sizes = [144, 32], strides = [1, 1]} : vector<2304x32xf32> to vector<144x32xf32>
    %c0_75 = arith.constant 0 : index
    %c2_76 = arith.constant 2 : index
    %c0_77 = arith.constant 0 : index
    %c0_78 = arith.constant 0 : index
    %100 = vector.load %arg11[%c0_75, %c2_76, %c0_77, %c0_78] : memref<1x16x32x32xf32, #tpu.memory_space<vmem>>, vector<1x1x32x32xf32>
    %101 = vector.shape_cast %100 : vector<1x1x32x32xf32> to vector<32x32xf32>
    %cst_79 = arith.constant dense<0.000000e+00> : vector<144x32xf32>
    %102 = tpu.matmul %99, %101, %cst_79 {dimension_numbers = #tpu.dot_dimension_numbers<[1], [0], [0], [1], [0, 0, 1, 1], [], []>} : vector<144x32xf32>, vector<32x32xf32>, vector<144x32xf32> -> vector<144x32xf32>
    %103 = arith.addf %98, %102 : vector<144x32xf32>
    %104 = vector.extract_strided_slice %87 {offsets = [432, 0], sizes = [144, 32], strides = [1, 1]} : vector<2304x32xf32> to vector<144x32xf32>
    %c0_80 = arith.constant 0 : index
    %c3_81 = arith.constant 3 : index
    %c0_82 = arith.constant 0 : index
    %c0_83 = arith.constant 0 : index
    %105 = vector.load %arg11[%c0_80, %c3_81, %c0_82, %c0_83] : memref<1x16x32x32xf32, #tpu.memory_space<vmem>>, vector<1x1x32x32xf32>
    %106 = vector.shape_cast %105 : vector<1x1x32x32xf32> to vector<32x32xf32>
    %cst_84 = arith.constant dense<0.000000e+00> : vector<144x32xf32>
    %107 = tpu.matmul %104, %106, %cst_84 {dimension_numbers = #tpu.dot_dimension_numbers<[1], [0], [0], [1], [0, 0, 1, 1], [], []>} : vector<144x32xf32>, vector<32x32xf32>, vector<144x32xf32> -> vector<144x32xf32>
    %108 = arith.addf %103, %107 : vector<144x32xf32>
    %109 = vector.extract_strided_slice %87 {offsets = [576, 0], sizes = [144, 32], strides = [1, 1]} : vector<2304x32xf32> to vector<144x32xf32>
    %c0_85 = arith.constant 0 : index
    %c4_86 = arith.constant 4 : index
    %c0_87 = arith.constant 0 : index
    %c0_88 = arith.constant 0 : index
    %110 = vector.load %arg11[%c0_85, %c4_86, %c0_87, %c0_88] : memref<1x16x32x32xf32, #tpu.memory_space<vmem>>, vector<1x1x32x32xf32>
    %111 = vector.shape_cast %110 : vector<1x1x32x32xf32> to vector<32x32xf32>
    %cst_89 = arith.constant dense<0.000000e+00> : vector<144x32xf32>
    %112 = tpu.matmul %109, %111, %cst_89 {dimension_numbers = #tpu.dot_dimension_numbers<[1], [0], [0], [1], [0, 0, 1, 1], [], []>} : vector<144x32xf32>, vector<32x32xf32>, vector<144x32xf32> -> vector<144x32xf32>
    %113 = arith.addf %108, %112 : vector<144x32xf32>
    %114 = vector.extract_strided_slice %87 {offsets = [720, 0], sizes = [144, 32], strides = [1, 1]} : vector<2304x32xf32> to vector<144x32xf32>
    %c0_90 = arith.constant 0 : index
    %c5_91 = arith.constant 5 : index
    %c0_92 = arith.constant 0 : index
    %c0_93 = arith.constant 0 : index
    %115 = vector.load %arg11[%c0_90, %c5_91, %c0_92, %c0_93] : memref<1x16x32x32xf32, #tpu.memory_space<vmem>>, vector<1x1x32x32xf32>
    %116 = vector.shape_cast %115 : vector<1x1x32x32xf32> to vector<32x32xf32>
    %cst_94 = arith.constant dense<0.000000e+00> : vector<144x32xf32>
    %117 = tpu.matmul %114, %116, %cst_94 {dimension_numbers = #tpu.dot_dimension_numbers<[1], [0], [0], [1], [0, 0, 1, 1], [], []>} : vector<144x32xf32>, vector<32x32xf32>, vector<144x32xf32> -> vector<144x32xf32>
    %118 = arith.addf %113, %117 : vector<144x32xf32>
    %119 = vector.extract_strided_slice %87 {offsets = [864, 0], sizes = [144, 32], strides = [1, 1]} : vector<2304x32xf32> to vector<144x32xf32>
    %c0_95 = arith.constant 0 : index
    %c6_96 = arith.constant 6 : index
    %c0_97 = arith.constant 0 : index
    %c0_98 = arith.constant 0 : index
    %120 = vector.load %arg11[%c0_95, %c6_96, %c0_97, %c0_98] : memref<1x16x32x32xf32, #tpu.memory_space<vmem>>, vector<1x1x32x32xf32>
    %121 = vector.shape_cast %120 : vector<1x1x32x32xf32> to vector<32x32xf32>
    %cst_99 = arith.constant dense<0.000000e+00> : vector<144x32xf32>
    %122 = tpu.matmul %119, %121, %cst_99 {dimension_numbers = #tpu.dot_dimension_numbers<[1], [0], [0], [1], [0, 0, 1, 1], [], []>} : vector<144x32xf32>, vector<32x32xf32>, vector<144x32xf32> -> vector<144x32xf32>
    %123 = arith.addf %118, %122 : vector<144x32xf32>
    %124 = vector.extract_strided_slice %87 {offsets = [1008, 0], sizes = [144, 32], strides = [1, 1]} : vector<2304x32xf32> to vector<144x32xf32>
    %c0_100 = arith.constant 0 : index
    %c7_101 = arith.constant 7 : index
    %c0_102 = arith.constant 0 : index
    %c0_103 = arith.constant 0 : index
    %125 = vector.load %arg11[%c0_100, %c7_101, %c0_102, %c0_103] : memref<1x16x32x32xf32, #tpu.memory_space<vmem>>, vector<1x1x32x32xf32>
    %126 = vector.shape_cast %125 : vector<1x1x32x32xf32> to vector<32x32xf32>
    %cst_104 = arith.constant dense<0.000000e+00> : vector<144x32xf32>
    %127 = tpu.matmul %124, %126, %cst_104 {dimension_numbers = #tpu.dot_dimension_numbers<[1], [0], [0], [1], [0, 0, 1, 1], [], []>} : vector<144x32xf32>, vector<32x32xf32>, vector<144x32xf32> -> vector<144x32xf32>
    %128 = arith.addf %123, %127 : vector<144x32xf32>
    %129 = vector.extract_strided_slice %87 {offsets = [1152, 0], sizes = [144, 32], strides = [1, 1]} : vector<2304x32xf32> to vector<144x32xf32>
    %c0_105 = arith.constant 0 : index
    %c8_106 = arith.constant 8 : index
    %c0_107 = arith.constant 0 : index
    %c0_108 = arith.constant 0 : index
    %130 = vector.load %arg11[%c0_105, %c8_106, %c0_107, %c0_108] : memref<1x16x32x32xf32, #tpu.memory_space<vmem>>, vector<1x1x32x32xf32>
    %131 = vector.shape_cast %130 : vector<1x1x32x32xf32> to vector<32x32xf32>
    %cst_109 = arith.constant dense<0.000000e+00> : vector<144x32xf32>
    %132 = tpu.matmul %129, %131, %cst_109 {dimension_numbers = #tpu.dot_dimension_numbers<[1], [0], [0], [1], [0, 0, 1, 1], [], []>} : vector<144x32xf32>, vector<32x32xf32>, vector<144x32xf32> -> vector<144x32xf32>
    %133 = arith.addf %128, %132 : vector<144x32xf32>
    %134 = vector.extract_strided_slice %87 {offsets = [1296, 0], sizes = [144, 32], strides = [1, 1]} : vector<2304x32xf32> to vector<144x32xf32>
    %c0_110 = arith.constant 0 : index
    %c9 = arith.constant 9 : index
    %c0_111 = arith.constant 0 : index
    %c0_112 = arith.constant 0 : index
    %135 = vector.load %arg11[%c0_110, %c9, %c0_111, %c0_112] : memref<1x16x32x32xf32, #tpu.memory_space<vmem>>, vector<1x1x32x32xf32>
    %136 = vector.shape_cast %135 : vector<1x1x32x32xf32> to vector<32x32xf32>
    %cst_113 = arith.constant dense<0.000000e+00> : vector<144x32xf32>
    %137 = tpu.matmul %134, %136, %cst_113 {dimension_numbers = #tpu.dot_dimension_numbers<[1], [0], [0], [1], [0, 0, 1, 1], [], []>} : vector<144x32xf32>, vector<32x32xf32>, vector<144x32xf32> -> vector<144x32xf32>
    %138 = arith.addf %133, %137 : vector<144x32xf32>
    %139 = vector.extract_strided_slice %87 {offsets = [1440, 0], sizes = [144, 32], strides = [1, 1]} : vector<2304x32xf32> to vector<144x32xf32>
    %c0_114 = arith.constant 0 : index
    %c10 = arith.constant 10 : index
    %c0_115 = arith.constant 0 : index
    %c0_116 = arith.constant 0 : index
    %140 = vector.load %arg11[%c0_114, %c10, %c0_115, %c0_116] : memref<1x16x32x32xf32, #tpu.memory_space<vmem>>, vector<1x1x32x32xf32>
    %141 = vector.shape_cast %140 : vector<1x1x32x32xf32> to vector<32x32xf32>
    %cst_117 = arith.constant dense<0.000000e+00> : vector<144x32xf32>
    %142 = tpu.matmul %139, %141, %cst_117 {dimension_numbers = #tpu.dot_dimension_numbers<[1], [0], [0], [1], [0, 0, 1, 1], [], []>} : vector<144x32xf32>, vector<32x32xf32>, vector<144x32xf32> -> vector<144x32xf32>
    %143 = arith.addf %138, %142 : vector<144x32xf32>
    %144 = vector.extract_strided_slice %87 {offsets = [1584, 0], sizes = [144, 32], strides = [1, 1]} : vector<2304x32xf32> to vector<144x32xf32>
    %c0_118 = arith.constant 0 : index
    %c11 = arith.constant 11 : index
    %c0_119 = arith.constant 0 : index
    %c0_120 = arith.constant 0 : index
    %145 = vector.load %arg11[%c0_118, %c11, %c0_119, %c0_120] : memref<1x16x32x32xf32, #tpu.memory_space<vmem>>, vector<1x1x32x32xf32>
    %146 = vector.shape_cast %145 : vector<1x1x32x32xf32> to vector<32x32xf32>
    %cst_121 = arith.constant dense<0.000000e+00> : vector<144x32xf32>
    %147 = tpu.matmul %144, %146, %cst_121 {dimension_numbers = #tpu.dot_dimension_numbers<[1], [0], [0], [1], [0, 0, 1, 1], [], []>} : vector<144x32xf32>, vector<32x32xf32>, vector<144x32xf32> -> vector<144x32xf32>
    %148 = arith.addf %143, %147 : vector<144x32xf32>
    %149 = vector.extract_strided_slice %87 {offsets = [1728, 0], sizes = [144, 32], strides = [1, 1]} : vector<2304x32xf32> to vector<144x32xf32>
    %c0_122 = arith.constant 0 : index
    %c12 = arith.constant 12 : index
    %c0_123 = arith.constant 0 : index
    %c0_124 = arith.constant 0 : index
    %150 = vector.load %arg11[%c0_122, %c12, %c0_123, %c0_124] : memref<1x16x32x32xf32, #tpu.memory_space<vmem>>, vector<1x1x32x32xf32>
    %151 = vector.shape_cast %150 : vector<1x1x32x32xf32> to vector<32x32xf32>
    %cst_125 = arith.constant dense<0.000000e+00> : vector<144x32xf32>
    %152 = tpu.matmul %149, %151, %cst_125 {dimension_numbers = #tpu.dot_dimension_numbers<[1], [0], [0], [1], [0, 0, 1, 1], [], []>} : vector<144x32xf32>, vector<32x32xf32>, vector<144x32xf32> -> vector<144x32xf32>
    %153 = arith.addf %148, %152 : vector<144x32xf32>
    %154 = vector.extract_strided_slice %87 {offsets = [1872, 0], sizes = [144, 32], strides = [1, 1]} : vector<2304x32xf32> to vector<144x32xf32>
    %c0_126 = arith.constant 0 : index
    %c13 = arith.constant 13 : index
    %c0_127 = arith.constant 0 : index
    %c0_128 = arith.constant 0 : index
    %155 = vector.load %arg11[%c0_126, %c13, %c0_127, %c0_128] : memref<1x16x32x32xf32, #tpu.memory_space<vmem>>, vector<1x1x32x32xf32>
    %156 = vector.shape_cast %155 : vector<1x1x32x32xf32> to vector<32x32xf32>
    %cst_129 = arith.constant dense<0.000000e+00> : vector<144x32xf32>
    %157 = tpu.matmul %154, %156, %cst_129 {dimension_numbers = #tpu.dot_dimension_numbers<[1], [0], [0], [1], [0, 0, 1, 1], [], []>} : vector<144x32xf32>, vector<32x32xf32>, vector<144x32xf32> -> vector<144x32xf32>
    %158 = arith.addf %153, %157 : vector<144x32xf32>
    %159 = vector.extract_strided_slice %87 {offsets = [2016, 0], sizes = [144, 32], strides = [1, 1]} : vector<2304x32xf32> to vector<144x32xf32>
    %c0_130 = arith.constant 0 : index
    %c14 = arith.constant 14 : index
    %c0_131 = arith.constant 0 : index
    %c0_132 = arith.constant 0 : index
    %160 = vector.load %arg11[%c0_130, %c14, %c0_131, %c0_132] : memref<1x16x32x32xf32, #tpu.memory_space<vmem>>, vector<1x1x32x32xf32>
    %161 = vector.shape_cast %160 : vector<1x1x32x32xf32> to vector<32x32xf32>
    %cst_133 = arith.constant dense<0.000000e+00> : vector<144x32xf32>
    %162 = tpu.matmul %159, %161, %cst_133 {dimension_numbers = #tpu.dot_dimension_numbers<[1], [0], [0], [1], [0, 0, 1, 1], [], []>} : vector<144x32xf32>, vector<32x32xf32>, vector<144x32xf32> -> vector<144x32xf32>
    %163 = arith.addf %158, %162 : vector<144x32xf32>
    %164 = vector.extract_strided_slice %87 {offsets = [2160, 0], sizes = [144, 32], strides = [1, 1]} : vector<2304x32xf32> to vector<144x32xf32>
    %c0_134 = arith.constant 0 : index
    %c15 = arith.constant 15 : index
    %c0_135 = arith.constant 0 : index
    %c0_136 = arith.constant 0 : index
    %165 = vector.load %arg11[%c0_134, %c15, %c0_135, %c0_136] : memref<1x16x32x32xf32, #tpu.memory_space<vmem>>, vector<1x1x32x32xf32>
    %166 = vector.shape_cast %165 : vector<1x1x32x32xf32> to vector<32x32xf32>
    %cst_137 = arith.constant dense<0.000000e+00> : vector<144x32xf32>
    %167 = tpu.matmul %164, %166, %cst_137 {dimension_numbers = #tpu.dot_dimension_numbers<[1], [0], [0], [1], [0, 0, 1, 1], [], []>} : vector<144x32xf32>, vector<32x32xf32>, vector<144x32xf32> -> vector<144x32xf32>
    %168 = arith.addf %163, %167 : vector<144x32xf32>
    %cst_138 = arith.constant 0.000000e+00 : f32
    %169 = vector.broadcast %cst_138 : f32 to vector<144x32xf32>
    %170 = arith.maximumf %168, %169 : vector<144x32xf32>
    %c0_139 = arith.constant 0 : index
    %c0_140 = arith.constant 0 : index
    %c0_141 = arith.constant 0 : index
    %171 = vector.load %arg7[%c0_139, %c0_140, %c0_141] : memref<1x128x144xf32, #tpu.memory_space<vmem>>, vector<1x128x144xf32>
    %172 = vector.shape_cast %171 : vector<1x128x144xf32> to vector<128x144xf32>
    %cst_142 = arith.constant dense<0.000000e+00> : vector<128x32xf32>
    %173 = tpu.matmul %172, %170, %cst_142 {dimension_numbers = #tpu.dot_dimension_numbers<[1], [0], [0], [1], [0, 0, 1, 1], [], []>} : vector<128x144xf32>, vector<144x32xf32>, vector<128x32xf32> -> vector<128x32xf32>
    %174 = arith.addf %12, %173 : vector<128x32xf32>
    %cst_143 = arith.constant dense<0.000000e+00> : vector<128xf32>
    %175 = vector.multi_reduction <add>, %174, %cst_143 [1] : vector<128x32xf32> to vector<128xf32>
    %176 = vector.shape_cast %175 : vector<128xf32> to vector<128x1xf32>
    %cst_144 = arith.constant 3.200000e+01 : f32
    %177 = vector.broadcast %cst_144 : f32 to vector<128x1xf32>
    %178 = arith.divf %176, %177 : vector<128x1xf32>
    %179 = vector.broadcast %178 : vector<128x1xf32> to vector<128x32xf32>
    %180 = arith.subf %174, %179 : vector<128x32xf32>
    %181 = arith.mulf %180, %180 : vector<128x32xf32>
    %cst_145 = arith.constant dense<0.000000e+00> : vector<128xf32>
    %182 = vector.multi_reduction <add>, %181, %cst_145 [1] : vector<128x32xf32> to vector<128xf32>
    %183 = vector.shape_cast %182 : vector<128xf32> to vector<128x1xf32>
    %cst_146 = arith.constant 3.200000e+01 : f32
    %184 = vector.broadcast %cst_146 : f32 to vector<128x1xf32>
    %185 = arith.divf %183, %184 : vector<128x1xf32>
    %186 = vector.broadcast %178 : vector<128x1xf32> to vector<128x32xf32>
    %187 = arith.subf %174, %186 : vector<128x32xf32>
    %cst_147 = arith.constant 9.99999974E-6 : f32
    %188 = vector.broadcast %cst_147 : f32 to vector<128x1xf32>
    %189 = arith.addf %185, %188 : vector<128x1xf32>
    %190 = math.rsqrt %189 : vector<128x1xf32>
    %191 = vector.broadcast %190 : vector<128x1xf32> to vector<128x32xf32>
    %192 = arith.mulf %187, %191 : vector<128x32xf32>
    %c0_148 = arith.constant 0 : index
    %c0_149 = arith.constant 0 : index
    %c0_150 = arith.constant 0 : index
    %193 = vector.load %arg12[%c0_148, %c0_149, %c0_150] : memref<1x1x32xf32, #tpu.memory_space<vmem>>, vector<1x1x32xf32>
    %194 = vector.shape_cast %193 : vector<1x1x32xf32> to vector<1x32xf32>
    %195 = vector.broadcast %194 : vector<1x32xf32> to vector<128x32xf32>
    %196 = arith.mulf %192, %195 : vector<128x32xf32>
    %c0_151 = arith.constant 0 : index
    %c0_152 = arith.constant 0 : index
    %c0_153 = arith.constant 0 : index
    %197 = vector.load %arg13[%c0_151, %c0_152, %c0_153] : memref<1x1x32xf32, #tpu.memory_space<vmem>>, vector<1x1x32xf32>
    %198 = vector.shape_cast %197 : vector<1x1x32xf32> to vector<1x32xf32>
    %199 = vector.broadcast %198 : vector<1x32xf32> to vector<128x32xf32>
    %200 = arith.addf %196, %199 : vector<128x32xf32>
    %c0_154 = arith.constant 0 : index
    %c0_155 = arith.constant 0 : index
    %201 = vector.load %arg14[%c0_154, %c0_155] : memref<128x32xf32, #tpu.memory_space<vmem>>, vector<128x32xf32>
    %c0_156 = arith.constant 0 : index
    %c0_157 = arith.constant 0 : index
    %c0_158 = arith.constant 0 : index
    %202 = vector.load %arg4[%c0_156, %c0_157, %c0_158] : memref<1x128x128xf32, #tpu.memory_space<vmem>>, vector<1x128x128xf32>
    %203 = vector.shape_cast %202 : vector<1x128x128xf32> to vector<128x128xf32>
    %cst_159 = arith.constant dense<0.000000e+00> : vector<128x32xf32>
    %204 = tpu.matmul %203, %200, %cst_159 {dimension_numbers = #tpu.dot_dimension_numbers<[1], [0], [0], [1], [0, 0, 1, 1], [], []>} : vector<128x128xf32>, vector<128x32xf32>, vector<128x32xf32> -> vector<128x32xf32>
    %205 = arith.addf %201, %204 : vector<128x32xf32>
    %c0_160 = arith.constant 0 : index
    %c0_161 = arith.constant 0 : index
    %206 = vector.load %arg14[%c0_160, %c0_161] : memref<128x32xf32, #tpu.memory_space<vmem>>, vector<128x32xf32>
    tpu.vector_store %arg14[%c0_160, %c0_161], %205 {strides = array<i32>} : memref<128x32xf32, #tpu.memory_space<vmem>>, vector<128x32xf32>,
    return
  }
  func.func @transform_0(%arg0: i32, %arg1: memref<4xi32, #tpu.memory_space<smem>>) -> (i32, i32) {
    %c0_i32 = arith.constant 0 : i32
    %c0_i32_0 = arith.constant 0 : i32
    %c0_i32_1 = arith.constant 0 : i32
    return %c0_i32, %c0_i32_0 : i32, i32
  }
  func.func @transform_1(%arg0: i32, %arg1: memref<4xi32, #tpu.memory_space<smem>>) -> (i32, i32, i32) {
    %c0_i32 = arith.constant 0 : i32
    %c0_i32_0 = arith.constant 0 : i32
    %c0_i32_1 = arith.constant 0 : i32
    return %arg0, %c0_i32, %c0_i32_0 : i32, i32, i32
  }
  func.func @transform_2(%arg0: i32, %arg1: memref<4xi32, #tpu.memory_space<smem>>) -> (i32, i32, i32) {
    %c0_i32 = arith.constant 0 : i32
    %c0_i32_0 = arith.constant 0 : i32
    %c0_i32_1 = arith.constant 0 : i32
    return %arg0, %c0_i32, %c0_i32_0 : i32, i32, i32
  }
  func.func @transform_3(%arg0: i32, %arg1: memref<4xi32, #tpu.memory_space<smem>>) -> (i32, i32, i32) {
    %0 = arith.index_cast %arg0 : i32 to index
    %1 = memref.load %arg1[%0] : memref<4xi32, #tpu.memory_space<smem>>
    %c0_i32 = arith.constant 0 : i32
    %c0_i32_0 = arith.constant 0 : i32
    %c0_i32_1 = arith.constant 0 : i32
    return %1, %c0_i32, %c0_i32_0 : i32, i32, i32
  }
  func.func @transform_4(%arg0: i32, %arg1: memref<4xi32, #tpu.memory_space<smem>>) -> (i32, i32, i32) {
    %0 = arith.index_cast %arg0 : i32 to index
    %1 = memref.load %arg1[%0] : memref<4xi32, #tpu.memory_space<smem>>
    %c0_i32 = arith.constant 0 : i32
    %c0_i32_0 = arith.constant 0 : i32
    %c0_i32_1 = arith.constant 0 : i32
    return %1, %c0_i32, %c0_i32_0 : i32, i32, i32
  }
  func.func @transform_5(%arg0: i32, %arg1: memref<4xi32, #tpu.memory_space<smem>>) -> (i32, i32, i32) {
    %0 = arith.index_cast %arg0 : i32 to index
    %1 = memref.load %arg1[%0] : memref<4xi32, #tpu.memory_space<smem>>
    %c0_i32 = arith.constant 0 : i32
    %c0_i32_0 = arith.constant 0 : i32
    %c0_i32_1 = arith.constant 0 : i32
    return %1, %c0_i32, %c0_i32_0 : i32, i32, i32
  }
  func.func @transform_6(%arg0: i32, %arg1: memref<4xi32, #tpu.memory_space<smem>>) -> (i32, i32, i32) {
    %c0_i32 = arith.constant 0 : i32
    %c0_i32_0 = arith.constant 0 : i32
    %c0_i32_1 = arith.constant 0 : i32
    return %arg0, %c0_i32, %c0_i32_0 : i32, i32, i32
  }
  func.func @transform_7(%arg0: i32, %arg1: memref<4xi32, #tpu.memory_space<smem>>) -> (i32, i32, i32) {
    %c0_i32 = arith.constant 0 : i32
    %c0_i32_0 = arith.constant 0 : i32
    %c0_i32_1 = arith.constant 0 : i32
    return %arg0, %c0_i32, %c0_i32_0 : i32, i32, i32
  }
  func.func @transform_8(%arg0: i32, %arg1: memref<4xi32, #tpu.memory_space<smem>>) -> (i32, i32, i32, i32) {
    %c0_i32 = arith.constant 0 : i32
    %c0_i32_0 = arith.constant 0 : i32
    %c0_i32_1 = arith.constant 0 : i32
    %c0_i32_2 = arith.constant 0 : i32
    return %arg0, %c0_i32, %c0_i32_0, %c0_i32_1 : i32, i32, i32, i32
  }
  func.func @transform_9(%arg0: i32, %arg1: memref<4xi32, #tpu.memory_space<smem>>) -> (i32, i32, i32, i32) {
    %c0_i32 = arith.constant 0 : i32
    %c0_i32_0 = arith.constant 0 : i32
    %c0_i32_1 = arith.constant 0 : i32
    %c0_i32_2 = arith.constant 0 : i32
    return %arg0, %c0_i32, %c0_i32_0, %c0_i32_1 : i32, i32, i32, i32
  }
  func.func @transform_10(%arg0: i32, %arg1: memref<4xi32, #tpu.memory_space<smem>>) -> (i32, i32, i32) {
    %c0_i32 = arith.constant 0 : i32
    %c0_i32_0 = arith.constant 0 : i32
    %c0_i32_1 = arith.constant 0 : i32
    return %arg0, %c0_i32, %c0_i32_0 : i32, i32, i32
  }
  func.func @transform_11(%arg0: i32, %arg1: memref<4xi32, #tpu.memory_space<smem>>) -> (i32, i32, i32) {
    %c0_i32 = arith.constant 0 : i32
    %c0_i32_0 = arith.constant 0 : i32
    %c0_i32_1 = arith.constant 0 : i32
    return %arg0, %c0_i32, %c0_i32_0 : i32, i32, i32
  }
  func.func @transform_12(%arg0: i32, %arg1: memref<4xi32, #tpu.memory_space<smem>>) -> (i32, i32) {
    %c0_i32 = arith.constant 0 : i32
    %c0_i32_0 = arith.constant 0 : i32
    %c0_i32_1 = arith.constant 0 : i32
    return %c0_i32, %c0_i32_0 : i32, i32
  }
}

</mosaic_0001>

<llo_original>
// kernel: mixtral_sparse_moe_forward.1
$region0: #{mixtral_sparse_moe_forward.1}
  #allocation0 [shape = 'u32[]', space=smem, size = 0x4, offset = 0x4, fixed_abs, tag = 'smem constant byte address 0x4 - core index']
  #allocation1 [shape = 'u32[72,128]{1,0:T(1,128)}', space=vmem, size = 0x9000, scoped, tag = 'internal scratch']
  #allocation2 [shape = 's32[1]{0}', space=sflag, size = 0x4, scoped, tag = 'scoped memory for mixtral_sparse_moe_forward.1']
  #allocation3 [shape = 'u8[512]{0}', space=smem, size = 0x200, scoped, tag = 'prefetched SMEM operand 0']
  %s0 = inlined_call_operand.vmem [shape: s32[4], index: 0, kind: input, shape index: {}]
  %s1 = inlined_call_operand.vmem [shape: f32[128,32], index: 1, kind: input, shape index: {}]
  %s2 = inlined_call_operand.vmem [shape: f32[4,128,128], index: 2, kind: input, shape index: {}]
  %s3 = inlined_call_operand.vmem [shape: f32[4,128,128], index: 3, kind: input, shape index: {}]
  %s4 = inlined_call_operand.vmem [shape: bf16[12,360,128], index: 4, kind: input, shape index: {}]
  %s5 = inlined_call_operand.hbm [shape: bf16[12,2304,40], index: 5, kind: input, shape index: {}]
  %s6 = inlined_call_operand.vmem [shape: f32[12,128,144], index: 6, kind: input, shape index: {}]
  %s7 = inlined_call_operand.vmem [shape: f32[4,32,1024], index: 7, kind: input, shape index: {}]
  %s8 = inlined_call_operand.vmem [shape: f32[4,1024,32], index: 8, kind: input, shape index: {}]
  %s9 = inlined_call_operand.vmem [shape: f32[4,9,32,32], index: 9, kind: input, shape index: {}]
  %s10 = inlined_call_operand.vmem [shape: f32[4,16,32,32], index: 10, kind: input, shape index: {}]
  %s11 = inlined_call_operand.vmem [shape: f32[4,1,32], index: 11, kind: input, shape index: {}]
  %s12 = inlined_call_operand.vmem [shape: f32[4,1,32], index: 12, kind: input, shape index: {}]
  %s13 = inlined_call_operand.vmem [shape: f32[128,32], index: 13, kind: output, shape index: {}]
  %s14 = sld [smem:[#allocation0]]
  $region89: #{mixtral_sparse_moe_forward.1} parent=0
    _
  %s16 = ssub.s32 1, %s14
  %s17 = scalar_select 0, %s16, %s14
  %s19 = sshll.u32 %s0, 4
  %s20 = int_to_ptr.vmem [resolvable:$true] %s19
  %22 = dma.vmem_to_smem %s20, 16, [#allocation3], [#allocation2]
  %24 = dma.done [#allocation2], 16
  %25 = sfence
  $region1: #{mixtral_sparse_moe_forward.1} parent=0
    #allocation4 [shape = 'u8[1179648]{0}', space=vmem, size = 0x120000, scoped, tag = 'input window, operand 5']
    #allocation5 [shape = 's32[2]{0}', space=sflag, size = 0x8, scoped, tag = 'scoped memory for mixtral_sparse_moe_forward.1']
    %26 = vsyncpa [#allocation5], 0
    %s27 = scalar_lea.sflag [#allocation5], 1
    %28 = vsyncpa %s27, 0
    loop: start=0, step=1, limit=6
    $region2: #{mixtral_sparse_moe_forward.1} parent=1 // loop_pre_header
      _
    $region3: #{mixtral_sparse_moe_forward.1} parent=1 // loop_header
      %s30 = sphi 0, %s34
      %p31 = scmp.ge.s32.totalorder %s30, 6
      %s38 = sphi 0, %s38
      %s40 = sphi 0, %s38
      %s41 = sphi 0, %s40
      %s55 = sphi 0, %s41
      %s61 = sphi 0, %s63
      %s64 = sphi 0, %s61
      %s65 = sphi 0, %s64
      %s81 = sphi 0, %s65
      %s87 = sphi 0, %s89
      %s90 = sphi 0, %s87
      %s91 = sphi 0, %s90
      %s107 = sphi 0, %s91
      %s115 = sphi 0, %s117
      %s118 = sphi 0, %s115
      %s119 = sphi 0, %s118
      %s135 = sphi 0, %s119
      %s143 = sphi 0, %s145
      %s146 = sphi 0, %s143
      %s147 = sphi 0, %s146
      %s163 = sphi 0, %s147
      %s171 = sphi 0, %s173
      %s174 = sphi 0, %s171
      %s175 = sphi 0, %s174
      %s191 = sphi 0, %s175
      %s197 = sphi 0, %s199
      %s200 = sphi 0, %s197
      %s201 = sphi 0, %s200
      %s217 = sphi 0, %s201
      %s223 = sphi 0, %s225
      %s226 = sphi 0, %s223
      %s227 = sphi 0, %s226
      %s243 = sphi 0, %s227
      %s249 = sphi 0, %s251
      %s252 = sphi 0, %s249
      %s253 = sphi 0, %s252
      %s269 = sphi 0, %s253
      %s275 = sphi 0, %s277
      %s278 = sphi 0, %s275
      %s279 = sphi 0, %s278
      %s295 = sphi 0, %s279
      %s301 = sphi 0, %s303
      %s304 = sphi 0, %s301
      %s305 = sphi 0, %s304
      %s321 = sphi 0, %s305
      %s327 = sphi 0, %s329
      %s330 = sphi 0, %s327
      %s331 = sphi 0, %s330
      %s347 = sphi 0, %s331
      %s351 = sphi 0, %s351
      %s353 = sphi 0, %s351
      %s354 = sphi 0, %s353
      %s368 = sphi 0, %s354
    $region4: #{mixtral_sparse_moe_forward.1} parent=1 // loop_header_branch
      %33 = sbr.rel (%p31) target = $region8
    $region5: #{mixtral_sparse_moe_forward.1} parent=1 // loop_body
      %s35 = ssub.s32 %s30, 1
      %s36 = ssub.s32 %s30, 2
      %s37 = sadd.s32 %s30, 1
      %s39 = sadd.s32 %s38, 1
      %p42 = scmp.eq.s32.totalorder %s30, 3
      %p43 = scmp.ne.s32.totalorder %s38, %s40
      %p44 = scmp.eq.s32.totalorder %s30, 0
      %p45 = por %p43, %p44
      %p46 = scmp.ne.s32.totalorder %s38, %s40
      %p47 = scmp.eq.s32.totalorder %s35, 3
      %p48 = por %p46, %p47
      %p49 = scmp.ne.s32.totalorder %s40, %s41
      %p50 = scmp.eq.s32.totalorder %s35, 0
      %p51 = por %p49, %p50
      %p52 = scmp.ne.s32.totalorder %s40, %s41
      %p53 = scmp.eq.s32.totalorder %s36, 3
      %p54 = por %p52, %p53
      %p56 = scmp.ne.s32.totalorder %s41, %s55
      %p57 = scmp.eq.s32.totalorder %s36, 0
      %p58 = por %p56, %p57
      %s59 = ssub.s32 %s30, %s37
      %p60 = scmp.eq.s32.totalorder %s59, 0
      %s62 = sadd.s32 %s61, 1
      %s63 = scalar_select %p60, %s61, %s62
      %p66 = pneg %p60
      %p67 = scmp.eq.s32.totalorder %s30, 3
      %p68 = por %p66, %p67
      %p69 = scmp.ne.s32.totalorder %s61, %s64
      %p70 = scmp.eq.s32.totalorder %s30, 0
      %p71 = por %p69, %p70
      %p72 = scmp.ne.s32.totalorder %s61, %s64
      %p73 = scmp.eq.s32.totalorder %s35, 3
      %p74 = por %p72, %p73
      %p75 = scmp.ne.s32.totalorder %s64, %s65
      %p76 = scmp.eq.s32.totalorder %s35, 0
      %p77 = por %p75, %p76
      %p78 = scmp.ne.s32.totalorder %s64, %s65
      %p79 = scmp.eq.s32.totalorder %s36, 3
      %p80 = por %p78, %p79
      %p82 = scmp.ne.s32.totalorder %s65, %s81
      %p83 = scmp.eq.s32.totalorder %s36, 0
      %p84 = por %p82, %p83
      %s85 = ssub.s32 %s30, %s37
      %p86 = scmp.eq.s32.totalorder %s85, 0
      %s88 = sadd.s32 %s87, 1
      %s89 = scalar_select %p86, %s87, %s88
      %p92 = pneg %p86
      %p93 = scmp.eq.s32.totalorder %s30, 3
      %p94 = por %p92, %p93
      %p95 = scmp.ne.s32.totalorder %s87, %s90
      %p96 = scmp.eq.s32.totalorder %s30, 0
      %p97 = por %p95, %p96
      %p98 = scmp.ne.s32.totalorder %s87, %s90
      %p99 = scmp.eq.s32.totalorder %s35, 3
      %p100 = por %p98, %p99
      %p101 = scmp.ne.s32.totalorder %s90, %s91
      %p102 = scmp.eq.s32.totalorder %s35, 0
      %p103 = por %p101, %p102
      %p104 = scmp.ne.s32.totalorder %s90, %s91
      %p105 = scmp.eq.s32.totalorder %s36, 3
      %p106 = por %p104, %p105
      %p108 = scmp.ne.s32.totalorder %s91, %s107
      %p109 = scmp.eq.s32.totalorder %s36, 0
      %p110 = por %p108, %p109
      %s111 = sld [smem:[#allocation3 + %s30]]
      %s112 = sld [smem:[#allocation3 + %s37]]
      %s113 = ssub.s32 %s111, %s112
      %p114 = scmp.eq.s32.totalorder %s113, 0
      %s116 = sadd.s32 %s115, 1
      %s117 = scalar_select %p114, %s115, %s116
      %p120 = pneg %p114
      %p121 = scmp.eq.s32.totalorder %s30, 3
      %p122 = por %p120, %p121
      %p123 = scmp.ne.s32.totalorder %s115, %s118
      %p124 = scmp.eq.s32.totalorder %s30, 0
      %p125 = por %p123, %p124
      %p126 = scmp.ne.s32.totalorder %s115, %s118
      %p127 = scmp.eq.s32.totalorder %s35, 3
      %p128 = por %p126, %p127
      %p129 = scmp.ne.s32.totalorder %s118, %s119
      %p130 = scmp.eq.s32.totalorder %s35, 0
      %p131 = por %p129, %p130
      %p132 = scmp.ne.s32.totalorder %s118, %s119
      %p133 = scmp.eq.s32.totalorder %s36, 3
      %p134 = por %p132, %p133
      %p136 = scmp.ne.s32.totalorder %s119, %s135
      %p137 = scmp.eq.s32.totalorder %s36, 0
      %p138 = por %p136, %p137
      %s139 = sld [smem:[#allocation3 + %s30]]
      %s140 = sld [smem:[#allocation3 + %s37]]
      %s141 = ssub.s32 %s139, %s140
      %p142 = scmp.eq.s32.totalorder %s141, 0
      %s144 = sadd.s32 %s143, 1
      %s145 = scalar_select %p142, %s143, %s144
      %p148 = pneg %p142
      %p149 = scmp.eq.s32.totalorder %s30, 3
      %p150 = por %p148, %p149
      %p151 = scmp.ne.s32.totalorder %s143, %s146
      %p152 = scmp.eq.s32.totalorder %s30, 0
      %p153 = por %p151, %p152
      %p154 = scmp.ne.s32.totalorder %s143, %s146
      %p155 = scmp.eq.s32.totalorder %s35, 3
      %p156 = por %p154, %p155
      %p157 = scmp.ne.s32.totalorder %s146, %s147
      %p158 = scmp.eq.s32.totalorder %s35, 0
      %p159 = por %p157, %p158
      %p160 = scmp.ne.s32.totalorder %s146, %s147
      %p161 = scmp.eq.s32.totalorder %s36, 3
      %p162 = por %p160, %p161
      %p164 = scmp.ne.s32.totalorder %s147, %s163
      %p165 = scmp.eq.s32.totalorder %s36, 0
      %p166 = por %p164, %p165
      %s167 = sld [smem:[#allocation3 + %s30]]
      %s168 = sld [smem:[#allocation3 + %s37]]
      %s169 = ssub.s32 %s167, %s168
      %p170 = scmp.eq.s32.totalorder %s169, 0
      %s172 = sadd.s32 %s171, 1
      %s173 = scalar_select %p170, %s171, %s172
      %p176 = pneg %p170
      %p177 = scmp.eq.s32.totalorder %s30, 3
      %p178 = por %p176, %p177
      %p179 = scmp.ne.s32.totalorder %s171, %s174
      %p180 = scmp.eq.s32.totalorder %s30, 0
      %p181 = por %p179, %p180
      %p182 = scmp.ne.s32.totalorder %s171, %s174
      %p183 = scmp.eq.s32.totalorder %s35, 3
      %p184 = por %p182, %p183
      %p185 = scmp.ne.s32.totalorder %s174, %s175
      %p186 = scmp.eq.s32.totalorder %s35, 0
      %p187 = por %p185, %p186
      %p188 = scmp.ne.s32.totalorder %s174, %s175
      %p189 = scmp.eq.s32.totalorder %s36, 3
      %p190 = por %p188, %p189
      %p192 = scmp.ne.s32.totalorder %s175, %s191
      %p193 = scmp.eq.s32.totalorder %s36, 0
      %p194 = por %p192, %p193
      %s195 = ssub.s32 %s30, %s37
      %p196 = scmp.eq.s32.totalorder %s195, 0
      %s198 = sadd.s32 %s197, 1
      %s199 = scalar_select %p196, %s197, %s198
      %p202 = pneg %p196
      %p203 = scmp.eq.s32.totalorder %s30, 3
      %p204 = por %p202, %p203
      %p205 = scmp.ne.s32.totalorder %s197, %s200
      %p206 = scmp.eq.s32.totalorder %s30, 0
      %p207 = por %p205, %p206
      %p208 = scmp.ne.s32.totalorder %s197, %s200
      %p209 = scmp.eq.s32.totalorder %s35, 3
      %p210 = por %p208, %p209
      %p211 = scmp.ne.s32.totalorder %s200, %s201
      %p212 = scmp.eq.s32.totalorder %s35, 0
      %p213 = por %p211, %p212
      %p214 = scmp.ne.s32.totalorder %s200, %s201
      %p215 = scmp.eq.s32.totalorder %s36, 3
      %p216 = por %p214, %p215
      %p218 = scmp.ne.s32.totalorder %s201, %s217
      %p219 = scmp.eq.s32.totalorder %s36, 0
      %p220 = por %p218, %p219
      %s221 = ssub.s32 %s30, %s37
      %p222 = scmp.eq.s32.totalorder %s221, 0
      %s224 = sadd.s32 %s223, 1
      %s225 = scalar_select %p222, %s223, %s224
      %p228 = pneg %p222
      %p229 = scmp.eq.s32.totalorder %s30, 3
      %p230 = por %p228, %p229
      %p231 = scmp.ne.s32.totalorder %s223, %s226
      %p232 = scmp.eq.s32.totalorder %s30, 0
      %p233 = por %p231, %p232
      %p234 = scmp.ne.s32.totalorder %s223, %s226
      %p235 = scmp.eq.s32.totalorder %s35, 3
      %p236 = por %p234, %p235
      %p237 = scmp.ne.s32.totalorder %s226, %s227
      %p238 = scmp.eq.s32.totalorder %s35, 0
      %p239 = por %p237, %p238
      %p240 = scmp.ne.s32.totalorder %s226, %s227
      %p241 = scmp.eq.s32.totalorder %s36, 3
      %p242 = por %p240, %p241
      %p244 = scmp.ne.s32.totalorder %s227, %s243
      %p245 = scmp.eq.s32.totalorder %s36, 0
      %p246 = por %p244, %p245
      %s247 = ssub.s32 %s30, %s37
      %p248 = scmp.eq.s32.totalorder %s247, 0
      %s250 = sadd.s32 %s249, 1
      %s251 = scalar_select %p248, %s249, %s250
      %p254 = pneg %p248
      %p255 = scmp.eq.s32.totalorder %s30, 3
      %p256 = por %p254, %p255
      %p257 = scmp.ne.s32.totalorder %s249, %s252
      %p258 = scmp.eq.s32.totalorder %s30, 0
      %p259 = por %p257, %p258
      %p260 = scmp.ne.s32.totalorder %s249, %s252
      %p261 = scmp.eq.s32.totalorder %s35, 3
      %p262 = por %p260, %p261
      %p263 = scmp.ne.s32.totalorder %s252, %s253
      %p264 = scmp.eq.s32.totalorder %s35, 0
      %p265 = por %p263, %p264
      %p266 = scmp.ne.s32.totalorder %s252, %s253
      %p267 = scmp.eq.s32.totalorder %s36, 3
      %p268 = por %p266, %p267
      %p270 = scmp.ne.s32.totalorder %s253, %s269
      %p271 = scmp.eq.s32.totalorder %s36, 0
      %p272 = por %p270, %p271
      %s273 = ssub.s32 %s30, %s37
      %p274 = scmp.eq.s32.totalorder %s273, 0
      %s276 = sadd.s32 %s275, 1
      %s277 = scalar_select %p274, %s275, %s276
      %p280 = pneg %p274
      %p281 = scmp.eq.s32.totalorder %s30, 3
      %p282 = por %p280, %p281
      %p283 = scmp.ne.s32.totalorder %s275, %s278
      %p284 = scmp.eq.s32.totalorder %s30, 0
      %p285 = por %p283, %p284
      %p286 = scmp.ne.s32.totalorder %s275, %s278
      %p287 = scmp.eq.s32.totalorder %s35, 3
      %p288 = por %p286, %p287
      %p289 = scmp.ne.s32.totalorder %s278, %s279
      %p290 = scmp.eq.s32.totalorder %s35, 0
      %p291 = por %p289, %p290
      %p292 = scmp.ne.s32.totalorder %s278, %s279
      %p293 = scmp.eq.s32.totalorder %s36, 3
      %p294 = por %p292, %p293
      %p296 = scmp.ne.s32.totalorder %s279, %s295
      %p297 = scmp.eq.s32.totalorder %s36, 0
      %p298 = por %p296, %p297
      %s299 = ssub.s32 %s30, %s37
      %p300 = scmp.eq.s32.totalorder %s299, 0
      %s302 = sadd.s32 %s301, 1
      %s303 = scalar_select %p300, %s301, %s302
      %p306 = pneg %p300
      %p307 = scmp.eq.s32.totalorder %s30, 3
      %p308 = por %p306, %p307
      %p309 = scmp.ne.s32.totalorder %s301, %s304
      %p310 = scmp.eq.s32.totalorder %s30, 0
      %p311 = por %p309, %p310
      %p312 = scmp.ne.s32.totalorder %s301, %s304
      %p313 = scmp.eq.s32.totalorder %s35, 3
      %p314 = por %p312, %p313
      %p315 = scmp.ne.s32.totalorder %s304, %s305
      %p316 = scmp.eq.s32.totalorder %s35, 0
      %p317 = por %p315, %p316
      %p318 = scmp.ne.s32.totalorder %s304, %s305
      %p319 = scmp.eq.s32.totalorder %s36, 3
      %p320 = por %p318, %p319
      %p322 = scmp.ne.s32.totalorder %s305, %s321
      %p323 = scmp.eq.s32.totalorder %s36, 0
      %p324 = por %p322, %p323
      %s325 = ssub.s32 %s30, %s37
      %p326 = scmp.eq.s32.totalorder %s325, 0
      %s328 = sadd.s32 %s327, 1
      %s329 = scalar_select %p326, %s327, %s328
      %p332 = pneg %p326
      %p333 = scmp.eq.s32.totalorder %s30, 3
      %p334 = por %p332, %p333
      %p335 = scmp.ne.s32.totalorder %s327, %s330
      %p336 = scmp.eq.s32.totalorder %s30, 0
      %p337 = por %p335, %p336
      %p338 = scmp.ne.s32.totalorder %s327, %s330
      %p339 = scmp.eq.s32.totalorder %s35, 3
      %p340 = por %p338, %p339
      %p341 = scmp.ne.s32.totalorder %s330, %s331
      %p342 = scmp.eq.s32.totalorder %s35, 0
      %p343 = por %p341, %p342
      %p344 = scmp.ne.s32.totalorder %s330, %s331
      %p345 = scmp.eq.s32.totalorder %s36, 3
      %p346 = por %p344, %p345
      %p348 = scmp.ne.s32.totalorder %s331, %s347
      %p349 = scmp.eq.s32.totalorder %s36, 0
      %p350 = por %p348, %p349
      %s352 = sadd.s32 %s351, 1
      %p355 = scmp.eq.s32.totalorder %s30, 3
      %p356 = scmp.ne.s32.totalorder %s351, %s353
      %p357 = scmp.eq.s32.totalorder %s30, 0
      %p358 = por %p356, %p357
      %p359 = scmp.ne.s32.totalorder %s351, %s353
      %p360 = scmp.eq.s32.totalorder %s35, 3
      %p361 = por %p359, %p360
      %p362 = scmp.ne.s32.totalorder %s353, %s354
      %p363 = scmp.eq.s32.totalorder %s35, 0
      %p364 = por %p362, %p363
      %p365 = scmp.ne.s32.totalorder %s353, %s354
      %p366 = scmp.eq.s32.totalorder %s36, 3
      %p367 = por %p365, %p366
      %p369 = scmp.ne.s32.totalorder %s354, %s368
      %p370 = scmp.eq.s32.totalorder %s36, 0
      %p371 = por %p369, %p370
      %p372 = scmp.le.s32.totalorder 1, %s30
      %p373 = scmp.lt.s32.totalorder %s30, 5
      %p374 = pnand %p372, %p373
      %p375 = pneg %p374
      // Predicated region
      $region9: #{mixtral_sparse_moe_forward.1} parent=5 // pred_check
        _
      $region10: #{mixtral_sparse_moe_forward.1} parent=5 // pred_check_branch
        %377 = sbr.rel (%p374) target = $region12
      $region11: #{mixtral_sparse_moe_forward.1} parent=5 // pred_region
        %s378 = ssub.s32 %s30, 1
        // Predicated region
        $region13: #{mixtral_sparse_moe_forward.1} parent=11 // pred_check
          %p379 = pneg %p51
        $region14: #{mixtral_sparse_moe_forward.1} parent=11 // pred_check_branch
          %381 = sbr.rel (%p379) target = $region16
        $region15: #{mixtral_sparse_moe_forward.1} parent=11 // pred_region
          _
        $region16: #{mixtral_sparse_moe_forward.1} parent=11 // pred_fallthru
          _
      $region12: #{mixtral_sparse_moe_forward.1} parent=5 // pred_fallthru
        _
      %p382 = scmp.lt.s32.totalorder %s30, 4
      // Predicated region
      $region17: #{mixtral_sparse_moe_forward.1} parent=5 // pred_check
        %p383 = pneg %p382
      $region18: #{mixtral_sparse_moe_forward.1} parent=5 // pred_check_branch
        %385 = sbr.rel (%p383) target = $region20
      $region19: #{mixtral_sparse_moe_forward.1} parent=5 // pred_region
        // Predicated region
        $region21: #{mixtral_sparse_moe_forward.1} parent=19 // pred_check
          %p386 = pneg %p71
        $region22: #{mixtral_sparse_moe_forward.1} parent=19 // pred_check_branch
          %388 = sbr.rel (%p386) target = $region24
        $region23: #{mixtral_sparse_moe_forward.1} parent=19 // pred_region
          %p389 = scmp.lt.s32.totalorder %s30, 3
          %s390 = scalar_select %p389, %s30, 3
          %s391 = smul.addr %s390, 16
          %s392 = smul.addr %s391, 8
          %s393 = scalar_lea.vmem %s2, %s392
        $region24: #{mixtral_sparse_moe_forward.1} parent=19 // pred_fallthru
          _
        // Predicated region
        $region25: #{mixtral_sparse_moe_forward.1} parent=19 // pred_check
          %p394 = pneg %p97
        $region26: #{mixtral_sparse_moe_forward.1} parent=19 // pred_check_branch
          %396 = sbr.rel (%p394) target = $region28
        $region27: #{mixtral_sparse_moe_forward.1} parent=19 // pred_region
          %p397 = scmp.lt.s32.totalorder %s30, 3
          %s398 = scalar_select %p397, %s30, 3
          %s399 = smul.addr %s398, 16
          %s400 = smul.addr %s399, 8
          %s401 = scalar_lea.vmem %s3, %s400
        $region28: #{mixtral_sparse_moe_forward.1} parent=19 // pred_fallthru
          _
        // Predicated region
        $region29: #{mixtral_sparse_moe_forward.1} parent=19 // pred_check
          %p402 = pneg %p125
        $region30: #{mixtral_sparse_moe_forward.1} parent=19 // pred_check_branch
          %404 = sbr.rel (%p402) target = $region32
        $region31: #{mixtral_sparse_moe_forward.1} parent=19 // pred_region
          %s405 = sld [smem:[#allocation3 + %s30]]
          %p406 = scmp.lt.s32.totalorder %s405, 11
          %s407 = scalar_select %p406, %s405, 11
          %s408 = smul.addr %s407, 45
          %s409 = smul.addr %s408, 4
          %s410 = scalar_lea.vmem %s4, %s409
          %s411 = sld [smem:[#allocation3 + %s30]]
        $region32: #{mixtral_sparse_moe_forward.1} parent=19 // pred_fallthru
          _
        // Predicated region
        $region33: #{mixtral_sparse_moe_forward.1} parent=19 // pred_check
          %p412 = pneg %p153
        $region34: #{mixtral_sparse_moe_forward.1} parent=19 // pred_check_branch
          %414 = sbr.rel (%p412) target = $region36
        $region35: #{mixtral_sparse_moe_forward.1} parent=19 // pred_region
          %s415 = sand.u32 %s143, 1
          %s416 = scalar_lea.sflag [#allocation5], %s415
          %s417 = sand.u32 %s143, 1
          %s418 = smul.addr %s417, 1152
          %s419 = scalar_lea.vmem [#allocation4], %s418
          %s420 = sld [smem:[#allocation3 + %s30]]
          %422 = vsyncadd %s416, 0
          %s423 = smul.addr %s420, 288
          %s424 = smul.addr %s423, 4
          %s425 = scalar_lea.hbm %s5, %s424
          %s426 = sshll.u32 %s425, 4
          %s427 = int_to_ptr.hbm [resolvable:$true] %s426
          %s428 = sshll.u32 %s419, 4
          %s429 = int_to_ptr.vmem [resolvable:$true] %s428
          %434 = dma.hbm_to_vmem [thread:$0]  %s427, 18432, %s429, %s416, 64, 64, 4
        $region36: #{mixtral_sparse_moe_forward.1} parent=19 // pred_fallthru
          _
        // Predicated region
        $region37: #{mixtral_sparse_moe_forward.1} parent=19 // pred_check
          %p435 = pneg %p181
        $region38: #{mixtral_sparse_moe_forward.1} parent=19 // pred_check_branch
          %437 = sbr.rel (%p435) target = $region40
        $region39: #{mixtral_sparse_moe_forward.1} parent=19 // pred_region
          %s438 = sld [smem:[#allocation3 + %s30]]
          %p439 = scmp.lt.s32.totalorder %s438, 11
          %s440 = scalar_select %p439, %s438, 11
          %s441 = smul.addr %s440, 32
          %s442 = smul.addr %s441, 8
          %s443 = scalar_lea.vmem %s6, %s442
          %s444 = sld [smem:[#allocation3 + %s30]]
        $region40: #{mixtral_sparse_moe_forward.1} parent=19 // pred_fallthru
          _
        // Predicated region
        $region41: #{mixtral_sparse_moe_forward.1} parent=19 // pred_check
          %p445 = pneg %p207
        $region42: #{mixtral_sparse_moe_forward.1} parent=19 // pred_check_branch
          %447 = sbr.rel (%p445) target = $region44
        $region43: #{mixtral_sparse_moe_forward.1} parent=19 // pred_region
          %p448 = scmp.lt.s32.totalorder %s30, 3
          %s449 = scalar_select %p448, %s30, 3
          %s450 = smul.addr %s449, 32
          %s451 = smul.addr %s450, 8
          %s452 = scalar_lea.vmem %s7, %s451
        $region44: #{mixtral_sparse_moe_forward.1} parent=19 // pred_fallthru
          _
        // Predicated region
        $region45: #{mixtral_sparse_moe_forward.1} parent=19 // pred_check
          %p453 = pneg %p233
        $region46: #{mixtral_sparse_moe_forward.1} parent=19 // pred_check_branch
          %455 = sbr.rel (%p453) target = $region48
        $region47: #{mixtral_sparse_moe_forward.1} parent=19 // pred_region
          %p456 = scmp.lt.s32.totalorder %s30, 3
          %s457 = scalar_select %p456, %s30, 3
          %s458 = smul.addr %s457, 128
          %s459 = smul.addr %s458, 8
          %s460 = scalar_lea.vmem %s8, %s459
        $region48: #{mixtral_sparse_moe_forward.1} parent=19 // pred_fallthru
          _
        // Predicated region
        $region49: #{mixtral_sparse_moe_forward.1} parent=19 // pred_check
          %p461 = pneg %p259
        $region50: #{mixtral_sparse_moe_forward.1} parent=19 // pred_check_branch
          %463 = sbr.rel (%p461) target = $region52
        $region51: #{mixtral_sparse_moe_forward.1} parent=19 // pred_region
          %p464 = scmp.lt.s32.totalorder %s30, 3
          %s465 = scalar_select %p464, %s30, 3
          %s466 = smul.addr %s465, 36
          %s467 = smul.addr %s466, 8
          %s468 = scalar_lea.vmem %s9, %s467
        $region52: #{mixtral_sparse_moe_forward.1} parent=19 // pred_fallthru
          _
        // Predicated region
        $region53: #{mixtral_sparse_moe_forward.1} parent=19 // pred_check
          %p469 = pneg %p285
        $region54: #{mixtral_sparse_moe_forward.1} parent=19 // pred_check_branch
          %471 = sbr.rel (%p469) target = $region56
        $region55: #{mixtral_sparse_moe_forward.1} parent=19 // pred_region
          %p472 = scmp.lt.s32.totalorder %s30, 3
          %s473 = scalar_select %p472, %s30, 3
          %s474 = smul.addr %s473, 64
          %s475 = smul.addr %s474, 8
          %s476 = scalar_lea.vmem %s10, %s475
        $region56: #{mixtral_sparse_moe_forward.1} parent=19 // pred_fallthru
          _
        // Predicated region
        $region57: #{mixtral_sparse_moe_forward.1} parent=19 // pred_check
          %p477 = pneg %p311
        $region58: #{mixtral_sparse_moe_forward.1} parent=19 // pred_check_branch
          %479 = sbr.rel (%p477) target = $region60
        $region59: #{mixtral_sparse_moe_forward.1} parent=19 // pred_region
          %p480 = scmp.lt.s32.totalorder %s30, 3
          %s481 = scalar_select %p480, %s30, 3
          %s482 = scalar_lea.vmem %s11, %s481
        $region60: #{mixtral_sparse_moe_forward.1} parent=19 // pred_fallthru
          _
        // Predicated region
        $region61: #{mixtral_sparse_moe_forward.1} parent=19 // pred_check
          %p483 = pneg %p337
        $region62: #{mixtral_sparse_moe_forward.1} parent=19 // pred_check_branch
          %485 = sbr.rel (%p483) target = $region64
        $region63: #{mixtral_sparse_moe_forward.1} parent=19 // pred_region
          %p486 = scmp.lt.s32.totalorder %s30, 3
          %s487 = scalar_select %p486, %s30, 3
          %s488 = scalar_lea.vmem %s12, %s487
        $region64: #{mixtral_sparse_moe_forward.1} parent=19 // pred_fallthru
          _
      $region20: #{mixtral_sparse_moe_forward.1} parent=5 // pred_fallthru
        _
      %p489 = scmp.le.s32.totalorder 1, %s30
      %p490 = scmp.lt.s32.totalorder %s30, 5
      %p491 = pnand %p489, %p490
      %p492 = pneg %p491
      // Predicated region
      $region65: #{mixtral_sparse_moe_forward.1} parent=5 // pred_check
        _
      $region66: #{mixtral_sparse_moe_forward.1} parent=5 // pred_check_branch
        %494 = sbr.rel (%p491) target = $region68
      $region67: #{mixtral_sparse_moe_forward.1} parent=5 // pred_region
        %s495 = ssub.s32 %s30, 1
        %s496 = sand.u32 %s146, 1
        %s497 = scalar_lea.sflag [#allocation5], %s496
        %s498 = sand.u32 %s146, 1
        %s499 = smul.addr %s498, 1152
        %s500 = scalar_lea.vmem [#allocation4], %s499
        // Predicated region
        $region69: #{mixtral_sparse_moe_forward.1} parent=67 // pred_check
          %p501 = pneg %p159
        $region70: #{mixtral_sparse_moe_forward.1} parent=67 // pred_check_branch
          %503 = sbr.rel (%p501) target = $region72
        $region71: #{mixtral_sparse_moe_forward.1} parent=67 // pred_region
          %505 = dma.done %s497, 18432
        $region72: #{mixtral_sparse_moe_forward.1} parent=67 // pred_fallthru
          _
        %p506 = pneg %p51
        %p507 = pneg %p48
        %p508 = scmp.lt.s32.totalorder %s35, 3
        %s509 = scalar_select %p508, %s35, 3
        %s510 = smul.addr %s509, 16
        %s511 = smul.addr %s510, 8
        %s512 = scalar_lea.vmem %s2, %s511
        %p513 = pneg %p77
        %p514 = pneg %p74
        %p515 = scmp.lt.s32.totalorder %s35, 3
        %s516 = scalar_select %p515, %s35, 3
        %s517 = smul.addr %s516, 16
        %s518 = smul.addr %s517, 8
        %s519 = scalar_lea.vmem %s3, %s518
        %p520 = pneg %p103
        %p521 = pneg %p100
        %s522 = sld [smem:[#allocation3 + %s35]]
        %p523 = scmp.lt.s32.totalorder %s522, 11
        %s524 = scalar_select %p523, %s522, 11
        %s525 = smul.addr %s524, 45
        %s526 = smul.addr %s525, 4
        %s527 = scalar_lea.vmem %s4, %s526
        %p528 = pneg %p131
        %p529 = pneg %p128
        %s530 = sand.u32 %s146, 1
        %s531 = scalar_lea.sflag [#allocation5], %s530
        %s532 = sand.u32 %s146, 1
        %s533 = smul.addr %s532, 1152
        %s534 = scalar_lea.vmem [#allocation4], %s533
        %p535 = pneg %p159
        %p536 = pneg %p156
        %s537 = sld [smem:[#allocation3 + %s35]]
        %p538 = scmp.lt.s32.totalorder %s537, 11
        %s539 = scalar_select %p538, %s537, 11
        %s540 = smul.addr %s539, 32
        %s541 = smul.addr %s540, 8
        %s542 = scalar_lea.vmem %s6, %s541
        %p543 = pneg %p187
        %p544 = pneg %p184
        %p545 = scmp.lt.s32.totalorder %s35, 3
        %s546 = scalar_select %p545, %s35, 3
        %s547 = smul.addr %s546, 32
        %s548 = smul.addr %s547, 8
        %s549 = scalar_lea.vmem %s7, %s548
        %p550 = pneg %p213
        %p551 = pneg %p210
        %p552 = scmp.lt.s32.totalorder %s35, 3
        %s553 = scalar_select %p552, %s35, 3
        %s554 = smul.addr %s553, 128
        %s555 = smul.addr %s554, 8
        %s556 = scalar_lea.vmem %s8, %s555
        %p557 = pneg %p239
        %p558 = pneg %p236
        %p559 = scmp.lt.s32.totalorder %s35, 3
        %s560 = scalar_select %p559, %s35, 3
        %s561 = smul.addr %s560, 36
        %s562 = smul.addr %s561, 8
        %s563 = scalar_lea.vmem %s9, %s562
        %p564 = pneg %p265
        %p565 = pneg %p262
        %p566 = scmp.lt.s32.totalorder %s35, 3
        %s567 = scalar_select %p566, %s35, 3
        %s568 = smul.addr %s567, 64
        %s569 = smul.addr %s568, 8
        %s570 = scalar_lea.vmem %s10, %s569
        %p571 = pneg %p291
        %p572 = pneg %p288
        %p573 = scmp.lt.s32.totalorder %s35, 3
        %s574 = scalar_select %p573, %s35, 3
        %s575 = scalar_lea.vmem %s11, %s574
        %p576 = pneg %p317
        %p577 = pneg %p314
        %p578 = scmp.lt.s32.totalorder %s35, 3
        %s579 = scalar_select %p578, %s35, 3
        %s580 = scalar_lea.vmem %s12, %s579
        %p581 = pneg %p343
        %p582 = pneg %p340
        %p583 = pneg %p364
        %p584 = pneg %p361
        %p585 = scmp.lt.s32.totalorder %s35, 3
        %s586 = scalar_select %p585, %s35, 3
        %s587 = smul.addr %s586, 16
        %s588 = smul.addr %s587, 8
        %s589 = scalar_lea.vmem %s2, %s588
        %p590 = scmp.lt.s32.totalorder %s35, 3
        %s591 = scalar_select %p590, %s35, 3
        %s592 = smul.addr %s591, 16
        %s593 = smul.addr %s592, 8
        %s594 = scalar_lea.vmem %s3, %s593
        %s595 = sld [smem:[#allocation3 + %s35]]
        %p596 = scmp.lt.s32.totalorder %s595, 11
        %s597 = scalar_select %p596, %s595, 11
        %s598 = smul.addr %s597, 45
        %s599 = smul.addr %s598, 4
        %s600 = scalar_lea.vmem %s4, %s599
        %s601 = sld [smem:[#allocation3 + %s35]]
        %s602 = sld [smem:[#allocation3 + %s35]]
        %s603 = sld [smem:[#allocation3 + %s35]]
        %p604 = scmp.lt.s32.totalorder %s603, 11
        %s605 = scalar_select %p604, %s603, 11
        %s606 = smul.addr %s605, 32
        %s607 = smul.addr %s606, 8
        %s608 = scalar_lea.vmem %s6, %s607
        %s609 = sld [smem:[#allocation3 + %s35]]
        %p610 = scmp.lt.s32.totalorder %s35, 3
        %s611 = scalar_select %p610, %s35, 3
        %s612 = smul.addr %s611, 32
        %s613 = smul.addr %s612, 8
        %s614 = scalar_lea.vmem %s7, %s613
        %p615 = scmp.lt.s32.totalorder %s35, 3
        %s616 = scalar_select %p615, %s35, 3
        %s617 = smul.addr %s616, 128
        %s618 = smul.addr %s617, 8
        %s619 = scalar_lea.vmem %s8, %s618
        %p620 = scmp.lt.s32.totalorder %s35, 3
        %s621 = scalar_select %p620, %s35, 3
        %s622 = smul.addr %s621, 36
        %s623 = smul.addr %s622, 8
        %s624 = scalar_lea.vmem %s9, %s623
        %p625 = scmp.lt.s32.totalorder %s35, 3
        %s626 = scalar_select %p625, %s35, 3
        %s627 = smul.addr %s626, 64
        %s628 = smul.addr %s627, 8
        %s629 = scalar_lea.vmem %s10, %s628
        %p630 = scmp.lt.s32.totalorder %s35, 3
        %s631 = scalar_select %p630, %s35, 3
        %s632 = scalar_lea.vmem %s11, %s631
        %p633 = scmp.lt.s32.totalorder %s35, 3
        %s634 = scalar_select %p633, %s35, 3
        %s635 = scalar_lea.vmem %s12, %s634
        %p636 = scmp.eq.s32.totalorder %s35, 0
        // Predicated region
        $region73: #{mixtral_sparse_moe_forward.1} parent=67 // pred_check
          %p637 = pneg %p636
        $region74: #{mixtral_sparse_moe_forward.1} parent=67 // pred_check_branch
          %639 = sbr.rel (%p637) target = $region76
        $region75: #{mixtral_sparse_moe_forward.1} parent=67 // pred_region
          %vm640 = vcmask 261120
          %641 = vst.msk [vmem:[%s13] sm:$0xff] %vm640, 0.0
          %642 = vst.msk [vmem:[%s13 + $0x8] sm:$0xff] %vm640, 0.0
          %643 = vst.msk [vmem:[%s13 + $0x10] sm:$0xff] %vm640, 0.0
          %644 = vst.msk [vmem:[%s13 + $0x18] sm:$0xff] %vm640, 0.0
          %645 = vst.msk [vmem:[%s13 + $0x20] sm:$0xff] %vm640, 0.0
          %646 = vst.msk [vmem:[%s13 + $0x28] sm:$0xff] %vm640, 0.0
          %647 = vst.msk [vmem:[%s13 + $0x30] sm:$0xff] %vm640, 0.0
          %648 = vst.msk [vmem:[%s13 + $0x38] sm:$0xff] %vm640, 0.0
          %649 = vst.msk [vmem:[%s13 + $0x40] sm:$0xff] %vm640, 0.0
          %650 = vst.msk [vmem:[%s13 + $0x48] sm:$0xff] %vm640, 0.0
          %651 = vst.msk [vmem:[%s13 + $0x50] sm:$0xff] %vm640, 0.0
          %652 = vst.msk [vmem:[%s13 + $0x58] sm:$0xff] %vm640, 0.0
          %653 = vst.msk [vmem:[%s13 + $0x60] sm:$0xff] %vm640, 0.0
          %654 = vst.msk [vmem:[%s13 + $0x68] sm:$0xff] %vm640, 0.0
          %655 = vst.msk [vmem:[%s13 + $0x70] sm:$0xff] %vm640, 0.0
          %656 = vst.msk [vmem:[%s13 + $0x78] sm:$0xff] %vm640, 0.0
        $region76: #{mixtral_sparse_moe_forward.1} parent=67 // pred_fallthru
          _
        %s657 = sld [smem:[#allocation3 + %s35]]
        %s658 = smul.u32 %s657, %s657
        %p659 = scmp.gt.s32.totalorder %s658, 1
        %s660 = scalar_select %p659, %s658, 1
        %s661 = scvt.s32.f32 %s660
        %v662 = vstv %s661
        %v663 = vrcp.pop %v662
        %v664 = vmul.f32 %v662, %v663
        %v665 = vsub.f32 1.0, %v664
        %v666 = vmul.f32 %v663, %v665
        %v667 = vadd.f32 %v663, %v666
        %vm668 = vweird.f32 %v662
        %vm669 = vweird.f32 %v663
        %vm670 = vmor %vm668, %vm669
        %v671 = vsel %vm670, %v663, %v667
        %v672 = vand.u32 2147483647, %v662
        %vm673 = vcmp.eq.f32.partialorder %v672, 8.507059e+37
        %v674 = vand.u32 %v662, 2147483648
        %v675 = vor.u32 1.1754944e-38, %v674
        %v676 = vsel %vm673, %v675, %v671
        %s677 = vtos %v676
        %v678 = vld [vmem:[%s1] sm:$0xff]
        %v679 = vld [vmem:[%s1 + $0x8] sm:$0xff]
        %v680 = vld [vmem:[%s1 + $0x10] sm:$0xff]
        %v681 = vld [vmem:[%s1 + $0x18] sm:$0xff]
        %v682 = vld [vmem:[%s1 + $0x20] sm:$0xff]
        %v683 = vld [vmem:[%s1 + $0x28] sm:$0xff]
        %v684 = vld [vmem:[%s1 + $0x30] sm:$0xff]
        %v685 = vld [vmem:[%s1 + $0x38] sm:$0xff]
        %v686 = vld [vmem:[%s1 + $0x40] sm:$0xff]
        %v687 = vld [vmem:[%s1 + $0x48] sm:$0xff]
        %v688 = vld [vmem:[%s1 + $0x50] sm:$0xff]
        %v689 = vld [vmem:[%s1 + $0x58] sm:$0xff]
        %v690 = vld [vmem:[%s1 + $0x60] sm:$0xff]
        %v691 = vld [vmem:[%s1 + $0x68] sm:$0xff]
        %v692 = vld [vmem:[%s1 + $0x70] sm:$0xff]
        %v693 = vld [vmem:[%s1 + $0x78] sm:$0xff]
        %v694 = vld [vmem:[%s589] sm:$0xff]
        %v695 = vld [vmem:[%s589 + $0x8] sm:$0xff]
        %v696 = vld [vmem:[%s589 + $0x10] sm:$0xff]
        %v697 = vld [vmem:[%s589 + $0x18] sm:$0xff]
        %v698 = vld [vmem:[%s589 + $0x20] sm:$0xff]
        %v699 = vld [vmem:[%s589 + $0x28] sm:$0xff]
        %v700 = vld [vmem:[%s589 + $0x30] sm:$0xff]
        %v701 = vld [vmem:[%s589 + $0x38] sm:$0xff]
        %v702 = vld [vmem:[%s589 + $0x40] sm:$0xff]
        %v703 = vld [vmem:[%s589 + $0x48] sm:$0xff]
        %v704 = vld [vmem:[%s589 + $0x50] sm:$0xff]
        %v705 = vld [vmem:[%s589 + $0x58] sm:$0xff]
        %v706 = vld [vmem:[%s589 + $0x60] sm:$0xff]
        %v707 = vld [vmem:[%s589 + $0x68] sm:$0xff]
        %v708 = vld [vmem:[%s589 + $0x70] sm:$0xff]
        %v709 = vld [vmem:[%s589 + $0x78] sm:$0xff]
        %710 = vmatpush.msra.mxu0 %v693
        %711 = vmatpush.msra.mxu0 %v692
        %712 = vmatpush.msra.mxu0 %v691
        %713 = vmatpush.msra.mxu0 %v690
        %714 = vmatpush.msra.mxu0 %v689
        %715 = vmatpush.msra.mxu0 %v688
        %716 = vmatpush.msra.mxu0 %v687
        %717 = vmatpush.msra.mxu0 %v686
        %718 = vmatpush.msra.mxu0 %v685
        %719 = vmatpush.msra.mxu0 %v684
        %720 = vmatpush.msra.mxu0 %v683
        %721 = vmatpush.msra.mxu0 %v682
        %722 = vmatpush.msra.mxu0 %v681
        %723 = vmatpush.msra.mxu0 %v680
        %724 = vmatpush.msra.mxu0 %v679
        %725 = vmatpush.msra.mxu0 %v678
        %726 = vmatmul.f32.gmra.mxu0 %v694
        %v727 = vpop.f32.mrf.mxu0
        %v728 = vadd.f32 0.0, %v727
        %729 = vmatmul.f32.gmra.mxu0 %v695
        %v730 = vpop.f32.mrf.mxu0
        %v731 = vadd.f32 0.0, %v730
        %732 = vmatmul.f32.gmra.mxu0 %v696
        %v733 = vpop.f32.mrf.mxu0
        %v734 = vadd.f32 0.0, %v733
        %735 = vmatmul.f32.gmra.mxu0 %v697
        %v736 = vpop.f32.mrf.mxu0
        %v737 = vadd.f32 0.0, %v736
        %738 = vmatmul.f32.gmra.mxu0 %v698
        %v739 = vpop.f32.mrf.mxu0
        %v740 = vadd.f32 0.0, %v739
        %741 = vmatmul.f32.gmra.mxu0 %v699
        %v742 = vpop.f32.mrf.mxu0
        %v743 = vadd.f32 0.0, %v742
        %744 = vmatmul.f32.gmra.mxu0 %v700
        %v745 = vpop.f32.mrf.mxu0
        %v746 = vadd.f32 0.0, %v745
        %747 = vmatmul.f32.gmra.mxu0 %v701
        %v748 = vpop.f32.mrf.mxu0
        %v749 = vadd.f32 0.0, %v748
        %750 = vmatmul.f32.gmra.mxu0 %v702
        %v751 = vpop.f32.mrf.mxu0
        %v752 = vadd.f32 0.0, %v751
        %753 = vmatmul.f32.gmra.mxu0 %v703
        %v754 = vpop.f32.mrf.mxu0
        %v755 = vadd.f32 0.0, %v754
        %756 = vmatmul.f32.gmra.mxu0 %v704
        %v757 = vpop.f32.mrf.mxu0
        %v758 = vadd.f32 0.0, %v757
        %759 = vmatmul.f32.gmra.mxu0 %v705
        %v760 = vpop.f32.mrf.mxu0
        %v761 = vadd.f32 0.0, %v760
        %762 = vmatmul.f32.gmra.mxu0 %v706
        %v763 = vpop.f32.mrf.mxu0
        %v764 = vadd.f32 0.0, %v763
        %765 = vmatmul.f32.gmra.mxu0 %v707
        %v766 = vpop.f32.mrf.mxu0
        %v767 = vadd.f32 0.0, %v766
        %768 = vmatmul.f32.gmra.mxu0 %v708
        %v769 = vpop.f32.mrf.mxu0
        %v770 = vadd.f32 0.0, %v769
        %771 = vmatmul.f32.gmra.mxu0 %v709
        %v772 = vpop.f32.mrf.mxu0
        %v773 = vadd.f32 0.0, %v772
        %774 = vdwg.mxu0
        %vm775 = vcmask 261120
        %v776 = vsel %vm775, %v728, 0.0
        %v777 = vsel %vm775, %v731, 0.0
        %v778 = vadd.f32 %v776, %v777
        %v779 = vsel %vm775, %v734, 0.0
        %v780 = vadd.f32 %v778, %v779
        %v781 = vsel %vm775, %v737, 0.0
        %v782 = vadd.f32 %v780, %v781
        %v783 = vsel %vm775, %v740, 0.0
        %v784 = vadd.f32 %v782, %v783
        %v785 = vsel %vm775, %v743, 0.0
        %v786 = vadd.f32 %v784, %v785
        %v787 = vsel %vm775, %v746, 0.0
        %v788 = vadd.f32 %v786, %v787
        %v789 = vsel %vm775, %v749, 0.0
        %v790 = vadd.f32 %v788, %v789
        %v791 = vsel %vm775, %v752, 0.0
        %v792 = vadd.f32 %v790, %v791
        %v793 = vsel %vm775, %v755, 0.0
        %v794 = vadd.f32 %v792, %v793
        %v795 = vsel %vm775, %v758, 0.0
        %v796 = vadd.f32 %v794, %v795
        %v797 = vsel %vm775, %v761, 0.0
        %v798 = vadd.f32 %v796, %v797
        %v799 = vsel %vm775, %v764, 0.0
        %v800 = vadd.f32 %v798, %v799
        %v801 = vsel %vm775, %v767, 0.0
        %v802 = vadd.f32 %v800, %v801
        %v803 = vsel %vm775, %v770, 0.0
        %v804 = vadd.f32 %v802, %v803
        %v805 = vsel %vm775, %v773, 0.0
        %v806 = vadd.f32 %v804, %v805
        %v807 = vrot.slane %v806, 4
        %v808 = vadd.f32 %v806, %v807
        %v809 = vrot.slane %v808, 2
        %v810 = vadd.f32 %v808, %v809
        %v811 = vrot.slane %v810, 1
        %v812 = vadd.f32 %v810, %v811
        %v813 = vstv %s677
        %v814 = vmul.f32 %v812, %v813
        %v815 = vld [vmem:[%s614] sm:$0xff]
        %v816 = vld [vmem:[%s614 + $0x8] sm:$0xff]
        %v817 = vld [vmem:[%s614 + $0x10] sm:$0xff]
        %v818 = vld [vmem:[%s614 + $0x18] sm:$0xff]
        %v819 = vld [vmem:[%s614 + $0x20] sm:$0xff]
        %v820 = vld [vmem:[%s614 + $0x28] sm:$0xff]
        %v821 = vld [vmem:[%s614 + $0x30] sm:$0xff]
        %v822 = vld [vmem:[%s614 + $0x38] sm:$0xff]
        %v823 = vld [vmem:[%s614 + $0x40] sm:$0xff]
        %v824 = vld [vmem:[%s614 + $0x48] sm:$0xff]
        %v825 = vld [vmem:[%s614 + $0x50] sm:$0xff]
        %v826 = vld [vmem:[%s614 + $0x58] sm:$0xff]
        %v827 = vld [vmem:[%s614 + $0x60] sm:$0xff]
        %v828 = vld [vmem:[%s614 + $0x68] sm:$0xff]
        %v829 = vld [vmem:[%s614 + $0x70] sm:$0xff]
        %v830 = vld [vmem:[%s614 + $0x78] sm:$0xff]
        %v831 = vld [vmem:[%s614 + $0x80] sm:$0xff]
        %v832 = vld [vmem:[%s614 + $0x88] sm:$0xff]
        %v833 = vld [vmem:[%s614 + $0x90] sm:$0xff]
        %v834 = vld [vmem:[%s614 + $0x98] sm:$0xff]
        %v835 = vld [vmem:[%s614 + $0xa0] sm:$0xff]
        %v836 = vld [vmem:[%s614 + $0xa8] sm:$0xff]
        %v837 = vld [vmem:[%s614 + $0xb0] sm:$0xff]
        %v838 = vld [vmem:[%s614 + $0xb8] sm:$0xff]
        %v839 = vld [vmem:[%s614 + $0xc0] sm:$0xff]
        %v840 = vld [vmem:[%s614 + $0xc8] sm:$0xff]
        %v841 = vld [vmem:[%s614 + $0xd0] sm:$0xff]
        %v842 = vld [vmem:[%s614 + $0xd8] sm:$0xff]
        %v843 = vld [vmem:[%s614 + $0xe0] sm:$0xff]
        %v844 = vld [vmem:[%s614 + $0xe8] sm:$0xff]
        %v845 = vld [vmem:[%s614 + $0xf0] sm:$0xff]
        %v846 = vld [vmem:[%s614 + $0xf8] sm:$0xff]
        %v848 = vsel %vm775, %v814, 0
        %850 = vmatpush.msra.mxu0 0.0
        %851 = vmatpush.msra.mxu0 0.0
        %852 = vmatpush.msra.mxu0 0.0
        %853 = vmatpush.msra.mxu0 0.0
        %854 = vmatpush.msra.mxu0 0.0
        %855 = vmatpush.msra.mxu0 0.0
        %856 = vmatpush.msra.mxu0 0.0
        %857 = vmatpush.msra.mxu0 0.0
        %858 = vmatpush.msra.mxu0 0.0
        %859 = vmatpush.msra.mxu0 0.0
        %860 = vmatpush.msra.mxu0 0.0
        %861 = vmatpush.msra.mxu0 0.0
        %862 = vmatpush.msra.mxu0 %v839
        %863 = vmatpush.msra.mxu0 %v831
        %864 = vmatpush.msra.mxu0 %v823
        %865 = vmatpush.msra.mxu0 %v815
        %866 = vmatmul.f32.gmra.mxu0 %v848
        %v867 = vpop.f32.mrf.mxu0
        %v868 = vadd.f32 0.0, %v867
        %869 = vdwg.mxu0
        %870 = vmatpush.msra.mxu0 0.0
        %871 = vmatpush.msra.mxu0 0.0
        %872 = vmatpush.msra.mxu0 0.0
        %873 = vmatpush.msra.mxu0 0.0
        %874 = vmatpush.msra.mxu0 0.0
        %875 = vmatpush.msra.mxu0 0.0
        %876 = vmatpush.msra.mxu0 0.0
        %877 = vmatpush.msra.mxu0 0.0
        %878 = vmatpush.msra.mxu0 0.0
        %879 = vmatpush.msra.mxu0 0.0
        %880 = vmatpush.msra.mxu0 0.0
        %881 = vmatpush.msra.mxu0 0.0
        %882 = vmatpush.msra.mxu0 %v840
        %883 = vmatpush.msra.mxu0 %v832
        %884 = vmatpush.msra.mxu0 %v824
        %885 = vmatpush.msra.mxu0 %v816
        %886 = vmatmul.f32.gmra.mxu0 %v848
        %v887 = vpop.f32.mrf.mxu0
        %v888 = vadd.f32 0.0, %v887
        %889 = vdwg.mxu0
        %890 = vmatpush.msra.mxu0 0.0
        %891 = vmatpush.msra.mxu0 0.0
        %892 = vmatpush.msra.mxu0 0.0
        %893 = vmatpush.msra.mxu0 0.0
        %894 = vmatpush.msra.mxu0 0.0
        %895 = vmatpush.msra.mxu0 0.0
        %896 = vmatpush.msra.mxu0 0.0
        %897 = vmatpush.msra.mxu0 0.0
        %898 = vmatpush.msra.mxu0 0.0
        %899 = vmatpush.msra.mxu0 0.0
        %900 = vmatpush.msra.mxu0 0.0
        %901 = vmatpush.msra.mxu0 0.0
        %902 = vmatpush.msra.mxu0 %v841
        %903 = vmatpush.msra.mxu0 %v833
        %904 = vmatpush.msra.mxu0 %v825
        %905 = vmatpush.msra.mxu0 %v817
        %906 = vmatmul.f32.gmra.mxu0 %v848
        %v907 = vpop.f32.mrf.mxu0
        %v908 = vadd.f32 0.0, %v907
        %909 = vdwg.mxu0
        %910 = vmatpush.msra.mxu0 0.0
        %911 = vmatpush.msra.mxu0 0.0
        %912 = vmatpush.msra.mxu0 0.0
        %913 = vmatpush.msra.mxu0 0.0
        %914 = vmatpush.msra.mxu0 0.0
        %915 = vmatpush.msra.mxu0 0.0
        %916 = vmatpush.msra.mxu0 0.0
        %917 = vmatpush.msra.mxu0 0.0
        %918 = vmatpush.msra.mxu0 0.0
        %919 = vmatpush.msra.mxu0 0.0
        %920 = vmatpush.msra.mxu0 0.0
        %921 = vmatpush.msra.mxu0 0.0
        %922 = vmatpush.msra.mxu0 %v842
        %923 = vmatpush.msra.mxu0 %v834
        %924 = vmatpush.msra.mxu0 %v826
        %925 = vmatpush.msra.mxu0 %v818
        %926 = vmatmul.f32.gmra.mxu0 %v848
        %v927 = vpop.f32.mrf.mxu0
        %v928 = vadd.f32 0.0, %v927
        %929 = vdwg.mxu0
        %930 = vmatpush.msra.mxu0 0.0
        %931 = vmatpush.msra.mxu0 0.0
        %932 = vmatpush.msra.mxu0 0.0
        %933 = vmatpush.msra.mxu0 0.0
        %934 = vmatpush.msra.mxu0 0.0
        %935 = vmatpush.msra.mxu0 0.0
        %936 = vmatpush.msra.mxu0 0.0
        %937 = vmatpush.msra.mxu0 0.0
        %938 = vmatpush.msra.mxu0 0.0
        %939 = vmatpush.msra.mxu0 0.0
        %940 = vmatpush.msra.mxu0 0.0
        %941 = vmatpush.msra.mxu0 0.0
        %942 = vmatpush.msra.mxu0 %v843
        %943 = vmatpush.msra.mxu0 %v835
        %944 = vmatpush.msra.mxu0 %v827
        %945 = vmatpush.msra.mxu0 %v819
        %946 = vmatmul.f32.gmra.mxu0 %v848
        %v947 = vpop.f32.mrf.mxu0
        %v948 = vadd.f32 0.0, %v947
        %949 = vdwg.mxu0
        %950 = vmatpush.msra.mxu0 0.0
        %951 = vmatpush.msra.mxu0 0.0
        %952 = vmatpush.msra.mxu0 0.0
        %953 = vmatpush.msra.mxu0 0.0
        %954 = vmatpush.msra.mxu0 0.0
        %955 = vmatpush.msra.mxu0 0.0
        %956 = vmatpush.msra.mxu0 0.0
        %957 = vmatpush.msra.mxu0 0.0
        %958 = vmatpush.msra.mxu0 0.0
        %959 = vmatpush.msra.mxu0 0.0
        %960 = vmatpush.msra.mxu0 0.0
        %961 = vmatpush.msra.mxu0 0.0
        %962 = vmatpush.msra.mxu0 %v844
        %963 = vmatpush.msra.mxu0 %v836
        %964 = vmatpush.msra.mxu0 %v828
        %965 = vmatpush.msra.mxu0 %v820
        %966 = vmatmul.f32.gmra.mxu0 %v848
        %v967 = vpop.f32.mrf.mxu0
        %v968 = vadd.f32 0.0, %v967
        %969 = vdwg.mxu0
        %970 = vmatpush.msra.mxu0 0.0
        %971 = vmatpush.msra.mxu0 0.0
        %972 = vmatpush.msra.mxu0 0.0
        %973 = vmatpush.msra.mxu0 0.0
        %974 = vmatpush.msra.mxu0 0.0
        %975 = vmatpush.msra.mxu0 0.0
        %976 = vmatpush.msra.mxu0 0.0
        %977 = vmatpush.msra.mxu0 0.0
        %978 = vmatpush.msra.mxu0 0.0
        %979 = vmatpush.msra.mxu0 0.0
        %980 = vmatpush.msra.mxu0 0.0
        %981 = vmatpush.msra.mxu0 0.0
        %982 = vmatpush.msra.mxu0 %v845
        %983 = vmatpush.msra.mxu0 %v837
        %984 = vmatpush.msra.mxu0 %v829
        %985 = vmatpush.msra.mxu0 %v821
        %986 = vmatmul.f32.gmra.mxu0 %v848
        %v987 = vpop.f32.mrf.mxu0
        %v988 = vadd.f32 0.0, %v987
        %989 = vdwg.mxu0
        %990 = vmatpush.msra.mxu0 0.0
        %991 = vmatpush.msra.mxu0 0.0
        %992 = vmatpush.msra.mxu0 0.0
        %993 = vmatpush.msra.mxu0 0.0
        %994 = vmatpush.msra.mxu0 0.0
        %995 = vmatpush.msra.mxu0 0.0
        %996 = vmatpush.msra.mxu0 0.0
        %997 = vmatpush.msra.mxu0 0.0
        %998 = vmatpush.msra.mxu0 0.0
        %999 = vmatpush.msra.mxu0 0.0
        %1000 = vmatpush.msra.mxu0 0.0
        %1001 = vmatpush.msra.mxu0 0.0
        %1002 = vmatpush.msra.mxu0 %v846
        %1003 = vmatpush.msra.mxu0 %v838
        %1004 = vmatpush.msra.mxu0 %v830
        %1005 = vmatpush.msra.mxu0 %v822
        %1006 = vmatmul.f32.gmra.mxu0 %v848
        %v1007 = vpop.f32.mrf.mxu0
        %v1008 = vadd.f32 0.0, %v1007
        %1009 = vdwg.mxu0
        %v1010 = vmax.f32 %v868, 0.0
        %v1011 = vmax.f32 %v888, 0.0
        %v1012 = vmax.f32 %v908, 0.0
        %v1013 = vmax.f32 %v928, 0.0
        %v1014 = vmax.f32 %v948, 0.0
        %v1015 = vmax.f32 %v968, 0.0
        %v1016 = vmax.f32 %v988, 0.0
        %v1017 = vmax.f32 %v1008, 0.0
        %v1018 = vld [vmem:[%s619] sm:$0xff]
        %v1019 = vld [vmem:[%s619 + $0x8] sm:$0xff]
        %v1020 = vld [vmem:[%s619 + $0x10] sm:$0xff]
        %v1021 = vld [vmem:[%s619 + $0x18] sm:$0xff]
        %v1022 = vld [vmem:[%s619 + $0x20] sm:$0xff]
        %v1023 = vld [vmem:[%s619 + $0x28] sm:$0xff]
        %v1024 = vld [vmem:[%s619 + $0x30] sm:$0xff]
        %v1025 = vld [vmem:[%s619 + $0x38] sm:$0xff]
        %v1026 = vld [vmem:[%s619 + $0x40] sm:$0xff]
        %v1027 = vld [vmem:[%s619 + $0x48] sm:$0xff]
        %v1028 = vld [vmem:[%s619 + $0x50] sm:$0xff]
        %v1029 = vld [vmem:[%s619 + $0x58] sm:$0xff]
        %v1030 = vld [vmem:[%s619 + $0x60] sm:$0xff]
        %v1031 = vld [vmem:[%s619 + $0x68] sm:$0xff]
        %v1032 = vld [vmem:[%s619 + $0x70] sm:$0xff]
        %v1033 = vld [vmem:[%s619 + $0x78] sm:$0xff]
        %v1034 = vld [vmem:[%s619 + $0x80] sm:$0xff]
        %v1035 = vld [vmem:[%s619 + $0x88] sm:$0xff]
        %v1036 = vld [vmem:[%s619 + $0x90] sm:$0xff]
        %v1037 = vld [vmem:[%s619 + $0x98] sm:$0xff]
        %v1038 = vld [vmem:[%s619 + $0xa0] sm:$0xff]
        %v1039 = vld [vmem:[%s619 + $0xa8] sm:$0xff]
        %v1040 = vld [vmem:[%s619 + $0xb0] sm:$0xff]
        %v1041 = vld [vmem:[%s619 + $0xb8] sm:$0xff]
        %v1042 = vld [vmem:[%s619 + $0xc0] sm:$0xff]
        %v1043 = vld [vmem:[%s619 + $0xc8] sm:$0xff]
        %v1044 = vld [vmem:[%s619 + $0xd0] sm:$0xff]
        %v1045 = vld [vmem:[%s619 + $0xd8] sm:$0xff]
        %v1046 = vld [vmem:[%s619 + $0xe0] sm:$0xff]
        %v1047 = vld [vmem:[%s619 + $0xe8] sm:$0xff]
        %v1048 = vld [vmem:[%s619 + $0xf0] sm:$0xff]
        %v1049 = vld [vmem:[%s619 + $0xf8] sm:$0xff]
        %v1050 = vld [vmem:[%s619 + $0x100] sm:$0xff]
        %v1051 = vld [vmem:[%s619 + $0x108] sm:$0xff]
        %v1052 = vld [vmem:[%s619 + $0x110] sm:$0xff]
        %v1053 = vld [vmem:[%s619 + $0x118] sm:$0xff]
        %v1054 = vld [vmem:[%s619 + $0x120] sm:$0xff]
        %v1055 = vld [vmem:[%s619 + $0x128] sm:$0xff]
        %v1056 = vld [vmem:[%s619 + $0x130] sm:$0xff]
        %v1057 = vld [vmem:[%s619 + $0x138] sm:$0xff]
        %v1058 = vld [vmem:[%s619 + $0x140] sm:$0xff]
        %v1059 = vld [vmem:[%s619 + $0x148] sm:$0xff]
        %v1060 = vld [vmem:[%s619 + $0x150] sm:$0xff]
        %v1061 = vld [vmem:[%s619 + $0x158] sm:$0xff]
        %v1062 = vld [vmem:[%s619 + $0x160] sm:$0xff]
        %v1063 = vld [vmem:[%s619 + $0x168] sm:$0xff]
        %v1064 = vld [vmem:[%s619 + $0x170] sm:$0xff]
        %v1065 = vld [vmem:[%s619 + $0x178] sm:$0xff]
        %v1066 = vld [vmem:[%s619 + $0x180] sm:$0xff]
        %v1067 = vld [vmem:[%s619 + $0x188] sm:$0xff]
        %v1068 = vld [vmem:[%s619 + $0x190] sm:$0xff]
        %v1069 = vld [vmem:[%s619 + $0x198] sm:$0xff]
        %v1070 = vld [vmem:[%s619 + $0x1a0] sm:$0xff]
        %v1071 = vld [vmem:[%s619 + $0x1a8] sm:$0xff]
        %v1072 = vld [vmem:[%s619 + $0x1b0] sm:$0xff]
        %v1073 = vld [vmem:[%s619 + $0x1b8] sm:$0xff]
        %v1074 = vld [vmem:[%s619 + $0x1c0] sm:$0xff]
        %v1075 = vld [vmem:[%s619 + $0x1c8] sm:$0xff]
        %v1076 = vld [vmem:[%s619 + $0x1d0] sm:$0xff]
        %v1077 = vld [vmem:[%s619 + $0x1d8] sm:$0xff]
        %v1078 = vld [vmem:[%s619 + $0x1e0] sm:$0xff]
        %v1079 = vld [vmem:[%s619 + $0x1e8] sm:$0xff]
        %v1080 = vld [vmem:[%s619 + $0x1f0] sm:$0xff]
        %v1081 = vld [vmem:[%s619 + $0x1f8] sm:$0xff]
        %v1082 = vld [vmem:[%s619 + $0x200] sm:$0xff]
        %v1083 = vld [vmem:[%s619 + $0x208] sm:$0xff]
        %v1084 = vld [vmem:[%s619 + $0x210] sm:$0xff]
        %v1085 = vld [vmem:[%s619 + $0x218] sm:$0xff]
        %v1086 = vld [vmem:[%s619 + $0x220] sm:$0xff]
        %v1087 = vld [vmem:[%s619 + $0x228] sm:$0xff]
        %v1088 = vld [vmem:[%s619 + $0x230] sm:$0xff]
        %v1089 = vld [vmem:[%s619 + $0x238] sm:$0xff]
        %v1090 = vld [vmem:[%s619 + $0x240] sm:$0xff]
        %v1091 = vld [vmem:[%s619 + $0x248] sm:$0xff]
        %v1092 = vld [vmem:[%s619 + $0x250] sm:$0xff]
        %v1093 = vld [vmem:[%s619 + $0x258] sm:$0xff]
        %v1094 = vld [vmem:[%s619 + $0x260] sm:$0xff]
        %v1095 = vld [vmem:[%s619 + $0x268] sm:$0xff]
        %v1096 = vld [vmem:[%s619 + $0x270] sm:$0xff]
        %v1097 = vld [vmem:[%s619 + $0x278] sm:$0xff]
        %v1098 = vld [vmem:[%s619 + $0x280] sm:$0xff]
        %v1099 = vld [vmem:[%s619 + $0x288] sm:$0xff]
        %v1100 = vld [vmem:[%s619 + $0x290] sm:$0xff]
        %v1101 = vld [vmem:[%s619 + $0x298] sm:$0xff]
        %v1102 = vld [vmem:[%s619 + $0x2a0] sm:$0xff]
        %v1103 = vld [vmem:[%s619 + $0x2a8] sm:$0xff]
        %v1104 = vld [vmem:[%s619 + $0x2b0] sm:$0xff]
        %v1105 = vld [vmem:[%s619 + $0x2b8] sm:$0xff]
        %v1106 = vld [vmem:[%s619 + $0x2c0] sm:$0xff]
        %v1107 = vld [vmem:[%s619 + $0x2c8] sm:$0xff]
        %v1108 = vld [vmem:[%s619 + $0x2d0] sm:$0xff]
        %v1109 = vld [vmem:[%s619 + $0x2d8] sm:$0xff]
        %v1110 = vld [vmem:[%s619 + $0x2e0] sm:$0xff]
        %v1111 = vld [vmem:[%s619 + $0x2e8] sm:$0xff]
        %v1112 = vld [vmem:[%s619 + $0x2f0] sm:$0xff]
        %v1113 = vld [vmem:[%s619 + $0x2f8] sm:$0xff]
        %v1114 = vld [vmem:[%s619 + $0x300] sm:$0xff]
        %v1115 = vld [vmem:[%s619 + $0x308] sm:$0xff]
        %v1116 = vld [vmem:[%s619 + $0x310] sm:$0xff]
        %v1117 = vld [vmem:[%s619 + $0x318] sm:$0xff]
        %v1118 = vld [vmem:[%s619 + $0x320] sm:$0xff]
        %v1119 = vld [vmem:[%s619 + $0x328] sm:$0xff]
        %v1120 = vld [vmem:[%s619 + $0x330] sm:$0xff]
        %v1121 = vld [vmem:[%s619 + $0x338] sm:$0xff]
        %v1122 = vld [vmem:[%s619 + $0x340] sm:$0xff]
        %v1123 = vld [vmem:[%s619 + $0x348] sm:$0xff]
        %v1124 = vld [vmem:[%s619 + $0x350] sm:$0xff]
        %v1125 = vld [vmem:[%s619 + $0x358] sm:$0xff]
        %v1126 = vld [vmem:[%s619 + $0x360] sm:$0xff]
        %v1127 = vld [vmem:[%s619 + $0x368] sm:$0xff]
        %v1128 = vld [vmem:[%s619 + $0x370] sm:$0xff]
        %v1129 = vld [vmem:[%s619 + $0x378] sm:$0xff]
        %v1130 = vld [vmem:[%s619 + $0x380] sm:$0xff]
        %v1131 = vld [vmem:[%s619 + $0x388] sm:$0xff]
        %v1132 = vld [vmem:[%s619 + $0x390] sm:$0xff]
        %v1133 = vld [vmem:[%s619 + $0x398] sm:$0xff]
        %v1134 = vld [vmem:[%s619 + $0x3a0] sm:$0xff]
        %v1135 = vld [vmem:[%s619 + $0x3a8] sm:$0xff]
        %v1136 = vld [vmem:[%s619 + $0x3b0] sm:$0xff]
        %v1137 = vld [vmem:[%s619 + $0x3b8] sm:$0xff]
        %v1138 = vld [vmem:[%s619 + $0x3c0] sm:$0xff]
        %v1139 = vld [vmem:[%s619 + $0x3c8] sm:$0xff]
        %v1140 = vld [vmem:[%s619 + $0x3d0] sm:$0xff]
        %v1141 = vld [vmem:[%s619 + $0x3d8] sm:$0xff]
        %v1142 = vld [vmem:[%s619 + $0x3e0] sm:$0xff]
        %v1143 = vld [vmem:[%s619 + $0x3e8] sm:$0xff]
        %v1144 = vld [vmem:[%s619 + $0x3f0] sm:$0xff]
        %v1145 = vld [vmem:[%s619 + $0x3f8] sm:$0xff]
        %1146 = vmatpush.msra.mxu0 %v1033
        %1147 = vmatpush.msra.mxu0 %v1032
        %1148 = vmatpush.msra.mxu0 %v1031
        %1149 = vmatpush.msra.mxu0 %v1030
        %1150 = vmatpush.msra.mxu0 %v1029
        %1151 = vmatpush.msra.mxu0 %v1028
        %1152 = vmatpush.msra.mxu0 %v1027
        %1153 = vmatpush.msra.mxu0 %v1026
        %1154 = vmatpush.msra.mxu0 %v1025
        %1155 = vmatpush.msra.mxu0 %v1024
        %1156 = vmatpush.msra.mxu0 %v1023
        %1157 = vmatpush.msra.mxu0 %v1022
        %1158 = vmatpush.msra.mxu0 %v1021
        %1159 = vmatpush.msra.mxu0 %v1020
        %1160 = vmatpush.msra.mxu0 %v1019
        %1161 = vmatpush.msra.mxu0 %v1018
        %1162 = vmatmul.f32.gmra.mxu0 %v1010
        %v1163 = vpop.f32.mrf.mxu0
        %v1164 = vadd.f32 0.0, %v1163
        %1165 = vdwg.mxu0
        %1166 = vmatpush.msra.mxu0 %v1049
        %1167 = vmatpush.msra.mxu0 %v1048
        %1168 = vmatpush.msra.mxu0 %v1047
        %1169 = vmatpush.msra.mxu0 %v1046
        %1170 = vmatpush.msra.mxu0 %v1045
        %1171 = vmatpush.msra.mxu0 %v1044
        %1172 = vmatpush.msra.mxu0 %v1043
        %1173 = vmatpush.msra.mxu0 %v1042
        %1174 = vmatpush.msra.mxu0 %v1041
        %1175 = vmatpush.msra.mxu0 %v1040
        %1176 = vmatpush.msra.mxu0 %v1039
        %1177 = vmatpush.msra.mxu0 %v1038
        %1178 = vmatpush.msra.mxu0 %v1037
        %1179 = vmatpush.msra.mxu0 %v1036
        %1180 = vmatpush.msra.mxu0 %v1035
        %1181 = vmatpush.msra.mxu0 %v1034
        %1182 = vmatmul.f32.gmra.mxu0 %v1011
        %v1183 = vpop.f32.mrf.mxu0
        %v1184 = vadd.f32 %v1164, %v1183
        %1185 = vdwg.mxu0
        %1186 = vmatpush.msra.mxu0 %v1065
        %1187 = vmatpush.msra.mxu0 %v1064
        %1188 = vmatpush.msra.mxu0 %v1063
        %1189 = vmatpush.msra.mxu0 %v1062
        %1190 = vmatpush.msra.mxu0 %v1061
        %1191 = vmatpush.msra.mxu0 %v1060
        %1192 = vmatpush.msra.mxu0 %v1059
        %1193 = vmatpush.msra.mxu0 %v1058
        %1194 = vmatpush.msra.mxu0 %v1057
        %1195 = vmatpush.msra.mxu0 %v1056
        %1196 = vmatpush.msra.mxu0 %v1055
        %1197 = vmatpush.msra.mxu0 %v1054
        %1198 = vmatpush.msra.mxu0 %v1053
        %1199 = vmatpush.msra.mxu0 %v1052
        %1200 = vmatpush.msra.mxu0 %v1051
        %1201 = vmatpush.msra.mxu0 %v1050
        %1202 = vmatmul.f32.gmra.mxu0 %v1012
        %v1203 = vpop.f32.mrf.mxu0
        %v1204 = vadd.f32 %v1184, %v1203
        %1205 = vdwg.mxu0
        %1206 = vmatpush.msra.mxu0 %v1081
        %1207 = vmatpush.msra.mxu0 %v1080
        %1208 = vmatpush.msra.mxu0 %v1079
        %1209 = vmatpush.msra.mxu0 %v1078
        %1210 = vmatpush.msra.mxu0 %v1077
        %1211 = vmatpush.msra.mxu0 %v1076
        %1212 = vmatpush.msra.mxu0 %v1075
        %1213 = vmatpush.msra.mxu0 %v1074
        %1214 = vmatpush.msra.mxu0 %v1073
        %1215 = vmatpush.msra.mxu0 %v1072
        %1216 = vmatpush.msra.mxu0 %v1071
        %1217 = vmatpush.msra.mxu0 %v1070
        %1218 = vmatpush.msra.mxu0 %v1069
        %1219 = vmatpush.msra.mxu0 %v1068
        %1220 = vmatpush.msra.mxu0 %v1067
        %1221 = vmatpush.msra.mxu0 %v1066
        %1222 = vmatmul.f32.gmra.mxu0 %v1013
        %v1223 = vpop.f32.mrf.mxu0
        %v1224 = vadd.f32 %v1204, %v1223
        %1225 = vdwg.mxu0
        %1226 = vmatpush.msra.mxu0 %v1097
        %1227 = vmatpush.msra.mxu0 %v1096
        %1228 = vmatpush.msra.mxu0 %v1095
        %1229 = vmatpush.msra.mxu0 %v1094
        %1230 = vmatpush.msra.mxu0 %v1093
        %1231 = vmatpush.msra.mxu0 %v1092
        %1232 = vmatpush.msra.mxu0 %v1091
        %1233 = vmatpush.msra.mxu0 %v1090
        %1234 = vmatpush.msra.mxu0 %v1089
        %1235 = vmatpush.msra.mxu0 %v1088
        %1236 = vmatpush.msra.mxu0 %v1087
        %1237 = vmatpush.msra.mxu0 %v1086
        %1238 = vmatpush.msra.mxu0 %v1085
        %1239 = vmatpush.msra.mxu0 %v1084
        %1240 = vmatpush.msra.mxu0 %v1083
        %1241 = vmatpush.msra.mxu0 %v1082
        %1242 = vmatmul.f32.gmra.mxu0 %v1014
        %v1243 = vpop.f32.mrf.mxu0
        %v1244 = vadd.f32 %v1224, %v1243
        %1245 = vdwg.mxu0
        %1246 = vmatpush.msra.mxu0 %v1113
        %1247 = vmatpush.msra.mxu0 %v1112
        %1248 = vmatpush.msra.mxu0 %v1111
        %1249 = vmatpush.msra.mxu0 %v1110
        %1250 = vmatpush.msra.mxu0 %v1109
        %1251 = vmatpush.msra.mxu0 %v1108
        %1252 = vmatpush.msra.mxu0 %v1107
        %1253 = vmatpush.msra.mxu0 %v1106
        %1254 = vmatpush.msra.mxu0 %v1105
        %1255 = vmatpush.msra.mxu0 %v1104
        %1256 = vmatpush.msra.mxu0 %v1103
        %1257 = vmatpush.msra.mxu0 %v1102
        %1258 = vmatpush.msra.mxu0 %v1101
        %1259 = vmatpush.msra.mxu0 %v1100
        %1260 = vmatpush.msra.mxu0 %v1099
        %1261 = vmatpush.msra.mxu0 %v1098
        %1262 = vmatmul.f32.gmra.mxu0 %v1015
        %v1263 = vpop.f32.mrf.mxu0
        %v1264 = vadd.f32 %v1244, %v1263
        %1265 = vdwg.mxu0
        %1266 = vmatpush.msra.mxu0 %v1129
        %1267 = vmatpush.msra.mxu0 %v1128
        %1268 = vmatpush.msra.mxu0 %v1127
        %1269 = vmatpush.msra.mxu0 %v1126
        %1270 = vmatpush.msra.mxu0 %v1125
        %1271 = vmatpush.msra.mxu0 %v1124
        %1272 = vmatpush.msra.mxu0 %v1123
        %1273 = vmatpush.msra.mxu0 %v1122
        %1274 = vmatpush.msra.mxu0 %v1121
        %1275 = vmatpush.msra.mxu0 %v1120
        %1276 = vmatpush.msra.mxu0 %v1119
        %1277 = vmatpush.msra.mxu0 %v1118
        %1278 = vmatpush.msra.mxu0 %v1117
        %1279 = vmatpush.msra.mxu0 %v1116
        %1280 = vmatpush.msra.mxu0 %v1115
        %1281 = vmatpush.msra.mxu0 %v1114
        %1282 = vmatmul.f32.gmra.mxu0 %v1016
        %v1283 = vpop.f32.mrf.mxu0
        %v1284 = vadd.f32 %v1264, %v1283
        %1285 = vdwg.mxu0
        %1286 = vmatpush.msra.mxu0 %v1145
        %1287 = vmatpush.msra.mxu0 %v1144
        %1288 = vmatpush.msra.mxu0 %v1143
        %1289 = vmatpush.msra.mxu0 %v1142
        %1290 = vmatpush.msra.mxu0 %v1141
        %1291 = vmatpush.msra.mxu0 %v1140
        %1292 = vmatpush.msra.mxu0 %v1139
        %1293 = vmatpush.msra.mxu0 %v1138
        %1294 = vmatpush.msra.mxu0 %v1137
        %1295 = vmatpush.msra.mxu0 %v1136
        %1296 = vmatpush.msra.mxu0 %v1135
        %1297 = vmatpush.msra.mxu0 %v1134
        %1298 = vmatpush.msra.mxu0 %v1133
        %1299 = vmatpush.msra.mxu0 %v1132
        %1300 = vmatpush.msra.mxu0 %v1131
        %1301 = vmatpush.msra.mxu0 %v1130
        %1302 = vmatmul.f32.gmra.mxu0 %v1017
        %v1303 = vpop.f32.mrf.mxu0
        %v1304 = vadd.f32 %v1284, %v1303
        %1305 = vdwg.mxu0
        %v1306 = vxor.u32 %v1304, 2147483648
        %v1307 = vmul.f32 %v1306, 1.442695
        %v1308 = vpow.pop %v1307
        %v1309 = vadd.f32 %v1308, 1.0
        %v1310 = vrcp.pop %v1309
        %v1311 = vmul.f32 %v1309, %v1310
        %v1312 = vsub.f32 1.0, %v1311
        %v1313 = vmul.f32 %v1310, %v1312
        %v1314 = vadd.f32 %v1310, %v1313
        %vm1315 = vweird.f32 %v1309
        %vm1316 = vweird.f32 %v1310
        %vm1317 = vmor %vm1315, %vm1316
        %v1318 = vsel %vm1317, %v1310, %v1314
        %v1319 = vand.u32 2147483647, %v1309
        %vm1320 = vcmp.eq.f32.partialorder %v1319, 8.507059e+37
        %v1321 = vand.u32 %v1309, 2147483648
        %v1322 = vor.u32 1.1754944e-38, %v1321
        %v1323 = vsel %vm1320, %v1322, %v1318
        %v1324 = vmul.f32 1.0, %v1323
        %v1325 = vperm.slane %v1324, 0
        %v1326 = vmul.f32 %v728, %v1325
        %v1327 = vmul.f32 %v731, %v1325
        %v1328 = vmul.f32 %v734, %v1325
        %v1329 = vmul.f32 %v737, %v1325
        %v1330 = vmul.f32 %v740, %v1325
        %v1331 = vmul.f32 %v743, %v1325
        %v1332 = vmul.f32 %v746, %v1325
        %v1333 = vmul.f32 %v749, %v1325
        %v1334 = vmul.f32 %v752, %v1325
        %v1335 = vmul.f32 %v755, %v1325
        %v1336 = vmul.f32 %v758, %v1325
        %v1337 = vmul.f32 %v761, %v1325
        %v1338 = vmul.f32 %v764, %v1325
        %v1339 = vmul.f32 %v767, %v1325
        %v1340 = vmul.f32 %v770, %v1325
        %v1341 = vmul.f32 %v773, %v1325
        %v1342 = vld [vmem:[%s600] sm:$0xf]
        %v1343 = vld [vmem:[%s600 + $0x4] sm:$0xf]
        %v1344 = vld [vmem:[%s600 + $0x8] sm:$0xf]
        %v1345 = vld [vmem:[%s600 + $0xc] sm:$0xf]
        %v1346 = vld [vmem:[%s600 + $0x10] sm:$0xf]
        %v1347 = vld [vmem:[%s600 + $0x14] sm:$0xf]
        %v1348 = vld [vmem:[%s600 + $0x18] sm:$0xf]
        %v1349 = vld [vmem:[%s600 + $0x1c] sm:$0xf]
        %v1350 = vld [vmem:[%s600 + $0x20] sm:$0xf]
        %v1351 = vld [vmem:[%s600 + $0x24] sm:$0xf]
        %v1352 = vld [vmem:[%s600 + $0x28] sm:$0xf]
        %v1353 = vld [vmem:[%s600 + $0x2c] sm:$0xf]
        %v1354 = vld [vmem:[%s600 + $0x30] sm:$0xf]
        %v1355 = vld [vmem:[%s600 + $0x34] sm:$0xf]
        %v1356 = vld [vmem:[%s600 + $0x38] sm:$0xf]
        %v1357 = vld [vmem:[%s600 + $0x3c] sm:$0xf]
        %v1358 = vld [vmem:[%s600 + $0x40] sm:$0xf]
        %v1359 = vld [vmem:[%s600 + $0x44] sm:$0xf]
        %v1360 = vld [vmem:[%s600 + $0x48] sm:$0xf]
        %v1361 = vld [vmem:[%s600 + $0x4c] sm:$0xf]
        %v1362 = vld [vmem:[%s600 + $0x50] sm:$0xf]
        %v1363 = vld [vmem:[%s600 + $0x54] sm:$0xf]
        %v1364 = vld [vmem:[%s600 + $0x58] sm:$0xf]
        %v1365 = vld [vmem:[%s600 + $0x5c] sm:$0xf]
        %v1366 = vld [vmem:[%s600 + $0x60] sm:$0xf]
        %v1367 = vld [vmem:[%s600 + $0x64] sm:$0xf]
        %v1368 = vld [vmem:[%s600 + $0x68] sm:$0xf]
        %v1369 = vld [vmem:[%s600 + $0x6c] sm:$0xf]
        %v1370 = vld [vmem:[%s600 + $0x70] sm:$0xf]
        %v1371 = vld [vmem:[%s600 + $0x74] sm:$0xf]
        %v1372 = vld [vmem:[%s600 + $0x78] sm:$0xf]
        %v1373 = vld [vmem:[%s600 + $0x7c] sm:$0xf]
        %v1374 = vld [vmem:[%s600 + $0x80] sm:$0xf]
        %v1375 = vld [vmem:[%s600 + $0x84] sm:$0xf]
        %v1376 = vld [vmem:[%s600 + $0x88] sm:$0xf]
        %v1377 = vld [vmem:[%s600 + $0x8c] sm:$0xf]
        %v1378 = vld [vmem:[%s600 + $0x90] sm:$0xf]
        %v1379 = vld [vmem:[%s600 + $0x94] sm:$0xf]
        %v1380 = vld [vmem:[%s600 + $0x98] sm:$0xf]
        %v1381 = vld [vmem:[%s600 + $0x9c] sm:$0xf]
        %v1382 = vld [vmem:[%s600 + $0xa0] sm:$0xf]
        %v1383 = vld [vmem:[%s600 + $0xa4] sm:$0xf]
        %v1384 = vld [vmem:[%s600 + $0xa8] sm:$0xf]
        %v1385 = vld [vmem:[%s600 + $0xac] sm:$0xf]
        %v1386 = vld [vmem:[%s600 + $0xb0] sm:$0xf]
        %v1387 = vunpack.c.l.bf16 %v1342
        %v1388 = vunpack.c.l.bf16 %v1343
        %v1389 = vunpack.c.l.bf16 %v1344
        %v1390 = vunpack.c.l.bf16 %v1345
        %v1391 = vunpack.c.l.bf16 %v1346
        %v1392 = vunpack.c.l.bf16 %v1347
        %v1393 = vunpack.c.l.bf16 %v1348
        %v1394 = vunpack.c.l.bf16 %v1349
        %v1395 = vunpack.c.l.bf16 %v1350
        %v1396 = vunpack.c.l.bf16 %v1351
        %v1397 = vunpack.c.l.bf16 %v1352
        %v1398 = vunpack.c.l.bf16 %v1353
        %v1399 = vunpack.c.l.bf16 %v1354
        %v1400 = vunpack.c.l.bf16 %v1355
        %v1401 = vunpack.c.l.bf16 %v1356
        %v1402 = vunpack.c.l.bf16 %v1357
        %v1403 = vunpack.c.l.bf16 %v1358
        %v1404 = vunpack.c.l.bf16 %v1359
        %v1405 = vunpack.c.l.bf16 %v1360
        %v1406 = vunpack.c.l.bf16 %v1361
        %v1407 = vunpack.c.l.bf16 %v1362
        %v1408 = vunpack.c.l.bf16 %v1363
        %v1409 = vunpack.c.l.bf16 %v1364
        %v1410 = vunpack.c.l.bf16 %v1365
        %v1411 = vunpack.c.l.bf16 %v1366
        %v1412 = vunpack.c.l.bf16 %v1367
        %v1413 = vunpack.c.l.bf16 %v1368
        %v1414 = vunpack.c.l.bf16 %v1369
        %v1415 = vunpack.c.l.bf16 %v1370
        %v1416 = vunpack.c.l.bf16 %v1371
        %v1417 = vunpack.c.l.bf16 %v1372
        %v1418 = vunpack.c.l.bf16 %v1373
        %v1419 = vunpack.c.l.bf16 %v1374
        %v1420 = vunpack.c.l.bf16 %v1375
        %v1421 = vunpack.c.l.bf16 %v1376
        %v1422 = vunpack.c.l.bf16 %v1377
        %v1423 = vunpack.c.l.bf16 %v1378
        %v1424 = vunpack.c.l.bf16 %v1379
        %v1425 = vunpack.c.l.bf16 %v1380
        %v1426 = vunpack.c.l.bf16 %v1381
        %v1427 = vunpack.c.l.bf16 %v1382
        %v1428 = vunpack.c.l.bf16 %v1383
        %v1429 = vunpack.c.l.bf16 %v1384
        %v1430 = vunpack.c.l.bf16 %v1385
        %v1431 = vunpack.c.l.bf16 %v1386
        %1432 = vmatpush.msra.mxu0 %v1341
        %1433 = vmatpush.msra.mxu0 %v1340
        %1434 = vmatpush.msra.mxu0 %v1339
        %1435 = vmatpush.msra.mxu0 %v1338
        %1436 = vmatpush.msra.mxu0 %v1337
        %1437 = vmatpush.msra.mxu0 %v1336
        %1438 = vmatpush.msra.mxu0 %v1335
        %1439 = vmatpush.msra.mxu0 %v1334
        %1440 = vmatpush.msra.mxu0 %v1333
        %1441 = vmatpush.msra.mxu0 %v1332
        %1442 = vmatpush.msra.mxu0 %v1331
        %1443 = vmatpush.msra.mxu0 %v1330
        %1444 = vmatpush.msra.mxu0 %v1329
        %1445 = vmatpush.msra.mxu0 %v1328
        %1446 = vmatpush.msra.mxu0 %v1327
        %1447 = vmatpush.msra.mxu0 %v1326
        %1448 = vmatmul.f32.gmra.mxu0 %v1387
        %v1449 = vpop.f32.mrf.mxu0
        %v1450 = vadd.f32 0.0, %v1449
        %1451 = vmatmul.f32.gmra.mxu0 %v1388
        %v1452 = vpop.f32.mrf.mxu0
        %v1453 = vadd.f32 0.0, %v1452
        %1454 = vmatmul.f32.gmra.mxu0 %v1389
        %v1455 = vpop.f32.mrf.mxu0
        %v1456 = vadd.f32 0.0, %v1455
        %1457 = vmatmul.f32.gmra.mxu0 %v1390
        %v1458 = vpop.f32.mrf.mxu0
        %v1459 = vadd.f32 0.0, %v1458
        %1460 = vmatmul.f32.gmra.mxu0 %v1391
        %v1461 = vpop.f32.mrf.mxu0
        %v1462 = vadd.f32 0.0, %v1461
        %1463 = vmatmul.f32.gmra.mxu0 %v1392
        %v1464 = vpop.f32.mrf.mxu0
        %v1465 = vadd.f32 0.0, %v1464
        %1466 = vmatmul.f32.gmra.mxu0 %v1393
        %v1467 = vpop.f32.mrf.mxu0
        %v1468 = vadd.f32 0.0, %v1467
        %1469 = vmatmul.f32.gmra.mxu0 %v1394
        %v1470 = vpop.f32.mrf.mxu0
        %v1471 = vadd.f32 0.0, %v1470
        %1472 = vmatmul.f32.gmra.mxu0 %v1395
        %v1473 = vpop.f32.mrf.mxu0
        %v1474 = vadd.f32 0.0, %v1473
        %1475 = vmatmul.f32.gmra.mxu0 %v1396
        %v1476 = vpop.f32.mrf.mxu0
        %v1477 = vadd.f32 0.0, %v1476
        %1478 = vmatmul.f32.gmra.mxu0 %v1397
        %v1479 = vpop.f32.mrf.mxu0
        %v1480 = vadd.f32 0.0, %v1479
        %1481 = vmatmul.f32.gmra.mxu0 %v1398
        %v1482 = vpop.f32.mrf.mxu0
        %v1483 = vadd.f32 0.0, %v1482
        %1484 = vmatmul.f32.gmra.mxu0 %v1399
        %v1485 = vpop.f32.mrf.mxu0
        %v1486 = vadd.f32 0.0, %v1485
        %1487 = vmatmul.f32.gmra.mxu0 %v1400
        %v1488 = vpop.f32.mrf.mxu0
        %v1489 = vadd.f32 0.0, %v1488
        %1490 = vmatmul.f32.gmra.mxu0 %v1401
        %v1491 = vpop.f32.mrf.mxu0
        %v1492 = vadd.f32 0.0, %v1491
        %1493 = vmatmul.f32.gmra.mxu0 %v1402
        %v1494 = vpop.f32.mrf.mxu0
        %v1495 = vadd.f32 0.0, %v1494
        %1496 = vmatmul.f32.gmra.mxu0 %v1403
        %v1497 = vpop.f32.mrf.mxu0
        %v1498 = vadd.f32 0.0, %v1497
        %1499 = vmatmul.f32.gmra.mxu0 %v1404
        %v1500 = vpop.f32.mrf.mxu0
        %v1501 = vadd.f32 0.0, %v1500
        %1502 = vmatmul.f32.gmra.mxu0 %v1405
        %v1503 = vpop.f32.mrf.mxu0
        %v1504 = vadd.f32 0.0, %v1503
        %1505 = vmatmul.f32.gmra.mxu0 %v1406
        %v1506 = vpop.f32.mrf.mxu0
        %v1507 = vadd.f32 0.0, %v1506
        %1508 = vmatmul.f32.gmra.mxu0 %v1407
        %v1509 = vpop.f32.mrf.mxu0
        %v1510 = vadd.f32 0.0, %v1509
        %1511 = vmatmul.f32.gmra.mxu0 %v1408
        %v1512 = vpop.f32.mrf.mxu0
        %v1513 = vadd.f32 0.0, %v1512
        %1514 = vmatmul.f32.gmra.mxu0 %v1409
        %v1515 = vpop.f32.mrf.mxu0
        %v1516 = vadd.f32 0.0, %v1515
        %1517 = vmatmul.f32.gmra.mxu0 %v1410
        %v1518 = vpop.f32.mrf.mxu0
        %v1519 = vadd.f32 0.0, %v1518
        %1520 = vmatmul.f32.gmra.mxu0 %v1411
        %v1521 = vpop.f32.mrf.mxu0
        %v1522 = vadd.f32 0.0, %v1521
        %1523 = vmatmul.f32.gmra.mxu0 %v1412
        %v1524 = vpop.f32.mrf.mxu0
        %v1525 = vadd.f32 0.0, %v1524
        %1526 = vmatmul.f32.gmra.mxu0 %v1413
        %v1527 = vpop.f32.mrf.mxu0
        %v1528 = vadd.f32 0.0, %v1527
        %1529 = vmatmul.f32.gmra.mxu0 %v1414
        %v1530 = vpop.f32.mrf.mxu0
        %v1531 = vadd.f32 0.0, %v1530
        %1532 = vmatmul.f32.gmra.mxu0 %v1415
        %v1533 = vpop.f32.mrf.mxu0
        %v1534 = vadd.f32 0.0, %v1533
        %1535 = vmatmul.f32.gmra.mxu0 %v1416
        %v1536 = vpop.f32.mrf.mxu0
        %v1537 = vadd.f32 0.0, %v1536
        %1538 = vmatmul.f32.gmra.mxu0 %v1417
        %v1539 = vpop.f32.mrf.mxu0
        %v1540 = vadd.f32 0.0, %v1539
        %1541 = vmatmul.f32.gmra.mxu0 %v1418
        %v1542 = vpop.f32.mrf.mxu0
        %v1543 = vadd.f32 0.0, %v1542
        %1544 = vmatmul.f32.gmra.mxu0 %v1419
        %v1545 = vpop.f32.mrf.mxu0
        %v1546 = vadd.f32 0.0, %v1545
        %1547 = vmatmul.f32.gmra.mxu0 %v1420
        %v1548 = vpop.f32.mrf.mxu0
        %v1549 = vadd.f32 0.0, %v1548
        %1550 = vmatmul.f32.gmra.mxu0 %v1421
        %v1551 = vpop.f32.mrf.mxu0
        %v1552 = vadd.f32 0.0, %v1551
        %1553 = vmatmul.f32.gmra.mxu0 %v1422
        %v1554 = vpop.f32.mrf.mxu0
        %v1555 = vadd.f32 0.0, %v1554
        %1556 = vmatmul.f32.gmra.mxu0 %v1423
        %v1557 = vpop.f32.mrf.mxu0
        %v1558 = vadd.f32 0.0, %v1557
        %1559 = vmatmul.f32.gmra.mxu0 %v1424
        %v1560 = vpop.f32.mrf.mxu0
        %v1561 = vadd.f32 0.0, %v1560
        %1562 = vmatmul.f32.gmra.mxu0 %v1425
        %v1563 = vpop.f32.mrf.mxu0
        %v1564 = vadd.f32 0.0, %v1563
        %1565 = vmatmul.f32.gmra.mxu0 %v1426
        %v1566 = vpop.f32.mrf.mxu0
        %v1567 = vadd.f32 0.0, %v1566
        %1568 = vmatmul.f32.gmra.mxu0 %v1427
        %v1569 = vpop.f32.mrf.mxu0
        %v1570 = vadd.f32 0.0, %v1569
        %1571 = vmatmul.f32.gmra.mxu0 %v1428
        %v1572 = vpop.f32.mrf.mxu0
        %v1573 = vadd.f32 0.0, %v1572
        %1574 = vmatmul.f32.gmra.mxu0 %v1429
        %v1575 = vpop.f32.mrf.mxu0
        %v1576 = vadd.f32 0.0, %v1575
        %1577 = vmatmul.f32.gmra.mxu0 %v1430
        %v1578 = vpop.f32.mrf.mxu0
        %v1579 = vadd.f32 0.0, %v1578
        %1580 = vmatmul.f32.gmra.mxu0 %v1431
        %v1581 = vpop.f32.mrf.mxu0
        %v1582 = vadd.f32 0.0, %v1581
        %1583 = vdwg.mxu0
        %v1584 = vld [vmem:[%s624] sm:$0xff]
        %v1585 = vld [vmem:[%s624 + $0x8] sm:$0xff]
        %v1586 = vld [vmem:[%s624 + $0x10] sm:$0xff]
        %v1587 = vld [vmem:[%s624 + $0x18] sm:$0xff]
        %s1588 = scalar_lea.vmem %s624, 32
        %v1589 = vld [vmem:[%s1588] sm:$0xff]
        %v1590 = vld [vmem:[%s1588 + $0x8] sm:$0xff]
        %v1591 = vld [vmem:[%s1588 + $0x10] sm:$0xff]
        %v1592 = vld [vmem:[%s1588 + $0x18] sm:$0xff]
        %v1594 = vsel %vm775, %v1465, 0
        %v1597 = vsel %vm775, %v1468, 0
        %v1600 = vsel %vm775, %v1471, 0
        %v1603 = vsel %vm775, %v1474, 0
        %v1606 = vsel %vm775, %v1477, 0
        %1608 = vmatpush.msra.mxu0 0.0
        %1609 = vmatpush.msra.mxu0 0.0
        %1610 = vmatpush.msra.mxu0 0.0
        %1611 = vmatpush.msra.mxu0 0.0
        %1612 = vmatpush.msra.mxu0 0.0
        %1613 = vmatpush.msra.mxu0 0.0
        %1614 = vmatpush.msra.mxu0 0.0
        %1615 = vmatpush.msra.mxu0 0.0
        %1616 = vmatpush.msra.mxu0 0.0
        %1617 = vmatpush.msra.mxu0 0.0
        %1618 = vmatpush.msra.mxu0 0.0
        %1619 = vmatpush.msra.mxu0 0.0
        %1620 = vmatpush.msra.mxu0 %v1592
        %1621 = vmatpush.msra.mxu0 %v1591
        %1622 = vmatpush.msra.mxu0 %v1590
        %1623 = vmatpush.msra.mxu0 %v1589
        %1624 = vmatmul.f32.gmra.mxu0 %v1594
        %v1625 = vpop.f32.mrf.mxu0
        %v1626 = vadd.f32 0.0, %v1625
        %1627 = vmatmul.f32.gmra.mxu0 %v1597
        %v1628 = vpop.f32.mrf.mxu0
        %v1629 = vadd.f32 0.0, %v1628
        %1630 = vmatmul.f32.gmra.mxu0 %v1600
        %v1631 = vpop.f32.mrf.mxu0
        %v1632 = vadd.f32 0.0, %v1631
        %1633 = vmatmul.f32.gmra.mxu0 %v1603
        %v1634 = vpop.f32.mrf.mxu0
        %v1635 = vadd.f32 0.0, %v1634
        %1636 = vmatmul.f32.gmra.mxu0 %v1606
        %v1637 = vpop.f32.mrf.mxu0
        %v1638 = vadd.f32 0.0, %v1637
        %1639 = vdwg.mxu0
        %v1641 = vsel %vm775, %v1450, 0
        %v1644 = vsel %vm775, %v1453, 0
        %v1647 = vsel %vm775, %v1456, 0
        %v1650 = vsel %vm775, %v1459, 0
        %v1653 = vsel %vm775, %v1462, 0
        %1655 = vmatpush.msra.mxu0 0.0
        %1656 = vmatpush.msra.mxu0 0.0
        %1657 = vmatpush.msra.mxu0 0.0
        %1658 = vmatpush.msra.mxu0 0.0
        %1659 = vmatpush.msra.mxu0 0.0
        %1660 = vmatpush.msra.mxu0 0.0
        %1661 = vmatpush.msra.mxu0 0.0
        %1662 = vmatpush.msra.mxu0 0.0
        %1663 = vmatpush.msra.mxu0 0.0
        %1664 = vmatpush.msra.mxu0 0.0
        %1665 = vmatpush.msra.mxu0 0.0
        %1666 = vmatpush.msra.mxu0 0.0
        %1667 = vmatpush.msra.mxu0 %v1587
        %1668 = vmatpush.msra.mxu0 %v1586
        %1669 = vmatpush.msra.mxu0 %v1585
        %1670 = vmatpush.msra.mxu0 %v1584
        %1671 = vmatmul.f32.gmra.mxu0 %v1641
        %v1672 = vpop.f32.mrf.mxu0
        %v1673 = vadd.f32 %v1626, %v1672
        %1674 = vmatmul.f32.gmra.mxu0 %v1644
        %v1675 = vpop.f32.mrf.mxu0
        %v1676 = vadd.f32 %v1629, %v1675
        %1677 = vmatmul.f32.gmra.mxu0 %v1647
        %v1678 = vpop.f32.mrf.mxu0
        %v1679 = vadd.f32 %v1632, %v1678
        %1680 = vmatmul.f32.gmra.mxu0 %v1650
        %v1681 = vpop.f32.mrf.mxu0
        %v1682 = vadd.f32 %v1635, %v1681
        %1683 = vmatmul.f32.gmra.mxu0 %v1653
        %v1684 = vpop.f32.mrf.mxu0
        %v1685 = vadd.f32 %v1638, %v1684
        %1686 = vdwg.mxu0
        %s1687 = scalar_lea.vmem %s624, 64
        %v1688 = vld [vmem:[%s1687] sm:$0xff]
        %v1689 = vld [vmem:[%s1687 + $0x8] sm:$0xff]
        %v1690 = vld [vmem:[%s1687 + $0x10] sm:$0xff]
        %v1691 = vld [vmem:[%s1687 + $0x18] sm:$0xff]
        %v1693 = vsel %vm775, %v1480, 0
        %v1696 = vsel %vm775, %v1483, 0
        %v1699 = vsel %vm775, %v1486, 0
        %v1702 = vsel %vm775, %v1489, 0
        %v1705 = vsel %vm775, %v1492, 0
        %1707 = vmatpush.msra.mxu0 0.0
        %1708 = vmatpush.msra.mxu0 0.0
        %1709 = vmatpush.msra.mxu0 0.0
        %1710 = vmatpush.msra.mxu0 0.0
        %1711 = vmatpush.msra.mxu0 0.0
        %1712 = vmatpush.msra.mxu0 0.0
        %1713 = vmatpush.msra.mxu0 0.0
        %1714 = vmatpush.msra.mxu0 0.0
        %1715 = vmatpush.msra.mxu0 0.0
        %1716 = vmatpush.msra.mxu0 0.0
        %1717 = vmatpush.msra.mxu0 0.0
        %1718 = vmatpush.msra.mxu0 0.0
        %1719 = vmatpush.msra.mxu0 %v1691
        %1720 = vmatpush.msra.mxu0 %v1690
        %1721 = vmatpush.msra.mxu0 %v1689
        %1722 = vmatpush.msra.mxu0 %v1688
        %1723 = vmatmul.f32.gmra.mxu0 %v1693
        %v1724 = vpop.f32.mrf.mxu0
        %v1725 = vadd.f32 0.0, %v1724
        %1726 = vmatmul.f32.gmra.mxu0 %v1696
        %v1727 = vpop.f32.mrf.mxu0
        %v1728 = vadd.f32 0.0, %v1727
        %1729 = vmatmul.f32.gmra.mxu0 %v1699
        %v1730 = vpop.f32.mrf.mxu0
        %v1731 = vadd.f32 0.0, %v1730
        %1732 = vmatmul.f32.gmra.mxu0 %v1702
        %v1733 = vpop.f32.mrf.mxu0
        %v1734 = vadd.f32 0.0, %v1733
        %1735 = vmatmul.f32.gmra.mxu0 %v1705
        %v1736 = vpop.f32.mrf.mxu0
        %v1737 = vadd.f32 0.0, %v1736
        %1738 = vdwg.mxu0
        %v1739 = vadd.f32 %v1673, %v1725
        %v1740 = vadd.f32 %v1676, %v1728
        %v1741 = vadd.f32 %v1679, %v1731
        %v1742 = vadd.f32 %v1682, %v1734
        %v1743 = vadd.f32 %v1685, %v1737
        %s1744 = scalar_lea.vmem %s624, 96
        %v1745 = vld [vmem:[%s1744] sm:$0xff]
        %v1746 = vld [vmem:[%s1744 + $0x8] sm:$0xff]
        %v1747 = vld [vmem:[%s1744 + $0x10] sm:$0xff]
        %v1748 = vld [vmem:[%s1744 + $0x18] sm:$0xff]
        %v1750 = vsel %vm775, %v1495, 0
        %v1753 = vsel %vm775, %v1498, 0
        %v1756 = vsel %vm775, %v1501, 0
        %v1759 = vsel %vm775, %v1504, 0
        %v1762 = vsel %vm775, %v1507, 0
        %1764 = vmatpush.msra.mxu0 0.0
        %1765 = vmatpush.msra.mxu0 0.0
        %1766 = vmatpush.msra.mxu0 0.0
        %1767 = vmatpush.msra.mxu0 0.0
        %1768 = vmatpush.msra.mxu0 0.0
        %1769 = vmatpush.msra.mxu0 0.0
        %1770 = vmatpush.msra.mxu0 0.0
        %1771 = vmatpush.msra.mxu0 0.0
        %1772 = vmatpush.msra.mxu0 0.0
        %1773 = vmatpush.msra.mxu0 0.0
        %1774 = vmatpush.msra.mxu0 0.0
        %1775 = vmatpush.msra.mxu0 0.0
        %1776 = vmatpush.msra.mxu0 %v1748
        %1777 = vmatpush.msra.mxu0 %v1747
        %1778 = vmatpush.msra.mxu0 %v1746
        %1779 = vmatpush.msra.mxu0 %v1745
        %1780 = vmatmul.f32.gmra.mxu0 %v1750
        %v1781 = vpop.f32.mrf.mxu0
        %v1782 = vadd.f32 0.0, %v1781
        %1783 = vmatmul.f32.gmra.mxu0 %v1753
        %v1784 = vpop.f32.mrf.mxu0
        %v1785 = vadd.f32 0.0, %v1784
        %1786 = vmatmul.f32.gmra.mxu0 %v1756
        %v1787 = vpop.f32.mrf.mxu0
        %v1788 = vadd.f32 0.0, %v1787
        %1789 = vmatmul.f32.gmra.mxu0 %v1759
        %v1790 = vpop.f32.mrf.mxu0
        %v1791 = vadd.f32 0.0, %v1790
        %1792 = vmatmul.f32.gmra.mxu0 %v1762
        %v1793 = vpop.f32.mrf.mxu0
        %v1794 = vadd.f32 0.0, %v1793
        %1795 = vdwg.mxu0
        %v1796 = vadd.f32 %v1739, %v1782
        %v1797 = vadd.f32 %v1740, %v1785
        %v1798 = vadd.f32 %v1741, %v1788
        %v1799 = vadd.f32 %v1742, %v1791
        %v1800 = vadd.f32 %v1743, %v1794
        %s1801 = scalar_lea.vmem %s624, 128
        %v1802 = vld [vmem:[%s1801] sm:$0xff]
        %v1803 = vld [vmem:[%s1801 + $0x8] sm:$0xff]
        %v1804 = vld [vmem:[%s1801 + $0x10] sm:$0xff]
        %v1805 = vld [vmem:[%s1801 + $0x18] sm:$0xff]
        %v1807 = vsel %vm775, %v1510, 0
        %v1810 = vsel %vm775, %v1513, 0
        %v1813 = vsel %vm775, %v1516, 0
        %v1816 = vsel %vm775, %v1519, 0
        %v1819 = vsel %vm775, %v1522, 0
        %1821 = vmatpush.msra.mxu0 0.0
        %1822 = vmatpush.msra.mxu0 0.0
        %1823 = vmatpush.msra.mxu0 0.0
        %1824 = vmatpush.msra.mxu0 0.0
        %1825 = vmatpush.msra.mxu0 0.0
        %1826 = vmatpush.msra.mxu0 0.0
        %1827 = vmatpush.msra.mxu0 0.0
        %1828 = vmatpush.msra.mxu0 0.0
        %1829 = vmatpush.msra.mxu0 0.0
        %1830 = vmatpush.msra.mxu0 0.0
        %1831 = vmatpush.msra.mxu0 0.0
        %1832 = vmatpush.msra.mxu0 0.0
        %1833 = vmatpush.msra.mxu0 %v1805
        %1834 = vmatpush.msra.mxu0 %v1804
        %1835 = vmatpush.msra.mxu0 %v1803
        %1836 = vmatpush.msra.mxu0 %v1802
        %1837 = vmatmul.f32.gmra.mxu0 %v1807
        %v1838 = vpop.f32.mrf.mxu0
        %v1839 = vadd.f32 0.0, %v1838
        %1840 = vmatmul.f32.gmra.mxu0 %v1810
        %v1841 = vpop.f32.mrf.mxu0
        %v1842 = vadd.f32 0.0, %v1841
        %1843 = vmatmul.f32.gmra.mxu0 %v1813
        %v1844 = vpop.f32.mrf.mxu0
        %v1845 = vadd.f32 0.0, %v1844
        %1846 = vmatmul.f32.gmra.mxu0 %v1816
        %v1847 = vpop.f32.mrf.mxu0
        %v1848 = vadd.f32 0.0, %v1847
        %1849 = vmatmul.f32.gmra.mxu0 %v1819
        %v1850 = vpop.f32.mrf.mxu0
        %v1851 = vadd.f32 0.0, %v1850
        %1852 = vdwg.mxu0
        %v1853 = vadd.f32 %v1796, %v1839
        %v1854 = vadd.f32 %v1797, %v1842
        %v1855 = vadd.f32 %v1798, %v1845
        %v1856 = vadd.f32 %v1799, %v1848
        %v1857 = vadd.f32 %v1800, %v1851
        %s1858 = scalar_lea.vmem %s624, 160
        %v1859 = vld [vmem:[%s1858] sm:$0xff]
        %v1860 = vld [vmem:[%s1858 + $0x8] sm:$0xff]
        %v1861 = vld [vmem:[%s1858 + $0x10] sm:$0xff]
        %v1862 = vld [vmem:[%s1858 + $0x18] sm:$0xff]
        %v1864 = vsel %vm775, %v1525, 0
        %v1867 = vsel %vm775, %v1528, 0
        %v1870 = vsel %vm775, %v1531, 0
        %v1873 = vsel %vm775, %v1534, 0
        %v1876 = vsel %vm775, %v1537, 0
        %1878 = vmatpush.msra.mxu0 0.0
        %1879 = vmatpush.msra.mxu0 0.0
        %1880 = vmatpush.msra.mxu0 0.0
        %1881 = vmatpush.msra.mxu0 0.0
        %1882 = vmatpush.msra.mxu0 0.0
        %1883 = vmatpush.msra.mxu0 0.0
        %1884 = vmatpush.msra.mxu0 0.0
        %1885 = vmatpush.msra.mxu0 0.0
        %1886 = vmatpush.msra.mxu0 0.0
        %1887 = vmatpush.msra.mxu0 0.0
        %1888 = vmatpush.msra.mxu0 0.0
        %1889 = vmatpush.msra.mxu0 0.0
        %1890 = vmatpush.msra.mxu0 %v1862
        %1891 = vmatpush.msra.mxu0 %v1861
        %1892 = vmatpush.msra.mxu0 %v1860
        %1893 = vmatpush.msra.mxu0 %v1859
        %1894 = vmatmul.f32.gmra.mxu0 %v1864
        %v1895 = vpop.f32.mrf.mxu0
        %v1896 = vadd.f32 0.0, %v1895
        %1897 = vmatmul.f32.gmra.mxu0 %v1867
        %v1898 = vpop.f32.mrf.mxu0
        %v1899 = vadd.f32 0.0, %v1898
        %1900 = vmatmul.f32.gmra.mxu0 %v1870
        %v1901 = vpop.f32.mrf.mxu0
        %v1902 = vadd.f32 0.0, %v1901
        %1903 = vmatmul.f32.gmra.mxu0 %v1873
        %v1904 = vpop.f32.mrf.mxu0
        %v1905 = vadd.f32 0.0, %v1904
        %1906 = vmatmul.f32.gmra.mxu0 %v1876
        %v1907 = vpop.f32.mrf.mxu0
        %v1908 = vadd.f32 0.0, %v1907
        %1909 = vdwg.mxu0
        %v1910 = vadd.f32 %v1853, %v1896
        %v1911 = vadd.f32 %v1854, %v1899
        %v1912 = vadd.f32 %v1855, %v1902
        %v1913 = vadd.f32 %v1856, %v1905
        %v1914 = vadd.f32 %v1857, %v1908
        %s1915 = scalar_lea.vmem %s624, 192
        %v1916 = vld [vmem:[%s1915] sm:$0xff]
        %v1917 = vld [vmem:[%s1915 + $0x8] sm:$0xff]
        %v1918 = vld [vmem:[%s1915 + $0x10] sm:$0xff]
        %v1919 = vld [vmem:[%s1915 + $0x18] sm:$0xff]
        %v1921 = vsel %vm775, %v1540, 0
        %v1924 = vsel %vm775, %v1543, 0
        %v1927 = vsel %vm775, %v1546, 0
        %v1930 = vsel %vm775, %v1549, 0
        %v1933 = vsel %vm775, %v1552, 0
        %1935 = vmatpush.msra.mxu0 0.0
        %1936 = vmatpush.msra.mxu0 0.0
        %1937 = vmatpush.msra.mxu0 0.0
        %1938 = vmatpush.msra.mxu0 0.0
        %1939 = vmatpush.msra.mxu0 0.0
        %1940 = vmatpush.msra.mxu0 0.0
        %1941 = vmatpush.msra.mxu0 0.0
        %1942 = vmatpush.msra.mxu0 0.0
        %1943 = vmatpush.msra.mxu0 0.0
        %1944 = vmatpush.msra.mxu0 0.0
        %1945 = vmatpush.msra.mxu0 0.0
        %1946 = vmatpush.msra.mxu0 0.0
        %1947 = vmatpush.msra.mxu0 %v1919
        %1948 = vmatpush.msra.mxu0 %v1918
        %1949 = vmatpush.msra.mxu0 %v1917
        %1950 = vmatpush.msra.mxu0 %v1916
        %1951 = vmatmul.f32.gmra.mxu0 %v1921
        %v1952 = vpop.f32.mrf.mxu0
        %v1953 = vadd.f32 0.0, %v1952
        %1954 = vmatmul.f32.gmra.mxu0 %v1924
        %v1955 = vpop.f32.mrf.mxu0
        %v1956 = vadd.f32 0.0, %v1955
        %1957 = vmatmul.f32.gmra.mxu0 %v1927
        %v1958 = vpop.f32.mrf.mxu0
        %v1959 = vadd.f32 0.0, %v1958
        %1960 = vmatmul.f32.gmra.mxu0 %v1930
        %v1961 = vpop.f32.mrf.mxu0
        %v1962 = vadd.f32 0.0, %v1961
        %1963 = vmatmul.f32.gmra.mxu0 %v1933
        %v1964 = vpop.f32.mrf.mxu0
        %v1965 = vadd.f32 0.0, %v1964
        %1966 = vdwg.mxu0
        %v1967 = vadd.f32 %v1910, %v1953
        %v1968 = vadd.f32 %v1911, %v1956
        %v1969 = vadd.f32 %v1912, %v1959
        %v1970 = vadd.f32 %v1913, %v1962
        %v1971 = vadd.f32 %v1914, %v1965
        %s1972 = scalar_lea.vmem %s624, 224
        %v1973 = vld [vmem:[%s1972] sm:$0xff]
        %v1974 = vld [vmem:[%s1972 + $0x8] sm:$0xff]
        %v1975 = vld [vmem:[%s1972 + $0x10] sm:$0xff]
        %v1976 = vld [vmem:[%s1972 + $0x18] sm:$0xff]
        %v1978 = vsel %vm775, %v1555, 0
        %v1981 = vsel %vm775, %v1558, 0
        %v1984 = vsel %vm775, %v1561, 0
        %v1987 = vsel %vm775, %v1564, 0
        %v1990 = vsel %vm775, %v1567, 0
        %1992 = vmatpush.msra.mxu0 0.0
        %1993 = vmatpush.msra.mxu0 0.0
        %1994 = vmatpush.msra.mxu0 0.0
        %1995 = vmatpush.msra.mxu0 0.0
        %1996 = vmatpush.msra.mxu0 0.0
        %1997 = vmatpush.msra.mxu0 0.0
        %1998 = vmatpush.msra.mxu0 0.0
        %1999 = vmatpush.msra.mxu0 0.0
        %2000 = vmatpush.msra.mxu0 0.0
        %2001 = vmatpush.msra.mxu0 0.0
        %2002 = vmatpush.msra.mxu0 0.0
        %2003 = vmatpush.msra.mxu0 0.0
        %2004 = vmatpush.msra.mxu0 %v1976
        %2005 = vmatpush.msra.mxu0 %v1975
        %2006 = vmatpush.msra.mxu0 %v1974
        %2007 = vmatpush.msra.mxu0 %v1973
        %2008 = vmatmul.f32.gmra.mxu0 %v1978
        %v2009 = vpop.f32.mrf.mxu0
        %v2010 = vadd.f32 0.0, %v2009
        %2011 = vmatmul.f32.gmra.mxu0 %v1981
        %v2012 = vpop.f32.mrf.mxu0
        %v2013 = vadd.f32 0.0, %v2012
        %2014 = vmatmul.f32.gmra.mxu0 %v1984
        %v2015 = vpop.f32.mrf.mxu0
        %v2016 = vadd.f32 0.0, %v2015
        %2017 = vmatmul.f32.gmra.mxu0 %v1987
        %v2018 = vpop.f32.mrf.mxu0
        %v2019 = vadd.f32 0.0, %v2018
        %2020 = vmatmul.f32.gmra.mxu0 %v1990
        %v2021 = vpop.f32.mrf.mxu0
        %v2022 = vadd.f32 0.0, %v2021
        %2023 = vdwg.mxu0
        %v2024 = vadd.f32 %v1967, %v2010
        %v2025 = vadd.f32 %v1968, %v2013
        %v2026 = vadd.f32 %v1969, %v2016
        %v2027 = vadd.f32 %v1970, %v2019
        %v2028 = vadd.f32 %v1971, %v2022
        %s2029 = scalar_lea.vmem %s624, 256
        %v2030 = vld [vmem:[%s2029] sm:$0xff]
        %v2031 = vld [vmem:[%s2029 + $0x8] sm:$0xff]
        %v2032 = vld [vmem:[%s2029 + $0x10] sm:$0xff]
        %v2033 = vld [vmem:[%s2029 + $0x18] sm:$0xff]
        %v2035 = vsel %vm775, %v1570, 0
        %v2038 = vsel %vm775, %v1573, 0
        %v2041 = vsel %vm775, %v1576, 0
        %v2044 = vsel %vm775, %v1579, 0
        %v2047 = vsel %vm775, %v1582, 0
        %2049 = vmatpush.msra.mxu0 0.0
        %2050 = vmatpush.msra.mxu0 0.0
        %2051 = vmatpush.msra.mxu0 0.0
        %2052 = vmatpush.msra.mxu0 0.0
        %2053 = vmatpush.msra.mxu0 0.0
        %2054 = vmatpush.msra.mxu0 0.0
        %2055 = vmatpush.msra.mxu0 0.0
        %2056 = vmatpush.msra.mxu0 0.0
        %2057 = vmatpush.msra.mxu0 0.0
        %2058 = vmatpush.msra.mxu0 0.0
        %2059 = vmatpush.msra.mxu0 0.0
        %2060 = vmatpush.msra.mxu0 0.0
        %2061 = vmatpush.msra.mxu0 %v2033
        %2062 = vmatpush.msra.mxu0 %v2032
        %2063 = vmatpush.msra.mxu0 %v2031
        %2064 = vmatpush.msra.mxu0 %v2030
        %2065 = vmatmul.f32.gmra.mxu0 %v2035
        %v2066 = vpop.f32.mrf.mxu0
        %v2067 = vadd.f32 0.0, %v2066
        %2068 = vmatmul.f32.gmra.mxu0 %v2038
        %v2069 = vpop.f32.mrf.mxu0
        %v2070 = vadd.f32 0.0, %v2069
        %2071 = vmatmul.f32.gmra.mxu0 %v2041
        %v2072 = vpop.f32.mrf.mxu0
        %v2073 = vadd.f32 0.0, %v2072
        %2074 = vmatmul.f32.gmra.mxu0 %v2044
        %v2075 = vpop.f32.mrf.mxu0
        %v2076 = vadd.f32 0.0, %v2075
        %2077 = vmatmul.f32.gmra.mxu0 %v2047
        %v2078 = vpop.f32.mrf.mxu0
        %v2079 = vadd.f32 0.0, %v2078
        %2080 = vdwg.mxu0
        %v2081 = vadd.f32 %v2024, %v2067
        %v2082 = vadd.f32 %v2025, %v2070
        %v2083 = vadd.f32 %v2026, %v2073
        %v2084 = vadd.f32 %v2027, %v2076
        %v2085 = vadd.f32 %v2028, %v2079
        %v2086 = vmax.f32 %v2081, 0.0
        %v2087 = vmax.f32 %v2082, 0.0
        %v2088 = vmax.f32 %v2083, 0.0
        %v2089 = vmax.f32 %v2084, 0.0
        %v2090 = vmax.f32 %v2085, 0.0
        %v2091 = vld [vmem:[%s500] sm:$0xf]
        %v2092 = vld [vmem:[%s500 + $0x4] sm:$0xf]
        %v2093 = vld [vmem:[%s500 + $0x8] sm:$0xf]
        %v2094 = vld [vmem:[%s500 + $0xc] sm:$0xf]
        %v2095 = vld [vmem:[%s500 + $0x10] sm:$0xf]
        %v2096 = vld [vmem:[%s500 + $0x14] sm:$0xf]
        %v2097 = vld [vmem:[%s500 + $0x18] sm:$0xf]
        %v2098 = vld [vmem:[%s500 + $0x1c] sm:$0xf]
        %v2099 = vld [vmem:[%s500 + $0x20] sm:$0xf]
        %v2100 = vld [vmem:[%s500 + $0x24] sm:$0xf]
        %v2101 = vld [vmem:[%s500 + $0x28] sm:$0xf]
        %v2102 = vld [vmem:[%s500 + $0x2c] sm:$0xf]
        %v2103 = vld [vmem:[%s500 + $0x30] sm:$0xf]
        %v2104 = vld [vmem:[%s500 + $0x34] sm:$0xf]
        %v2105 = vld [vmem:[%s500 + $0x38] sm:$0xf]
        %v2106 = vld [vmem:[%s500 + $0x3c] sm:$0xf]
        %v2107 = vld [vmem:[%s500 + $0x40] sm:$0xf]
        %v2108 = vld [vmem:[%s500 + $0x44] sm:$0xf]
        %v2109 = vld [vmem:[%s500 + $0x48] sm:$0xf]
        %v2110 = vld [vmem:[%s500 + $0x4c] sm:$0xf]
        %v2111 = vld [vmem:[%s500 + $0x50] sm:$0xf]
        %v2112 = vld [vmem:[%s500 + $0x54] sm:$0xf]
        %v2113 = vld [vmem:[%s500 + $0x58] sm:$0xf]
        %v2114 = vld [vmem:[%s500 + $0x5c] sm:$0xf]
        %v2115 = vld [vmem:[%s500 + $0x60] sm:$0xf]
        %v2116 = vld [vmem:[%s500 + $0x64] sm:$0xf]
        %v2117 = vld [vmem:[%s500 + $0x68] sm:$0xf]
        %v2118 = vld [vmem:[%s500 + $0x6c] sm:$0xf]
        %v2119 = vld [vmem:[%s500 + $0x70] sm:$0xf]
        %v2120 = vld [vmem:[%s500 + $0x74] sm:$0xf]
        %v2121 = vld [vmem:[%s500 + $0x78] sm:$0xf]
        %v2122 = vld [vmem:[%s500 + $0x7c] sm:$0xf]
        %v2123 = vld [vmem:[%s500 + $0x80] sm:$0xf]
        %v2124 = vld [vmem:[%s500 + $0x84] sm:$0xf]
        %v2125 = vld [vmem:[%s500 + $0x88] sm:$0xf]
        %v2126 = vld [vmem:[%s500 + $0x8c] sm:$0xf]
        %v2127 = vld [vmem:[%s500 + $0x90] sm:$0xf]
        %v2128 = vld [vmem:[%s500 + $0x94] sm:$0xf]
        %v2129 = vld [vmem:[%s500 + $0x98] sm:$0xf]
        %v2130 = vld [vmem:[%s500 + $0x9c] sm:$0xf]
        %v2131 = vld [vmem:[%s500 + $0xa0] sm:$0xf]
        %v2132 = vld [vmem:[%s500 + $0xa4] sm:$0xf]
        %v2133 = vld [vmem:[%s500 + $0xa8] sm:$0xf]
        %v2134 = vld [vmem:[%s500 + $0xac] sm:$0xf]
        %v2135 = vld [vmem:[%s500 + $0xb0] sm:$0xf]
        %v2136 = vld [vmem:[%s500 + $0xb4] sm:$0xf]
        %v2137 = vld [vmem:[%s500 + $0xb8] sm:$0xf]
        %v2138 = vld [vmem:[%s500 + $0xbc] sm:$0xf]
        %v2139 = vld [vmem:[%s500 + $0xc0] sm:$0xf]
        %v2140 = vld [vmem:[%s500 + $0xc4] sm:$0xf]
        %v2141 = vld [vmem:[%s500 + $0xc8] sm:$0xf]
        %v2142 = vld [vmem:[%s500 + $0xcc] sm:$0xf]
        %v2143 = vld [vmem:[%s500 + $0xd0] sm:$0xf]
        %v2144 = vld [vmem:[%s500 + $0xd4] sm:$0xf]
        %v2145 = vld [vmem:[%s500 + $0xd8] sm:$0xf]
        %v2146 = vld [vmem:[%s500 + $0xdc] sm:$0xf]
        %v2147 = vld [vmem:[%s500 + $0xe0] sm:$0xf]
        %v2148 = vld [vmem:[%s500 + $0xe4] sm:$0xf]
        %v2149 = vld [vmem:[%s500 + $0xe8] sm:$0xf]
        %v2150 = vld [vmem:[%s500 + $0xec] sm:$0xf]
        %v2151 = vld [vmem:[%s500 + $0xf0] sm:$0xf]
        %v2152 = vld [vmem:[%s500 + $0xf4] sm:$0xf]
        %v2153 = vld [vmem:[%s500 + $0xf8] sm:$0xf]
        %v2154 = vld [vmem:[%s500 + $0xfc] sm:$0xf]
        %v2155 = vld [vmem:[%s500 + $0x100] sm:$0xf]
        %v2156 = vld [vmem:[%s500 + $0x104] sm:$0xf]
        %v2157 = vld [vmem:[%s500 + $0x108] sm:$0xf]
        %v2158 = vld [vmem:[%s500 + $0x10c] sm:$0xf]
        %v2159 = vld [vmem:[%s500 + $0x110] sm:$0xf]
        %v2160 = vld [vmem:[%s500 + $0x114] sm:$0xf]
        %v2161 = vld [vmem:[%s500 + $0x118] sm:$0xf]
        %v2162 = vld [vmem:[%s500 + $0x11c] sm:$0xf]
        %v2163 = vld [vmem:[%s500 + $0x120] sm:$0xf]
        %v2164 = vld [vmem:[%s500 + $0x124] sm:$0xf]
        %v2165 = vld [vmem:[%s500 + $0x128] sm:$0xf]
        %v2166 = vld [vmem:[%s500 + $0x12c] sm:$0xf]
        %v2167 = vld [vmem:[%s500 + $0x130] sm:$0xf]
        %v2168 = vld [vmem:[%s500 + $0x134] sm:$0xf]
        %v2169 = vld [vmem:[%s500 + $0x138] sm:$0xf]
        %v2170 = vld [vmem:[%s500 + $0x13c] sm:$0xf]
        %v2171 = vld [vmem:[%s500 + $0x140] sm:$0xf]
        %v2172 = vld [vmem:[%s500 + $0x144] sm:$0xf]
        %v2173 = vld [vmem:[%s500 + $0x148] sm:$0xf]
        %v2174 = vld [vmem:[%s500 + $0x14c] sm:$0xf]
        %v2175 = vld [vmem:[%s500 + $0x150] sm:$0xf]
        %v2176 = vld [vmem:[%s500 + $0x154] sm:$0xf]
        %v2177 = vld [vmem:[%s500 + $0x158] sm:$0xf]
        %v2178 = vld [vmem:[%s500 + $0x15c] sm:$0xf]
        %v2179 = vld [vmem:[%s500 + $0x160] sm:$0xf]
        %v2180 = vld [vmem:[%s500 + $0x164] sm:$0xf]
        %v2181 = vld [vmem:[%s500 + $0x168] sm:$0xf]
        %v2182 = vld [vmem:[%s500 + $0x16c] sm:$0xf]
        %v2183 = vld [vmem:[%s500 + $0x170] sm:$0xf]
        %v2184 = vld [vmem:[%s500 + $0x174] sm:$0xf]
        %v2185 = vld [vmem:[%s500 + $0x178] sm:$0xf]
        %v2186 = vld [vmem:[%s500 + $0x17c] sm:$0xf]
        %v2187 = vld [vmem:[%s500 + $0x180] sm:$0xf]
        %v2188 = vld [vmem:[%s500 + $0x184] sm:$0xf]
        %v2189 = vld [vmem:[%s500 + $0x188] sm:$0xf]
        %v2190 = vld [vmem:[%s500 + $0x18c] sm:$0xf]
        %v2191 = vld [vmem:[%s500 + $0x190] sm:$0xf]
        %v2192 = vld [vmem:[%s500 + $0x194] sm:$0xf]
        %v2193 = vld [vmem:[%s500 + $0x198] sm:$0xf]
        %v2194 = vld [vmem:[%s500 + $0x19c] sm:$0xf]
        %v2195 = vld [vmem:[%s500 + $0x1a0] sm:$0xf]
        %v2196 = vld [vmem:[%s500 + $0x1a4] sm:$0xf]
        %v2197 = vld [vmem:[%s500 + $0x1a8] sm:$0xf]
        %v2198 = vld [vmem:[%s500 + $0x1ac] sm:$0xf]
        %v2199 = vld [vmem:[%s500 + $0x1b0] sm:$0xf]
        %v2200 = vld [vmem:[%s500 + $0x1b4] sm:$0xf]
        %v2201 = vld [vmem:[%s500 + $0x1b8] sm:$0xf]
        %v2202 = vld [vmem:[%s500 + $0x1bc] sm:$0xf]
        %v2203 = vld [vmem:[%s500 + $0x1c0] sm:$0xf]
        %v2204 = vld [vmem:[%s500 + $0x1c4] sm:$0xf]
        %v2205 = vld [vmem:[%s500 + $0x1c8] sm:$0xf]
        %v2206 = vld [vmem:[%s500 + $0x1cc] sm:$0xf]
        %v2207 = vld [vmem:[%s500 + $0x1d0] sm:$0xf]
        %v2208 = vld [vmem:[%s500 + $0x1d4] sm:$0xf]
        %v2209 = vld [vmem:[%s500 + $0x1d8] sm:$0xf]
        %v2210 = vld [vmem:[%s500 + $0x1dc] sm:$0xf]
        %v2211 = vld [vmem:[%s500 + $0x1e0] sm:$0xf]
        %v2212 = vld [vmem:[%s500 + $0x1e4] sm:$0xf]
        %v2213 = vld [vmem:[%s500 + $0x1e8] sm:$0xf]
        %v2214 = vld [vmem:[%s500 + $0x1ec] sm:$0xf]
        %v2215 = vld [vmem:[%s500 + $0x1f0] sm:$0xf]
        %v2216 = vld [vmem:[%s500 + $0x1f4] sm:$0xf]
        %v2217 = vld [vmem:[%s500 + $0x1f8] sm:$0xf]
        %v2218 = vld [vmem:[%s500 + $0x1fc] sm:$0xf]
        %v2219 = vld [vmem:[%s500 + $0x200] sm:$0xf]
        %v2220 = vld [vmem:[%s500 + $0x204] sm:$0xf]
        %v2221 = vld [vmem:[%s500 + $0x208] sm:$0xf]
        %v2222 = vld [vmem:[%s500 + $0x20c] sm:$0xf]
        %v2223 = vld [vmem:[%s500 + $0x210] sm:$0xf]
        %v2224 = vld [vmem:[%s500 + $0x214] sm:$0xf]
        %v2225 = vld [vmem:[%s500 + $0x218] sm:$0xf]
        %v2226 = vld [vmem:[%s500 + $0x21c] sm:$0xf]
        %v2227 = vld [vmem:[%s500 + $0x220] sm:$0xf]
        %v2228 = vld [vmem:[%s500 + $0x224] sm:$0xf]
        %v2229 = vld [vmem:[%s500 + $0x228] sm:$0xf]
        %v2230 = vld [vmem:[%s500 + $0x22c] sm:$0xf]
        %v2231 = vld [vmem:[%s500 + $0x230] sm:$0xf]
        %v2232 = vld [vmem:[%s500 + $0x234] sm:$0xf]
        %v2233 = vld [vmem:[%s500 + $0x238] sm:$0xf]
        %v2234 = vld [vmem:[%s500 + $0x23c] sm:$0xf]
        %v2235 = vld [vmem:[%s500 + $0x240] sm:$0xf]
        %v2236 = vld [vmem:[%s500 + $0x244] sm:$0xf]
        %v2237 = vld [vmem:[%s500 + $0x248] sm:$0xf]
        %v2238 = vld [vmem:[%s500 + $0x24c] sm:$0xf]
        %v2239 = vld [vmem:[%s500 + $0x250] sm:$0xf]
        %v2240 = vld [vmem:[%s500 + $0x254] sm:$0xf]
        %v2241 = vld [vmem:[%s500 + $0x258] sm:$0xf]
        %v2242 = vld [vmem:[%s500 + $0x25c] sm:$0xf]
        %v2243 = vld [vmem:[%s500 + $0x260] sm:$0xf]
        %v2244 = vld [vmem:[%s500 + $0x264] sm:$0xf]
        %v2245 = vld [vmem:[%s500 + $0x268] sm:$0xf]
        %v2246 = vld [vmem:[%s500 + $0x26c] sm:$0xf]
        %v2247 = vld [vmem:[%s500 + $0x270] sm:$0xf]
        %v2248 = vld [vmem:[%s500 + $0x274] sm:$0xf]
        %v2249 = vld [vmem:[%s500 + $0x278] sm:$0xf]
        %v2250 = vld [vmem:[%s500 + $0x27c] sm:$0xf]
        %v2251 = vld [vmem:[%s500 + $0x280] sm:$0xf]
        %v2252 = vld [vmem:[%s500 + $0x284] sm:$0xf]
        %v2253 = vld [vmem:[%s500 + $0x288] sm:$0xf]
        %v2254 = vld [vmem:[%s500 + $0x28c] sm:$0xf]
        %v2255 = vld [vmem:[%s500 + $0x290] sm:$0xf]
        %v2256 = vld [vmem:[%s500 + $0x294] sm:$0xf]
        %v2257 = vld [vmem:[%s500 + $0x298] sm:$0xf]
        %v2258 = vld [vmem:[%s500 + $0x29c] sm:$0xf]
        %v2259 = vld [vmem:[%s500 + $0x2a0] sm:$0xf]
        %v2260 = vld [vmem:[%s500 + $0x2a4] sm:$0xf]
        %v2261 = vld [vmem:[%s500 + $0x2a8] sm:$0xf]
        %v2262 = vld [vmem:[%s500 + $0x2ac] sm:$0xf]
        %v2263 = vld [vmem:[%s500 + $0x2b0] sm:$0xf]
        %v2264 = vld [vmem:[%s500 + $0x2b4] sm:$0xf]
        %v2265 = vld [vmem:[%s500 + $0x2b8] sm:$0xf]
        %v2266 = vld [vmem:[%s500 + $0x2bc] sm:$0xf]
        %v2267 = vld [vmem:[%s500 + $0x2c0] sm:$0xf]
        %v2268 = vld [vmem:[%s500 + $0x2c4] sm:$0xf]
        %v2269 = vld [vmem:[%s500 + $0x2c8] sm:$0xf]
        %v2270 = vld [vmem:[%s500 + $0x2cc] sm:$0xf]
        %v2271 = vld [vmem:[%s500 + $0x2d0] sm:$0xf]
        %v2272 = vld [vmem:[%s500 + $0x2d4] sm:$0xf]
        %v2273 = vld [vmem:[%s500 + $0x2d8] sm:$0xf]
        %v2274 = vld [vmem:[%s500 + $0x2dc] sm:$0xf]
        %v2275 = vld [vmem:[%s500 + $0x2e0] sm:$0xf]
        %v2276 = vld [vmem:[%s500 + $0x2e4] sm:$0xf]
        %v2277 = vld [vmem:[%s500 + $0x2e8] sm:$0xf]
        %v2278 = vld [vmem:[%s500 + $0x2ec] sm:$0xf]
        %v2279 = vld [vmem:[%s500 + $0x2f0] sm:$0xf]
        %v2280 = vld [vmem:[%s500 + $0x2f4] sm:$0xf]
        %v2281 = vld [vmem:[%s500 + $0x2f8] sm:$0xf]
        %v2282 = vld [vmem:[%s500 + $0x2fc] sm:$0xf]
        %v2283 = vld [vmem:[%s500 + $0x300] sm:$0xf]
        %v2284 = vld [vmem:[%s500 + $0x304] sm:$0xf]
        %v2285 = vld [vmem:[%s500 + $0x308] sm:$0xf]
        %v2286 = vld [vmem:[%s500 + $0x30c] sm:$0xf]
        %v2287 = vld [vmem:[%s500 + $0x310] sm:$0xf]
        %v2288 = vld [vmem:[%s500 + $0x314] sm:$0xf]
        %v2289 = vld [vmem:[%s500 + $0x318] sm:$0xf]
        %v2290 = vld [vmem:[%s500 + $0x31c] sm:$0xf]
        %v2291 = vld [vmem:[%s500 + $0x320] sm:$0xf]
        %v2292 = vld [vmem:[%s500 + $0x324] sm:$0xf]
        %v2293 = vld [vmem:[%s500 + $0x328] sm:$0xf]
        %v2294 = vld [vmem:[%s500 + $0x32c] sm:$0xf]
        %v2295 = vld [vmem:[%s500 + $0x330] sm:$0xf]
        %v2296 = vld [vmem:[%s500 + $0x334] sm:$0xf]
        %v2297 = vld [vmem:[%s500 + $0x338] sm:$0xf]
        %v2298 = vld [vmem:[%s500 + $0x33c] sm:$0xf]
        %v2299 = vld [vmem:[%s500 + $0x340] sm:$0xf]
        %v2300 = vld [vmem:[%s500 + $0x344] sm:$0xf]
        %v2301 = vld [vmem:[%s500 + $0x348] sm:$0xf]
        %v2302 = vld [vmem:[%s500 + $0x34c] sm:$0xf]
        %v2303 = vld [vmem:[%s500 + $0x350] sm:$0xf]
        %v2304 = vld [vmem:[%s500 + $0x354] sm:$0xf]
        %v2305 = vld [vmem:[%s500 + $0x358] sm:$0xf]
        %v2306 = vld [vmem:[%s500 + $0x35c] sm:$0xf]
        %v2307 = vld [vmem:[%s500 + $0x360] sm:$0xf]
        %v2308 = vld [vmem:[%s500 + $0x364] sm:$0xf]
        %v2309 = vld [vmem:[%s500 + $0x368] sm:$0xf]
        %v2310 = vld [vmem:[%s500 + $0x36c] sm:$0xf]
        %v2311 = vld [vmem:[%s500 + $0x370] sm:$0xf]
        %v2312 = vld [vmem:[%s500 + $0x374] sm:$0xf]
        %v2313 = vld [vmem:[%s500 + $0x378] sm:$0xf]
        %v2314 = vld [vmem:[%s500 + $0x37c] sm:$0xf]
        %v2315 = vld [vmem:[%s500 + $0x380] sm:$0xf]
        %v2316 = vld [vmem:[%s500 + $0x384] sm:$0xf]
        %v2317 = vld [vmem:[%s500 + $0x388] sm:$0xf]
        %v2318 = vld [vmem:[%s500 + $0x38c] sm:$0xf]
        %v2319 = vld [vmem:[%s500 + $0x390] sm:$0xf]
        %v2320 = vld [vmem:[%s500 + $0x394] sm:$0xf]
        %v2321 = vld [vmem:[%s500 + $0x398] sm:$0xf]
        %v2322 = vld [vmem:[%s500 + $0x39c] sm:$0xf]
        %v2323 = vld [vmem:[%s500 + $0x3a0] sm:$0xf]
        %v2324 = vld [vmem:[%s500 + $0x3a4] sm:$0xf]
        %v2325 = vld [vmem:[%s500 + $0x3a8] sm:$0xf]
        %v2326 = vld [vmem:[%s500 + $0x3ac] sm:$0xf]
        %v2327 = vld [vmem:[%s500 + $0x3b0] sm:$0xf]
        %v2328 = vld [vmem:[%s500 + $0x3b4] sm:$0xf]
        %v2329 = vld [vmem:[%s500 + $0x3b8] sm:$0xf]
        %v2330 = vld [vmem:[%s500 + $0x3bc] sm:$0xf]
        %v2331 = vld [vmem:[%s500 + $0x3c0] sm:$0xf]
        %v2332 = vld [vmem:[%s500 + $0x3c4] sm:$0xf]
        %v2333 = vld [vmem:[%s500 + $0x3c8] sm:$0xf]
        %v2334 = vld [vmem:[%s500 + $0x3cc] sm:$0xf]
        %v2335 = vld [vmem:[%s500 + $0x3d0] sm:$0xf]
        %v2336 = vld [vmem:[%s500 + $0x3d4] sm:$0xf]
        %v2337 = vld [vmem:[%s500 + $0x3d8] sm:$0xf]
        %v2338 = vld [vmem:[%s500 + $0x3dc] sm:$0xf]
        %v2339 = vld [vmem:[%s500 + $0x3e0] sm:$0xf]
        %v2340 = vld [vmem:[%s500 + $0x3e4] sm:$0xf]
        %v2341 = vld [vmem:[%s500 + $0x3e8] sm:$0xf]
        %v2342 = vld [vmem:[%s500 + $0x3ec] sm:$0xf]
        %v2343 = vld [vmem:[%s500 + $0x3f0] sm:$0xf]
        %v2344 = vld [vmem:[%s500 + $0x3f4] sm:$0xf]
        %v2345 = vld [vmem:[%s500 + $0x3f8] sm:$0xf]
        %v2346 = vld [vmem:[%s500 + $0x3fc] sm:$0xf]
        %v2347 = vld [vmem:[%s500 + $0x400] sm:$0xf]
        %v2348 = vld [vmem:[%s500 + $0x404] sm:$0xf]
        %v2349 = vld [vmem:[%s500 + $0x408] sm:$0xf]
        %v2350 = vld [vmem:[%s500 + $0x40c] sm:$0xf]
        %v2351 = vld [vmem:[%s500 + $0x410] sm:$0xf]
        %v2352 = vld [vmem:[%s500 + $0x414] sm:$0xf]
        %v2353 = vld [vmem:[%s500 + $0x418] sm:$0xf]
        %v2354 = vld [vmem:[%s500 + $0x41c] sm:$0xf]
        %v2355 = vld [vmem:[%s500 + $0x420] sm:$0xf]
        %v2356 = vld [vmem:[%s500 + $0x424] sm:$0xf]
        %v2357 = vld [vmem:[%s500 + $0x428] sm:$0xf]
        %v2358 = vld [vmem:[%s500 + $0x42c] sm:$0xf]
        %v2359 = vld [vmem:[%s500 + $0x430] sm:$0xf]
        %v2360 = vld [vmem:[%s500 + $0x434] sm:$0xf]
        %v2361 = vld [vmem:[%s500 + $0x438] sm:$0xf]
        %v2362 = vld [vmem:[%s500 + $0x43c] sm:$0xf]
        %v2363 = vld [vmem:[%s500 + $0x440] sm:$0xf]
        %v2364 = vld [vmem:[%s500 + $0x444] sm:$0xf]
        %v2365 = vld [vmem:[%s500 + $0x448] sm:$0xf]
        %v2366 = vld [vmem:[%s500 + $0x44c] sm:$0xf]
        %v2367 = vld [vmem:[%s500 + $0x450] sm:$0xf]
        %v2368 = vld [vmem:[%s500 + $0x454] sm:$0xf]
        %v2369 = vld [vmem:[%s500 + $0x458] sm:$0xf]
        %v2370 = vld [vmem:[%s500 + $0x45c] sm:$0xf]
        %v2371 = vld [vmem:[%s500 + $0x460] sm:$0xf]
        %v2372 = vld [vmem:[%s500 + $0x464] sm:$0xf]
        %v2373 = vld [vmem:[%s500 + $0x468] sm:$0xf]
        %v2374 = vld [vmem:[%s500 + $0x46c] sm:$0xf]
        %v2375 = vld [vmem:[%s500 + $0x470] sm:$0xf]
        %v2376 = vld [vmem:[%s500 + $0x474] sm:$0xf]
        %v2377 = vld [vmem:[%s500 + $0x478] sm:$0xf]
        %v2378 = vld [vmem:[%s500 + $0x47c] sm:$0xf]
        %v2379 = vunpack.c.l.bf16 %v2091
        %v2380 = vunpack.c.l.bf16 %v2092
        %v2381 = vunpack.c.l.bf16 %v2093
        %v2382 = vunpack.c.l.bf16 %v2094
        %v2383 = vunpack.c.l.bf16 %v2095
        %v2384 = vunpack.c.l.bf16 %v2096
        %v2385 = vunpack.c.l.bf16 %v2097
        %v2386 = vunpack.c.l.bf16 %v2098
        %v2387 = vunpack.c.l.bf16 %v2099
        %v2388 = vunpack.c.l.bf16 %v2100
        %v2389 = vunpack.c.l.bf16 %v2101
        %v2390 = vunpack.c.l.bf16 %v2102
        %v2391 = vunpack.c.l.bf16 %v2103
        %v2392 = vunpack.c.l.bf16 %v2104
        %v2393 = vunpack.c.l.bf16 %v2105
        %v2394 = vunpack.c.l.bf16 %v2106
        %v2395 = vunpack.c.l.bf16 %v2107
        %v2396 = vunpack.c.l.bf16 %v2108
        %v2397 = vunpack.c.l.bf16 %v2109
        %v2398 = vunpack.c.l.bf16 %v2110
        %v2399 = vunpack.c.l.bf16 %v2111
        %v2400 = vunpack.c.l.bf16 %v2112
        %v2401 = vunpack.c.l.bf16 %v2113
        %v2402 = vunpack.c.l.bf16 %v2114
        %v2403 = vunpack.c.l.bf16 %v2115
        %v2404 = vunpack.c.l.bf16 %v2116
        %v2405 = vunpack.c.l.bf16 %v2117
        %v2406 = vunpack.c.l.bf16 %v2118
        %v2407 = vunpack.c.l.bf16 %v2119
        %v2408 = vunpack.c.l.bf16 %v2120
        %v2409 = vunpack.c.l.bf16 %v2121
        %v2410 = vunpack.c.l.bf16 %v2122
        %v2411 = vunpack.c.l.bf16 %v2123
        %v2412 = vunpack.c.l.bf16 %v2124
        %v2413 = vunpack.c.l.bf16 %v2125
        %v2414 = vunpack.c.l.bf16 %v2126
        %v2415 = vunpack.c.l.bf16 %v2127
        %v2416 = vunpack.c.l.bf16 %v2128
        %v2417 = vunpack.c.l.bf16 %v2129
        %v2418 = vunpack.c.l.bf16 %v2130
        %v2419 = vunpack.c.l.bf16 %v2131
        %v2420 = vunpack.c.l.bf16 %v2132
        %v2421 = vunpack.c.l.bf16 %v2133
        %v2422 = vunpack.c.l.bf16 %v2134
        %v2423 = vunpack.c.l.bf16 %v2135
        %v2424 = vunpack.c.l.bf16 %v2136
        %v2425 = vunpack.c.l.bf16 %v2137
        %v2426 = vunpack.c.l.bf16 %v2138
        %v2427 = vunpack.c.l.bf16 %v2139
        %v2428 = vunpack.c.l.bf16 %v2140
        %v2429 = vunpack.c.l.bf16 %v2141
        %v2430 = vunpack.c.l.bf16 %v2142
        %v2431 = vunpack.c.l.bf16 %v2143
        %v2432 = vunpack.c.l.bf16 %v2144
        %v2433 = vunpack.c.l.bf16 %v2145
        %v2434 = vunpack.c.l.bf16 %v2146
        %v2435 = vunpack.c.l.bf16 %v2147
        %v2436 = vunpack.c.l.bf16 %v2148
        %v2437 = vunpack.c.l.bf16 %v2149
        %v2438 = vunpack.c.l.bf16 %v2150
        %v2439 = vunpack.c.l.bf16 %v2151
        %v2440 = vunpack.c.l.bf16 %v2152
        %v2441 = vunpack.c.l.bf16 %v2153
        %v2442 = vunpack.c.l.bf16 %v2154
        %v2443 = vunpack.c.l.bf16 %v2155
        %v2444 = vunpack.c.l.bf16 %v2156
        %v2445 = vunpack.c.l.bf16 %v2157
        %v2446 = vunpack.c.l.bf16 %v2158
        %v2447 = vunpack.c.l.bf16 %v2159
        %v2448 = vunpack.c.l.bf16 %v2160
        %v2449 = vunpack.c.l.bf16 %v2161
        %v2450 = vunpack.c.l.bf16 %v2162
        %v2451 = vunpack.c.l.bf16 %v2163
        %v2452 = vunpack.c.l.bf16 %v2164
        %v2453 = vunpack.c.l.bf16 %v2165
        %v2454 = vunpack.c.l.bf16 %v2166
        %v2455 = vunpack.c.l.bf16 %v2167
        %v2456 = vunpack.c.l.bf16 %v2168
        %v2457 = vunpack.c.l.bf16 %v2169
        %v2458 = vunpack.c.l.bf16 %v2170
        %v2459 = vunpack.c.l.bf16 %v2171
        %v2460 = vunpack.c.l.bf16 %v2172
        %v2461 = vunpack.c.l.bf16 %v2173
        %v2462 = vunpack.c.l.bf16 %v2174
        %v2463 = vunpack.c.l.bf16 %v2175
        %v2464 = vunpack.c.l.bf16 %v2176
        %v2465 = vunpack.c.l.bf16 %v2177
        %v2466 = vunpack.c.l.bf16 %v2178
        %v2467 = vunpack.c.l.bf16 %v2179
        %v2468 = vunpack.c.l.bf16 %v2180
        %v2469 = vunpack.c.l.bf16 %v2181
        %v2470 = vunpack.c.l.bf16 %v2182
        %v2471 = vunpack.c.l.bf16 %v2183
        %v2472 = vunpack.c.l.bf16 %v2184
        %v2473 = vunpack.c.l.bf16 %v2185
        %v2474 = vunpack.c.l.bf16 %v2186
        %v2475 = vunpack.c.l.bf16 %v2187
        %v2476 = vunpack.c.l.bf16 %v2188
        %v2477 = vunpack.c.l.bf16 %v2189
        %v2478 = vunpack.c.l.bf16 %v2190
        %v2479 = vunpack.c.l.bf16 %v2191
        %v2480 = vunpack.c.l.bf16 %v2192
        %v2481 = vunpack.c.l.bf16 %v2193
        %v2482 = vunpack.c.l.bf16 %v2194
        %v2483 = vunpack.c.l.bf16 %v2195
        %v2484 = vunpack.c.l.bf16 %v2196
        %v2485 = vunpack.c.l.bf16 %v2197
        %v2486 = vunpack.c.l.bf16 %v2198
        %v2487 = vunpack.c.l.bf16 %v2199
        %v2488 = vunpack.c.l.bf16 %v2200
        %v2489 = vunpack.c.l.bf16 %v2201
        %v2490 = vunpack.c.l.bf16 %v2202
        %v2491 = vunpack.c.l.bf16 %v2203
        %v2492 = vunpack.c.l.bf16 %v2204
        %v2493 = vunpack.c.l.bf16 %v2205
        %v2494 = vunpack.c.l.bf16 %v2206
        %v2495 = vunpack.c.l.bf16 %v2207
        %v2496 = vunpack.c.l.bf16 %v2208
        %v2497 = vunpack.c.l.bf16 %v2209
        %v2498 = vunpack.c.l.bf16 %v2210
        %v2499 = vunpack.c.l.bf16 %v2211
        %v2500 = vunpack.c.l.bf16 %v2212
        %v2501 = vunpack.c.l.bf16 %v2213
        %v2502 = vunpack.c.l.bf16 %v2214
        %v2503 = vunpack.c.l.bf16 %v2215
        %v2504 = vunpack.c.l.bf16 %v2216
        %v2505 = vunpack.c.l.bf16 %v2217
        %v2506 = vunpack.c.l.bf16 %v2218
        %v2507 = vunpack.c.l.bf16 %v2219
        %v2508 = vunpack.c.l.bf16 %v2220
        %v2509 = vunpack.c.l.bf16 %v2221
        %v2510 = vunpack.c.l.bf16 %v2222
        %v2511 = vunpack.c.l.bf16 %v2223
        %v2512 = vunpack.c.l.bf16 %v2224
        %v2513 = vunpack.c.l.bf16 %v2225
        %v2514 = vunpack.c.l.bf16 %v2226
        %v2515 = vunpack.c.l.bf16 %v2227
        %v2516 = vunpack.c.l.bf16 %v2228
        %v2517 = vunpack.c.l.bf16 %v2229
        %v2518 = vunpack.c.l.bf16 %v2230
        %v2519 = vunpack.c.l.bf16 %v2231
        %v2520 = vunpack.c.l.bf16 %v2232
        %v2521 = vunpack.c.l.bf16 %v2233
        %v2522 = vunpack.c.l.bf16 %v2234
        %v2523 = vunpack.c.l.bf16 %v2235
        %v2524 = vunpack.c.l.bf16 %v2236
        %v2525 = vunpack.c.l.bf16 %v2237
        %v2526 = vunpack.c.l.bf16 %v2238
        %v2527 = vunpack.c.l.bf16 %v2239
        %v2528 = vunpack.c.l.bf16 %v2240
        %v2529 = vunpack.c.l.bf16 %v2241
        %v2530 = vunpack.c.l.bf16 %v2242
        %v2531 = vunpack.c.l.bf16 %v2243
        %v2532 = vunpack.c.l.bf16 %v2244
        %v2533 = vunpack.c.l.bf16 %v2245
        %v2534 = vunpack.c.l.bf16 %v2246
        %v2535 = vunpack.c.l.bf16 %v2247
        %v2536 = vunpack.c.l.bf16 %v2248
        %v2537 = vunpack.c.l.bf16 %v2249
        %v2538 = vunpack.c.l.bf16 %v2250
        %v2539 = vunpack.c.l.bf16 %v2251
        %v2540 = vunpack.c.l.bf16 %v2252
        %v2541 = vunpack.c.l.bf16 %v2253
        %v2542 = vunpack.c.l.bf16 %v2254
        %v2543 = vunpack.c.l.bf16 %v2255
        %v2544 = vunpack.c.l.bf16 %v2256
        %v2545 = vunpack.c.l.bf16 %v2257
        %v2546 = vunpack.c.l.bf16 %v2258
        %v2547 = vunpack.c.l.bf16 %v2259
        %v2548 = vunpack.c.l.bf16 %v2260
        %v2549 = vunpack.c.l.bf16 %v2261
        %v2550 = vunpack.c.l.bf16 %v2262
        %v2551 = vunpack.c.l.bf16 %v2263
        %v2552 = vunpack.c.l.bf16 %v2264
        %v2553 = vunpack.c.l.bf16 %v2265
        %v2554 = vunpack.c.l.bf16 %v2266
        %v2555 = vunpack.c.l.bf16 %v2267
        %v2556 = vunpack.c.l.bf16 %v2268
        %v2557 = vunpack.c.l.bf16 %v2269
        %v2558 = vunpack.c.l.bf16 %v2270
        %v2559 = vunpack.c.l.bf16 %v2271
        %v2560 = vunpack.c.l.bf16 %v2272
        %v2561 = vunpack.c.l.bf16 %v2273
        %v2562 = vunpack.c.l.bf16 %v2274
        %v2563 = vunpack.c.l.bf16 %v2275
        %v2564 = vunpack.c.l.bf16 %v2276
        %v2565 = vunpack.c.l.bf16 %v2277
        %v2566 = vunpack.c.l.bf16 %v2278
        %v2567 = vunpack.c.l.bf16 %v2279
        %v2568 = vunpack.c.l.bf16 %v2280
        %v2569 = vunpack.c.l.bf16 %v2281
        %v2570 = vunpack.c.l.bf16 %v2282
        %v2571 = vunpack.c.l.bf16 %v2283
        %v2572 = vunpack.c.l.bf16 %v2284
        %v2573 = vunpack.c.l.bf16 %v2285
        %v2574 = vunpack.c.l.bf16 %v2286
        %v2575 = vunpack.c.l.bf16 %v2287
        %v2576 = vunpack.c.l.bf16 %v2288
        %v2577 = vunpack.c.l.bf16 %v2289
        %v2578 = vunpack.c.l.bf16 %v2290
        %v2579 = vunpack.c.l.bf16 %v2291
        %v2580 = vunpack.c.l.bf16 %v2292
        %v2581 = vunpack.c.l.bf16 %v2293
        %v2582 = vunpack.c.l.bf16 %v2294
        %v2583 = vunpack.c.l.bf16 %v2295
        %v2584 = vunpack.c.l.bf16 %v2296
        %v2585 = vunpack.c.l.bf16 %v2297
        %v2586 = vunpack.c.l.bf16 %v2298
        %v2587 = vunpack.c.l.bf16 %v2299
        %v2588 = vunpack.c.l.bf16 %v2300
        %v2589 = vunpack.c.l.bf16 %v2301
        %v2590 = vunpack.c.l.bf16 %v2302
        %v2591 = vunpack.c.l.bf16 %v2303
        %v2592 = vunpack.c.l.bf16 %v2304
        %v2593 = vunpack.c.l.bf16 %v2305
        %v2594 = vunpack.c.l.bf16 %v2306
        %v2595 = vunpack.c.l.bf16 %v2307
        %v2596 = vunpack.c.l.bf16 %v2308
        %v2597 = vunpack.c.l.bf16 %v2309
        %v2598 = vunpack.c.l.bf16 %v2310
        %v2599 = vunpack.c.l.bf16 %v2311
        %v2600 = vunpack.c.l.bf16 %v2312
        %v2601 = vunpack.c.l.bf16 %v2313
        %v2602 = vunpack.c.l.bf16 %v2314
        %v2603 = vunpack.c.l.bf16 %v2315
        %v2604 = vunpack.c.l.bf16 %v2316
        %v2605 = vunpack.c.l.bf16 %v2317
        %v2606 = vunpack.c.l.bf16 %v2318
        %v2607 = vunpack.c.l.bf16 %v2319
        %v2608 = vunpack.c.l.bf16 %v2320
        %v2609 = vunpack.c.l.bf16 %v2321
        %v2610 = vunpack.c.l.bf16 %v2322
        %v2611 = vunpack.c.l.bf16 %v2323
        %v2612 = vunpack.c.l.bf16 %v2324
        %v2613 = vunpack.c.l.bf16 %v2325
        %v2614 = vunpack.c.l.bf16 %v2326
        %v2615 = vunpack.c.l.bf16 %v2327
        %v2616 = vunpack.c.l.bf16 %v2328
        %v2617 = vunpack.c.l.bf16 %v2329
        %v2618 = vunpack.c.l.bf16 %v2330
        %v2619 = vunpack.c.l.bf16 %v2331
        %v2620 = vunpack.c.l.bf16 %v2332
        %v2621 = vunpack.c.l.bf16 %v2333
        %v2622 = vunpack.c.l.bf16 %v2334
        %v2623 = vunpack.c.l.bf16 %v2335
        %v2624 = vunpack.c.l.bf16 %v2336
        %v2625 = vunpack.c.l.bf16 %v2337
        %v2626 = vunpack.c.l.bf16 %v2338
        %v2627 = vunpack.c.l.bf16 %v2339
        %v2628 = vunpack.c.l.bf16 %v2340
        %v2629 = vunpack.c.l.bf16 %v2341
        %v2630 = vunpack.c.l.bf16 %v2342
        %v2631 = vunpack.c.l.bf16 %v2343
        %v2632 = vunpack.c.l.bf16 %v2344
        %v2633 = vunpack.c.l.bf16 %v2345
        %v2634 = vunpack.c.l.bf16 %v2346
        %v2635 = vunpack.c.l.bf16 %v2347
        %v2636 = vunpack.c.l.bf16 %v2348
        %v2637 = vunpack.c.l.bf16 %v2349
        %v2638 = vunpack.c.l.bf16 %v2350
        %v2639 = vunpack.c.l.bf16 %v2351
        %v2640 = vunpack.c.l.bf16 %v2352
        %v2641 = vunpack.c.l.bf16 %v2353
        %v2642 = vunpack.c.l.bf16 %v2354
        %v2643 = vunpack.c.l.bf16 %v2355
        %v2644 = vunpack.c.l.bf16 %v2356
        %v2645 = vunpack.c.l.bf16 %v2357
        %v2646 = vunpack.c.l.bf16 %v2358
        %v2647 = vunpack.c.l.bf16 %v2359
        %v2648 = vunpack.c.l.bf16 %v2360
        %v2649 = vunpack.c.l.bf16 %v2361
        %v2650 = vunpack.c.l.bf16 %v2362
        %v2651 = vunpack.c.l.bf16 %v2363
        %v2652 = vunpack.c.l.bf16 %v2364
        %v2653 = vunpack.c.l.bf16 %v2365
        %v2654 = vunpack.c.l.bf16 %v2366
        %v2655 = vunpack.c.l.bf16 %v2367
        %v2656 = vunpack.c.l.bf16 %v2368
        %v2657 = vunpack.c.l.bf16 %v2369
        %v2658 = vunpack.c.l.bf16 %v2370
        %v2659 = vunpack.c.l.bf16 %v2371
        %v2660 = vunpack.c.l.bf16 %v2372
        %v2661 = vunpack.c.l.bf16 %v2373
        %v2662 = vunpack.c.l.bf16 %v2374
        %v2663 = vunpack.c.l.bf16 %v2375
        %v2664 = vunpack.c.l.bf16 %v2376
        %v2665 = vunpack.c.l.bf16 %v2377
        %v2666 = vunpack.c.l.bf16 %v2378
        %vm2667 = vcmask 326656
        %v2669 = vsel %vm2667, %v2379, 0
        %v2672 = vsel %vm2667, %v2380, 0
        %v2675 = vsel %vm2667, %v2381, 0
        %v2678 = vsel %vm2667, %v2382, 0
        %v2681 = vsel %vm2667, %v2383, 0
        %v2684 = vsel %vm2667, %v2384, 0
        %v2687 = vsel %vm2667, %v2385, 0
        %v2690 = vsel %vm2667, %v2386, 0
        %v2693 = vsel %vm2667, %v2387, 0
        %v2696 = vsel %vm2667, %v2388, 0
        %v2699 = vsel %vm2667, %v2389, 0
        %v2702 = vsel %vm2667, %v2390, 0
        %v2705 = vsel %vm2667, %v2391, 0
        %v2708 = vsel %vm2667, %v2392, 0
        %v2711 = vsel %vm2667, %v2393, 0
        %v2714 = vsel %vm2667, %v2394, 0
        %v2717 = vsel %vm2667, %v2395, 0
        %v2720 = vsel %vm2667, %v2396, 0
        %v2723 = vsel %vm2667, %v2397, 0
        %v2726 = vsel %vm2667, %v2398, 0
        %v2729 = vsel %vm2667, %v2399, 0
        %v2732 = vsel %vm2667, %v2400, 0
        %v2735 = vsel %vm2667, %v2401, 0
        %v2738 = vsel %vm2667, %v2402, 0
        %v2741 = vsel %vm2667, %v2403, 0
        %v2744 = vsel %vm2667, %v2404, 0
        %v2747 = vsel %vm2667, %v2405, 0
        %v2750 = vsel %vm2667, %v2406, 0
        %v2753 = vsel %vm2667, %v2407, 0
        %v2756 = vsel %vm2667, %v2408, 0
        %v2759 = vsel %vm2667, %v2409, 0
        %v2762 = vsel %vm2667, %v2410, 0
        %v2765 = vsel %vm2667, %v2411, 0
        %v2768 = vsel %vm2667, %v2412, 0
        %v2771 = vsel %vm2667, %v2413, 0
        %v2774 = vsel %vm2667, %v2414, 0
        %v2777 = vsel %vm2667, %v2415, 0
        %v2780 = vsel %vm2667, %v2416, 0
        %v2783 = vsel %vm2667, %v2417, 0
        %v2786 = vsel %vm2667, %v2418, 0
        %v2789 = vsel %vm2667, %v2419, 0
        %v2792 = vsel %vm2667, %v2420, 0
        %v2795 = vsel %vm2667, %v2421, 0
        %v2798 = vsel %vm2667, %v2422, 0
        %v2801 = vsel %vm2667, %v2423, 0
        %v2804 = vsel %vm2667, %v2424, 0
        %v2807 = vsel %vm2667, %v2425, 0
        %v2810 = vsel %vm2667, %v2426, 0
        %v2813 = vsel %vm2667, %v2427, 0
        %v2816 = vsel %vm2667, %v2428, 0
        %v2819 = vsel %vm2667, %v2429, 0
        %v2822 = vsel %vm2667, %v2430, 0
        %v2825 = vsel %vm2667, %v2431, 0
        %v2828 = vsel %vm2667, %v2432, 0
        %v2831 = vsel %vm2667, %v2433, 0
        %v2834 = vsel %vm2667, %v2434, 0
        %v2837 = vsel %vm2667, %v2435, 0
        %v2840 = vsel %vm2667, %v2436, 0
        %v2843 = vsel %vm2667, %v2437, 0
        %v2846 = vsel %vm2667, %v2438, 0
        %v2849 = vsel %vm2667, %v2439, 0
        %v2852 = vsel %vm2667, %v2440, 0
        %v2855 = vsel %vm2667, %v2441, 0
        %v2858 = vsel %vm2667, %v2442, 0
        %v2861 = vsel %vm2667, %v2443, 0
        %v2864 = vsel %vm2667, %v2444, 0
        %v2867 = vsel %vm2667, %v2445, 0
        %v2870 = vsel %vm2667, %v2446, 0
        %v2873 = vsel %vm2667, %v2447, 0
        %v2876 = vsel %vm2667, %v2448, 0
        %v2879 = vsel %vm2667, %v2449, 0
        %v2882 = vsel %vm2667, %v2450, 0
        %v2885 = vsel %vm2667, %v2451, 0
        %v2888 = vsel %vm2667, %v2452, 0
        %v2891 = vsel %vm2667, %v2453, 0
        %v2894 = vsel %vm2667, %v2454, 0
        %v2897 = vsel %vm2667, %v2455, 0
        %v2900 = vsel %vm2667, %v2456, 0
        %v2903 = vsel %vm2667, %v2457, 0
        %v2906 = vsel %vm2667, %v2458, 0
        %v2909 = vsel %vm2667, %v2459, 0
        %v2912 = vsel %vm2667, %v2460, 0
        %v2915 = vsel %vm2667, %v2461, 0
        %v2918 = vsel %vm2667, %v2462, 0
        %v2921 = vsel %vm2667, %v2463, 0
        %v2924 = vsel %vm2667, %v2464, 0
        %v2927 = vsel %vm2667, %v2465, 0
        %v2930 = vsel %vm2667, %v2466, 0
        %v2933 = vsel %vm2667, %v2467, 0
        %v2936 = vsel %vm2667, %v2468, 0
        %v2939 = vsel %vm2667, %v2469, 0
        %v2942 = vsel %vm2667, %v2470, 0
        %v2945 = vsel %vm2667, %v2471, 0
        %v2948 = vsel %vm2667, %v2472, 0
        %v2951 = vsel %vm2667, %v2473, 0
        %v2954 = vsel %vm2667, %v2474, 0
        %v2957 = vsel %vm2667, %v2475, 0
        %v2960 = vsel %vm2667, %v2476, 0
        %v2963 = vsel %vm2667, %v2477, 0
        %v2966 = vsel %vm2667, %v2478, 0
        %v2969 = vsel %vm2667, %v2479, 0
        %v2972 = vsel %vm2667, %v2480, 0
        %v2975 = vsel %vm2667, %v2481, 0
        %v2978 = vsel %vm2667, %v2482, 0
        %v2981 = vsel %vm2667, %v2483, 0
        %v2984 = vsel %vm2667, %v2484, 0
        %v2987 = vsel %vm2667, %v2485, 0
        %v2990 = vsel %vm2667, %v2486, 0
        %v2993 = vsel %vm2667, %v2487, 0
        %v2996 = vsel %vm2667, %v2488, 0
        %v2999 = vsel %vm2667, %v2489, 0
        %v3002 = vsel %vm2667, %v2490, 0
        %v3005 = vsel %vm2667, %v2491, 0
        %v3008 = vsel %vm2667, %v2492, 0
        %v3011 = vsel %vm2667, %v2493, 0
        %v3014 = vsel %vm2667, %v2494, 0
        %v3017 = vsel %vm2667, %v2495, 0
        %v3020 = vsel %vm2667, %v2496, 0
        %v3023 = vsel %vm2667, %v2497, 0
        %v3026 = vsel %vm2667, %v2498, 0
        %v3029 = vsel %vm2667, %v2499, 0
        %v3032 = vsel %vm2667, %v2500, 0
        %v3035 = vsel %vm2667, %v2501, 0
        %v3038 = vsel %vm2667, %v2502, 0
        %v3041 = vsel %vm2667, %v2503, 0
        %v3044 = vsel %vm2667, %v2504, 0
        %v3047 = vsel %vm2667, %v2505, 0
        %v3050 = vsel %vm2667, %v2506, 0
        %v3053 = vsel %vm2667, %v2507, 0
        %v3056 = vsel %vm2667, %v2508, 0
        %v3059 = vsel %vm2667, %v2509, 0
        %v3062 = vsel %vm2667, %v2510, 0
        %v3065 = vsel %vm2667, %v2511, 0
        %v3068 = vsel %vm2667, %v2512, 0
        %v3071 = vsel %vm2667, %v2513, 0
        %v3074 = vsel %vm2667, %v2514, 0
        %v3077 = vsel %vm2667, %v2515, 0
        %v3080 = vsel %vm2667, %v2516, 0
        %v3083 = vsel %vm2667, %v2517, 0
        %v3086 = vsel %vm2667, %v2518, 0
        %v3089 = vsel %vm2667, %v2519, 0
        %v3092 = vsel %vm2667, %v2520, 0
        %v3095 = vsel %vm2667, %v2521, 0
        %v3098 = vsel %vm2667, %v2522, 0
        %v3101 = vsel %vm2667, %v2523, 0
        %v3104 = vsel %vm2667, %v2524, 0
        %v3107 = vsel %vm2667, %v2525, 0
        %v3110 = vsel %vm2667, %v2526, 0
        %v3113 = vsel %vm2667, %v2527, 0
        %v3116 = vsel %vm2667, %v2528, 0
        %v3119 = vsel %vm2667, %v2529, 0
        %v3122 = vsel %vm2667, %v2530, 0
        %v3125 = vsel %vm2667, %v2531, 0
        %v3128 = vsel %vm2667, %v2532, 0
        %v3131 = vsel %vm2667, %v2533, 0
        %v3134 = vsel %vm2667, %v2534, 0
        %v3137 = vsel %vm2667, %v2535, 0
        %v3140 = vsel %vm2667, %v2536, 0
        %v3143 = vsel %vm2667, %v2537, 0
        %v3146 = vsel %vm2667, %v2538, 0
        %v3149 = vsel %vm2667, %v2539, 0
        %v3152 = vsel %vm2667, %v2540, 0
        %v3155 = vsel %vm2667, %v2541, 0
        %v3158 = vsel %vm2667, %v2542, 0
        %v3161 = vsel %vm2667, %v2543, 0
        %v3164 = vsel %vm2667, %v2544, 0
        %v3167 = vsel %vm2667, %v2545, 0
        %v3170 = vsel %vm2667, %v2546, 0
        %v3173 = vsel %vm2667, %v2547, 0
        %v3176 = vsel %vm2667, %v2548, 0
        %v3179 = vsel %vm2667, %v2549, 0
        %v3182 = vsel %vm2667, %v2550, 0
        %v3185 = vsel %vm2667, %v2551, 0
        %v3188 = vsel %vm2667, %v2552, 0
        %v3191 = vsel %vm2667, %v2553, 0
        %v3194 = vsel %vm2667, %v2554, 0
        %v3197 = vsel %vm2667, %v2555, 0
        %v3200 = vsel %vm2667, %v2556, 0
        %v3203 = vsel %vm2667, %v2557, 0
        %v3206 = vsel %vm2667, %v2558, 0
        %v3209 = vsel %vm2667, %v2559, 0
        %v3212 = vsel %vm2667, %v2560, 0
        %v3215 = vsel %vm2667, %v2561, 0
        %v3218 = vsel %vm2667, %v2562, 0
        %v3221 = vsel %vm2667, %v2563, 0
        %v3224 = vsel %vm2667, %v2564, 0
        %v3227 = vsel %vm2667, %v2565, 0
        %v3230 = vsel %vm2667, %v2566, 0
        %v3233 = vsel %vm2667, %v2567, 0
        %v3236 = vsel %vm2667, %v2568, 0
        %v3239 = vsel %vm2667, %v2569, 0
        %v3242 = vsel %vm2667, %v2570, 0
        %v3245 = vsel %vm2667, %v2571, 0
        %v3248 = vsel %vm2667, %v2572, 0
        %v3251 = vsel %vm2667, %v2573, 0
        %v3254 = vsel %vm2667, %v2574, 0
        %v3257 = vsel %vm2667, %v2575, 0
        %v3260 = vsel %vm2667, %v2576, 0
        %v3263 = vsel %vm2667, %v2577, 0
        %v3266 = vsel %vm2667, %v2578, 0
        %v3269 = vsel %vm2667, %v2579, 0
        %v3272 = vsel %vm2667, %v2580, 0
        %v3275 = vsel %vm2667, %v2581, 0
        %v3278 = vsel %vm2667, %v2582, 0
        %v3281 = vsel %vm2667, %v2583, 0
        %v3284 = vsel %vm2667, %v2584, 0
        %v3287 = vsel %vm2667, %v2585, 0
        %v3290 = vsel %vm2667, %v2586, 0
        %v3293 = vsel %vm2667, %v2587, 0
        %v3296 = vsel %vm2667, %v2588, 0
        %v3299 = vsel %vm2667, %v2589, 0
        %v3302 = vsel %vm2667, %v2590, 0
        %v3305 = vsel %vm2667, %v2591, 0
        %v3308 = vsel %vm2667, %v2592, 0
        %v3311 = vsel %vm2667, %v2593, 0
        %v3314 = vsel %vm2667, %v2594, 0
        %v3317 = vsel %vm2667, %v2595, 0
        %v3320 = vsel %vm2667, %v2596, 0
        %v3323 = vsel %vm2667, %v2597, 0
        %v3326 = vsel %vm2667, %v2598, 0
        %v3329 = vsel %vm2667, %v2599, 0
        %v3332 = vsel %vm2667, %v2600, 0
        %v3335 = vsel %vm2667, %v2601, 0
        %v3338 = vsel %vm2667, %v2602, 0
        %v3341 = vsel %vm2667, %v2603, 0
        %v3344 = vsel %vm2667, %v2604, 0
        %v3347 = vsel %vm2667, %v2605, 0
        %v3350 = vsel %vm2667, %v2606, 0
        %v3353 = vsel %vm2667, %v2607, 0
        %v3356 = vsel %vm2667, %v2608, 0
        %v3359 = vsel %vm2667, %v2609, 0
        %v3362 = vsel %vm2667, %v2610, 0
        %v3365 = vsel %vm2667, %v2611, 0
        %v3368 = vsel %vm2667, %v2612, 0
        %v3371 = vsel %vm2667, %v2613, 0
        %v3374 = vsel %vm2667, %v2614, 0
        %v3377 = vsel %vm2667, %v2615, 0
        %v3380 = vsel %vm2667, %v2616, 0
        %v3383 = vsel %vm2667, %v2617, 0
        %v3386 = vsel %vm2667, %v2618, 0
        %v3389 = vsel %vm2667, %v2619, 0
        %v3392 = vsel %vm2667, %v2620, 0
        %v3395 = vsel %vm2667, %v2621, 0
        %v3398 = vsel %vm2667, %v2622, 0
        %v3401 = vsel %vm2667, %v2623, 0
        %v3404 = vsel %vm2667, %v2624, 0
        %v3407 = vsel %vm2667, %v2625, 0
        %v3410 = vsel %vm2667, %v2626, 0
        %v3413 = vsel %vm2667, %v2627, 0
        %v3416 = vsel %vm2667, %v2628, 0
        %v3419 = vsel %vm2667, %v2629, 0
        %v3422 = vsel %vm2667, %v2630, 0
        %v3425 = vsel %vm2667, %v2631, 0
        %v3428 = vsel %vm2667, %v2632, 0
        %v3431 = vsel %vm2667, %v2633, 0
        %v3434 = vsel %vm2667, %v2634, 0
        %v3437 = vsel %vm2667, %v2635, 0
        %v3440 = vsel %vm2667, %v2636, 0
        %v3443 = vsel %vm2667, %v2637, 0
        %v3446 = vsel %vm2667, %v2638, 0
        %v3449 = vsel %vm2667, %v2639, 0
        %v3452 = vsel %vm2667, %v2640, 0
        %v3455 = vsel %vm2667, %v2641, 0
        %v3458 = vsel %vm2667, %v2642, 0
        %v3461 = vsel %vm2667, %v2643, 0
        %v3464 = vsel %vm2667, %v2644, 0
        %v3467 = vsel %vm2667, %v2645, 0
        %v3470 = vsel %vm2667, %v2646, 0
        %v3473 = vsel %vm2667, %v2647, 0
        %v3476 = vsel %vm2667, %v2648, 0
        %v3479 = vsel %vm2667, %v2649, 0
        %v3482 = vsel %vm2667, %v2650, 0
        %v3485 = vsel %vm2667, %v2651, 0
        %v3488 = vsel %vm2667, %v2652, 0
        %v3491 = vsel %vm2667, %v2653, 0
        %v3494 = vsel %vm2667, %v2654, 0
        %v3497 = vsel %vm2667, %v2655, 0
        %v3500 = vsel %vm2667, %v2656, 0
        %v3503 = vsel %vm2667, %v2657, 0
        %v3506 = vsel %vm2667, %v2658, 0
        %v3509 = vsel %vm2667, %v2659, 0
        %v3512 = vsel %vm2667, %v2660, 0
        %v3515 = vsel %vm2667, %v2661, 0
        %v3518 = vsel %vm2667, %v2662, 0
        %v3521 = vsel %vm2667, %v2663, 0
        %v3524 = vsel %vm2667, %v2664, 0
        %v3527 = vsel %vm2667, %v2665, 0
        %v3530 = vsel %vm2667, %v2666, 0
        %3532 = vmatpush.msra.mxu0 0.0
        %3533 = vmatpush.msra.mxu0 0.0
        %3534 = vmatpush.msra.mxu0 0.0
        %3535 = vmatpush.msra.mxu0 0.0
        %3536 = vmatpush.msra.mxu0 0.0
        %3537 = vmatpush.msra.mxu0 0.0
        %3538 = vmatpush.msra.mxu0 0.0
        %3539 = vmatpush.msra.mxu0 0.0
        %3540 = vmatpush.msra.mxu0 0.0
        %3541 = vmatpush.msra.mxu0 0.0
        %3542 = vmatpush.msra.mxu0 0.0
        %3543 = vmatpush.msra.mxu0 %v2090
        %3544 = vmatpush.msra.mxu0 %v2089
        %3545 = vmatpush.msra.mxu0 %v2088
        %3546 = vmatpush.msra.mxu0 %v2087
        %3547 = vmatpush.msra.mxu0 %v2086
        %3548 = vmatmul.f32.gmra.mxu0 %v2669
        %v3549 = vpop.f32.mrf.mxu0
        %v3550 = vadd.f32 0.0, %v3549
        %3551 = vmatmul.f32.gmra.mxu0 %v2672
        %v3552 = vpop.f32.mrf.mxu0
        %v3553 = vadd.f32 0.0, %v3552
        %3554 = vmatmul.f32.gmra.mxu0 %v2675
        %v3555 = vpop.f32.mrf.mxu0
        %v3556 = vadd.f32 0.0, %v3555
        %3557 = vmatmul.f32.gmra.mxu0 %v2678
        %v3558 = vpop.f32.mrf.mxu0
        %v3559 = vadd.f32 0.0, %v3558
        %3560 = vmatmul.f32.gmra.mxu0 %v2681
        %v3561 = vpop.f32.mrf.mxu0
        %v3562 = vadd.f32 0.0, %v3561
        %3563 = vmatmul.f32.gmra.mxu0 %v2684
        %v3564 = vpop.f32.mrf.mxu0
        %v3565 = vadd.f32 0.0, %v3564
        %3566 = vmatmul.f32.gmra.mxu0 %v2687
        %v3567 = vpop.f32.mrf.mxu0
        %v3568 = vadd.f32 0.0, %v3567
        %3569 = vmatmul.f32.gmra.mxu0 %v2690
        %v3570 = vpop.f32.mrf.mxu0
        %v3571 = vadd.f32 0.0, %v3570
        %3572 = vmatmul.f32.gmra.mxu0 %v2693
        %v3573 = vpop.f32.mrf.mxu0
        %v3574 = vadd.f32 0.0, %v3573
        %3575 = vmatmul.f32.gmra.mxu0 %v2696
        %v3576 = vpop.f32.mrf.mxu0
        %v3577 = vadd.f32 0.0, %v3576
        %3578 = vmatmul.f32.gmra.mxu0 %v2699
        %v3579 = vpop.f32.mrf.mxu0
        %v3580 = vadd.f32 0.0, %v3579
        %3581 = vmatmul.f32.gmra.mxu0 %v2702
        %v3582 = vpop.f32.mrf.mxu0
        %v3583 = vadd.f32 0.0, %v3582
        %3584 = vmatmul.f32.gmra.mxu0 %v2705
        %v3585 = vpop.f32.mrf.mxu0
        %v3586 = vadd.f32 0.0, %v3585
        %3587 = vmatmul.f32.gmra.mxu0 %v2708
        %v3588 = vpop.f32.mrf.mxu0
        %v3589 = vadd.f32 0.0, %v3588
        %3590 = vmatmul.f32.gmra.mxu0 %v2711
        %v3591 = vpop.f32.mrf.mxu0
        %v3592 = vadd.f32 0.0, %v3591
        %3593 = vmatmul.f32.gmra.mxu0 %v2714
        %v3594 = vpop.f32.mrf.mxu0
        %v3595 = vadd.f32 0.0, %v3594
        %3596 = vmatmul.f32.gmra.mxu0 %v2717
        %v3597 = vpop.f32.mrf.mxu0
        %v3598 = vadd.f32 0.0, %v3597
        %3599 = vmatmul.f32.gmra.mxu0 %v2720
        %v3600 = vpop.f32.mrf.mxu0
        %v3601 = vadd.f32 0.0, %v3600
        %3602 = vmatmul.f32.gmra.mxu0 %v2723
        %v3603 = vpop.f32.mrf.mxu0
        %v3604 = vadd.f32 0.0, %v3603
        %3605 = vmatmul.f32.gmra.mxu0 %v2726
        %v3606 = vpop.f32.mrf.mxu0
        %v3607 = vadd.f32 0.0, %v3606
        %3608 = vmatmul.f32.gmra.mxu0 %v2729
        %v3609 = vpop.f32.mrf.mxu0
        %v3610 = vadd.f32 0.0, %v3609
        %3611 = vmatmul.f32.gmra.mxu0 %v2732
        %v3612 = vpop.f32.mrf.mxu0
        %v3613 = vadd.f32 0.0, %v3612
        %3614 = vmatmul.f32.gmra.mxu0 %v2735
        %v3615 = vpop.f32.mrf.mxu0
        %v3616 = vadd.f32 0.0, %v3615
        %3617 = vmatmul.f32.gmra.mxu0 %v2738
        %v3618 = vpop.f32.mrf.mxu0
        %v3619 = vadd.f32 0.0, %v3618
        %3620 = vmatmul.f32.gmra.mxu0 %v2741
        %v3621 = vpop.f32.mrf.mxu0
        %v3622 = vadd.f32 0.0, %v3621
        %3623 = vmatmul.f32.gmra.mxu0 %v2744
        %v3624 = vpop.f32.mrf.mxu0
        %v3625 = vadd.f32 0.0, %v3624
        %3626 = vmatmul.f32.gmra.mxu0 %v2747
        %v3627 = vpop.f32.mrf.mxu0
        %v3628 = vadd.f32 0.0, %v3627
        %3629 = vmatmul.f32.gmra.mxu0 %v2750
        %v3630 = vpop.f32.mrf.mxu0
        %v3631 = vadd.f32 0.0, %v3630
        %3632 = vmatmul.f32.gmra.mxu0 %v2753
        %v3633 = vpop.f32.mrf.mxu0
        %v3634 = vadd.f32 0.0, %v3633
        %3635 = vmatmul.f32.gmra.mxu0 %v2756
        %v3636 = vpop.f32.mrf.mxu0
        %v3637 = vadd.f32 0.0, %v3636
        %3638 = vmatmul.f32.gmra.mxu0 %v2759
        %v3639 = vpop.f32.mrf.mxu0
        %v3640 = vadd.f32 0.0, %v3639
        %3641 = vmatmul.f32.gmra.mxu0 %v2762
        %v3642 = vpop.f32.mrf.mxu0
        %v3643 = vadd.f32 0.0, %v3642
        %3644 = vmatmul.f32.gmra.mxu0 %v2765
        %v3645 = vpop.f32.mrf.mxu0
        %v3646 = vadd.f32 0.0, %v3645
        %3647 = vmatmul.f32.gmra.mxu0 %v2768
        %v3648 = vpop.f32.mrf.mxu0
        %v3649 = vadd.f32 0.0, %v3648
        %3650 = vmatmul.f32.gmra.mxu0 %v2771
        %v3651 = vpop.f32.mrf.mxu0
        %v3652 = vadd.f32 0.0, %v3651
        %3653 = vmatmul.f32.gmra.mxu0 %v2774
        %v3654 = vpop.f32.mrf.mxu0
        %v3655 = vadd.f32 0.0, %v3654
        %3656 = vmatmul.f32.gmra.mxu0 %v2777
        %v3657 = vpop.f32.mrf.mxu0
        %v3658 = vadd.f32 0.0, %v3657
        %3659 = vmatmul.f32.gmra.mxu0 %v2780
        %v3660 = vpop.f32.mrf.mxu0
        %v3661 = vadd.f32 0.0, %v3660
        %3662 = vmatmul.f32.gmra.mxu0 %v2783
        %v3663 = vpop.f32.mrf.mxu0
        %v3664 = vadd.f32 0.0, %v3663
        %3665 = vmatmul.f32.gmra.mxu0 %v2786
        %v3666 = vpop.f32.mrf.mxu0
        %v3667 = vadd.f32 0.0, %v3666
        %3668 = vmatmul.f32.gmra.mxu0 %v2789
        %v3669 = vpop.f32.mrf.mxu0
        %v3670 = vadd.f32 0.0, %v3669
        %3671 = vmatmul.f32.gmra.mxu0 %v2792
        %v3672 = vpop.f32.mrf.mxu0
        %v3673 = vadd.f32 0.0, %v3672
        %3674 = vmatmul.f32.gmra.mxu0 %v2795
        %v3675 = vpop.f32.mrf.mxu0
        %v3676 = vadd.f32 0.0, %v3675
        %3677 = vmatmul.f32.gmra.mxu0 %v2798
        %v3678 = vpop.f32.mrf.mxu0
        %v3679 = vadd.f32 0.0, %v3678
        %3680 = vmatmul.f32.gmra.mxu0 %v2801
        %v3681 = vpop.f32.mrf.mxu0
        %v3682 = vadd.f32 0.0, %v3681
        %3683 = vmatmul.f32.gmra.mxu0 %v2804
        %v3684 = vpop.f32.mrf.mxu0
        %v3685 = vadd.f32 0.0, %v3684
        %3686 = vmatmul.f32.gmra.mxu0 %v2807
        %v3687 = vpop.f32.mrf.mxu0
        %v3688 = vadd.f32 0.0, %v3687
        %3689 = vmatmul.f32.gmra.mxu0 %v2810
        %v3690 = vpop.f32.mrf.mxu0
        %v3691 = vadd.f32 0.0, %v3690
        %3692 = vmatmul.f32.gmra.mxu0 %v2813
        %v3693 = vpop.f32.mrf.mxu0
        %v3694 = vadd.f32 0.0, %v3693
        %3695 = vmatmul.f32.gmra.mxu0 %v2816
        %v3696 = vpop.f32.mrf.mxu0
        %v3697 = vadd.f32 0.0, %v3696
        %3698 = vmatmul.f32.gmra.mxu0 %v2819
        %v3699 = vpop.f32.mrf.mxu0
        %v3700 = vadd.f32 0.0, %v3699
        %3701 = vmatmul.f32.gmra.mxu0 %v2822
        %v3702 = vpop.f32.mrf.mxu0
        %v3703 = vadd.f32 0.0, %v3702
        %3704 = vmatmul.f32.gmra.mxu0 %v2825
        %v3705 = vpop.f32.mrf.mxu0
        %v3706 = vadd.f32 0.0, %v3705
        %3707 = vmatmul.f32.gmra.mxu0 %v2828
        %v3708 = vpop.f32.mrf.mxu0
        %v3709 = vadd.f32 0.0, %v3708
        %3710 = vmatmul.f32.gmra.mxu0 %v2831
        %v3711 = vpop.f32.mrf.mxu0
        %v3712 = vadd.f32 0.0, %v3711
        %3713 = vmatmul.f32.gmra.mxu0 %v2834
        %v3714 = vpop.f32.mrf.mxu0
        %v3715 = vadd.f32 0.0, %v3714
        %3716 = vmatmul.f32.gmra.mxu0 %v2837
        %v3717 = vpop.f32.mrf.mxu0
        %v3718 = vadd.f32 0.0, %v3717
        %3719 = vmatmul.f32.gmra.mxu0 %v2840
        %v3720 = vpop.f32.mrf.mxu0
        %v3721 = vadd.f32 0.0, %v3720
        %3722 = vmatmul.f32.gmra.mxu0 %v2843
        %v3723 = vpop.f32.mrf.mxu0
        %v3724 = vadd.f32 0.0, %v3723
        %3725 = vmatmul.f32.gmra.mxu0 %v2846
        %v3726 = vpop.f32.mrf.mxu0
        %v3727 = vadd.f32 0.0, %v3726
        %3728 = vmatmul.f32.gmra.mxu0 %v2849
        %v3729 = vpop.f32.mrf.mxu0
        %v3730 = vadd.f32 0.0, %v3729
        %3731 = vmatmul.f32.gmra.mxu0 %v2852
        %v3732 = vpop.f32.mrf.mxu0
        %v3733 = vadd.f32 0.0, %v3732
        %3734 = vmatmul.f32.gmra.mxu0 %v2855
        %v3735 = vpop.f32.mrf.mxu0
        %v3736 = vadd.f32 0.0, %v3735
        %3737 = vmatmul.f32.gmra.mxu0 %v2858
        %v3738 = vpop.f32.mrf.mxu0
        %v3739 = vadd.f32 0.0, %v3738
        %3740 = vmatmul.f32.gmra.mxu0 %v2861
        %v3741 = vpop.f32.mrf.mxu0
        %v3742 = vadd.f32 0.0, %v3741
        %3743 = vmatmul.f32.gmra.mxu0 %v2864
        %v3744 = vpop.f32.mrf.mxu0
        %v3745 = vadd.f32 0.0, %v3744
        %3746 = vmatmul.f32.gmra.mxu0 %v2867
        %v3747 = vpop.f32.mrf.mxu0
        %v3748 = vadd.f32 0.0, %v3747
        %3749 = vmatmul.f32.gmra.mxu0 %v2870
        %v3750 = vpop.f32.mrf.mxu0
        %v3751 = vadd.f32 0.0, %v3750
        %3752 = vmatmul.f32.gmra.mxu0 %v2873
        %v3753 = vpop.f32.mrf.mxu0
        %v3754 = vadd.f32 0.0, %v3753
        %3755 = vmatmul.f32.gmra.mxu0 %v2876
        %v3756 = vpop.f32.mrf.mxu0
        %v3757 = vadd.f32 0.0, %v3756
        %3758 = vmatmul.f32.gmra.mxu0 %v2879
        %v3759 = vpop.f32.mrf.mxu0
        %v3760 = vadd.f32 0.0, %v3759
        %3761 = vmatmul.f32.gmra.mxu0 %v2882
        %v3762 = vpop.f32.mrf.mxu0
        %v3763 = vadd.f32 0.0, %v3762
        %3764 = vmatmul.f32.gmra.mxu0 %v2885
        %v3765 = vpop.f32.mrf.mxu0
        %v3766 = vadd.f32 0.0, %v3765
        %3767 = vmatmul.f32.gmra.mxu0 %v2888
        %v3768 = vpop.f32.mrf.mxu0
        %v3769 = vadd.f32 0.0, %v3768
        %3770 = vmatmul.f32.gmra.mxu0 %v2891
        %v3771 = vpop.f32.mrf.mxu0
        %v3772 = vadd.f32 0.0, %v3771
        %3773 = vmatmul.f32.gmra.mxu0 %v2894
        %v3774 = vpop.f32.mrf.mxu0
        %v3775 = vadd.f32 0.0, %v3774
        %3776 = vmatmul.f32.gmra.mxu0 %v2897
        %v3777 = vpop.f32.mrf.mxu0
        %v3778 = vadd.f32 0.0, %v3777
        %3779 = vmatmul.f32.gmra.mxu0 %v2900
        %v3780 = vpop.f32.mrf.mxu0
        %v3781 = vadd.f32 0.0, %v3780
        %3782 = vmatmul.f32.gmra.mxu0 %v2903
        %v3783 = vpop.f32.mrf.mxu0
        %v3784 = vadd.f32 0.0, %v3783
        %3785 = vmatmul.f32.gmra.mxu0 %v2906
        %v3786 = vpop.f32.mrf.mxu0
        %v3787 = vadd.f32 0.0, %v3786
        %3788 = vmatmul.f32.gmra.mxu0 %v2909
        %v3789 = vpop.f32.mrf.mxu0
        %v3790 = vadd.f32 0.0, %v3789
        %3791 = vmatmul.f32.gmra.mxu0 %v2912
        %v3792 = vpop.f32.mrf.mxu0
        %v3793 = vadd.f32 0.0, %v3792
        %3794 = vmatmul.f32.gmra.mxu0 %v2915
        %v3795 = vpop.f32.mrf.mxu0
        %v3796 = vadd.f32 0.0, %v3795
        %3797 = vmatmul.f32.gmra.mxu0 %v2918
        %v3798 = vpop.f32.mrf.mxu0
        %v3799 = vadd.f32 0.0, %v3798
        %3800 = vmatmul.f32.gmra.mxu0 %v2921
        %v3801 = vpop.f32.mrf.mxu0
        %v3802 = vadd.f32 0.0, %v3801
        %3803 = vmatmul.f32.gmra.mxu0 %v2924
        %v3804 = vpop.f32.mrf.mxu0
        %v3805 = vadd.f32 0.0, %v3804
        %3806 = vmatmul.f32.gmra.mxu0 %v2927
        %v3807 = vpop.f32.mrf.mxu0
        %v3808 = vadd.f32 0.0, %v3807
        %3809 = vmatmul.f32.gmra.mxu0 %v2930
        %v3810 = vpop.f32.mrf.mxu0
        %v3811 = vadd.f32 0.0, %v3810
        %3812 = vmatmul.f32.gmra.mxu0 %v2933
        %v3813 = vpop.f32.mrf.mxu0
        %v3814 = vadd.f32 0.0, %v3813
        %3815 = vmatmul.f32.gmra.mxu0 %v2936
        %v3816 = vpop.f32.mrf.mxu0
        %v3817 = vadd.f32 0.0, %v3816
        %3818 = vmatmul.f32.gmra.mxu0 %v2939
        %v3819 = vpop.f32.mrf.mxu0
        %v3820 = vadd.f32 0.0, %v3819
        %3821 = vmatmul.f32.gmra.mxu0 %v2942
        %v3822 = vpop.f32.mrf.mxu0
        %v3823 = vadd.f32 0.0, %v3822
        %3824 = vmatmul.f32.gmra.mxu0 %v2945
        %v3825 = vpop.f32.mrf.mxu0
        %v3826 = vadd.f32 0.0, %v3825
        %3827 = vmatmul.f32.gmra.mxu0 %v2948
        %v3828 = vpop.f32.mrf.mxu0
        %v3829 = vadd.f32 0.0, %v3828
        %3830 = vmatmul.f32.gmra.mxu0 %v2951
        %v3831 = vpop.f32.mrf.mxu0
        %v3832 = vadd.f32 0.0, %v3831
        %3833 = vmatmul.f32.gmra.mxu0 %v2954
        %v3834 = vpop.f32.mrf.mxu0
        %v3835 = vadd.f32 0.0, %v3834
        %3836 = vmatmul.f32.gmra.mxu0 %v2957
        %v3837 = vpop.f32.mrf.mxu0
        %v3838 = vadd.f32 0.0, %v3837
        %3839 = vmatmul.f32.gmra.mxu0 %v2960
        %v3840 = vpop.f32.mrf.mxu0
        %v3841 = vadd.f32 0.0, %v3840
        %3842 = vmatmul.f32.gmra.mxu0 %v2963
        %v3843 = vpop.f32.mrf.mxu0
        %v3844 = vadd.f32 0.0, %v3843
        %3845 = vmatmul.f32.gmra.mxu0 %v2966
        %v3846 = vpop.f32.mrf.mxu0
        %v3847 = vadd.f32 0.0, %v3846
        %3848 = vmatmul.f32.gmra.mxu0 %v2969
        %v3849 = vpop.f32.mrf.mxu0
        %v3850 = vadd.f32 0.0, %v3849
        %3851 = vmatmul.f32.gmra.mxu0 %v2972
        %v3852 = vpop.f32.mrf.mxu0
        %v3853 = vadd.f32 0.0, %v3852
        %3854 = vmatmul.f32.gmra.mxu0 %v2975
        %v3855 = vpop.f32.mrf.mxu0
        %v3856 = vadd.f32 0.0, %v3855
        %3857 = vmatmul.f32.gmra.mxu0 %v2978
        %v3858 = vpop.f32.mrf.mxu0
        %v3859 = vadd.f32 0.0, %v3858
        %3860 = vmatmul.f32.gmra.mxu0 %v2981
        %v3861 = vpop.f32.mrf.mxu0
        %v3862 = vadd.f32 0.0, %v3861
        %3863 = vmatmul.f32.gmra.mxu0 %v2984
        %v3864 = vpop.f32.mrf.mxu0
        %v3865 = vadd.f32 0.0, %v3864
        %3866 = vmatmul.f32.gmra.mxu0 %v2987
        %v3867 = vpop.f32.mrf.mxu0
        %v3868 = vadd.f32 0.0, %v3867
        %3869 = vmatmul.f32.gmra.mxu0 %v2990
        %v3870 = vpop.f32.mrf.mxu0
        %v3871 = vadd.f32 0.0, %v3870
        %3872 = vmatmul.f32.gmra.mxu0 %v2993
        %v3873 = vpop.f32.mrf.mxu0
        %v3874 = vadd.f32 0.0, %v3873
        %3875 = vmatmul.f32.gmra.mxu0 %v2996
        %v3876 = vpop.f32.mrf.mxu0
        %v3877 = vadd.f32 0.0, %v3876
        %3878 = vmatmul.f32.gmra.mxu0 %v2999
        %v3879 = vpop.f32.mrf.mxu0
        %v3880 = vadd.f32 0.0, %v3879
        %3881 = vmatmul.f32.gmra.mxu0 %v3002
        %v3882 = vpop.f32.mrf.mxu0
        %v3883 = vadd.f32 0.0, %v3882
        %3884 = vmatmul.f32.gmra.mxu0 %v3005
        %v3885 = vpop.f32.mrf.mxu0
        %v3886 = vadd.f32 0.0, %v3885
        %3887 = vmatmul.f32.gmra.mxu0 %v3008
        %v3888 = vpop.f32.mrf.mxu0
        %v3889 = vadd.f32 0.0, %v3888
        %3890 = vmatmul.f32.gmra.mxu0 %v3011
        %v3891 = vpop.f32.mrf.mxu0
        %v3892 = vadd.f32 0.0, %v3891
        %3893 = vmatmul.f32.gmra.mxu0 %v3014
        %v3894 = vpop.f32.mrf.mxu0
        %v3895 = vadd.f32 0.0, %v3894
        %3896 = vmatmul.f32.gmra.mxu0 %v3017
        %v3897 = vpop.f32.mrf.mxu0
        %v3898 = vadd.f32 0.0, %v3897
        %3899 = vmatmul.f32.gmra.mxu0 %v3020
        %v3900 = vpop.f32.mrf.mxu0
        %v3901 = vadd.f32 0.0, %v3900
        %3902 = vmatmul.f32.gmra.mxu0 %v3023
        %v3903 = vpop.f32.mrf.mxu0
        %v3904 = vadd.f32 0.0, %v3903
        %3905 = vmatmul.f32.gmra.mxu0 %v3026
        %v3906 = vpop.f32.mrf.mxu0
        %v3907 = vadd.f32 0.0, %v3906
        %3908 = vmatmul.f32.gmra.mxu0 %v3029
        %v3909 = vpop.f32.mrf.mxu0
        %v3910 = vadd.f32 0.0, %v3909
        %3911 = vmatmul.f32.gmra.mxu0 %v3032
        %v3912 = vpop.f32.mrf.mxu0
        %v3913 = vadd.f32 0.0, %v3912
        %3914 = vmatmul.f32.gmra.mxu0 %v3035
        %v3915 = vpop.f32.mrf.mxu0
        %v3916 = vadd.f32 0.0, %v3915
        %3917 = vmatmul.f32.gmra.mxu0 %v3038
        %v3918 = vpop.f32.mrf.mxu0
        %v3919 = vadd.f32 0.0, %v3918
        %3920 = vmatmul.f32.gmra.mxu0 %v3041
        %v3921 = vpop.f32.mrf.mxu0
        %v3922 = vadd.f32 0.0, %v3921
        %3923 = vmatmul.f32.gmra.mxu0 %v3044
        %v3924 = vpop.f32.mrf.mxu0
        %v3925 = vadd.f32 0.0, %v3924
        %3926 = vmatmul.f32.gmra.mxu0 %v3047
        %v3927 = vpop.f32.mrf.mxu0
        %v3928 = vadd.f32 0.0, %v3927
        %3929 = vmatmul.f32.gmra.mxu0 %v3050
        %v3930 = vpop.f32.mrf.mxu0
        %v3931 = vadd.f32 0.0, %v3930
        %3932 = vmatmul.f32.gmra.mxu0 %v3053
        %v3933 = vpop.f32.mrf.mxu0
        %v3934 = vadd.f32 0.0, %v3933
        %3935 = vmatmul.f32.gmra.mxu0 %v3056
        %v3936 = vpop.f32.mrf.mxu0
        %v3937 = vadd.f32 0.0, %v3936
        %3938 = vmatmul.f32.gmra.mxu0 %v3059
        %v3939 = vpop.f32.mrf.mxu0
        %v3940 = vadd.f32 0.0, %v3939
        %3941 = vmatmul.f32.gmra.mxu0 %v3062
        %v3942 = vpop.f32.mrf.mxu0
        %v3943 = vadd.f32 0.0, %v3942
        %3944 = vmatmul.f32.gmra.mxu0 %v3065
        %v3945 = vpop.f32.mrf.mxu0
        %v3946 = vadd.f32 0.0, %v3945
        %3947 = vmatmul.f32.gmra.mxu0 %v3068
        %v3948 = vpop.f32.mrf.mxu0
        %v3949 = vadd.f32 0.0, %v3948
        %3950 = vmatmul.f32.gmra.mxu0 %v3071
        %v3951 = vpop.f32.mrf.mxu0
        %v3952 = vadd.f32 0.0, %v3951
        %3953 = vmatmul.f32.gmra.mxu0 %v3074
        %v3954 = vpop.f32.mrf.mxu0
        %v3955 = vadd.f32 0.0, %v3954
        %3956 = vmatmul.f32.gmra.mxu0 %v3077
        %v3957 = vpop.f32.mrf.mxu0
        %v3958 = vadd.f32 0.0, %v3957
        %3959 = vmatmul.f32.gmra.mxu0 %v3080
        %v3960 = vpop.f32.mrf.mxu0
        %v3961 = vadd.f32 0.0, %v3960
        %3962 = vmatmul.f32.gmra.mxu0 %v3083
        %v3963 = vpop.f32.mrf.mxu0
        %v3964 = vadd.f32 0.0, %v3963
        %3965 = vmatmul.f32.gmra.mxu0 %v3086
        %v3966 = vpop.f32.mrf.mxu0
        %v3967 = vadd.f32 0.0, %v3966
        %3968 = vmatmul.f32.gmra.mxu0 %v3089
        %v3969 = vpop.f32.mrf.mxu0
        %v3970 = vadd.f32 0.0, %v3969
        %3971 = vmatmul.f32.gmra.mxu0 %v3092
        %v3972 = vpop.f32.mrf.mxu0
        %v3973 = vadd.f32 0.0, %v3972
        %3974 = vmatmul.f32.gmra.mxu0 %v3095
        %v3975 = vpop.f32.mrf.mxu0
        %v3976 = vadd.f32 0.0, %v3975
        %3977 = vmatmul.f32.gmra.mxu0 %v3098
        %v3978 = vpop.f32.mrf.mxu0
        %v3979 = vadd.f32 0.0, %v3978
        %3980 = vmatmul.f32.gmra.mxu0 %v3101
        %v3981 = vpop.f32.mrf.mxu0
        %v3982 = vadd.f32 0.0, %v3981
        %3983 = vmatmul.f32.gmra.mxu0 %v3104
        %v3984 = vpop.f32.mrf.mxu0
        %v3985 = vadd.f32 0.0, %v3984
        %3986 = vmatmul.f32.gmra.mxu0 %v3107
        %v3987 = vpop.f32.mrf.mxu0
        %v3988 = vadd.f32 0.0, %v3987
        %3989 = vmatmul.f32.gmra.mxu0 %v3110
        %v3990 = vpop.f32.mrf.mxu0
        %v3991 = vadd.f32 0.0, %v3990
        %3992 = vmatmul.f32.gmra.mxu0 %v3113
        %v3993 = vpop.f32.mrf.mxu0
        %v3994 = vadd.f32 0.0, %v3993
        %3995 = vmatmul.f32.gmra.mxu0 %v3116
        %v3996 = vpop.f32.mrf.mxu0
        %v3997 = vadd.f32 0.0, %v3996
        %3998 = vmatmul.f32.gmra.mxu0 %v3119
        %v3999 = vpop.f32.mrf.mxu0
        %v4000 = vadd.f32 0.0, %v3999
        %4001 = vmatmul.f32.gmra.mxu0 %v3122
        %v4002 = vpop.f32.mrf.mxu0
        %v4003 = vadd.f32 0.0, %v4002
        %4004 = vmatmul.f32.gmra.mxu0 %v3125
        %v4005 = vpop.f32.mrf.mxu0
        %v4006 = vadd.f32 0.0, %v4005
        %4007 = vmatmul.f32.gmra.mxu0 %v3128
        %v4008 = vpop.f32.mrf.mxu0
        %v4009 = vadd.f32 0.0, %v4008
        %4010 = vmatmul.f32.gmra.mxu0 %v3131
        %v4011 = vpop.f32.mrf.mxu0
        %v4012 = vadd.f32 0.0, %v4011
        %4013 = vmatmul.f32.gmra.mxu0 %v3134
        %v4014 = vpop.f32.mrf.mxu0
        %v4015 = vadd.f32 0.0, %v4014
        %4016 = vmatmul.f32.gmra.mxu0 %v3137
        %v4017 = vpop.f32.mrf.mxu0
        %v4018 = vadd.f32 0.0, %v4017
        %4019 = vmatmul.f32.gmra.mxu0 %v3140
        %v4020 = vpop.f32.mrf.mxu0
        %v4021 = vadd.f32 0.0, %v4020
        %4022 = vmatmul.f32.gmra.mxu0 %v3143
        %v4023 = vpop.f32.mrf.mxu0
        %v4024 = vadd.f32 0.0, %v4023
        %4025 = vmatmul.f32.gmra.mxu0 %v3146
        %v4026 = vpop.f32.mrf.mxu0
        %v4027 = vadd.f32 0.0, %v4026
        %4028 = vmatmul.f32.gmra.mxu0 %v3149
        %v4029 = vpop.f32.mrf.mxu0
        %v4030 = vadd.f32 0.0, %v4029
        %4031 = vmatmul.f32.gmra.mxu0 %v3152
        %v4032 = vpop.f32.mrf.mxu0
        %v4033 = vadd.f32 0.0, %v4032
        %4034 = vmatmul.f32.gmra.mxu0 %v3155
        %v4035 = vpop.f32.mrf.mxu0
        %v4036 = vadd.f32 0.0, %v4035
        %4037 = vmatmul.f32.gmra.mxu0 %v3158
        %v4038 = vpop.f32.mrf.mxu0
        %v4039 = vadd.f32 0.0, %v4038
        %4040 = vmatmul.f32.gmra.mxu0 %v3161
        %v4041 = vpop.f32.mrf.mxu0
        %v4042 = vadd.f32 0.0, %v4041
        %4043 = vmatmul.f32.gmra.mxu0 %v3164
        %v4044 = vpop.f32.mrf.mxu0
        %v4045 = vadd.f32 0.0, %v4044
        %4046 = vmatmul.f32.gmra.mxu0 %v3167
        %v4047 = vpop.f32.mrf.mxu0
        %v4048 = vadd.f32 0.0, %v4047
        %4049 = vmatmul.f32.gmra.mxu0 %v3170
        %v4050 = vpop.f32.mrf.mxu0
        %v4051 = vadd.f32 0.0, %v4050
        %4052 = vmatmul.f32.gmra.mxu0 %v3173
        %v4053 = vpop.f32.mrf.mxu0
        %v4054 = vadd.f32 0.0, %v4053
        %4055 = vmatmul.f32.gmra.mxu0 %v3176
        %v4056 = vpop.f32.mrf.mxu0
        %v4057 = vadd.f32 0.0, %v4056
        %4058 = vmatmul.f32.gmra.mxu0 %v3179
        %v4059 = vpop.f32.mrf.mxu0
        %v4060 = vadd.f32 0.0, %v4059
        %4061 = vmatmul.f32.gmra.mxu0 %v3182
        %v4062 = vpop.f32.mrf.mxu0
        %v4063 = vadd.f32 0.0, %v4062
        %4064 = vmatmul.f32.gmra.mxu0 %v3185
        %v4065 = vpop.f32.mrf.mxu0
        %v4066 = vadd.f32 0.0, %v4065
        %4067 = vmatmul.f32.gmra.mxu0 %v3188
        %v4068 = vpop.f32.mrf.mxu0
        %v4069 = vadd.f32 0.0, %v4068
        %4070 = vmatmul.f32.gmra.mxu0 %v3191
        %v4071 = vpop.f32.mrf.mxu0
        %v4072 = vadd.f32 0.0, %v4071
        %4073 = vmatmul.f32.gmra.mxu0 %v3194
        %v4074 = vpop.f32.mrf.mxu0
        %v4075 = vadd.f32 0.0, %v4074
        %4076 = vmatmul.f32.gmra.mxu0 %v3197
        %v4077 = vpop.f32.mrf.mxu0
        %v4078 = vadd.f32 0.0, %v4077
        %4079 = vmatmul.f32.gmra.mxu0 %v3200
        %v4080 = vpop.f32.mrf.mxu0
        %v4081 = vadd.f32 0.0, %v4080
        %4082 = vmatmul.f32.gmra.mxu0 %v3203
        %v4083 = vpop.f32.mrf.mxu0
        %v4084 = vadd.f32 0.0, %v4083
        %4085 = vmatmul.f32.gmra.mxu0 %v3206
        %v4086 = vpop.f32.mrf.mxu0
        %v4087 = vadd.f32 0.0, %v4086
        %4088 = vmatmul.f32.gmra.mxu0 %v3209
        %v4089 = vpop.f32.mrf.mxu0
        %v4090 = vadd.f32 0.0, %v4089
        %4091 = vmatmul.f32.gmra.mxu0 %v3212
        %v4092 = vpop.f32.mrf.mxu0
        %v4093 = vadd.f32 0.0, %v4092
        %4094 = vmatmul.f32.gmra.mxu0 %v3215
        %v4095 = vpop.f32.mrf.mxu0
        %v4096 = vadd.f32 0.0, %v4095
        %4097 = vmatmul.f32.gmra.mxu0 %v3218
        %v4098 = vpop.f32.mrf.mxu0
        %v4099 = vadd.f32 0.0, %v4098
        %4100 = vmatmul.f32.gmra.mxu0 %v3221
        %v4101 = vpop.f32.mrf.mxu0
        %v4102 = vadd.f32 0.0, %v4101
        %4103 = vmatmul.f32.gmra.mxu0 %v3224
        %v4104 = vpop.f32.mrf.mxu0
        %v4105 = vadd.f32 0.0, %v4104
        %4106 = vmatmul.f32.gmra.mxu0 %v3227
        %v4107 = vpop.f32.mrf.mxu0
        %v4108 = vadd.f32 0.0, %v4107
        %4109 = vmatmul.f32.gmra.mxu0 %v3230
        %v4110 = vpop.f32.mrf.mxu0
        %v4111 = vadd.f32 0.0, %v4110
        %4112 = vmatmul.f32.gmra.mxu0 %v3233
        %v4113 = vpop.f32.mrf.mxu0
        %v4114 = vadd.f32 0.0, %v4113
        %4115 = vmatmul.f32.gmra.mxu0 %v3236
        %v4116 = vpop.f32.mrf.mxu0
        %v4117 = vadd.f32 0.0, %v4116
        %4118 = vmatmul.f32.gmra.mxu0 %v3239
        %v4119 = vpop.f32.mrf.mxu0
        %v4120 = vadd.f32 0.0, %v4119
        %4121 = vmatmul.f32.gmra.mxu0 %v3242
        %v4122 = vpop.f32.mrf.mxu0
        %v4123 = vadd.f32 0.0, %v4122
        %4124 = vmatmul.f32.gmra.mxu0 %v3245
        %v4125 = vpop.f32.mrf.mxu0
        %v4126 = vadd.f32 0.0, %v4125
        %4127 = vmatmul.f32.gmra.mxu0 %v3248
        %v4128 = vpop.f32.mrf.mxu0
        %v4129 = vadd.f32 0.0, %v4128
        %4130 = vmatmul.f32.gmra.mxu0 %v3251
        %v4131 = vpop.f32.mrf.mxu0
        %v4132 = vadd.f32 0.0, %v4131
        %4133 = vmatmul.f32.gmra.mxu0 %v3254
        %v4134 = vpop.f32.mrf.mxu0
        %v4135 = vadd.f32 0.0, %v4134
        %4136 = vmatmul.f32.gmra.mxu0 %v3257
        %v4137 = vpop.f32.mrf.mxu0
        %v4138 = vadd.f32 0.0, %v4137
        %4139 = vmatmul.f32.gmra.mxu0 %v3260
        %v4140 = vpop.f32.mrf.mxu0
        %v4141 = vadd.f32 0.0, %v4140
        %4142 = vmatmul.f32.gmra.mxu0 %v3263
        %v4143 = vpop.f32.mrf.mxu0
        %v4144 = vadd.f32 0.0, %v4143
        %4145 = vmatmul.f32.gmra.mxu0 %v3266
        %v4146 = vpop.f32.mrf.mxu0
        %v4147 = vadd.f32 0.0, %v4146
        %4148 = vmatmul.f32.gmra.mxu0 %v3269
        %v4149 = vpop.f32.mrf.mxu0
        %v4150 = vadd.f32 0.0, %v4149
        %4151 = vmatmul.f32.gmra.mxu0 %v3272
        %v4152 = vpop.f32.mrf.mxu0
        %v4153 = vadd.f32 0.0, %v4152
        %4154 = vmatmul.f32.gmra.mxu0 %v3275
        %v4155 = vpop.f32.mrf.mxu0
        %v4156 = vadd.f32 0.0, %v4155
        %4157 = vmatmul.f32.gmra.mxu0 %v3278
        %v4158 = vpop.f32.mrf.mxu0
        %v4159 = vadd.f32 0.0, %v4158
        %4160 = vmatmul.f32.gmra.mxu0 %v3281
        %v4161 = vpop.f32.mrf.mxu0
        %v4162 = vadd.f32 0.0, %v4161
        %4163 = vmatmul.f32.gmra.mxu0 %v3284
        %v4164 = vpop.f32.mrf.mxu0
        %v4165 = vadd.f32 0.0, %v4164
        %4166 = vmatmul.f32.gmra.mxu0 %v3287
        %v4167 = vpop.f32.mrf.mxu0
        %v4168 = vadd.f32 0.0, %v4167
        %4169 = vmatmul.f32.gmra.mxu0 %v3290
        %v4170 = vpop.f32.mrf.mxu0
        %v4171 = vadd.f32 0.0, %v4170
        %4172 = vmatmul.f32.gmra.mxu0 %v3293
        %v4173 = vpop.f32.mrf.mxu0
        %v4174 = vadd.f32 0.0, %v4173
        %4175 = vmatmul.f32.gmra.mxu0 %v3296
        %v4176 = vpop.f32.mrf.mxu0
        %v4177 = vadd.f32 0.0, %v4176
        %4178 = vmatmul.f32.gmra.mxu0 %v3299
        %v4179 = vpop.f32.mrf.mxu0
        %v4180 = vadd.f32 0.0, %v4179
        %4181 = vmatmul.f32.gmra.mxu0 %v3302
        %v4182 = vpop.f32.mrf.mxu0
        %v4183 = vadd.f32 0.0, %v4182
        %4184 = vmatmul.f32.gmra.mxu0 %v3305
        %v4185 = vpop.f32.mrf.mxu0
        %v4186 = vadd.f32 0.0, %v4185
        %4187 = vmatmul.f32.gmra.mxu0 %v3308
        %v4188 = vpop.f32.mrf.mxu0
        %v4189 = vadd.f32 0.0, %v4188
        %4190 = vmatmul.f32.gmra.mxu0 %v3311
        %v4191 = vpop.f32.mrf.mxu0
        %v4192 = vadd.f32 0.0, %v4191
        %4193 = vmatmul.f32.gmra.mxu0 %v3314
        %v4194 = vpop.f32.mrf.mxu0
        %v4195 = vadd.f32 0.0, %v4194
        %4196 = vmatmul.f32.gmra.mxu0 %v3317
        %v4197 = vpop.f32.mrf.mxu0
        %v4198 = vadd.f32 0.0, %v4197
        %4199 = vmatmul.f32.gmra.mxu0 %v3320
        %v4200 = vpop.f32.mrf.mxu0
        %v4201 = vadd.f32 0.0, %v4200
        %4202 = vmatmul.f32.gmra.mxu0 %v3323
        %v4203 = vpop.f32.mrf.mxu0
        %v4204 = vadd.f32 0.0, %v4203
        %4205 = vmatmul.f32.gmra.mxu0 %v3326
        %v4206 = vpop.f32.mrf.mxu0
        %v4207 = vadd.f32 0.0, %v4206
        %4208 = vmatmul.f32.gmra.mxu0 %v3329
        %v4209 = vpop.f32.mrf.mxu0
        %v4210 = vadd.f32 0.0, %v4209
        %4211 = vmatmul.f32.gmra.mxu0 %v3332
        %v4212 = vpop.f32.mrf.mxu0
        %v4213 = vadd.f32 0.0, %v4212
        %4214 = vmatmul.f32.gmra.mxu0 %v3335
        %v4215 = vpop.f32.mrf.mxu0
        %v4216 = vadd.f32 0.0, %v4215
        %4217 = vmatmul.f32.gmra.mxu0 %v3338
        %v4218 = vpop.f32.mrf.mxu0
        %v4219 = vadd.f32 0.0, %v4218
        %4220 = vmatmul.f32.gmra.mxu0 %v3341
        %v4221 = vpop.f32.mrf.mxu0
        %v4222 = vadd.f32 0.0, %v4221
        %4223 = vmatmul.f32.gmra.mxu0 %v3344
        %v4224 = vpop.f32.mrf.mxu0
        %v4225 = vadd.f32 0.0, %v4224
        %4226 = vmatmul.f32.gmra.mxu0 %v3347
        %v4227 = vpop.f32.mrf.mxu0
        %v4228 = vadd.f32 0.0, %v4227
        %4229 = vmatmul.f32.gmra.mxu0 %v3350
        %v4230 = vpop.f32.mrf.mxu0
        %v4231 = vadd.f32 0.0, %v4230
        %4232 = vmatmul.f32.gmra.mxu0 %v3353
        %v4233 = vpop.f32.mrf.mxu0
        %v4234 = vadd.f32 0.0, %v4233
        %4235 = vmatmul.f32.gmra.mxu0 %v3356
        %v4236 = vpop.f32.mrf.mxu0
        %v4237 = vadd.f32 0.0, %v4236
        %4238 = vmatmul.f32.gmra.mxu0 %v3359
        %v4239 = vpop.f32.mrf.mxu0
        %v4240 = vadd.f32 0.0, %v4239
        %4241 = vmatmul.f32.gmra.mxu0 %v3362
        %v4242 = vpop.f32.mrf.mxu0
        %v4243 = vadd.f32 0.0, %v4242
        %4244 = vmatmul.f32.gmra.mxu0 %v3365
        %v4245 = vpop.f32.mrf.mxu0
        %v4246 = vadd.f32 0.0, %v4245
        %4247 = vmatmul.f32.gmra.mxu0 %v3368
        %v4248 = vpop.f32.mrf.mxu0
        %v4249 = vadd.f32 0.0, %v4248
        %4250 = vmatmul.f32.gmra.mxu0 %v3371
        %v4251 = vpop.f32.mrf.mxu0
        %v4252 = vadd.f32 0.0, %v4251
        %4253 = vmatmul.f32.gmra.mxu0 %v3374
        %v4254 = vpop.f32.mrf.mxu0
        %v4255 = vadd.f32 0.0, %v4254
        %4256 = vmatmul.f32.gmra.mxu0 %v3377
        %v4257 = vpop.f32.mrf.mxu0
        %v4258 = vadd.f32 0.0, %v4257
        %4259 = vmatmul.f32.gmra.mxu0 %v3380
        %v4260 = vpop.f32.mrf.mxu0
        %v4261 = vadd.f32 0.0, %v4260
        %4262 = vmatmul.f32.gmra.mxu0 %v3383
        %v4263 = vpop.f32.mrf.mxu0
        %v4264 = vadd.f32 0.0, %v4263
        %4265 = vmatmul.f32.gmra.mxu0 %v3386
        %v4266 = vpop.f32.mrf.mxu0
        %v4267 = vadd.f32 0.0, %v4266
        %4268 = vmatmul.f32.gmra.mxu0 %v3389
        %v4269 = vpop.f32.mrf.mxu0
        %v4270 = vadd.f32 0.0, %v4269
        %4271 = vmatmul.f32.gmra.mxu0 %v3392
        %v4272 = vpop.f32.mrf.mxu0
        %v4273 = vadd.f32 0.0, %v4272
        %4274 = vmatmul.f32.gmra.mxu0 %v3395
        %v4275 = vpop.f32.mrf.mxu0
        %v4276 = vadd.f32 0.0, %v4275
        %4277 = vmatmul.f32.gmra.mxu0 %v3398
        %v4278 = vpop.f32.mrf.mxu0
        %v4279 = vadd.f32 0.0, %v4278
        %4280 = vmatmul.f32.gmra.mxu0 %v3401
        %v4281 = vpop.f32.mrf.mxu0
        %v4282 = vadd.f32 0.0, %v4281
        %4283 = vmatmul.f32.gmra.mxu0 %v3404
        %v4284 = vpop.f32.mrf.mxu0
        %v4285 = vadd.f32 0.0, %v4284
        %4286 = vmatmul.f32.gmra.mxu0 %v3407
        %v4287 = vpop.f32.mrf.mxu0
        %v4288 = vadd.f32 0.0, %v4287
        %4289 = vmatmul.f32.gmra.mxu0 %v3410
        %v4290 = vpop.f32.mrf.mxu0
        %v4291 = vadd.f32 0.0, %v4290
        %4292 = vmatmul.f32.gmra.mxu0 %v3413
        %v4293 = vpop.f32.mrf.mxu0
        %v4294 = vadd.f32 0.0, %v4293
        %4295 = vmatmul.f32.gmra.mxu0 %v3416
        %v4296 = vpop.f32.mrf.mxu0
        %v4297 = vadd.f32 0.0, %v4296
        %4298 = vmatmul.f32.gmra.mxu0 %v3419
        %v4299 = vpop.f32.mrf.mxu0
        %v4300 = vadd.f32 0.0, %v4299
        %4301 = vmatmul.f32.gmra.mxu0 %v3422
        %v4302 = vpop.f32.mrf.mxu0
        %v4303 = vadd.f32 0.0, %v4302
        %4304 = vmatmul.f32.gmra.mxu0 %v3425
        %v4305 = vpop.f32.mrf.mxu0
        %v4306 = vadd.f32 0.0, %v4305
        %4307 = vmatmul.f32.gmra.mxu0 %v3428
        %v4308 = vpop.f32.mrf.mxu0
        %v4309 = vadd.f32 0.0, %v4308
        %4310 = vmatmul.f32.gmra.mxu0 %v3431
        %v4311 = vpop.f32.mrf.mxu0
        %v4312 = vadd.f32 0.0, %v4311
        %4313 = vmatmul.f32.gmra.mxu0 %v3434
        %v4314 = vpop.f32.mrf.mxu0
        %v4315 = vadd.f32 0.0, %v4314
        %4316 = vmatmul.f32.gmra.mxu0 %v3437
        %v4317 = vpop.f32.mrf.mxu0
        %v4318 = vadd.f32 0.0, %v4317
        %4319 = vmatmul.f32.gmra.mxu0 %v3440
        %v4320 = vpop.f32.mrf.mxu0
        %v4321 = vadd.f32 0.0, %v4320
        %4322 = vmatmul.f32.gmra.mxu0 %v3443
        %v4323 = vpop.f32.mrf.mxu0
        %v4324 = vadd.f32 0.0, %v4323
        %4325 = vmatmul.f32.gmra.mxu0 %v3446
        %v4326 = vpop.f32.mrf.mxu0
        %v4327 = vadd.f32 0.0, %v4326
        %4328 = vmatmul.f32.gmra.mxu0 %v3449
        %v4329 = vpop.f32.mrf.mxu0
        %v4330 = vadd.f32 0.0, %v4329
        %4331 = vmatmul.f32.gmra.mxu0 %v3452
        %v4332 = vpop.f32.mrf.mxu0
        %v4333 = vadd.f32 0.0, %v4332
        %4334 = vmatmul.f32.gmra.mxu0 %v3455
        %v4335 = vpop.f32.mrf.mxu0
        %v4336 = vadd.f32 0.0, %v4335
        %4337 = vmatmul.f32.gmra.mxu0 %v3458
        %v4338 = vpop.f32.mrf.mxu0
        %v4339 = vadd.f32 0.0, %v4338
        %4340 = vmatmul.f32.gmra.mxu0 %v3461
        %v4341 = vpop.f32.mrf.mxu0
        %v4342 = vadd.f32 0.0, %v4341
        %4343 = vmatmul.f32.gmra.mxu0 %v3464
        %v4344 = vpop.f32.mrf.mxu0
        %v4345 = vadd.f32 0.0, %v4344
        %4346 = vmatmul.f32.gmra.mxu0 %v3467
        %v4347 = vpop.f32.mrf.mxu0
        %v4348 = vadd.f32 0.0, %v4347
        %4349 = vmatmul.f32.gmra.mxu0 %v3470
        %v4350 = vpop.f32.mrf.mxu0
        %v4351 = vadd.f32 0.0, %v4350
        %4352 = vmatmul.f32.gmra.mxu0 %v3473
        %v4353 = vpop.f32.mrf.mxu0
        %v4354 = vadd.f32 0.0, %v4353
        %4355 = vmatmul.f32.gmra.mxu0 %v3476
        %v4356 = vpop.f32.mrf.mxu0
        %v4357 = vadd.f32 0.0, %v4356
        %4358 = vmatmul.f32.gmra.mxu0 %v3479
        %v4359 = vpop.f32.mrf.mxu0
        %v4360 = vadd.f32 0.0, %v4359
        %4361 = vmatmul.f32.gmra.mxu0 %v3482
        %v4362 = vpop.f32.mrf.mxu0
        %v4363 = vadd.f32 0.0, %v4362
        %4364 = vmatmul.f32.gmra.mxu0 %v3485
        %v4365 = vpop.f32.mrf.mxu0
        %v4366 = vadd.f32 0.0, %v4365
        %4367 = vmatmul.f32.gmra.mxu0 %v3488
        %v4368 = vpop.f32.mrf.mxu0
        %v4369 = vadd.f32 0.0, %v4368
        %4370 = vmatmul.f32.gmra.mxu0 %v3491
        %v4371 = vpop.f32.mrf.mxu0
        %v4372 = vadd.f32 0.0, %v4371
        %4373 = vmatmul.f32.gmra.mxu0 %v3494
        %v4374 = vpop.f32.mrf.mxu0
        %v4375 = vadd.f32 0.0, %v4374
        %4376 = vmatmul.f32.gmra.mxu0 %v3497
        %v4377 = vpop.f32.mrf.mxu0
        %v4378 = vadd.f32 0.0, %v4377
        %4379 = vmatmul.f32.gmra.mxu0 %v3500
        %v4380 = vpop.f32.mrf.mxu0
        %v4381 = vadd.f32 0.0, %v4380
        %4382 = vmatmul.f32.gmra.mxu0 %v3503
        %v4383 = vpop.f32.mrf.mxu0
        %v4384 = vadd.f32 0.0, %v4383
        %4385 = vmatmul.f32.gmra.mxu0 %v3506
        %v4386 = vpop.f32.mrf.mxu0
        %v4387 = vadd.f32 0.0, %v4386
        %4388 = vmatmul.f32.gmra.mxu0 %v3509
        %v4389 = vpop.f32.mrf.mxu0
        %v4390 = vadd.f32 0.0, %v4389
        %4391 = vmatmul.f32.gmra.mxu0 %v3512
        %v4392 = vpop.f32.mrf.mxu0
        %v4393 = vadd.f32 0.0, %v4392
        %4394 = vmatmul.f32.gmra.mxu0 %v3515
        %v4395 = vpop.f32.mrf.mxu0
        %v4396 = vadd.f32 0.0, %v4395
        %4397 = vmatmul.f32.gmra.mxu0 %v3518
        %v4398 = vpop.f32.mrf.mxu0
        %v4399 = vadd.f32 0.0, %v4398
        %4400 = vmatmul.f32.gmra.mxu0 %v3521
        %v4401 = vpop.f32.mrf.mxu0
        %v4402 = vadd.f32 0.0, %v4401
        %4403 = vmatmul.f32.gmra.mxu0 %v3524
        %v4404 = vpop.f32.mrf.mxu0
        %v4405 = vadd.f32 0.0, %v4404
        %4406 = vmatmul.f32.gmra.mxu0 %v3527
        %v4407 = vpop.f32.mrf.mxu0
        %v4408 = vadd.f32 0.0, %v4407
        %4409 = vmatmul.f32.gmra.mxu0 %v3530
        %v4410 = vpop.f32.mrf.mxu0
        %v4411 = vadd.f32 0.0, %v4410
        %4412 = vdwg.mxu0
        %v4413 = vld [vmem:[%s629] sm:$0xff]
        %v4414 = vld [vmem:[%s629 + $0x8] sm:$0xff]
        %v4415 = vld [vmem:[%s629 + $0x10] sm:$0xff]
        %v4416 = vld [vmem:[%s629 + $0x18] sm:$0xff]
        %s4417 = scalar_lea.vmem %s629, 32
        %v4418 = vld [vmem:[%s4417] sm:$0xff]
        %v4419 = vld [vmem:[%s4417 + $0x8] sm:$0xff]
        %v4420 = vld [vmem:[%s4417 + $0x10] sm:$0xff]
        %v4421 = vld [vmem:[%s4417 + $0x18] sm:$0xff]
        %v4423 = vsel %vm775, %v3604, 0
        %v4426 = vsel %vm775, %v3607, 0
        %v4429 = vsel %vm775, %v3610, 0
        %v4432 = vsel %vm775, %v3613, 0
        %v4435 = vsel %vm775, %v3616, 0
        %v4438 = vsel %vm775, %v3619, 0
        %v4441 = vsel %vm775, %v3622, 0
        %v4444 = vsel %vm775, %v3625, 0
        %v4447 = vsel %vm775, %v3628, 0
        %v4450 = vsel %vm775, %v3631, 0
        %v4453 = vsel %vm775, %v3634, 0
        %v4456 = vsel %vm775, %v3637, 0
        %v4459 = vsel %vm775, %v3640, 0
        %v4462 = vsel %vm775, %v3643, 0
        %v4465 = vsel %vm775, %v3646, 0
        %v4468 = vsel %vm775, %v3649, 0
        %v4471 = vsel %vm775, %v3652, 0
        %v4474 = vsel %vm775, %v3655, 0
        %4476 = vmatpush.msra.mxu0 0.0
        %4477 = vmatpush.msra.mxu0 0.0
        %4478 = vmatpush.msra.mxu0 0.0
        %4479 = vmatpush.msra.mxu0 0.0
        %4480 = vmatpush.msra.mxu0 0.0
        %4481 = vmatpush.msra.mxu0 0.0
        %4482 = vmatpush.msra.mxu0 0.0
        %4483 = vmatpush.msra.mxu0 0.0
        %4484 = vmatpush.msra.mxu0 0.0
        %4485 = vmatpush.msra.mxu0 0.0
        %4486 = vmatpush.msra.mxu0 0.0
        %4487 = vmatpush.msra.mxu0 0.0
        %4488 = vmatpush.msra.mxu0 %v4421
        %4489 = vmatpush.msra.mxu0 %v4420
        %4490 = vmatpush.msra.mxu0 %v4419
        %4491 = vmatpush.msra.mxu0 %v4418
        %4492 = vmatmul.f32.gmra.mxu0 %v4423
        %v4493 = vpop.f32.mrf.mxu0
        %v4494 = vadd.f32 0.0, %v4493
        %4495 = vmatmul.f32.gmra.mxu0 %v4426
        %v4496 = vpop.f32.mrf.mxu0
        %v4497 = vadd.f32 0.0, %v4496
        %4498 = vmatmul.f32.gmra.mxu0 %v4429
        %v4499 = vpop.f32.mrf.mxu0
        %v4500 = vadd.f32 0.0, %v4499
        %4501 = vmatmul.f32.gmra.mxu0 %v4432
        %v4502 = vpop.f32.mrf.mxu0
        %v4503 = vadd.f32 0.0, %v4502
        %4504 = vmatmul.f32.gmra.mxu0 %v4435
        %v4505 = vpop.f32.mrf.mxu0
        %v4506 = vadd.f32 0.0, %v4505
        %4507 = vmatmul.f32.gmra.mxu0 %v4438
        %v4508 = vpop.f32.mrf.mxu0
        %v4509 = vadd.f32 0.0, %v4508
        %4510 = vmatmul.f32.gmra.mxu0 %v4441
        %v4511 = vpop.f32.mrf.mxu0
        %v4512 = vadd.f32 0.0, %v4511
        %4513 = vmatmul.f32.gmra.mxu0 %v4444
        %v4514 = vpop.f32.mrf.mxu0
        %v4515 = vadd.f32 0.0, %v4514
        %4516 = vmatmul.f32.gmra.mxu0 %v4447
        %v4517 = vpop.f32.mrf.mxu0
        %v4518 = vadd.f32 0.0, %v4517
        %4519 = vmatmul.f32.gmra.mxu0 %v4450
        %v4520 = vpop.f32.mrf.mxu0
        %v4521 = vadd.f32 0.0, %v4520
        %4522 = vmatmul.f32.gmra.mxu0 %v4453
        %v4523 = vpop.f32.mrf.mxu0
        %v4524 = vadd.f32 0.0, %v4523
        %4525 = vmatmul.f32.gmra.mxu0 %v4456
        %v4526 = vpop.f32.mrf.mxu0
        %v4527 = vadd.f32 0.0, %v4526
        %4528 = vmatmul.f32.gmra.mxu0 %v4459
        %v4529 = vpop.f32.mrf.mxu0
        %v4530 = vadd.f32 0.0, %v4529
        %4531 = vmatmul.f32.gmra.mxu0 %v4462
        %v4532 = vpop.f32.mrf.mxu0
        %v4533 = vadd.f32 0.0, %v4532
        %4534 = vmatmul.f32.gmra.mxu0 %v4465
        %v4535 = vpop.f32.mrf.mxu0
        %v4536 = vadd.f32 0.0, %v4535
        %4537 = vmatmul.f32.gmra.mxu0 %v4468
        %v4538 = vpop.f32.mrf.mxu0
        %v4539 = vadd.f32 0.0, %v4538
        %4540 = vmatmul.f32.gmra.mxu0 %v4471
        %v4541 = vpop.f32.mrf.mxu0
        %v4542 = vadd.f32 0.0, %v4541
        %4543 = vmatmul.f32.gmra.mxu0 %v4474
        %v4544 = vpop.f32.mrf.mxu0
        %v4545 = vadd.f32 0.0, %v4544
        %4546 = vdwg.mxu0
        %v4548 = vsel %vm775, %v3550, 0
        %v4551 = vsel %vm775, %v3553, 0
        %v4554 = vsel %vm775, %v3556, 0
        %v4557 = vsel %vm775, %v3559, 0
        %v4560 = vsel %vm775, %v3562, 0
        %v4563 = vsel %vm775, %v3565, 0
        %v4566 = vsel %vm775, %v3568, 0
        %v4569 = vsel %vm775, %v3571, 0
        %v4572 = vsel %vm775, %v3574, 0
        %v4575 = vsel %vm775, %v3577, 0
        %v4578 = vsel %vm775, %v3580, 0
        %v4581 = vsel %vm775, %v3583, 0
        %v4584 = vsel %vm775, %v3586, 0
        %v4587 = vsel %vm775, %v3589, 0
        %v4590 = vsel %vm775, %v3592, 0
        %v4593 = vsel %vm775, %v3595, 0
        %v4596 = vsel %vm775, %v3598, 0
        %v4599 = vsel %vm775, %v3601, 0
        %4601 = vmatpush.msra.mxu0 0.0
        %4602 = vmatpush.msra.mxu0 0.0
        %4603 = vmatpush.msra.mxu0 0.0
        %4604 = vmatpush.msra.mxu0 0.0
        %4605 = vmatpush.msra.mxu0 0.0
        %4606 = vmatpush.msra.mxu0 0.0
        %4607 = vmatpush.msra.mxu0 0.0
        %4608 = vmatpush.msra.mxu0 0.0
        %4609 = vmatpush.msra.mxu0 0.0
        %4610 = vmatpush.msra.mxu0 0.0
        %4611 = vmatpush.msra.mxu0 0.0
        %4612 = vmatpush.msra.mxu0 0.0
        %4613 = vmatpush.msra.mxu0 %v4416
        %4614 = vmatpush.msra.mxu0 %v4415
        %4615 = vmatpush.msra.mxu0 %v4414
        %4616 = vmatpush.msra.mxu0 %v4413
        %4617 = vmatmul.f32.gmra.mxu0 %v4548
        %v4618 = vpop.f32.mrf.mxu0
        %v4619 = vadd.f32 %v4494, %v4618
        %4620 = vmatmul.f32.gmra.mxu0 %v4551
        %v4621 = vpop.f32.mrf.mxu0
        %v4622 = vadd.f32 %v4497, %v4621
        %4623 = vmatmul.f32.gmra.mxu0 %v4554
        %v4624 = vpop.f32.mrf.mxu0
        %v4625 = vadd.f32 %v4500, %v4624
        %4626 = vmatmul.f32.gmra.mxu0 %v4557
        %v4627 = vpop.f32.mrf.mxu0
        %v4628 = vadd.f32 %v4503, %v4627
        %4629 = vmatmul.f32.gmra.mxu0 %v4560
        %v4630 = vpop.f32.mrf.mxu0
        %v4631 = vadd.f32 %v4506, %v4630
        %4632 = vmatmul.f32.gmra.mxu0 %v4563
        %v4633 = vpop.f32.mrf.mxu0
        %v4634 = vadd.f32 %v4509, %v4633
        %4635 = vmatmul.f32.gmra.mxu0 %v4566
        %v4636 = vpop.f32.mrf.mxu0
        %v4637 = vadd.f32 %v4512, %v4636
        %4638 = vmatmul.f32.gmra.mxu0 %v4569
        %v4639 = vpop.f32.mrf.mxu0
        %v4640 = vadd.f32 %v4515, %v4639
        %4641 = vmatmul.f32.gmra.mxu0 %v4572
        %v4642 = vpop.f32.mrf.mxu0
        %v4643 = vadd.f32 %v4518, %v4642
        %4644 = vmatmul.f32.gmra.mxu0 %v4575
        %v4645 = vpop.f32.mrf.mxu0
        %v4646 = vadd.f32 %v4521, %v4645
        %4647 = vmatmul.f32.gmra.mxu0 %v4578
        %v4648 = vpop.f32.mrf.mxu0
        %v4649 = vadd.f32 %v4524, %v4648
        %4650 = vmatmul.f32.gmra.mxu0 %v4581
        %v4651 = vpop.f32.mrf.mxu0
        %v4652 = vadd.f32 %v4527, %v4651
        %4653 = vmatmul.f32.gmra.mxu0 %v4584
        %v4654 = vpop.f32.mrf.mxu0
        %v4655 = vadd.f32 %v4530, %v4654
        %4656 = vmatmul.f32.gmra.mxu0 %v4587
        %v4657 = vpop.f32.mrf.mxu0
        %v4658 = vadd.f32 %v4533, %v4657
        %4659 = vmatmul.f32.gmra.mxu0 %v4590
        %v4660 = vpop.f32.mrf.mxu0
        %v4661 = vadd.f32 %v4536, %v4660
        %4662 = vmatmul.f32.gmra.mxu0 %v4593
        %v4663 = vpop.f32.mrf.mxu0
        %v4664 = vadd.f32 %v4539, %v4663
        %4665 = vmatmul.f32.gmra.mxu0 %v4596
        %v4666 = vpop.f32.mrf.mxu0
        %v4667 = vadd.f32 %v4542, %v4666
        %4668 = vmatmul.f32.gmra.mxu0 %v4599
        %v4669 = vpop.f32.mrf.mxu0
        %v4670 = vadd.f32 %v4545, %v4669
        %4671 = vdwg.mxu0
        %s4672 = scalar_lea.vmem %s629, 64
        %v4673 = vld [vmem:[%s4672] sm:$0xff]
        %v4674 = vld [vmem:[%s4672 + $0x8] sm:$0xff]
        %v4675 = vld [vmem:[%s4672 + $0x10] sm:$0xff]
        %v4676 = vld [vmem:[%s4672 + $0x18] sm:$0xff]
        %v4678 = vsel %vm775, %v3658, 0
        %v4681 = vsel %vm775, %v3661, 0
        %v4684 = vsel %vm775, %v3664, 0
        %v4687 = vsel %vm775, %v3667, 0
        %v4690 = vsel %vm775, %v3670, 0
        %v4693 = vsel %vm775, %v3673, 0
        %v4696 = vsel %vm775, %v3676, 0
        %v4699 = vsel %vm775, %v3679, 0
        %v4702 = vsel %vm775, %v3682, 0
        %v4705 = vsel %vm775, %v3685, 0
        %v4708 = vsel %vm775, %v3688, 0
        %v4711 = vsel %vm775, %v3691, 0
        %v4714 = vsel %vm775, %v3694, 0
        %v4717 = vsel %vm775, %v3697, 0
        %v4720 = vsel %vm775, %v3700, 0
        %v4723 = vsel %vm775, %v3703, 0
        %v4726 = vsel %vm775, %v3706, 0
        %v4729 = vsel %vm775, %v3709, 0
        %4731 = vmatpush.msra.mxu0 0.0
        %4732 = vmatpush.msra.mxu0 0.0
        %4733 = vmatpush.msra.mxu0 0.0
        %4734 = vmatpush.msra.mxu0 0.0
        %4735 = vmatpush.msra.mxu0 0.0
        %4736 = vmatpush.msra.mxu0 0.0
        %4737 = vmatpush.msra.mxu0 0.0
        %4738 = vmatpush.msra.mxu0 0.0
        %4739 = vmatpush.msra.mxu0 0.0
        %4740 = vmatpush.msra.mxu0 0.0
        %4741 = vmatpush.msra.mxu0 0.0
        %4742 = vmatpush.msra.mxu0 0.0
        %4743 = vmatpush.msra.mxu0 %v4676
        %4744 = vmatpush.msra.mxu0 %v4675
        %4745 = vmatpush.msra.mxu0 %v4674
        %4746 = vmatpush.msra.mxu0 %v4673
        %4747 = vmatmul.f32.gmra.mxu0 %v4678
        %v4748 = vpop.f32.mrf.mxu0
        %v4749 = vadd.f32 0.0, %v4748
        %4750 = vmatmul.f32.gmra.mxu0 %v4681
        %v4751 = vpop.f32.mrf.mxu0
        %v4752 = vadd.f32 0.0, %v4751
        %4753 = vmatmul.f32.gmra.mxu0 %v4684
        %v4754 = vpop.f32.mrf.mxu0
        %v4755 = vadd.f32 0.0, %v4754
        %4756 = vmatmul.f32.gmra.mxu0 %v4687
        %v4757 = vpop.f32.mrf.mxu0
        %v4758 = vadd.f32 0.0, %v4757
        %4759 = vmatmul.f32.gmra.mxu0 %v4690
        %v4760 = vpop.f32.mrf.mxu0
        %v4761 = vadd.f32 0.0, %v4760
        %4762 = vmatmul.f32.gmra.mxu0 %v4693
        %v4763 = vpop.f32.mrf.mxu0
        %v4764 = vadd.f32 0.0, %v4763
        %4765 = vmatmul.f32.gmra.mxu0 %v4696
        %v4766 = vpop.f32.mrf.mxu0
        %v4767 = vadd.f32 0.0, %v4766
        %4768 = vmatmul.f32.gmra.mxu0 %v4699
        %v4769 = vpop.f32.mrf.mxu0
        %v4770 = vadd.f32 0.0, %v4769
        %4771 = vmatmul.f32.gmra.mxu0 %v4702
        %v4772 = vpop.f32.mrf.mxu0
        %v4773 = vadd.f32 0.0, %v4772
        %4774 = vmatmul.f32.gmra.mxu0 %v4705
        %v4775 = vpop.f32.mrf.mxu0
        %v4776 = vadd.f32 0.0, %v4775
        %4777 = vmatmul.f32.gmra.mxu0 %v4708
        %v4778 = vpop.f32.mrf.mxu0
        %v4779 = vadd.f32 0.0, %v4778
        %4780 = vmatmul.f32.gmra.mxu0 %v4711
        %v4781 = vpop.f32.mrf.mxu0
        %v4782 = vadd.f32 0.0, %v4781
        %4783 = vmatmul.f32.gmra.mxu0 %v4714
        %v4784 = vpop.f32.mrf.mxu0
        %v4785 = vadd.f32 0.0, %v4784
        %4786 = vmatmul.f32.gmra.mxu0 %v4717
        %v4787 = vpop.f32.mrf.mxu0
        %v4788 = vadd.f32 0.0, %v4787
        %4789 = vmatmul.f32.gmra.mxu0 %v4720
        %v4790 = vpop.f32.mrf.mxu0
        %v4791 = vadd.f32 0.0, %v4790
        %4792 = vmatmul.f32.gmra.mxu0 %v4723
        %v4793 = vpop.f32.mrf.mxu0
        %v4794 = vadd.f32 0.0, %v4793
        %4795 = vmatmul.f32.gmra.mxu0 %v4726
        %v4796 = vpop.f32.mrf.mxu0
        %v4797 = vadd.f32 0.0, %v4796
        %4798 = vmatmul.f32.gmra.mxu0 %v4729
        %v4799 = vpop.f32.mrf.mxu0
        %v4800 = vadd.f32 0.0, %v4799
        %4801 = vdwg.mxu0
        %v4802 = vadd.f32 %v4619, %v4749
        %v4803 = vadd.f32 %v4622, %v4752
        %v4804 = vadd.f32 %v4625, %v4755
        %v4805 = vadd.f32 %v4628, %v4758
        %v4806 = vadd.f32 %v4631, %v4761
        %v4807 = vadd.f32 %v4634, %v4764
        %v4808 = vadd.f32 %v4637, %v4767
        %v4809 = vadd.f32 %v4640, %v4770
        %v4810 = vadd.f32 %v4643, %v4773
        %v4811 = vadd.f32 %v4646, %v4776
        %v4812 = vadd.f32 %v4649, %v4779
        %v4813 = vadd.f32 %v4652, %v4782
        %v4814 = vadd.f32 %v4655, %v4785
        %v4815 = vadd.f32 %v4658, %v4788
        %v4816 = vadd.f32 %v4661, %v4791
        %v4817 = vadd.f32 %v4664, %v4794
        %v4818 = vadd.f32 %v4667, %v4797
        %v4819 = vadd.f32 %v4670, %v4800
        %s4820 = scalar_lea.vmem %s629, 96
        %v4821 = vld [vmem:[%s4820] sm:$0xff]
        %v4822 = vld [vmem:[%s4820 + $0x8] sm:$0xff]
        %v4823 = vld [vmem:[%s4820 + $0x10] sm:$0xff]
        %v4824 = vld [vmem:[%s4820 + $0x18] sm:$0xff]
        %v4826 = vsel %vm775, %v3712, 0
        %v4829 = vsel %vm775, %v3715, 0
        %v4832 = vsel %vm775, %v3718, 0
        %v4835 = vsel %vm775, %v3721, 0
        %v4838 = vsel %vm775, %v3724, 0
        %v4841 = vsel %vm775, %v3727, 0
        %v4844 = vsel %vm775, %v3730, 0
        %v4847 = vsel %vm775, %v3733, 0
        %v4850 = vsel %vm775, %v3736, 0
        %v4853 = vsel %vm775, %v3739, 0
        %v4856 = vsel %vm775, %v3742, 0
        %v4859 = vsel %vm775, %v3745, 0
        %v4862 = vsel %vm775, %v3748, 0
        %v4865 = vsel %vm775, %v3751, 0
        %v4868 = vsel %vm775, %v3754, 0
        %v4871 = vsel %vm775, %v3757, 0
        %v4874 = vsel %vm775, %v3760, 0
        %v4877 = vsel %vm775, %v3763, 0
        %4879 = vmatpush.msra.mxu0 0.0
        %4880 = vmatpush.msra.mxu0 0.0
        %4881 = vmatpush.msra.mxu0 0.0
        %4882 = vmatpush.msra.mxu0 0.0
        %4883 = vmatpush.msra.mxu0 0.0
        %4884 = vmatpush.msra.mxu0 0.0
        %4885 = vmatpush.msra.mxu0 0.0
        %4886 = vmatpush.msra.mxu0 0.0
        %4887 = vmatpush.msra.mxu0 0.0
        %4888 = vmatpush.msra.mxu0 0.0
        %4889 = vmatpush.msra.mxu0 0.0
        %4890 = vmatpush.msra.mxu0 0.0
        %4891 = vmatpush.msra.mxu0 %v4824
        %4892 = vmatpush.msra.mxu0 %v4823
        %4893 = vmatpush.msra.mxu0 %v4822
        %4894 = vmatpush.msra.mxu0 %v4821
        %4895 = vmatmul.f32.gmra.mxu0 %v4826
        %v4896 = vpop.f32.mrf.mxu0
        %v4897 = vadd.f32 0.0, %v4896
        %4898 = vmatmul.f32.gmra.mxu0 %v4829
        %v4899 = vpop.f32.mrf.mxu0
        %v4900 = vadd.f32 0.0, %v4899
        %4901 = vmatmul.f32.gmra.mxu0 %v4832
        %v4902 = vpop.f32.mrf.mxu0
        %v4903 = vadd.f32 0.0, %v4902
        %4904 = vmatmul.f32.gmra.mxu0 %v4835
        %v4905 = vpop.f32.mrf.mxu0
        %v4906 = vadd.f32 0.0, %v4905
        %4907 = vmatmul.f32.gmra.mxu0 %v4838
        %v4908 = vpop.f32.mrf.mxu0
        %v4909 = vadd.f32 0.0, %v4908
        %4910 = vmatmul.f32.gmra.mxu0 %v4841
        %v4911 = vpop.f32.mrf.mxu0
        %v4912 = vadd.f32 0.0, %v4911
        %4913 = vmatmul.f32.gmra.mxu0 %v4844
        %v4914 = vpop.f32.mrf.mxu0
        %v4915 = vadd.f32 0.0, %v4914
        %4916 = vmatmul.f32.gmra.mxu0 %v4847
        %v4917 = vpop.f32.mrf.mxu0
        %v4918 = vadd.f32 0.0, %v4917
        %4919 = vmatmul.f32.gmra.mxu0 %v4850
        %v4920 = vpop.f32.mrf.mxu0
        %v4921 = vadd.f32 0.0, %v4920
        %4922 = vmatmul.f32.gmra.mxu0 %v4853
        %v4923 = vpop.f32.mrf.mxu0
        %v4924 = vadd.f32 0.0, %v4923
        %4925 = vmatmul.f32.gmra.mxu0 %v4856
        %v4926 = vpop.f32.mrf.mxu0
        %v4927 = vadd.f32 0.0, %v4926
        %4928 = vmatmul.f32.gmra.mxu0 %v4859
        %v4929 = vpop.f32.mrf.mxu0
        %v4930 = vadd.f32 0.0, %v4929
        %4931 = vmatmul.f32.gmra.mxu0 %v4862
        %v4932 = vpop.f32.mrf.mxu0
        %v4933 = vadd.f32 0.0, %v4932
        %4934 = vmatmul.f32.gmra.mxu0 %v4865
        %v4935 = vpop.f32.mrf.mxu0
        %v4936 = vadd.f32 0.0, %v4935
        %4937 = vmatmul.f32.gmra.mxu0 %v4868
        %v4938 = vpop.f32.mrf.mxu0
        %v4939 = vadd.f32 0.0, %v4938
        %4940 = vmatmul.f32.gmra.mxu0 %v4871
        %v4941 = vpop.f32.mrf.mxu0
        %v4942 = vadd.f32 0.0, %v4941
        %4943 = vmatmul.f32.gmra.mxu0 %v4874
        %v4944 = vpop.f32.mrf.mxu0
        %v4945 = vadd.f32 0.0, %v4944
        %4946 = vmatmul.f32.gmra.mxu0 %v4877
        %v4947 = vpop.f32.mrf.mxu0
        %v4948 = vadd.f32 0.0, %v4947
        %4949 = vdwg.mxu0
        %v4950 = vadd.f32 %v4802, %v4897
        %v4951 = vadd.f32 %v4803, %v4900
        %v4952 = vadd.f32 %v4804, %v4903
        %v4953 = vadd.f32 %v4805, %v4906
        %v4954 = vadd.f32 %v4806, %v4909
        %v4955 = vadd.f32 %v4807, %v4912
        %v4956 = vadd.f32 %v4808, %v4915
        %v4957 = vadd.f32 %v4809, %v4918
        %v4958 = vadd.f32 %v4810, %v4921
        %v4959 = vadd.f32 %v4811, %v4924
        %v4960 = vadd.f32 %v4812, %v4927
        %v4961 = vadd.f32 %v4813, %v4930
        %v4962 = vadd.f32 %v4814, %v4933
        %v4963 = vadd.f32 %v4815, %v4936
        %v4964 = vadd.f32 %v4816, %v4939
        %v4965 = vadd.f32 %v4817, %v4942
        %v4966 = vadd.f32 %v4818, %v4945
        %v4967 = vadd.f32 %v4819, %v4948
        %s4968 = scalar_lea.vmem %s629, 128
        %v4969 = vld [vmem:[%s4968] sm:$0xff]
        %v4970 = vld [vmem:[%s4968 + $0x8] sm:$0xff]
        %v4971 = vld [vmem:[%s4968 + $0x10] sm:$0xff]
        %v4972 = vld [vmem:[%s4968 + $0x18] sm:$0xff]
        %v4974 = vsel %vm775, %v3766, 0
        %v4977 = vsel %vm775, %v3769, 0
        %v4980 = vsel %vm775, %v3772, 0
        %v4983 = vsel %vm775, %v3775, 0
        %v4986 = vsel %vm775, %v3778, 0
        %v4989 = vsel %vm775, %v3781, 0
        %v4992 = vsel %vm775, %v3784, 0
        %v4995 = vsel %vm775, %v3787, 0
        %v4998 = vsel %vm775, %v3790, 0
        %v5001 = vsel %vm775, %v3793, 0
        %v5004 = vsel %vm775, %v3796, 0
        %v5007 = vsel %vm775, %v3799, 0
        %v5010 = vsel %vm775, %v3802, 0
        %v5013 = vsel %vm775, %v3805, 0
        %v5016 = vsel %vm775, %v3808, 0
        %v5019 = vsel %vm775, %v3811, 0
        %v5022 = vsel %vm775, %v3814, 0
        %v5025 = vsel %vm775, %v3817, 0
        %5027 = vmatpush.msra.mxu0 0.0
        %5028 = vmatpush.msra.mxu0 0.0
        %5029 = vmatpush.msra.mxu0 0.0
        %5030 = vmatpush.msra.mxu0 0.0
        %5031 = vmatpush.msra.mxu0 0.0
        %5032 = vmatpush.msra.mxu0 0.0
        %5033 = vmatpush.msra.mxu0 0.0
        %5034 = vmatpush.msra.mxu0 0.0
        %5035 = vmatpush.msra.mxu0 0.0
        %5036 = vmatpush.msra.mxu0 0.0
        %5037 = vmatpush.msra.mxu0 0.0
        %5038 = vmatpush.msra.mxu0 0.0
        %5039 = vmatpush.msra.mxu0 %v4972
        %5040 = vmatpush.msra.mxu0 %v4971
        %5041 = vmatpush.msra.mxu0 %v4970
        %5042 = vmatpush.msra.mxu0 %v4969
        %5043 = vmatmul.f32.gmra.mxu0 %v4974
        %v5044 = vpop.f32.mrf.mxu0
        %v5045 = vadd.f32 0.0, %v5044
        %5046 = vmatmul.f32.gmra.mxu0 %v4977
        %v5047 = vpop.f32.mrf.mxu0
        %v5048 = vadd.f32 0.0, %v5047
        %5049 = vmatmul.f32.gmra.mxu0 %v4980
        %v5050 = vpop.f32.mrf.mxu0
        %v5051 = vadd.f32 0.0, %v5050
        %5052 = vmatmul.f32.gmra.mxu0 %v4983
        %v5053 = vpop.f32.mrf.mxu0
        %v5054 = vadd.f32 0.0, %v5053
        %5055 = vmatmul.f32.gmra.mxu0 %v4986
        %v5056 = vpop.f32.mrf.mxu0
        %v5057 = vadd.f32 0.0, %v5056
        %5058 = vmatmul.f32.gmra.mxu0 %v4989
        %v5059 = vpop.f32.mrf.mxu0
        %v5060 = vadd.f32 0.0, %v5059
        %5061 = vmatmul.f32.gmra.mxu0 %v4992
        %v5062 = vpop.f32.mrf.mxu0
        %v5063 = vadd.f32 0.0, %v5062
        %5064 = vmatmul.f32.gmra.mxu0 %v4995
        %v5065 = vpop.f32.mrf.mxu0
        %v5066 = vadd.f32 0.0, %v5065
        %5067 = vmatmul.f32.gmra.mxu0 %v4998
        %v5068 = vpop.f32.mrf.mxu0
        %v5069 = vadd.f32 0.0, %v5068
        %5070 = vmatmul.f32.gmra.mxu0 %v5001
        %v5071 = vpop.f32.mrf.mxu0
        %v5072 = vadd.f32 0.0, %v5071
        %5073 = vmatmul.f32.gmra.mxu0 %v5004
        %v5074 = vpop.f32.mrf.mxu0
        %v5075 = vadd.f32 0.0, %v5074
        %5076 = vmatmul.f32.gmra.mxu0 %v5007
        %v5077 = vpop.f32.mrf.mxu0
        %v5078 = vadd.f32 0.0, %v5077
        %5079 = vmatmul.f32.gmra.mxu0 %v5010
        %v5080 = vpop.f32.mrf.mxu0
        %v5081 = vadd.f32 0.0, %v5080
        %5082 = vmatmul.f32.gmra.mxu0 %v5013
        %v5083 = vpop.f32.mrf.mxu0
        %v5084 = vadd.f32 0.0, %v5083
        %5085 = vmatmul.f32.gmra.mxu0 %v5016
        %v5086 = vpop.f32.mrf.mxu0
        %v5087 = vadd.f32 0.0, %v5086
        %5088 = vmatmul.f32.gmra.mxu0 %v5019
        %v5089 = vpop.f32.mrf.mxu0
        %v5090 = vadd.f32 0.0, %v5089
        %5091 = vmatmul.f32.gmra.mxu0 %v5022
        %v5092 = vpop.f32.mrf.mxu0
        %v5093 = vadd.f32 0.0, %v5092
        %5094 = vmatmul.f32.gmra.mxu0 %v5025
        %v5095 = vpop.f32.mrf.mxu0
        %v5096 = vadd.f32 0.0, %v5095
        %5097 = vdwg.mxu0
        %v5098 = vadd.f32 %v4950, %v5045
        %v5099 = vadd.f32 %v4951, %v5048
        %v5100 = vadd.f32 %v4952, %v5051
        %v5101 = vadd.f32 %v4953, %v5054
        %v5102 = vadd.f32 %v4954, %v5057
        %v5103 = vadd.f32 %v4955, %v5060
        %v5104 = vadd.f32 %v4956, %v5063
        %v5105 = vadd.f32 %v4957, %v5066
        %v5106 = vadd.f32 %v4958, %v5069
        %v5107 = vadd.f32 %v4959, %v5072
        %v5108 = vadd.f32 %v4960, %v5075
        %v5109 = vadd.f32 %v4961, %v5078
        %v5110 = vadd.f32 %v4962, %v5081
        %v5111 = vadd.f32 %v4963, %v5084
        %v5112 = vadd.f32 %v4964, %v5087
        %v5113 = vadd.f32 %v4965, %v5090
        %v5114 = vadd.f32 %v4966, %v5093
        %v5115 = vadd.f32 %v4967, %v5096
        %s5116 = scalar_lea.vmem %s629, 160
        %v5117 = vld [vmem:[%s5116] sm:$0xff]
        %v5118 = vld [vmem:[%s5116 + $0x8] sm:$0xff]
        %v5119 = vld [vmem:[%s5116 + $0x10] sm:$0xff]
        %v5120 = vld [vmem:[%s5116 + $0x18] sm:$0xff]
        %v5122 = vsel %vm775, %v3820, 0
        %v5125 = vsel %vm775, %v3823, 0
        %v5128 = vsel %vm775, %v3826, 0
        %v5131 = vsel %vm775, %v3829, 0
        %v5134 = vsel %vm775, %v3832, 0
        %v5137 = vsel %vm775, %v3835, 0
        %v5140 = vsel %vm775, %v3838, 0
        %v5143 = vsel %vm775, %v3841, 0
        %v5146 = vsel %vm775, %v3844, 0
        %v5149 = vsel %vm775, %v3847, 0
        %v5152 = vsel %vm775, %v3850, 0
        %v5155 = vsel %vm775, %v3853, 0
        %v5158 = vsel %vm775, %v3856, 0
        %v5161 = vsel %vm775, %v3859, 0
        %v5164 = vsel %vm775, %v3862, 0
        %v5167 = vsel %vm775, %v3865, 0
        %v5170 = vsel %vm775, %v3868, 0
        %v5173 = vsel %vm775, %v3871, 0
        %5175 = vmatpush.msra.mxu0 0.0
        %5176 = vmatpush.msra.mxu0 0.0
        %5177 = vmatpush.msra.mxu0 0.0
        %5178 = vmatpush.msra.mxu0 0.0
        %5179 = vmatpush.msra.mxu0 0.0
        %5180 = vmatpush.msra.mxu0 0.0
        %5181 = vmatpush.msra.mxu0 0.0
        %5182 = vmatpush.msra.mxu0 0.0
        %5183 = vmatpush.msra.mxu0 0.0
        %5184 = vmatpush.msra.mxu0 0.0
        %5185 = vmatpush.msra.mxu0 0.0
        %5186 = vmatpush.msra.mxu0 0.0
        %5187 = vmatpush.msra.mxu0 %v5120
        %5188 = vmatpush.msra.mxu0 %v5119
        %5189 = vmatpush.msra.mxu0 %v5118
        %5190 = vmatpush.msra.mxu0 %v5117
        %5191 = vmatmul.f32.gmra.mxu0 %v5122
        %v5192 = vpop.f32.mrf.mxu0
        %v5193 = vadd.f32 0.0, %v5192
        %5194 = vmatmul.f32.gmra.mxu0 %v5125
        %v5195 = vpop.f32.mrf.mxu0
        %v5196 = vadd.f32 0.0, %v5195
        %5197 = vmatmul.f32.gmra.mxu0 %v5128
        %v5198 = vpop.f32.mrf.mxu0
        %v5199 = vadd.f32 0.0, %v5198
        %5200 = vmatmul.f32.gmra.mxu0 %v5131
        %v5201 = vpop.f32.mrf.mxu0
        %v5202 = vadd.f32 0.0, %v5201
        %5203 = vmatmul.f32.gmra.mxu0 %v5134
        %v5204 = vpop.f32.mrf.mxu0
        %v5205 = vadd.f32 0.0, %v5204
        %5206 = vmatmul.f32.gmra.mxu0 %v5137
        %v5207 = vpop.f32.mrf.mxu0
        %v5208 = vadd.f32 0.0, %v5207
        %5209 = vmatmul.f32.gmra.mxu0 %v5140
        %v5210 = vpop.f32.mrf.mxu0
        %v5211 = vadd.f32 0.0, %v5210
        %5212 = vmatmul.f32.gmra.mxu0 %v5143
        %v5213 = vpop.f32.mrf.mxu0
        %v5214 = vadd.f32 0.0, %v5213
        %5215 = vmatmul.f32.gmra.mxu0 %v5146
        %v5216 = vpop.f32.mrf.mxu0
        %v5217 = vadd.f32 0.0, %v5216
        %5218 = vmatmul.f32.gmra.mxu0 %v5149
        %v5219 = vpop.f32.mrf.mxu0
        %v5220 = vadd.f32 0.0, %v5219
        %5221 = vmatmul.f32.gmra.mxu0 %v5152
        %v5222 = vpop.f32.mrf.mxu0
        %v5223 = vadd.f32 0.0, %v5222
        %5224 = vmatmul.f32.gmra.mxu0 %v5155
        %v5225 = vpop.f32.mrf.mxu0
        %v5226 = vadd.f32 0.0, %v5225
        %5227 = vmatmul.f32.gmra.mxu0 %v5158
        %v5228 = vpop.f32.mrf.mxu0
        %v5229 = vadd.f32 0.0, %v5228
        %5230 = vmatmul.f32.gmra.mxu0 %v5161
        %v5231 = vpop.f32.mrf.mxu0
        %v5232 = vadd.f32 0.0, %v5231
        %5233 = vmatmul.f32.gmra.mxu0 %v5164
        %v5234 = vpop.f32.mrf.mxu0
        %v5235 = vadd.f32 0.0, %v5234
        %5236 = vmatmul.f32.gmra.mxu0 %v5167
        %v5237 = vpop.f32.mrf.mxu0
        %v5238 = vadd.f32 0.0, %v5237
        %5239 = vmatmul.f32.gmra.mxu0 %v5170
        %v5240 = vpop.f32.mrf.mxu0
        %v5241 = vadd.f32 0.0, %v5240
        %5242 = vmatmul.f32.gmra.mxu0 %v5173
        %v5243 = vpop.f32.mrf.mxu0
        %v5244 = vadd.f32 0.0, %v5243
        %5245 = vdwg.mxu0
        %v5246 = vadd.f32 %v5098, %v5193
        %v5247 = vadd.f32 %v5099, %v5196
        %v5248 = vadd.f32 %v5100, %v5199
        %v5249 = vadd.f32 %v5101, %v5202
        %v5250 = vadd.f32 %v5102, %v5205
        %v5251 = vadd.f32 %v5103, %v5208
        %v5252 = vadd.f32 %v5104, %v5211
        %v5253 = vadd.f32 %v5105, %v5214
        %v5254 = vadd.f32 %v5106, %v5217
        %v5255 = vadd.f32 %v5107, %v5220
        %v5256 = vadd.f32 %v5108, %v5223
        %v5257 = vadd.f32 %v5109, %v5226
        %v5258 = vadd.f32 %v5110, %v5229
        %v5259 = vadd.f32 %v5111, %v5232
        %v5260 = vadd.f32 %v5112, %v5235
        %v5261 = vadd.f32 %v5113, %v5238
        %v5262 = vadd.f32 %v5114, %v5241
        %v5263 = vadd.f32 %v5115, %v5244
        %s5264 = scalar_lea.vmem %s629, 192
        %v5265 = vld [vmem:[%s5264] sm:$0xff]
        %v5266 = vld [vmem:[%s5264 + $0x8] sm:$0xff]
        %v5267 = vld [vmem:[%s5264 + $0x10] sm:$0xff]
        %v5268 = vld [vmem:[%s5264 + $0x18] sm:$0xff]
        %v5270 = vsel %vm775, %v3874, 0
        %v5273 = vsel %vm775, %v3877, 0
        %v5276 = vsel %vm775, %v3880, 0
        %v5279 = vsel %vm775, %v3883, 0
        %v5282 = vsel %vm775, %v3886, 0
        %v5285 = vsel %vm775, %v3889, 0
        %v5288 = vsel %vm775, %v3892, 0
        %v5291 = vsel %vm775, %v3895, 0
        %v5294 = vsel %vm775, %v3898, 0
        %v5297 = vsel %vm775, %v3901, 0
        %v5300 = vsel %vm775, %v3904, 0
        %v5303 = vsel %vm775, %v3907, 0
        %v5306 = vsel %vm775, %v3910, 0
        %v5309 = vsel %vm775, %v3913, 0
        %v5312 = vsel %vm775, %v3916, 0
        %v5315 = vsel %vm775, %v3919, 0
        %v5318 = vsel %vm775, %v3922, 0
        %v5321 = vsel %vm775, %v3925, 0
        %5323 = vmatpush.msra.mxu0 0.0
        %5324 = vmatpush.msra.mxu0 0.0
        %5325 = vmatpush.msra.mxu0 0.0
        %5326 = vmatpush.msra.mxu0 0.0
        %5327 = vmatpush.msra.mxu0 0.0
        %5328 = vmatpush.msra.mxu0 0.0
        %5329 = vmatpush.msra.mxu0 0.0
        %5330 = vmatpush.msra.mxu0 0.0
        %5331 = vmatpush.msra.mxu0 0.0
        %5332 = vmatpush.msra.mxu0 0.0
        %5333 = vmatpush.msra.mxu0 0.0
        %5334 = vmatpush.msra.mxu0 0.0
        %5335 = vmatpush.msra.mxu0 %v5268
        %5336 = vmatpush.msra.mxu0 %v5267
        %5337 = vmatpush.msra.mxu0 %v5266
        %5338 = vmatpush.msra.mxu0 %v5265
        %5339 = vmatmul.f32.gmra.mxu0 %v5270
        %v5340 = vpop.f32.mrf.mxu0
        %v5341 = vadd.f32 0.0, %v5340
        %5342 = vmatmul.f32.gmra.mxu0 %v5273
        %v5343 = vpop.f32.mrf.mxu0
        %v5344 = vadd.f32 0.0, %v5343
        %5345 = vmatmul.f32.gmra.mxu0 %v5276
        %v5346 = vpop.f32.mrf.mxu0
        %v5347 = vadd.f32 0.0, %v5346
        %5348 = vmatmul.f32.gmra.mxu0 %v5279
        %v5349 = vpop.f32.mrf.mxu0
        %v5350 = vadd.f32 0.0, %v5349
        %5351 = vmatmul.f32.gmra.mxu0 %v5282
        %v5352 = vpop.f32.mrf.mxu0
        %v5353 = vadd.f32 0.0, %v5352
        %5354 = vmatmul.f32.gmra.mxu0 %v5285
        %v5355 = vpop.f32.mrf.mxu0
        %v5356 = vadd.f32 0.0, %v5355
        %5357 = vmatmul.f32.gmra.mxu0 %v5288
        %v5358 = vpop.f32.mrf.mxu0
        %v5359 = vadd.f32 0.0, %v5358
        %5360 = vmatmul.f32.gmra.mxu0 %v5291
        %v5361 = vpop.f32.mrf.mxu0
        %v5362 = vadd.f32 0.0, %v5361
        %5363 = vmatmul.f32.gmra.mxu0 %v5294
        %v5364 = vpop.f32.mrf.mxu0
        %v5365 = vadd.f32 0.0, %v5364
        %5366 = vmatmul.f32.gmra.mxu0 %v5297
        %v5367 = vpop.f32.mrf.mxu0
        %v5368 = vadd.f32 0.0, %v5367
        %5369 = vmatmul.f32.gmra.mxu0 %v5300
        %v5370 = vpop.f32.mrf.mxu0
        %v5371 = vadd.f32 0.0, %v5370
        %5372 = vmatmul.f32.gmra.mxu0 %v5303
        %v5373 = vpop.f32.mrf.mxu0
        %v5374 = vadd.f32 0.0, %v5373
        %5375 = vmatmul.f32.gmra.mxu0 %v5306
        %v5376 = vpop.f32.mrf.mxu0
        %v5377 = vadd.f32 0.0, %v5376
        %5378 = vmatmul.f32.gmra.mxu0 %v5309
        %v5379 = vpop.f32.mrf.mxu0
        %v5380 = vadd.f32 0.0, %v5379
        %5381 = vmatmul.f32.gmra.mxu0 %v5312
        %v5382 = vpop.f32.mrf.mxu0
        %v5383 = vadd.f32 0.0, %v5382
        %5384 = vmatmul.f32.gmra.mxu0 %v5315
        %v5385 = vpop.f32.mrf.mxu0
        %v5386 = vadd.f32 0.0, %v5385
        %5387 = vmatmul.f32.gmra.mxu0 %v5318
        %v5388 = vpop.f32.mrf.mxu0
        %v5389 = vadd.f32 0.0, %v5388
        %5390 = vmatmul.f32.gmra.mxu0 %v5321
        %v5391 = vpop.f32.mrf.mxu0
        %v5392 = vadd.f32 0.0, %v5391
        %5393 = vdwg.mxu0
        %v5394 = vadd.f32 %v5246, %v5341
        %v5395 = vadd.f32 %v5247, %v5344
        %v5396 = vadd.f32 %v5248, %v5347
        %v5397 = vadd.f32 %v5249, %v5350
        %v5398 = vadd.f32 %v5250, %v5353
        %v5399 = vadd.f32 %v5251, %v5356
        %v5400 = vadd.f32 %v5252, %v5359
        %v5401 = vadd.f32 %v5253, %v5362
        %v5402 = vadd.f32 %v5254, %v5365
        %v5403 = vadd.f32 %v5255, %v5368
        %v5404 = vadd.f32 %v5256, %v5371
        %v5405 = vadd.f32 %v5257, %v5374
        %v5406 = vadd.f32 %v5258, %v5377
        %v5407 = vadd.f32 %v5259, %v5380
        %v5408 = vadd.f32 %v5260, %v5383
        %v5409 = vadd.f32 %v5261, %v5386
        %v5410 = vadd.f32 %v5262, %v5389
        %v5411 = vadd.f32 %v5263, %v5392
        %s5412 = scalar_lea.vmem %s629, 224
        %v5413 = vld [vmem:[%s5412] sm:$0xff]
        %v5414 = vld [vmem:[%s5412 + $0x8] sm:$0xff]
        %v5415 = vld [vmem:[%s5412 + $0x10] sm:$0xff]
        %v5416 = vld [vmem:[%s5412 + $0x18] sm:$0xff]
        %v5418 = vsel %vm775, %v3928, 0
        %v5421 = vsel %vm775, %v3931, 0
        %v5424 = vsel %vm775, %v3934, 0
        %v5427 = vsel %vm775, %v3937, 0
        %v5430 = vsel %vm775, %v3940, 0
        %v5433 = vsel %vm775, %v3943, 0
        %v5436 = vsel %vm775, %v3946, 0
        %v5439 = vsel %vm775, %v3949, 0
        %v5442 = vsel %vm775, %v3952, 0
        %v5445 = vsel %vm775, %v3955, 0
        %v5448 = vsel %vm775, %v3958, 0
        %v5451 = vsel %vm775, %v3961, 0
        %v5454 = vsel %vm775, %v3964, 0
        %v5457 = vsel %vm775, %v3967, 0
        %v5460 = vsel %vm775, %v3970, 0
        %v5463 = vsel %vm775, %v3973, 0
        %v5466 = vsel %vm775, %v3976, 0
        %v5469 = vsel %vm775, %v3979, 0
        %5471 = vmatpush.msra.mxu0 0.0
        %5472 = vmatpush.msra.mxu0 0.0
        %5473 = vmatpush.msra.mxu0 0.0
        %5474 = vmatpush.msra.mxu0 0.0
        %5475 = vmatpush.msra.mxu0 0.0
        %5476 = vmatpush.msra.mxu0 0.0
        %5477 = vmatpush.msra.mxu0 0.0
        %5478 = vmatpush.msra.mxu0 0.0
        %5479 = vmatpush.msra.mxu0 0.0
        %5480 = vmatpush.msra.mxu0 0.0
        %5481 = vmatpush.msra.mxu0 0.0
        %5482 = vmatpush.msra.mxu0 0.0
        %5483 = vmatpush.msra.mxu0 %v5416
        %5484 = vmatpush.msra.mxu0 %v5415
        %5485 = vmatpush.msra.mxu0 %v5414
        %5486 = vmatpush.msra.mxu0 %v5413
        %5487 = vmatmul.f32.gmra.mxu0 %v5418
        %v5488 = vpop.f32.mrf.mxu0
        %v5489 = vadd.f32 0.0, %v5488
        %5490 = vmatmul.f32.gmra.mxu0 %v5421
        %v5491 = vpop.f32.mrf.mxu0
        %v5492 = vadd.f32 0.0, %v5491
        %5493 = vmatmul.f32.gmra.mxu0 %v5424
        %v5494 = vpop.f32.mrf.mxu0
        %v5495 = vadd.f32 0.0, %v5494
        %5496 = vmatmul.f32.gmra.mxu0 %v5427
        %v5497 = vpop.f32.mrf.mxu0
        %v5498 = vadd.f32 0.0, %v5497
        %5499 = vmatmul.f32.gmra.mxu0 %v5430
        %v5500 = vpop.f32.mrf.mxu0
        %v5501 = vadd.f32 0.0, %v5500
        %5502 = vmatmul.f32.gmra.mxu0 %v5433
        %v5503 = vpop.f32.mrf.mxu0
        %v5504 = vadd.f32 0.0, %v5503
        %5505 = vmatmul.f32.gmra.mxu0 %v5436
        %v5506 = vpop.f32.mrf.mxu0
        %v5507 = vadd.f32 0.0, %v5506
        %5508 = vmatmul.f32.gmra.mxu0 %v5439
        %v5509 = vpop.f32.mrf.mxu0
        %v5510 = vadd.f32 0.0, %v5509
        %5511 = vmatmul.f32.gmra.mxu0 %v5442
        %v5512 = vpop.f32.mrf.mxu0
        %v5513 = vadd.f32 0.0, %v5512
        %5514 = vmatmul.f32.gmra.mxu0 %v5445
        %v5515 = vpop.f32.mrf.mxu0
        %v5516 = vadd.f32 0.0, %v5515
        %5517 = vmatmul.f32.gmra.mxu0 %v5448
        %v5518 = vpop.f32.mrf.mxu0
        %v5519 = vadd.f32 0.0, %v5518
        %5520 = vmatmul.f32.gmra.mxu0 %v5451
        %v5521 = vpop.f32.mrf.mxu0
        %v5522 = vadd.f32 0.0, %v5521
        %5523 = vmatmul.f32.gmra.mxu0 %v5454
        %v5524 = vpop.f32.mrf.mxu0
        %v5525 = vadd.f32 0.0, %v5524
        %5526 = vmatmul.f32.gmra.mxu0 %v5457
        %v5527 = vpop.f32.mrf.mxu0
        %v5528 = vadd.f32 0.0, %v5527
        %5529 = vmatmul.f32.gmra.mxu0 %v5460
        %v5530 = vpop.f32.mrf.mxu0
        %v5531 = vadd.f32 0.0, %v5530
        %5532 = vmatmul.f32.gmra.mxu0 %v5463
        %v5533 = vpop.f32.mrf.mxu0
        %v5534 = vadd.f32 0.0, %v5533
        %5535 = vmatmul.f32.gmra.mxu0 %v5466
        %v5536 = vpop.f32.mrf.mxu0
        %v5537 = vadd.f32 0.0, %v5536
        %5538 = vmatmul.f32.gmra.mxu0 %v5469
        %v5539 = vpop.f32.mrf.mxu0
        %v5540 = vadd.f32 0.0, %v5539
        %5541 = vdwg.mxu0
        %v5542 = vadd.f32 %v5394, %v5489
        %v5543 = vadd.f32 %v5395, %v5492
        %v5544 = vadd.f32 %v5396, %v5495
        %v5545 = vadd.f32 %v5397, %v5498
        %v5546 = vadd.f32 %v5398, %v5501
        %v5547 = vadd.f32 %v5399, %v5504
        %v5548 = vadd.f32 %v5400, %v5507
        %v5549 = vadd.f32 %v5401, %v5510
        %v5550 = vadd.f32 %v5402, %v5513
        %v5551 = vadd.f32 %v5403, %v5516
        %v5552 = vadd.f32 %v5404, %v5519
        %v5553 = vadd.f32 %v5405, %v5522
        %v5554 = vadd.f32 %v5406, %v5525
        %v5555 = vadd.f32 %v5407, %v5528
        %v5556 = vadd.f32 %v5408, %v5531
        %v5557 = vadd.f32 %v5409, %v5534
        %v5558 = vadd.f32 %v5410, %v5537
        %v5559 = vadd.f32 %v5411, %v5540
        %s5560 = scalar_lea.vmem %s629, 256
        %v5561 = vld [vmem:[%s5560] sm:$0xff]
        %v5562 = vld [vmem:[%s5560 + $0x8] sm:$0xff]
        %v5563 = vld [vmem:[%s5560 + $0x10] sm:$0xff]
        %v5564 = vld [vmem:[%s5560 + $0x18] sm:$0xff]
        %v5566 = vsel %vm775, %v3982, 0
        %v5569 = vsel %vm775, %v3985, 0
        %v5572 = vsel %vm775, %v3988, 0
        %v5575 = vsel %vm775, %v3991, 0
        %v5578 = vsel %vm775, %v3994, 0
        %v5581 = vsel %vm775, %v3997, 0
        %v5584 = vsel %vm775, %v4000, 0
        %v5587 = vsel %vm775, %v4003, 0
        %v5590 = vsel %vm775, %v4006, 0
        %v5593 = vsel %vm775, %v4009, 0
        %v5596 = vsel %vm775, %v4012, 0
        %v5599 = vsel %vm775, %v4015, 0
        %v5602 = vsel %vm775, %v4018, 0
        %v5605 = vsel %vm775, %v4021, 0
        %v5608 = vsel %vm775, %v4024, 0
        %v5611 = vsel %vm775, %v4027, 0
        %v5614 = vsel %vm775, %v4030, 0
        %v5617 = vsel %vm775, %v4033, 0
        %5619 = vmatpush.msra.mxu0 0.0
        %5620 = vmatpush.msra.mxu0 0.0
        %5621 = vmatpush.msra.mxu0 0.0
        %5622 = vmatpush.msra.mxu0 0.0
        %5623 = vmatpush.msra.mxu0 0.0
        %5624 = vmatpush.msra.mxu0 0.0
        %5625 = vmatpush.msra.mxu0 0.0
        %5626 = vmatpush.msra.mxu0 0.0
        %5627 = vmatpush.msra.mxu0 0.0
        %5628 = vmatpush.msra.mxu0 0.0
        %5629 = vmatpush.msra.mxu0 0.0
        %5630 = vmatpush.msra.mxu0 0.0
        %5631 = vmatpush.msra.mxu0 %v5564
        %5632 = vmatpush.msra.mxu0 %v5563
        %5633 = vmatpush.msra.mxu0 %v5562
        %5634 = vmatpush.msra.mxu0 %v5561
        %5635 = vmatmul.f32.gmra.mxu0 %v5566
        %v5636 = vpop.f32.mrf.mxu0
        %v5637 = vadd.f32 0.0, %v5636
        %5638 = vmatmul.f32.gmra.mxu0 %v5569
        %v5639 = vpop.f32.mrf.mxu0
        %v5640 = vadd.f32 0.0, %v5639
        %5641 = vmatmul.f32.gmra.mxu0 %v5572
        %v5642 = vpop.f32.mrf.mxu0
        %v5643 = vadd.f32 0.0, %v5642
        %5644 = vmatmul.f32.gmra.mxu0 %v5575
        %v5645 = vpop.f32.mrf.mxu0
        %v5646 = vadd.f32 0.0, %v5645
        %5647 = vmatmul.f32.gmra.mxu0 %v5578
        %v5648 = vpop.f32.mrf.mxu0
        %v5649 = vadd.f32 0.0, %v5648
        %5650 = vmatmul.f32.gmra.mxu0 %v5581
        %v5651 = vpop.f32.mrf.mxu0
        %v5652 = vadd.f32 0.0, %v5651
        %5653 = vmatmul.f32.gmra.mxu0 %v5584
        %v5654 = vpop.f32.mrf.mxu0
        %v5655 = vadd.f32 0.0, %v5654
        %5656 = vmatmul.f32.gmra.mxu0 %v5587
        %v5657 = vpop.f32.mrf.mxu0
        %v5658 = vadd.f32 0.0, %v5657
        %5659 = vmatmul.f32.gmra.mxu0 %v5590
        %v5660 = vpop.f32.mrf.mxu0
        %v5661 = vadd.f32 0.0, %v5660
        %5662 = vmatmul.f32.gmra.mxu0 %v5593
        %v5663 = vpop.f32.mrf.mxu0
        %v5664 = vadd.f32 0.0, %v5663
        %5665 = vmatmul.f32.gmra.mxu0 %v5596
        %v5666 = vpop.f32.mrf.mxu0
        %v5667 = vadd.f32 0.0, %v5666
        %5668 = vmatmul.f32.gmra.mxu0 %v5599
        %v5669 = vpop.f32.mrf.mxu0
        %v5670 = vadd.f32 0.0, %v5669
        %5671 = vmatmul.f32.gmra.mxu0 %v5602
        %v5672 = vpop.f32.mrf.mxu0
        %v5673 = vadd.f32 0.0, %v5672
        %5674 = vmatmul.f32.gmra.mxu0 %v5605
        %v5675 = vpop.f32.mrf.mxu0
        %v5676 = vadd.f32 0.0, %v5675
        %5677 = vmatmul.f32.gmra.mxu0 %v5608
        %v5678 = vpop.f32.mrf.mxu0
        %v5679 = vadd.f32 0.0, %v5678
        %5680 = vmatmul.f32.gmra.mxu0 %v5611
        %v5681 = vpop.f32.mrf.mxu0
        %v5682 = vadd.f32 0.0, %v5681
        %5683 = vmatmul.f32.gmra.mxu0 %v5614
        %v5684 = vpop.f32.mrf.mxu0
        %v5685 = vadd.f32 0.0, %v5684
        %5686 = vmatmul.f32.gmra.mxu0 %v5617
        %v5687 = vpop.f32.mrf.mxu0
        %v5688 = vadd.f32 0.0, %v5687
        %5689 = vdwg.mxu0
        %v5690 = vadd.f32 %v5542, %v5637
        %v5691 = vadd.f32 %v5543, %v5640
        %v5692 = vadd.f32 %v5544, %v5643
        %v5693 = vadd.f32 %v5545, %v5646
        %v5694 = vadd.f32 %v5546, %v5649
        %v5695 = vadd.f32 %v5547, %v5652
        %v5696 = vadd.f32 %v5548, %v5655
        %v5697 = vadd.f32 %v5549, %v5658
        %v5698 = vadd.f32 %v5550, %v5661
        %v5699 = vadd.f32 %v5551, %v5664
        %v5700 = vadd.f32 %v5552, %v5667
        %v5701 = vadd.f32 %v5553, %v5670
        %v5702 = vadd.f32 %v5554, %v5673
        %v5703 = vadd.f32 %v5555, %v5676
        %v5704 = vadd.f32 %v5556, %v5679
        %v5705 = vadd.f32 %v5557, %v5682
        %v5706 = vadd.f32 %v5558, %v5685
        %v5707 = vadd.f32 %v5559, %v5688
        %s5708 = scalar_lea.vmem %s629, 288
        %v5709 = vld [vmem:[%s5708] sm:$0xff]
        %v5710 = vld [vmem:[%s5708 + $0x8] sm:$0xff]
        %v5711 = vld [vmem:[%s5708 + $0x10] sm:$0xff]
        %v5712 = vld [vmem:[%s5708 + $0x18] sm:$0xff]
        %v5714 = vsel %vm775, %v4036, 0
        %v5717 = vsel %vm775, %v4039, 0
        %v5720 = vsel %vm775, %v4042, 0
        %v5723 = vsel %vm775, %v4045, 0
        %v5726 = vsel %vm775, %v4048, 0
        %v5729 = vsel %vm775, %v4051, 0
        %v5732 = vsel %vm775, %v4054, 0
        %v5735 = vsel %vm775, %v4057, 0
        %v5738 = vsel %vm775, %v4060, 0
        %v5741 = vsel %vm775, %v4063, 0
        %v5744 = vsel %vm775, %v4066, 0
        %v5747 = vsel %vm775, %v4069, 0
        %v5750 = vsel %vm775, %v4072, 0
        %v5753 = vsel %vm775, %v4075, 0
        %v5756 = vsel %vm775, %v4078, 0
        %v5759 = vsel %vm775, %v4081, 0
        %v5762 = vsel %vm775, %v4084, 0
        %v5765 = vsel %vm775, %v4087, 0
        %5767 = vmatpush.msra.mxu0 0.0
        %5768 = vmatpush.msra.mxu0 0.0
        %5769 = vmatpush.msra.mxu0 0.0
        %5770 = vmatpush.msra.mxu0 0.0
        %5771 = vmatpush.msra.mxu0 0.0
        %5772 = vmatpush.msra.mxu0 0.0
        %5773 = vmatpush.msra.mxu0 0.0
        %5774 = vmatpush.msra.mxu0 0.0
        %5775 = vmatpush.msra.mxu0 0.0
        %5776 = vmatpush.msra.mxu0 0.0
        %5777 = vmatpush.msra.mxu0 0.0
        %5778 = vmatpush.msra.mxu0 0.0
        %5779 = vmatpush.msra.mxu0 %v5712
        %5780 = vmatpush.msra.mxu0 %v5711
        %5781 = vmatpush.msra.mxu0 %v5710
        %5782 = vmatpush.msra.mxu0 %v5709
        %5783 = vmatmul.f32.gmra.mxu0 %v5714
        %v5784 = vpop.f32.mrf.mxu0
        %v5785 = vadd.f32 0.0, %v5784
        %5786 = vmatmul.f32.gmra.mxu0 %v5717
        %v5787 = vpop.f32.mrf.mxu0
        %v5788 = vadd.f32 0.0, %v5787
        %5789 = vmatmul.f32.gmra.mxu0 %v5720
        %v5790 = vpop.f32.mrf.mxu0
        %v5791 = vadd.f32 0.0, %v5790
        %5792 = vmatmul.f32.gmra.mxu0 %v5723
        %v5793 = vpop.f32.mrf.mxu0
        %v5794 = vadd.f32 0.0, %v5793
        %5795 = vmatmul.f32.gmra.mxu0 %v5726
        %v5796 = vpop.f32.mrf.mxu0
        %v5797 = vadd.f32 0.0, %v5796
        %5798 = vmatmul.f32.gmra.mxu0 %v5729
        %v5799 = vpop.f32.mrf.mxu0
        %v5800 = vadd.f32 0.0, %v5799
        %5801 = vmatmul.f32.gmra.mxu0 %v5732
        %v5802 = vpop.f32.mrf.mxu0
        %v5803 = vadd.f32 0.0, %v5802
        %5804 = vmatmul.f32.gmra.mxu0 %v5735
        %v5805 = vpop.f32.mrf.mxu0
        %v5806 = vadd.f32 0.0, %v5805
        %5807 = vmatmul.f32.gmra.mxu0 %v5738
        %v5808 = vpop.f32.mrf.mxu0
        %v5809 = vadd.f32 0.0, %v5808
        %5810 = vmatmul.f32.gmra.mxu0 %v5741
        %v5811 = vpop.f32.mrf.mxu0
        %v5812 = vadd.f32 0.0, %v5811
        %5813 = vmatmul.f32.gmra.mxu0 %v5744
        %v5814 = vpop.f32.mrf.mxu0
        %v5815 = vadd.f32 0.0, %v5814
        %5816 = vmatmul.f32.gmra.mxu0 %v5747
        %v5817 = vpop.f32.mrf.mxu0
        %v5818 = vadd.f32 0.0, %v5817
        %5819 = vmatmul.f32.gmra.mxu0 %v5750
        %v5820 = vpop.f32.mrf.mxu0
        %v5821 = vadd.f32 0.0, %v5820
        %5822 = vmatmul.f32.gmra.mxu0 %v5753
        %v5823 = vpop.f32.mrf.mxu0
        %v5824 = vadd.f32 0.0, %v5823
        %5825 = vmatmul.f32.gmra.mxu0 %v5756
        %v5826 = vpop.f32.mrf.mxu0
        %v5827 = vadd.f32 0.0, %v5826
        %5828 = vmatmul.f32.gmra.mxu0 %v5759
        %v5829 = vpop.f32.mrf.mxu0
        %v5830 = vadd.f32 0.0, %v5829
        %5831 = vmatmul.f32.gmra.mxu0 %v5762
        %v5832 = vpop.f32.mrf.mxu0
        %v5833 = vadd.f32 0.0, %v5832
        %5834 = vmatmul.f32.gmra.mxu0 %v5765
        %v5835 = vpop.f32.mrf.mxu0
        %v5836 = vadd.f32 0.0, %v5835
        %5837 = vdwg.mxu0
        %v5838 = vadd.f32 %v5690, %v5785
        %v5839 = vadd.f32 %v5691, %v5788
        %v5840 = vadd.f32 %v5692, %v5791
        %v5841 = vadd.f32 %v5693, %v5794
        %v5842 = vadd.f32 %v5694, %v5797
        %v5843 = vadd.f32 %v5695, %v5800
        %v5844 = vadd.f32 %v5696, %v5803
        %v5845 = vadd.f32 %v5697, %v5806
        %v5846 = vadd.f32 %v5698, %v5809
        %v5847 = vadd.f32 %v5699, %v5812
        %v5848 = vadd.f32 %v5700, %v5815
        %v5849 = vadd.f32 %v5701, %v5818
        %v5850 = vadd.f32 %v5702, %v5821
        %v5851 = vadd.f32 %v5703, %v5824
        %v5852 = vadd.f32 %v5704, %v5827
        %v5853 = vadd.f32 %v5705, %v5830
        %v5854 = vadd.f32 %v5706, %v5833
        %v5855 = vadd.f32 %v5707, %v5836
        %s5856 = scalar_lea.vmem %s629, 320
        %v5857 = vld [vmem:[%s5856] sm:$0xff]
        %v5858 = vld [vmem:[%s5856 + $0x8] sm:$0xff]
        %v5859 = vld [vmem:[%s5856 + $0x10] sm:$0xff]
        %v5860 = vld [vmem:[%s5856 + $0x18] sm:$0xff]
        %v5862 = vsel %vm775, %v4090, 0
        %v5865 = vsel %vm775, %v4093, 0
        %v5868 = vsel %vm775, %v4096, 0
        %v5871 = vsel %vm775, %v4099, 0
        %v5874 = vsel %vm775, %v4102, 0
        %v5877 = vsel %vm775, %v4105, 0
        %v5880 = vsel %vm775, %v4108, 0
        %v5883 = vsel %vm775, %v4111, 0
        %v5886 = vsel %vm775, %v4114, 0
        %v5889 = vsel %vm775, %v4117, 0
        %v5892 = vsel %vm775, %v4120, 0
        %v5895 = vsel %vm775, %v4123, 0
        %v5898 = vsel %vm775, %v4126, 0
        %v5901 = vsel %vm775, %v4129, 0
        %v5904 = vsel %vm775, %v4132, 0
        %v5907 = vsel %vm775, %v4135, 0
        %v5910 = vsel %vm775, %v4138, 0
        %v5913 = vsel %vm775, %v4141, 0
        %5915 = vmatpush.msra.mxu0 0.0
        %5916 = vmatpush.msra.mxu0 0.0
        %5917 = vmatpush.msra.mxu0 0.0
        %5918 = vmatpush.msra.mxu0 0.0
        %5919 = vmatpush.msra.mxu0 0.0
        %5920 = vmatpush.msra.mxu0 0.0
        %5921 = vmatpush.msra.mxu0 0.0
        %5922 = vmatpush.msra.mxu0 0.0
        %5923 = vmatpush.msra.mxu0 0.0
        %5924 = vmatpush.msra.mxu0 0.0
        %5925 = vmatpush.msra.mxu0 0.0
        %5926 = vmatpush.msra.mxu0 0.0
        %5927 = vmatpush.msra.mxu0 %v5860
        %5928 = vmatpush.msra.mxu0 %v5859
        %5929 = vmatpush.msra.mxu0 %v5858
        %5930 = vmatpush.msra.mxu0 %v5857
        %5931 = vmatmul.f32.gmra.mxu0 %v5862
        %v5932 = vpop.f32.mrf.mxu0
        %v5933 = vadd.f32 0.0, %v5932
        %5934 = vmatmul.f32.gmra.mxu0 %v5865
        %v5935 = vpop.f32.mrf.mxu0
        %v5936 = vadd.f32 0.0, %v5935
        %5937 = vmatmul.f32.gmra.mxu0 %v5868
        %v5938 = vpop.f32.mrf.mxu0
        %v5939 = vadd.f32 0.0, %v5938
        %5940 = vmatmul.f32.gmra.mxu0 %v5871
        %v5941 = vpop.f32.mrf.mxu0
        %v5942 = vadd.f32 0.0, %v5941
        %5943 = vmatmul.f32.gmra.mxu0 %v5874
        %v5944 = vpop.f32.mrf.mxu0
        %v5945 = vadd.f32 0.0, %v5944
        %5946 = vmatmul.f32.gmra.mxu0 %v5877
        %v5947 = vpop.f32.mrf.mxu0
        %v5948 = vadd.f32 0.0, %v5947
        %5949 = vmatmul.f32.gmra.mxu0 %v5880
        %v5950 = vpop.f32.mrf.mxu0
        %v5951 = vadd.f32 0.0, %v5950
        %5952 = vmatmul.f32.gmra.mxu0 %v5883
        %v5953 = vpop.f32.mrf.mxu0
        %v5954 = vadd.f32 0.0, %v5953
        %5955 = vmatmul.f32.gmra.mxu0 %v5886
        %v5956 = vpop.f32.mrf.mxu0
        %v5957 = vadd.f32 0.0, %v5956
        %5958 = vmatmul.f32.gmra.mxu0 %v5889
        %v5959 = vpop.f32.mrf.mxu0
        %v5960 = vadd.f32 0.0, %v5959
        %5961 = vmatmul.f32.gmra.mxu0 %v5892
        %v5962 = vpop.f32.mrf.mxu0
        %v5963 = vadd.f32 0.0, %v5962
        %5964 = vmatmul.f32.gmra.mxu0 %v5895
        %v5965 = vpop.f32.mrf.mxu0
        %v5966 = vadd.f32 0.0, %v5965
        %5967 = vmatmul.f32.gmra.mxu0 %v5898
        %v5968 = vpop.f32.mrf.mxu0
        %v5969 = vadd.f32 0.0, %v5968
        %5970 = vmatmul.f32.gmra.mxu0 %v5901
        %v5971 = vpop.f32.mrf.mxu0
        %v5972 = vadd.f32 0.0, %v5971
        %5973 = vmatmul.f32.gmra.mxu0 %v5904
        %v5974 = vpop.f32.mrf.mxu0
        %v5975 = vadd.f32 0.0, %v5974
        %5976 = vmatmul.f32.gmra.mxu0 %v5907
        %v5977 = vpop.f32.mrf.mxu0
        %v5978 = vadd.f32 0.0, %v5977
        %5979 = vmatmul.f32.gmra.mxu0 %v5910
        %v5980 = vpop.f32.mrf.mxu0
        %v5981 = vadd.f32 0.0, %v5980
        %5982 = vmatmul.f32.gmra.mxu0 %v5913
        %v5983 = vpop.f32.mrf.mxu0
        %v5984 = vadd.f32 0.0, %v5983
        %5985 = vdwg.mxu0
        %v5986 = vadd.f32 %v5838, %v5933
        %v5987 = vadd.f32 %v5839, %v5936
        %v5988 = vadd.f32 %v5840, %v5939
        %v5989 = vadd.f32 %v5841, %v5942
        %v5990 = vadd.f32 %v5842, %v5945
        %v5991 = vadd.f32 %v5843, %v5948
        %v5992 = vadd.f32 %v5844, %v5951
        %v5993 = vadd.f32 %v5845, %v5954
        %v5994 = vadd.f32 %v5846, %v5957
        %v5995 = vadd.f32 %v5847, %v5960
        %v5996 = vadd.f32 %v5848, %v5963
        %v5997 = vadd.f32 %v5849, %v5966
        %v5998 = vadd.f32 %v5850, %v5969
        %v5999 = vadd.f32 %v5851, %v5972
        %v6000 = vadd.f32 %v5852, %v5975
        %v6001 = vadd.f32 %v5853, %v5978
        %v6002 = vadd.f32 %v5854, %v5981
        %v6003 = vadd.f32 %v5855, %v5984
        %s6004 = scalar_lea.vmem %s629, 352
        %v6005 = vld [vmem:[%s6004] sm:$0xff]
        %v6006 = vld [vmem:[%s6004 + $0x8] sm:$0xff]
        %v6007 = vld [vmem:[%s6004 + $0x10] sm:$0xff]
        %v6008 = vld [vmem:[%s6004 + $0x18] sm:$0xff]
        %v6010 = vsel %vm775, %v4144, 0
        %v6013 = vsel %vm775, %v4147, 0
        %v6016 = vsel %vm775, %v4150, 0
        %v6019 = vsel %vm775, %v4153, 0
        %v6022 = vsel %vm775, %v4156, 0
        %v6025 = vsel %vm775, %v4159, 0
        %v6028 = vsel %vm775, %v4162, 0
        %v6031 = vsel %vm775, %v4165, 0
        %v6034 = vsel %vm775, %v4168, 0
        %v6037 = vsel %vm775, %v4171, 0
        %v6040 = vsel %vm775, %v4174, 0
        %v6043 = vsel %vm775, %v4177, 0
        %v6046 = vsel %vm775, %v4180, 0
        %v6049 = vsel %vm775, %v4183, 0
        %v6052 = vsel %vm775, %v4186, 0
        %v6055 = vsel %vm775, %v4189, 0
        %v6058 = vsel %vm775, %v4192, 0
        %v6061 = vsel %vm775, %v4195, 0
        %6063 = vmatpush.msra.mxu0 0.0
        %6064 = vmatpush.msra.mxu0 0.0
        %6065 = vmatpush.msra.mxu0 0.0
        %6066 = vmatpush.msra.mxu0 0.0
        %6067 = vmatpush.msra.mxu0 0.0
        %6068 = vmatpush.msra.mxu0 0.0
        %6069 = vmatpush.msra.mxu0 0.0
        %6070 = vmatpush.msra.mxu0 0.0
        %6071 = vmatpush.msra.mxu0 0.0
        %6072 = vmatpush.msra.mxu0 0.0
        %6073 = vmatpush.msra.mxu0 0.0
        %6074 = vmatpush.msra.mxu0 0.0
        %6075 = vmatpush.msra.mxu0 %v6008
        %6076 = vmatpush.msra.mxu0 %v6007
        %6077 = vmatpush.msra.mxu0 %v6006
        %6078 = vmatpush.msra.mxu0 %v6005
        %6079 = vmatmul.f32.gmra.mxu0 %v6010
        %v6080 = vpop.f32.mrf.mxu0
        %v6081 = vadd.f32 0.0, %v6080
        %6082 = vmatmul.f32.gmra.mxu0 %v6013
        %v6083 = vpop.f32.mrf.mxu0
        %v6084 = vadd.f32 0.0, %v6083
        %6085 = vmatmul.f32.gmra.mxu0 %v6016
        %v6086 = vpop.f32.mrf.mxu0
        %v6087 = vadd.f32 0.0, %v6086
        %6088 = vmatmul.f32.gmra.mxu0 %v6019
        %v6089 = vpop.f32.mrf.mxu0
        %v6090 = vadd.f32 0.0, %v6089
        %6091 = vmatmul.f32.gmra.mxu0 %v6022
        %v6092 = vpop.f32.mrf.mxu0
        %v6093 = vadd.f32 0.0, %v6092
        %6094 = vmatmul.f32.gmra.mxu0 %v6025
        %v6095 = vpop.f32.mrf.mxu0
        %v6096 = vadd.f32 0.0, %v6095
        %6097 = vmatmul.f32.gmra.mxu0 %v6028
        %v6098 = vpop.f32.mrf.mxu0
        %v6099 = vadd.f32 0.0, %v6098
        %6100 = vmatmul.f32.gmra.mxu0 %v6031
        %v6101 = vpop.f32.mrf.mxu0
        %v6102 = vadd.f32 0.0, %v6101
        %6103 = vmatmul.f32.gmra.mxu0 %v6034
        %v6104 = vpop.f32.mrf.mxu0
        %v6105 = vadd.f32 0.0, %v6104
        %6106 = vmatmul.f32.gmra.mxu0 %v6037
        %v6107 = vpop.f32.mrf.mxu0
        %v6108 = vadd.f32 0.0, %v6107
        %6109 = vmatmul.f32.gmra.mxu0 %v6040
        %v6110 = vpop.f32.mrf.mxu0
        %v6111 = vadd.f32 0.0, %v6110
        %6112 = vmatmul.f32.gmra.mxu0 %v6043
        %v6113 = vpop.f32.mrf.mxu0
        %v6114 = vadd.f32 0.0, %v6113
        %6115 = vmatmul.f32.gmra.mxu0 %v6046
        %v6116 = vpop.f32.mrf.mxu0
        %v6117 = vadd.f32 0.0, %v6116
        %6118 = vmatmul.f32.gmra.mxu0 %v6049
        %v6119 = vpop.f32.mrf.mxu0
        %v6120 = vadd.f32 0.0, %v6119
        %6121 = vmatmul.f32.gmra.mxu0 %v6052
        %v6122 = vpop.f32.mrf.mxu0
        %v6123 = vadd.f32 0.0, %v6122
        %6124 = vmatmul.f32.gmra.mxu0 %v6055
        %v6125 = vpop.f32.mrf.mxu0
        %v6126 = vadd.f32 0.0, %v6125
        %6127 = vmatmul.f32.gmra.mxu0 %v6058
        %v6128 = vpop.f32.mrf.mxu0
        %v6129 = vadd.f32 0.0, %v6128
        %6130 = vmatmul.f32.gmra.mxu0 %v6061
        %v6131 = vpop.f32.mrf.mxu0
        %v6132 = vadd.f32 0.0, %v6131
        %6133 = vdwg.mxu0
        %v6134 = vadd.f32 %v5986, %v6081
        %v6135 = vadd.f32 %v5987, %v6084
        %v6136 = vadd.f32 %v5988, %v6087
        %v6137 = vadd.f32 %v5989, %v6090
        %v6138 = vadd.f32 %v5990, %v6093
        %v6139 = vadd.f32 %v5991, %v6096
        %v6140 = vadd.f32 %v5992, %v6099
        %v6141 = vadd.f32 %v5993, %v6102
        %v6142 = vadd.f32 %v5994, %v6105
        %v6143 = vadd.f32 %v5995, %v6108
        %v6144 = vadd.f32 %v5996, %v6111
        %v6145 = vadd.f32 %v5997, %v6114
        %v6146 = vadd.f32 %v5998, %v6117
        %v6147 = vadd.f32 %v5999, %v6120
        %v6148 = vadd.f32 %v6000, %v6123
        %v6149 = vadd.f32 %v6001, %v6126
        %v6150 = vadd.f32 %v6002, %v6129
        %v6151 = vadd.f32 %v6003, %v6132
        %s6152 = scalar_lea.vmem %s629, 384
        %v6153 = vld [vmem:[%s6152] sm:$0xff]
        %v6154 = vld [vmem:[%s6152 + $0x8] sm:$0xff]
        %v6155 = vld [vmem:[%s6152 + $0x10] sm:$0xff]
        %v6156 = vld [vmem:[%s6152 + $0x18] sm:$0xff]
        %v6158 = vsel %vm775, %v4198, 0
        %v6161 = vsel %vm775, %v4201, 0
        %v6164 = vsel %vm775, %v4204, 0
        %v6167 = vsel %vm775, %v4207, 0
        %v6170 = vsel %vm775, %v4210, 0
        %v6173 = vsel %vm775, %v4213, 0
        %v6176 = vsel %vm775, %v4216, 0
        %v6179 = vsel %vm775, %v4219, 0
        %v6182 = vsel %vm775, %v4222, 0
        %v6185 = vsel %vm775, %v4225, 0
        %v6188 = vsel %vm775, %v4228, 0
        %v6191 = vsel %vm775, %v4231, 0
        %v6194 = vsel %vm775, %v4234, 0
        %v6197 = vsel %vm775, %v4237, 0
        %v6200 = vsel %vm775, %v4240, 0
        %v6203 = vsel %vm775, %v4243, 0
        %v6206 = vsel %vm775, %v4246, 0
        %v6209 = vsel %vm775, %v4249, 0
        %6211 = vmatpush.msra.mxu0 0.0
        %6212 = vmatpush.msra.mxu0 0.0
        %6213 = vmatpush.msra.mxu0 0.0
        %6214 = vmatpush.msra.mxu0 0.0
        %6215 = vmatpush.msra.mxu0 0.0
        %6216 = vmatpush.msra.mxu0 0.0
        %6217 = vmatpush.msra.mxu0 0.0
        %6218 = vmatpush.msra.mxu0 0.0
        %6219 = vmatpush.msra.mxu0 0.0
        %6220 = vmatpush.msra.mxu0 0.0
        %6221 = vmatpush.msra.mxu0 0.0
        %6222 = vmatpush.msra.mxu0 0.0
        %6223 = vmatpush.msra.mxu0 %v6156
        %6224 = vmatpush.msra.mxu0 %v6155
        %6225 = vmatpush.msra.mxu0 %v6154
        %6226 = vmatpush.msra.mxu0 %v6153
        %6227 = vmatmul.f32.gmra.mxu0 %v6158
        %v6228 = vpop.f32.mrf.mxu0
        %v6229 = vadd.f32 0.0, %v6228
        %6230 = vmatmul.f32.gmra.mxu0 %v6161
        %v6231 = vpop.f32.mrf.mxu0
        %v6232 = vadd.f32 0.0, %v6231
        %6233 = vmatmul.f32.gmra.mxu0 %v6164
        %v6234 = vpop.f32.mrf.mxu0
        %v6235 = vadd.f32 0.0, %v6234
        %6236 = vmatmul.f32.gmra.mxu0 %v6167
        %v6237 = vpop.f32.mrf.mxu0
        %v6238 = vadd.f32 0.0, %v6237
        %6239 = vmatmul.f32.gmra.mxu0 %v6170
        %v6240 = vpop.f32.mrf.mxu0
        %v6241 = vadd.f32 0.0, %v6240
        %6242 = vmatmul.f32.gmra.mxu0 %v6173
        %v6243 = vpop.f32.mrf.mxu0
        %v6244 = vadd.f32 0.0, %v6243
        %6245 = vmatmul.f32.gmra.mxu0 %v6176
        %v6246 = vpop.f32.mrf.mxu0
        %v6247 = vadd.f32 0.0, %v6246
        %6248 = vmatmul.f32.gmra.mxu0 %v6179
        %v6249 = vpop.f32.mrf.mxu0
        %v6250 = vadd.f32 0.0, %v6249
        %6251 = vmatmul.f32.gmra.mxu0 %v6182
        %v6252 = vpop.f32.mrf.mxu0
        %v6253 = vadd.f32 0.0, %v6252
        %6254 = vmatmul.f32.gmra.mxu0 %v6185
        %v6255 = vpop.f32.mrf.mxu0
        %v6256 = vadd.f32 0.0, %v6255
        %6257 = vmatmul.f32.gmra.mxu0 %v6188
        %v6258 = vpop.f32.mrf.mxu0
        %v6259 = vadd.f32 0.0, %v6258
        %6260 = vmatmul.f32.gmra.mxu0 %v6191
        %v6261 = vpop.f32.mrf.mxu0
        %v6262 = vadd.f32 0.0, %v6261
        %6263 = vmatmul.f32.gmra.mxu0 %v6194
        %v6264 = vpop.f32.mrf.mxu0
        %v6265 = vadd.f32 0.0, %v6264
        %6266 = vmatmul.f32.gmra.mxu0 %v6197
        %v6267 = vpop.f32.mrf.mxu0
        %v6268 = vadd.f32 0.0, %v6267
        %6269 = vmatmul.f32.gmra.mxu0 %v6200
        %v6270 = vpop.f32.mrf.mxu0
        %v6271 = vadd.f32 0.0, %v6270
        %6272 = vmatmul.f32.gmra.mxu0 %v6203
        %v6273 = vpop.f32.mrf.mxu0
        %v6274 = vadd.f32 0.0, %v6273
        %6275 = vmatmul.f32.gmra.mxu0 %v6206
        %v6276 = vpop.f32.mrf.mxu0
        %v6277 = vadd.f32 0.0, %v6276
        %6278 = vmatmul.f32.gmra.mxu0 %v6209
        %v6279 = vpop.f32.mrf.mxu0
        %v6280 = vadd.f32 0.0, %v6279
        %6281 = vdwg.mxu0
        %v6282 = vadd.f32 %v6134, %v6229
        %v6283 = vadd.f32 %v6135, %v6232
        %v6284 = vadd.f32 %v6136, %v6235
        %v6285 = vadd.f32 %v6137, %v6238
        %v6286 = vadd.f32 %v6138, %v6241
        %v6287 = vadd.f32 %v6139, %v6244
        %v6288 = vadd.f32 %v6140, %v6247
        %v6289 = vadd.f32 %v6141, %v6250
        %v6290 = vadd.f32 %v6142, %v6253
        %v6291 = vadd.f32 %v6143, %v6256
        %v6292 = vadd.f32 %v6144, %v6259
        %v6293 = vadd.f32 %v6145, %v6262
        %v6294 = vadd.f32 %v6146, %v6265
        %v6295 = vadd.f32 %v6147, %v6268
        %v6296 = vadd.f32 %v6148, %v6271
        %v6297 = vadd.f32 %v6149, %v6274
        %v6298 = vadd.f32 %v6150, %v6277
        %v6299 = vadd.f32 %v6151, %v6280
        %s6300 = scalar_lea.vmem %s629, 416
        %v6301 = vld [vmem:[%s6300] sm:$0xff]
        %v6302 = vld [vmem:[%s6300 + $0x8] sm:$0xff]
        %v6303 = vld [vmem:[%s6300 + $0x10] sm:$0xff]
        %v6304 = vld [vmem:[%s6300 + $0x18] sm:$0xff]
        %v6306 = vsel %vm775, %v4252, 0
        %v6309 = vsel %vm775, %v4255, 0
        %v6312 = vsel %vm775, %v4258, 0
        %v6315 = vsel %vm775, %v4261, 0
        %v6318 = vsel %vm775, %v4264, 0
        %v6321 = vsel %vm775, %v4267, 0
        %v6324 = vsel %vm775, %v4270, 0
        %v6327 = vsel %vm775, %v4273, 0
        %v6330 = vsel %vm775, %v4276, 0
        %v6333 = vsel %vm775, %v4279, 0
        %v6336 = vsel %vm775, %v4282, 0
        %v6339 = vsel %vm775, %v4285, 0
        %v6342 = vsel %vm775, %v4288, 0
        %v6345 = vsel %vm775, %v4291, 0
        %v6348 = vsel %vm775, %v4294, 0
        %v6351 = vsel %vm775, %v4297, 0
        %v6354 = vsel %vm775, %v4300, 0
        %v6357 = vsel %vm775, %v4303, 0
        %6359 = vmatpush.msra.mxu0 0.0
        %6360 = vmatpush.msra.mxu0 0.0
        %6361 = vmatpush.msra.mxu0 0.0
        %6362 = vmatpush.msra.mxu0 0.0
        %6363 = vmatpush.msra.mxu0 0.0
        %6364 = vmatpush.msra.mxu0 0.0
        %6365 = vmatpush.msra.mxu0 0.0
        %6366 = vmatpush.msra.mxu0 0.0
        %6367 = vmatpush.msra.mxu0 0.0
        %6368 = vmatpush.msra.mxu0 0.0
        %6369 = vmatpush.msra.mxu0 0.0
        %6370 = vmatpush.msra.mxu0 0.0
        %6371 = vmatpush.msra.mxu0 %v6304
        %6372 = vmatpush.msra.mxu0 %v6303
        %6373 = vmatpush.msra.mxu0 %v6302
        %6374 = vmatpush.msra.mxu0 %v6301
        %6375 = vmatmul.f32.gmra.mxu0 %v6306
        %v6376 = vpop.f32.mrf.mxu0
        %v6377 = vadd.f32 0.0, %v6376
        %6378 = vmatmul.f32.gmra.mxu0 %v6309
        %v6379 = vpop.f32.mrf.mxu0
        %v6380 = vadd.f32 0.0, %v6379
        %6381 = vmatmul.f32.gmra.mxu0 %v6312
        %v6382 = vpop.f32.mrf.mxu0
        %v6383 = vadd.f32 0.0, %v6382
        %6384 = vmatmul.f32.gmra.mxu0 %v6315
        %v6385 = vpop.f32.mrf.mxu0
        %v6386 = vadd.f32 0.0, %v6385
        %6387 = vmatmul.f32.gmra.mxu0 %v6318
        %v6388 = vpop.f32.mrf.mxu0
        %v6389 = vadd.f32 0.0, %v6388
        %6390 = vmatmul.f32.gmra.mxu0 %v6321
        %v6391 = vpop.f32.mrf.mxu0
        %v6392 = vadd.f32 0.0, %v6391
        %6393 = vmatmul.f32.gmra.mxu0 %v6324
        %v6394 = vpop.f32.mrf.mxu0
        %v6395 = vadd.f32 0.0, %v6394
        %6396 = vmatmul.f32.gmra.mxu0 %v6327
        %v6397 = vpop.f32.mrf.mxu0
        %v6398 = vadd.f32 0.0, %v6397
        %6399 = vmatmul.f32.gmra.mxu0 %v6330
        %v6400 = vpop.f32.mrf.mxu0
        %v6401 = vadd.f32 0.0, %v6400
        %6402 = vmatmul.f32.gmra.mxu0 %v6333
        %v6403 = vpop.f32.mrf.mxu0
        %v6404 = vadd.f32 0.0, %v6403
        %6405 = vmatmul.f32.gmra.mxu0 %v6336
        %v6406 = vpop.f32.mrf.mxu0
        %v6407 = vadd.f32 0.0, %v6406
        %6408 = vmatmul.f32.gmra.mxu0 %v6339
        %v6409 = vpop.f32.mrf.mxu0
        %v6410 = vadd.f32 0.0, %v6409
        %6411 = vmatmul.f32.gmra.mxu0 %v6342
        %v6412 = vpop.f32.mrf.mxu0
        %v6413 = vadd.f32 0.0, %v6412
        %6414 = vmatmul.f32.gmra.mxu0 %v6345
        %v6415 = vpop.f32.mrf.mxu0
        %v6416 = vadd.f32 0.0, %v6415
        %6417 = vmatmul.f32.gmra.mxu0 %v6348
        %v6418 = vpop.f32.mrf.mxu0
        %v6419 = vadd.f32 0.0, %v6418
        %6420 = vmatmul.f32.gmra.mxu0 %v6351
        %v6421 = vpop.f32.mrf.mxu0
        %v6422 = vadd.f32 0.0, %v6421
        %6423 = vmatmul.f32.gmra.mxu0 %v6354
        %v6424 = vpop.f32.mrf.mxu0
        %v6425 = vadd.f32 0.0, %v6424
        %6426 = vmatmul.f32.gmra.mxu0 %v6357
        %v6427 = vpop.f32.mrf.mxu0
        %v6428 = vadd.f32 0.0, %v6427
        %6429 = vdwg.mxu0
        %v6430 = vadd.f32 %v6282, %v6377
        %v6431 = vadd.f32 %v6283, %v6380
        %v6432 = vadd.f32 %v6284, %v6383
        %v6433 = vadd.f32 %v6285, %v6386
        %v6434 = vadd.f32 %v6286, %v6389
        %v6435 = vadd.f32 %v6287, %v6392
        %v6436 = vadd.f32 %v6288, %v6395
        %v6437 = vadd.f32 %v6289, %v6398
        %v6438 = vadd.f32 %v6290, %v6401
        %v6439 = vadd.f32 %v6291, %v6404
        %v6440 = vadd.f32 %v6292, %v6407
        %v6441 = vadd.f32 %v6293, %v6410
        %v6442 = vadd.f32 %v6294, %v6413
        %v6443 = vadd.f32 %v6295, %v6416
        %v6444 = vadd.f32 %v6296, %v6419
        %v6445 = vadd.f32 %v6297, %v6422
        %v6446 = vadd.f32 %v6298, %v6425
        %v6447 = vadd.f32 %v6299, %v6428
        %s6448 = scalar_lea.vmem %s629, 448
        %v6449 = vld [vmem:[%s6448] sm:$0xff]
        %v6450 = vld [vmem:[%s6448 + $0x8] sm:$0xff]
        %v6451 = vld [vmem:[%s6448 + $0x10] sm:$0xff]
        %v6452 = vld [vmem:[%s6448 + $0x18] sm:$0xff]
        %v6454 = vsel %vm775, %v4306, 0
        %v6457 = vsel %vm775, %v4309, 0
        %v6460 = vsel %vm775, %v4312, 0
        %v6463 = vsel %vm775, %v4315, 0
        %v6466 = vsel %vm775, %v4318, 0
        %v6469 = vsel %vm775, %v4321, 0
        %v6472 = vsel %vm775, %v4324, 0
        %v6475 = vsel %vm775, %v4327, 0
        %v6478 = vsel %vm775, %v4330, 0
        %v6481 = vsel %vm775, %v4333, 0
        %v6484 = vsel %vm775, %v4336, 0
        %v6487 = vsel %vm775, %v4339, 0
        %v6490 = vsel %vm775, %v4342, 0
        %v6493 = vsel %vm775, %v4345, 0
        %v6496 = vsel %vm775, %v4348, 0
        %v6499 = vsel %vm775, %v4351, 0
        %v6502 = vsel %vm775, %v4354, 0
        %v6505 = vsel %vm775, %v4357, 0
        %6507 = vmatpush.msra.mxu0 0.0
        %6508 = vmatpush.msra.mxu0 0.0
        %6509 = vmatpush.msra.mxu0 0.0
        %6510 = vmatpush.msra.mxu0 0.0
        %6511 = vmatpush.msra.mxu0 0.0
        %6512 = vmatpush.msra.mxu0 0.0
        %6513 = vmatpush.msra.mxu0 0.0
        %6514 = vmatpush.msra.mxu0 0.0
        %6515 = vmatpush.msra.mxu0 0.0
        %6516 = vmatpush.msra.mxu0 0.0
        %6517 = vmatpush.msra.mxu0 0.0
        %6518 = vmatpush.msra.mxu0 0.0
        %6519 = vmatpush.msra.mxu0 %v6452
        %6520 = vmatpush.msra.mxu0 %v6451
        %6521 = vmatpush.msra.mxu0 %v6450
        %6522 = vmatpush.msra.mxu0 %v6449
        %6523 = vmatmul.f32.gmra.mxu0 %v6454
        %v6524 = vpop.f32.mrf.mxu0
        %v6525 = vadd.f32 0.0, %v6524
        %6526 = vmatmul.f32.gmra.mxu0 %v6457
        %v6527 = vpop.f32.mrf.mxu0
        %v6528 = vadd.f32 0.0, %v6527
        %6529 = vmatmul.f32.gmra.mxu0 %v6460
        %v6530 = vpop.f32.mrf.mxu0
        %v6531 = vadd.f32 0.0, %v6530
        %6532 = vmatmul.f32.gmra.mxu0 %v6463
        %v6533 = vpop.f32.mrf.mxu0
        %v6534 = vadd.f32 0.0, %v6533
        %6535 = vmatmul.f32.gmra.mxu0 %v6466
        %v6536 = vpop.f32.mrf.mxu0
        %v6537 = vadd.f32 0.0, %v6536
        %6538 = vmatmul.f32.gmra.mxu0 %v6469
        %v6539 = vpop.f32.mrf.mxu0
        %v6540 = vadd.f32 0.0, %v6539
        %6541 = vmatmul.f32.gmra.mxu0 %v6472
        %v6542 = vpop.f32.mrf.mxu0
        %v6543 = vadd.f32 0.0, %v6542
        %6544 = vmatmul.f32.gmra.mxu0 %v6475
        %v6545 = vpop.f32.mrf.mxu0
        %v6546 = vadd.f32 0.0, %v6545
        %6547 = vmatmul.f32.gmra.mxu0 %v6478
        %v6548 = vpop.f32.mrf.mxu0
        %v6549 = vadd.f32 0.0, %v6548
        %6550 = vmatmul.f32.gmra.mxu0 %v6481
        %v6551 = vpop.f32.mrf.mxu0
        %v6552 = vadd.f32 0.0, %v6551
        %6553 = vmatmul.f32.gmra.mxu0 %v6484
        %v6554 = vpop.f32.mrf.mxu0
        %v6555 = vadd.f32 0.0, %v6554
        %6556 = vmatmul.f32.gmra.mxu0 %v6487
        %v6557 = vpop.f32.mrf.mxu0
        %v6558 = vadd.f32 0.0, %v6557
        %6559 = vmatmul.f32.gmra.mxu0 %v6490
        %v6560 = vpop.f32.mrf.mxu0
        %v6561 = vadd.f32 0.0, %v6560
        %6562 = vmatmul.f32.gmra.mxu0 %v6493
        %v6563 = vpop.f32.mrf.mxu0
        %v6564 = vadd.f32 0.0, %v6563
        %6565 = vmatmul.f32.gmra.mxu0 %v6496
        %v6566 = vpop.f32.mrf.mxu0
        %v6567 = vadd.f32 0.0, %v6566
        %6568 = vmatmul.f32.gmra.mxu0 %v6499
        %v6569 = vpop.f32.mrf.mxu0
        %v6570 = vadd.f32 0.0, %v6569
        %6571 = vmatmul.f32.gmra.mxu0 %v6502
        %v6572 = vpop.f32.mrf.mxu0
        %v6573 = vadd.f32 0.0, %v6572
        %6574 = vmatmul.f32.gmra.mxu0 %v6505
        %v6575 = vpop.f32.mrf.mxu0
        %v6576 = vadd.f32 0.0, %v6575
        %6577 = vdwg.mxu0
        %v6578 = vadd.f32 %v6430, %v6525
        %v6579 = vadd.f32 %v6431, %v6528
        %v6580 = vadd.f32 %v6432, %v6531
        %v6581 = vadd.f32 %v6433, %v6534
        %v6582 = vadd.f32 %v6434, %v6537
        %v6583 = vadd.f32 %v6435, %v6540
        %v6584 = vadd.f32 %v6436, %v6543
        %v6585 = vadd.f32 %v6437, %v6546
        %v6586 = vadd.f32 %v6438, %v6549
        %v6587 = vadd.f32 %v6439, %v6552
        %v6588 = vadd.f32 %v6440, %v6555
        %v6589 = vadd.f32 %v6441, %v6558
        %v6590 = vadd.f32 %v6442, %v6561
        %v6591 = vadd.f32 %v6443, %v6564
        %v6592 = vadd.f32 %v6444, %v6567
        %v6593 = vadd.f32 %v6445, %v6570
        %v6594 = vadd.f32 %v6446, %v6573
        %v6595 = vadd.f32 %v6447, %v6576
        %s6596 = scalar_lea.vmem %s629, 480
        %v6597 = vld [vmem:[%s6596] sm:$0xff]
        %v6598 = vld [vmem:[%s6596 + $0x8] sm:$0xff]
        %v6599 = vld [vmem:[%s6596 + $0x10] sm:$0xff]
        %v6600 = vld [vmem:[%s6596 + $0x18] sm:$0xff]
        %v6602 = vsel %vm775, %v4360, 0
        %v6605 = vsel %vm775, %v4363, 0
        %v6608 = vsel %vm775, %v4366, 0
        %v6611 = vsel %vm775, %v4369, 0
        %v6614 = vsel %vm775, %v4372, 0
        %v6617 = vsel %vm775, %v4375, 0
        %v6620 = vsel %vm775, %v4378, 0
        %v6623 = vsel %vm775, %v4381, 0
        %v6626 = vsel %vm775, %v4384, 0
        %v6629 = vsel %vm775, %v4387, 0
        %v6632 = vsel %vm775, %v4390, 0
        %v6635 = vsel %vm775, %v4393, 0
        %v6638 = vsel %vm775, %v4396, 0
        %v6641 = vsel %vm775, %v4399, 0
        %v6644 = vsel %vm775, %v4402, 0
        %v6647 = vsel %vm775, %v4405, 0
        %v6650 = vsel %vm775, %v4408, 0
        %v6653 = vsel %vm775, %v4411, 0
        %6655 = vmatpush.msra.mxu0 0.0
        %6656 = vmatpush.msra.mxu0 0.0
        %6657 = vmatpush.msra.mxu0 0.0
        %6658 = vmatpush.msra.mxu0 0.0
        %6659 = vmatpush.msra.mxu0 0.0
        %6660 = vmatpush.msra.mxu0 0.0
        %6661 = vmatpush.msra.mxu0 0.0
        %6662 = vmatpush.msra.mxu0 0.0
        %6663 = vmatpush.msra.mxu0 0.0
        %6664 = vmatpush.msra.mxu0 0.0
        %6665 = vmatpush.msra.mxu0 0.0
        %6666 = vmatpush.msra.mxu0 0.0
        %6667 = vmatpush.msra.mxu0 %v6600
        %6668 = vmatpush.msra.mxu0 %v6599
        %6669 = vmatpush.msra.mxu0 %v6598
        %6670 = vmatpush.msra.mxu0 %v6597
        %6671 = vmatmul.f32.gmra.mxu0 %v6602
        %v6672 = vpop.f32.mrf.mxu0
        %v6673 = vadd.f32 0.0, %v6672
        %6674 = vmatmul.f32.gmra.mxu0 %v6605
        %v6675 = vpop.f32.mrf.mxu0
        %v6676 = vadd.f32 0.0, %v6675
        %6677 = vmatmul.f32.gmra.mxu0 %v6608
        %v6678 = vpop.f32.mrf.mxu0
        %v6679 = vadd.f32 0.0, %v6678
        %6680 = vmatmul.f32.gmra.mxu0 %v6611
        %v6681 = vpop.f32.mrf.mxu0
        %v6682 = vadd.f32 0.0, %v6681
        %6683 = vmatmul.f32.gmra.mxu0 %v6614
        %v6684 = vpop.f32.mrf.mxu0
        %v6685 = vadd.f32 0.0, %v6684
        %6686 = vmatmul.f32.gmra.mxu0 %v6617
        %v6687 = vpop.f32.mrf.mxu0
        %v6688 = vadd.f32 0.0, %v6687
        %6689 = vmatmul.f32.gmra.mxu0 %v6620
        %v6690 = vpop.f32.mrf.mxu0
        %v6691 = vadd.f32 0.0, %v6690
        %6692 = vmatmul.f32.gmra.mxu0 %v6623
        %v6693 = vpop.f32.mrf.mxu0
        %v6694 = vadd.f32 0.0, %v6693
        %6695 = vmatmul.f32.gmra.mxu0 %v6626
        %v6696 = vpop.f32.mrf.mxu0
        %v6697 = vadd.f32 0.0, %v6696
        %6698 = vmatmul.f32.gmra.mxu0 %v6629
        %v6699 = vpop.f32.mrf.mxu0
        %v6700 = vadd.f32 0.0, %v6699
        %6701 = vmatmul.f32.gmra.mxu0 %v6632
        %v6702 = vpop.f32.mrf.mxu0
        %v6703 = vadd.f32 0.0, %v6702
        %6704 = vmatmul.f32.gmra.mxu0 %v6635
        %v6705 = vpop.f32.mrf.mxu0
        %v6706 = vadd.f32 0.0, %v6705
        %6707 = vmatmul.f32.gmra.mxu0 %v6638
        %v6708 = vpop.f32.mrf.mxu0
        %v6709 = vadd.f32 0.0, %v6708
        %6710 = vmatmul.f32.gmra.mxu0 %v6641
        %v6711 = vpop.f32.mrf.mxu0
        %v6712 = vadd.f32 0.0, %v6711
        %6713 = vmatmul.f32.gmra.mxu0 %v6644
        %v6714 = vpop.f32.mrf.mxu0
        %v6715 = vadd.f32 0.0, %v6714
        %6716 = vmatmul.f32.gmra.mxu0 %v6647
        %v6717 = vpop.f32.mrf.mxu0
        %v6718 = vadd.f32 0.0, %v6717
        %6719 = vmatmul.f32.gmra.mxu0 %v6650
        %v6720 = vpop.f32.mrf.mxu0
        %v6721 = vadd.f32 0.0, %v6720
        %6722 = vmatmul.f32.gmra.mxu0 %v6653
        %v6723 = vpop.f32.mrf.mxu0
        %v6724 = vadd.f32 0.0, %v6723
        %6725 = vdwg.mxu0
        %v6726 = vadd.f32 %v6578, %v6673
        %v6727 = vadd.f32 %v6579, %v6676
        %v6728 = vadd.f32 %v6580, %v6679
        %v6729 = vadd.f32 %v6581, %v6682
        %v6730 = vadd.f32 %v6582, %v6685
        %v6731 = vadd.f32 %v6583, %v6688
        %v6732 = vadd.f32 %v6584, %v6691
        %v6733 = vadd.f32 %v6585, %v6694
        %v6734 = vadd.f32 %v6586, %v6697
        %v6735 = vadd.f32 %v6587, %v6700
        %v6736 = vadd.f32 %v6588, %v6703
        %v6737 = vadd.f32 %v6589, %v6706
        %v6738 = vadd.f32 %v6590, %v6709
        %v6739 = vadd.f32 %v6591, %v6712
        %v6740 = vadd.f32 %v6592, %v6715
        %v6741 = vadd.f32 %v6593, %v6718
        %v6742 = vadd.f32 %v6594, %v6721
        %v6743 = vadd.f32 %v6595, %v6724
        %v6744 = vmax.f32 %v6726, 0.0
        %v6745 = vmax.f32 %v6727, 0.0
        %v6746 = vmax.f32 %v6728, 0.0
        %v6747 = vmax.f32 %v6729, 0.0
        %v6748 = vmax.f32 %v6730, 0.0
        %v6749 = vmax.f32 %v6731, 0.0
        %v6750 = vmax.f32 %v6732, 0.0
        %v6751 = vmax.f32 %v6733, 0.0
        %v6752 = vmax.f32 %v6734, 0.0
        %v6753 = vmax.f32 %v6735, 0.0
        %v6754 = vmax.f32 %v6736, 0.0
        %v6755 = vmax.f32 %v6737, 0.0
        %v6756 = vmax.f32 %v6738, 0.0
        %v6757 = vmax.f32 %v6739, 0.0
        %v6758 = vmax.f32 %v6740, 0.0
        %v6759 = vmax.f32 %v6741, 0.0
        %v6760 = vmax.f32 %v6742, 0.0
        %v6761 = vmax.f32 %v6743, 0.0
        %v6762 = vld [vmem:[%s608] sm:$0xff]
        %v6763 = vld [vmem:[%s608 + $0x8] sm:$0xff]
        %v6764 = vld [vmem:[%s608 + $0x10] sm:$0xff]
        %v6765 = vld [vmem:[%s608 + $0x18] sm:$0xff]
        %v6766 = vld [vmem:[%s608 + $0x20] sm:$0xff]
        %v6767 = vld [vmem:[%s608 + $0x28] sm:$0xff]
        %v6768 = vld [vmem:[%s608 + $0x30] sm:$0xff]
        %v6769 = vld [vmem:[%s608 + $0x38] sm:$0xff]
        %v6770 = vld [vmem:[%s608 + $0x40] sm:$0xff]
        %v6771 = vld [vmem:[%s608 + $0x48] sm:$0xff]
        %v6772 = vld [vmem:[%s608 + $0x50] sm:$0xff]
        %v6773 = vld [vmem:[%s608 + $0x58] sm:$0xff]
        %v6774 = vld [vmem:[%s608 + $0x60] sm:$0xff]
        %v6775 = vld [vmem:[%s608 + $0x68] sm:$0xff]
        %v6776 = vld [vmem:[%s608 + $0x70] sm:$0xff]
        %v6777 = vld [vmem:[%s608 + $0x78] sm:$0xff]
        %v6778 = vld [vmem:[%s608 + $0x80] sm:$0xff]
        %v6779 = vld [vmem:[%s608 + $0x88] sm:$0xff]
        %v6780 = vld [vmem:[%s608 + $0x90] sm:$0xff]
        %v6781 = vld [vmem:[%s608 + $0x98] sm:$0xff]
        %v6782 = vld [vmem:[%s608 + $0xa0] sm:$0xff]
        %v6783 = vld [vmem:[%s608 + $0xa8] sm:$0xff]
        %v6784 = vld [vmem:[%s608 + $0xb0] sm:$0xff]
        %v6785 = vld [vmem:[%s608 + $0xb8] sm:$0xff]
        %v6786 = vld [vmem:[%s608 + $0xc0] sm:$0xff]
        %v6787 = vld [vmem:[%s608 + $0xc8] sm:$0xff]
        %v6788 = vld [vmem:[%s608 + $0xd0] sm:$0xff]
        %v6789 = vld [vmem:[%s608 + $0xd8] sm:$0xff]
        %v6790 = vld [vmem:[%s608 + $0xe0] sm:$0xff]
        %v6791 = vld [vmem:[%s608 + $0xe8] sm:$0xff]
        %v6792 = vld [vmem:[%s608 + $0xf0] sm:$0xff]
        %v6793 = vld [vmem:[%s608 + $0xf8] sm:$0xff]
        %vm6794 = vcmask 130048
        %v6796 = vsel %vm6794, %v6763, 0
        %v6799 = vsel %vm6794, %v6765, 0
        %v6802 = vsel %vm6794, %v6767, 0
        %v6805 = vsel %vm6794, %v6769, 0
        %v6808 = vsel %vm6794, %v6771, 0
        %v6811 = vsel %vm6794, %v6773, 0
        %v6814 = vsel %vm6794, %v6775, 0
        %v6817 = vsel %vm6794, %v6777, 0
        %v6820 = vsel %vm6794, %v6779, 0
        %v6823 = vsel %vm6794, %v6781, 0
        %v6826 = vsel %vm6794, %v6783, 0
        %v6829 = vsel %vm6794, %v6785, 0
        %v6832 = vsel %vm6794, %v6787, 0
        %v6835 = vsel %vm6794, %v6789, 0
        %v6838 = vsel %vm6794, %v6791, 0
        %v6841 = vsel %vm6794, %v6793, 0
        %6843 = vmatpush.msra.mxu0 %v6759
        %6844 = vmatpush.msra.mxu0 %v6758
        %6845 = vmatpush.msra.mxu0 %v6757
        %6846 = vmatpush.msra.mxu0 %v6756
        %6847 = vmatpush.msra.mxu0 %v6755
        %6848 = vmatpush.msra.mxu0 %v6754
        %6849 = vmatpush.msra.mxu0 %v6753
        %6850 = vmatpush.msra.mxu0 %v6752
        %6851 = vmatpush.msra.mxu0 %v6751
        %6852 = vmatpush.msra.mxu0 %v6750
        %6853 = vmatpush.msra.mxu0 %v6749
        %6854 = vmatpush.msra.mxu0 %v6748
        %6855 = vmatpush.msra.mxu0 %v6747
        %6856 = vmatpush.msra.mxu0 %v6746
        %6857 = vmatpush.msra.mxu0 %v6745
        %6858 = vmatpush.msra.mxu0 %v6744
        %6859 = vmatmul.f32.gmra.mxu0 %v6762
        %v6860 = vpop.f32.mrf.mxu0
        %v6861 = vadd.f32 0.0, %v6860
        %6862 = vmatmul.f32.gmra.mxu0 %v6764
        %v6863 = vpop.f32.mrf.mxu0
        %v6864 = vadd.f32 0.0, %v6863
        %6865 = vmatmul.f32.gmra.mxu0 %v6766
        %v6866 = vpop.f32.mrf.mxu0
        %v6867 = vadd.f32 0.0, %v6866
        %6868 = vmatmul.f32.gmra.mxu0 %v6768
        %v6869 = vpop.f32.mrf.mxu0
        %v6870 = vadd.f32 0.0, %v6869
        %6871 = vmatmul.f32.gmra.mxu0 %v6770
        %v6872 = vpop.f32.mrf.mxu0
        %v6873 = vadd.f32 0.0, %v6872
        %6874 = vmatmul.f32.gmra.mxu0 %v6772
        %v6875 = vpop.f32.mrf.mxu0
        %v6876 = vadd.f32 0.0, %v6875
        %6877 = vmatmul.f32.gmra.mxu0 %v6774
        %v6878 = vpop.f32.mrf.mxu0
        %v6879 = vadd.f32 0.0, %v6878
        %6880 = vmatmul.f32.gmra.mxu0 %v6776
        %v6881 = vpop.f32.mrf.mxu0
        %v6882 = vadd.f32 0.0, %v6881
        %6883 = vmatmul.f32.gmra.mxu0 %v6778
        %v6884 = vpop.f32.mrf.mxu0
        %v6885 = vadd.f32 0.0, %v6884
        %6886 = vmatmul.f32.gmra.mxu0 %v6780
        %v6887 = vpop.f32.mrf.mxu0
        %v6888 = vadd.f32 0.0, %v6887
        %6889 = vmatmul.f32.gmra.mxu0 %v6782
        %v6890 = vpop.f32.mrf.mxu0
        %v6891 = vadd.f32 0.0, %v6890
        %6892 = vmatmul.f32.gmra.mxu0 %v6784
        %v6893 = vpop.f32.mrf.mxu0
        %v6894 = vadd.f32 0.0, %v6893
        %6895 = vmatmul.f32.gmra.mxu0 %v6786
        %v6896 = vpop.f32.mrf.mxu0
        %v6897 = vadd.f32 0.0, %v6896
        %6898 = vmatmul.f32.gmra.mxu0 %v6788
        %v6899 = vpop.f32.mrf.mxu0
        %v6900 = vadd.f32 0.0, %v6899
        %6901 = vmatmul.f32.gmra.mxu0 %v6790
        %v6902 = vpop.f32.mrf.mxu0
        %v6903 = vadd.f32 0.0, %v6902
        %6904 = vmatmul.f32.gmra.mxu0 %v6792
        %v6905 = vpop.f32.mrf.mxu0
        %v6906 = vadd.f32 0.0, %v6905
        %6907 = vdwg.mxu0
        %6908 = vmatpush.msra.mxu0 0.0
        %6909 = vmatpush.msra.mxu0 0.0
        %6910 = vmatpush.msra.mxu0 0.0
        %6911 = vmatpush.msra.mxu0 0.0
        %6912 = vmatpush.msra.mxu0 0.0
        %6913 = vmatpush.msra.mxu0 0.0
        %6914 = vmatpush.msra.mxu0 0.0
        %6915 = vmatpush.msra.mxu0 0.0
        %6916 = vmatpush.msra.mxu0 0.0
        %6917 = vmatpush.msra.mxu0 0.0
        %6918 = vmatpush.msra.mxu0 0.0
        %6919 = vmatpush.msra.mxu0 0.0
        %6920 = vmatpush.msra.mxu0 0.0
        %6921 = vmatpush.msra.mxu0 0.0
        %6922 = vmatpush.msra.mxu0 %v6761
        %6923 = vmatpush.msra.mxu0 %v6760
        %6924 = vmatmul.f32.gmra.mxu0 %v6796
        %v6925 = vpop.f32.mrf.mxu0
        %v6926 = vadd.f32 %v6861, %v6925
        %6927 = vmatmul.f32.gmra.mxu0 %v6799
        %v6928 = vpop.f32.mrf.mxu0
        %v6929 = vadd.f32 %v6864, %v6928
        %6930 = vmatmul.f32.gmra.mxu0 %v6802
        %v6931 = vpop.f32.mrf.mxu0
        %v6932 = vadd.f32 %v6867, %v6931
        %6933 = vmatmul.f32.gmra.mxu0 %v6805
        %v6934 = vpop.f32.mrf.mxu0
        %v6935 = vadd.f32 %v6870, %v6934
        %6936 = vmatmul.f32.gmra.mxu0 %v6808
        %v6937 = vpop.f32.mrf.mxu0
        %v6938 = vadd.f32 %v6873, %v6937
        %6939 = vmatmul.f32.gmra.mxu0 %v6811
        %v6940 = vpop.f32.mrf.mxu0
        %v6941 = vadd.f32 %v6876, %v6940
        %6942 = vmatmul.f32.gmra.mxu0 %v6814
        %v6943 = vpop.f32.mrf.mxu0
        %v6944 = vadd.f32 %v6879, %v6943
        %6945 = vmatmul.f32.gmra.mxu0 %v6817
        %v6946 = vpop.f32.mrf.mxu0
        %v6947 = vadd.f32 %v6882, %v6946
        %6948 = vmatmul.f32.gmra.mxu0 %v6820
        %v6949 = vpop.f32.mrf.mxu0
        %v6950 = vadd.f32 %v6885, %v6949
        %6951 = vmatmul.f32.gmra.mxu0 %v6823
        %v6952 = vpop.f32.mrf.mxu0
        %v6953 = vadd.f32 %v6888, %v6952
        %6954 = vmatmul.f32.gmra.mxu0 %v6826
        %v6955 = vpop.f32.mrf.mxu0
        %v6956 = vadd.f32 %v6891, %v6955
        %6957 = vmatmul.f32.gmra.mxu0 %v6829
        %v6958 = vpop.f32.mrf.mxu0
        %v6959 = vadd.f32 %v6894, %v6958
        %6960 = vmatmul.f32.gmra.mxu0 %v6832
        %v6961 = vpop.f32.mrf.mxu0
        %v6962 = vadd.f32 %v6897, %v6961
        %6963 = vmatmul.f32.gmra.mxu0 %v6835
        %v6964 = vpop.f32.mrf.mxu0
        %v6965 = vadd.f32 %v6900, %v6964
        %6966 = vmatmul.f32.gmra.mxu0 %v6838
        %v6967 = vpop.f32.mrf.mxu0
        %v6968 = vadd.f32 %v6903, %v6967
        %6969 = vmatmul.f32.gmra.mxu0 %v6841
        %v6970 = vpop.f32.mrf.mxu0
        %v6971 = vadd.f32 %v6906, %v6970
        %6972 = vdwg.mxu0
        %v6973 = vadd.f32 %v728, %v6926
        %v6974 = vadd.f32 %v731, %v6929
        %v6975 = vadd.f32 %v734, %v6932
        %v6976 = vadd.f32 %v737, %v6935
        %v6977 = vadd.f32 %v740, %v6938
        %v6978 = vadd.f32 %v743, %v6941
        %v6979 = vadd.f32 %v746, %v6944
        %v6980 = vadd.f32 %v749, %v6947
        %v6981 = vadd.f32 %v752, %v6950
        %v6982 = vadd.f32 %v755, %v6953
        %v6983 = vadd.f32 %v758, %v6956
        %v6984 = vadd.f32 %v761, %v6959
        %v6985 = vadd.f32 %v764, %v6962
        %v6986 = vadd.f32 %v767, %v6965
        %v6987 = vadd.f32 %v770, %v6968
        %v6988 = vadd.f32 %v773, %v6971
        %v6989 = vsel %vm775, %v6973, 0.0
        %6990 = vadd.xlane.f32.xlu0 %v6989
        %v6991 = vpop.xlane.xlu0 %6990
        %v6992 = vsel %vm775, %v6974, 0.0
        %6993 = vadd.xlane.f32.xlu0 %v6992
        %v6994 = vpop.xlane.xlu0 %6993
        %v6995 = vsel %vm775, %v6975, 0.0
        %6996 = vadd.xlane.f32.xlu0 %v6995
        %v6997 = vpop.xlane.xlu0 %6996
        %v6998 = vsel %vm775, %v6976, 0.0
        %6999 = vadd.xlane.f32.xlu0 %v6998
        %v7000 = vpop.xlane.xlu0 %6999
        %v7001 = vsel %vm775, %v6977, 0.0
        %7002 = vadd.xlane.f32.xlu0 %v7001
        %v7003 = vpop.xlane.xlu0 %7002
        %v7004 = vsel %vm775, %v6978, 0.0
        %7005 = vadd.xlane.f32.xlu0 %v7004
        %v7006 = vpop.xlane.xlu0 %7005
        %v7007 = vsel %vm775, %v6979, 0.0
        %7008 = vadd.xlane.f32.xlu0 %v7007
        %v7009 = vpop.xlane.xlu0 %7008
        %v7010 = vsel %vm775, %v6980, 0.0
        %7011 = vadd.xlane.f32.xlu0 %v7010
        %v7012 = vpop.xlane.xlu0 %7011
        %v7013 = vsel %vm775, %v6981, 0.0
        %7014 = vadd.xlane.f32.xlu0 %v7013
        %v7015 = vpop.xlane.xlu0 %7014
        %v7016 = vsel %vm775, %v6982, 0.0
        %7017 = vadd.xlane.f32.xlu0 %v7016
        %v7018 = vpop.xlane.xlu0 %7017
        %v7019 = vsel %vm775, %v6983, 0.0
        %7020 = vadd.xlane.f32.xlu0 %v7019
        %v7021 = vpop.xlane.xlu0 %7020
        %v7022 = vsel %vm775, %v6984, 0.0
        %7023 = vadd.xlane.f32.xlu0 %v7022
        %v7024 = vpop.xlane.xlu0 %7023
        %v7025 = vsel %vm775, %v6985, 0.0
        %7026 = vadd.xlane.f32.xlu0 %v7025
        %v7027 = vpop.xlane.xlu0 %7026
        %v7028 = vsel %vm775, %v6986, 0.0
        %7029 = vadd.xlane.f32.xlu0 %v7028
        %v7030 = vpop.xlane.xlu0 %7029
        %v7031 = vsel %vm775, %v6987, 0.0
        %7032 = vadd.xlane.f32.xlu0 %v7031
        %v7033 = vpop.xlane.xlu0 %7032
        %v7034 = vsel %vm775, %v6988, 0.0
        %7035 = vadd.xlane.f32.xlu0 %v7034
        %v7036 = vpop.xlane.xlu0 %7035
        %v7037 = vrcp.pop 32.0
        %v7038 = vmul.f32 32.0, %v7037
        %v7039 = vsub.f32 1.0, %v7038
        %v7040 = vmul.f32 %v7037, %v7039
        %v7041 = vadd.f32 %v7037, %v7040
        %vm7042 = vweird.f32 %v7037
        %v7043 = vsel %vm7042, %v7037, %v7041
        %v7044 = vmul.f32 %v6991, %v7043
        %v7045 = vmul.f32 %v6994, %v7043
        %v7046 = vmul.f32 %v6997, %v7043
        %v7047 = vmul.f32 %v7000, %v7043
        %v7048 = vmul.f32 %v7003, %v7043
        %v7049 = vmul.f32 %v7006, %v7043
        %v7050 = vmul.f32 %v7009, %v7043
        %v7051 = vmul.f32 %v7012, %v7043
        %v7052 = vmul.f32 %v7015, %v7043
        %v7053 = vmul.f32 %v7018, %v7043
        %v7054 = vmul.f32 %v7021, %v7043
        %v7055 = vmul.f32 %v7024, %v7043
        %v7056 = vmul.f32 %v7027, %v7043
        %v7057 = vmul.f32 %v7030, %v7043
        %v7058 = vmul.f32 %v7033, %v7043
        %v7059 = vmul.f32 %v7036, %v7043
        %v7060 = vsub.f32 %v6973, %v7044
        %v7061 = vsub.f32 %v6974, %v7045
        %v7062 = vsub.f32 %v6975, %v7046
        %v7063 = vsub.f32 %v6976, %v7047
        %v7064 = vsub.f32 %v6977, %v7048
        %v7065 = vsub.f32 %v6978, %v7049
        %v7066 = vsub.f32 %v6979, %v7050
        %v7067 = vsub.f32 %v6980, %v7051
        %v7068 = vsub.f32 %v6981, %v7052
        %v7069 = vsub.f32 %v6982, %v7053
        %v7070 = vsub.f32 %v6983, %v7054
        %v7071 = vsub.f32 %v6984, %v7055
        %v7072 = vsub.f32 %v6985, %v7056
        %v7073 = vsub.f32 %v6986, %v7057
        %v7074 = vsub.f32 %v6987, %v7058
        %v7075 = vsub.f32 %v6988, %v7059
        %v7076 = vmul.f32 %v7060, %v7060
        %v7077 = vmul.f32 %v7061, %v7061
        %v7078 = vmul.f32 %v7062, %v7062
        %v7079 = vmul.f32 %v7063, %v7063
        %v7080 = vmul.f32 %v7064, %v7064
        %v7081 = vmul.f32 %v7065, %v7065
        %v7082 = vmul.f32 %v7066, %v7066
        %v7083 = vmul.f32 %v7067, %v7067
        %v7084 = vmul.f32 %v7068, %v7068
        %v7085 = vmul.f32 %v7069, %v7069
        %v7086 = vmul.f32 %v7070, %v7070
        %v7087 = vmul.f32 %v7071, %v7071
        %v7088 = vmul.f32 %v7072, %v7072
        %v7089 = vmul.f32 %v7073, %v7073
        %v7090 = vmul.f32 %v7074, %v7074
        %v7091 = vmul.f32 %v7075, %v7075
        %v7092 = vsel %vm775, %v7076, 0.0
        %7093 = vadd.xlane.f32.xlu0 %v7092
        %v7094 = vpop.xlane.xlu0 %7093
        %v7095 = vsel %vm775, %v7077, 0.0
        %7096 = vadd.xlane.f32.xlu0 %v7095
        %v7097 = vpop.xlane.xlu0 %7096
        %v7098 = vsel %vm775, %v7078, 0.0
        %7099 = vadd.xlane.f32.xlu0 %v7098
        %v7100 = vpop.xlane.xlu0 %7099
        %v7101 = vsel %vm775, %v7079, 0.0
        %7102 = vadd.xlane.f32.xlu0 %v7101
        %v7103 = vpop.xlane.xlu0 %7102
        %v7104 = vsel %vm775, %v7080, 0.0
        %7105 = vadd.xlane.f32.xlu0 %v7104
        %v7106 = vpop.xlane.xlu0 %7105
        %v7107 = vsel %vm775, %v7081, 0.0
        %7108 = vadd.xlane.f32.xlu0 %v7107
        %v7109 = vpop.xlane.xlu0 %7108
        %v7110 = vsel %vm775, %v7082, 0.0
        %7111 = vadd.xlane.f32.xlu0 %v7110
        %v7112 = vpop.xlane.xlu0 %7111
        %v7113 = vsel %vm775, %v7083, 0.0
        %7114 = vadd.xlane.f32.xlu0 %v7113
        %v7115 = vpop.xlane.xlu0 %7114
        %v7116 = vsel %vm775, %v7084, 0.0
        %7117 = vadd.xlane.f32.xlu0 %v7116
        %v7118 = vpop.xlane.xlu0 %7117
        %v7119 = vsel %vm775, %v7085, 0.0
        %7120 = vadd.xlane.f32.xlu0 %v7119
        %v7121 = vpop.xlane.xlu0 %7120
        %v7122 = vsel %vm775, %v7086, 0.0
        %7123 = vadd.xlane.f32.xlu0 %v7122
        %v7124 = vpop.xlane.xlu0 %7123
        %v7125 = vsel %vm775, %v7087, 0.0
        %7126 = vadd.xlane.f32.xlu0 %v7125
        %v7127 = vpop.xlane.xlu0 %7126
        %v7128 = vsel %vm775, %v7088, 0.0
        %7129 = vadd.xlane.f32.xlu0 %v7128
        %v7130 = vpop.xlane.xlu0 %7129
        %v7131 = vsel %vm775, %v7089, 0.0
        %7132 = vadd.xlane.f32.xlu0 %v7131
        %v7133 = vpop.xlane.xlu0 %7132
        %v7134 = vsel %vm775, %v7090, 0.0
        %7135 = vadd.xlane.f32.xlu0 %v7134
        %v7136 = vpop.xlane.xlu0 %7135
        %v7137 = vsel %vm775, %v7091, 0.0
        %7138 = vadd.xlane.f32.xlu0 %v7137
        %v7139 = vpop.xlane.xlu0 %7138
        %v7140 = vmul.f32 %v7094, %v7043
        %v7141 = vmul.f32 %v7097, %v7043
        %v7142 = vmul.f32 %v7100, %v7043
        %v7143 = vmul.f32 %v7103, %v7043
        %v7144 = vmul.f32 %v7106, %v7043
        %v7145 = vmul.f32 %v7109, %v7043
        %v7146 = vmul.f32 %v7112, %v7043
        %v7147 = vmul.f32 %v7115, %v7043
        %v7148 = vmul.f32 %v7118, %v7043
        %v7149 = vmul.f32 %v7121, %v7043
        %v7150 = vmul.f32 %v7124, %v7043
        %v7151 = vmul.f32 %v7127, %v7043
        %v7152 = vmul.f32 %v7130, %v7043
        %v7153 = vmul.f32 %v7133, %v7043
        %v7154 = vmul.f32 %v7136, %v7043
        %v7155 = vmul.f32 %v7139, %v7043
        %v7156 = vadd.f32 %v7140, 1e-05
        %v7157 = vadd.f32 %v7141, 1e-05
        %v7158 = vadd.f32 %v7142, 1e-05
        %v7159 = vadd.f32 %v7143, 1e-05
        %v7160 = vadd.f32 %v7144, 1e-05
        %v7161 = vadd.f32 %v7145, 1e-05
        %v7162 = vadd.f32 %v7146, 1e-05
        %v7163 = vadd.f32 %v7147, 1e-05
        %v7164 = vadd.f32 %v7148, 1e-05
        %v7165 = vadd.f32 %v7149, 1e-05
        %v7166 = vadd.f32 %v7150, 1e-05
        %v7167 = vadd.f32 %v7151, 1e-05
        %v7168 = vadd.f32 %v7152, 1e-05
        %v7169 = vadd.f32 %v7153, 1e-05
        %v7170 = vadd.f32 %v7154, 1e-05
        %v7171 = vadd.f32 %v7155, 1e-05
        %v7172 = vrsqrt.pop %v7156
        %v7173 = vmul.f32 %v7172, %v7156
        %v7174 = vmul.f32 %v7173, %v7172
        %v7175 = vmul.f32 0.5, %v7174
        %v7176 = vsub.f32 1.5, %v7175
        %v7177 = vmul.f32 %v7172, %v7176
        %vm7178 = vweird.f32 %v7156
        %vm7179 = vweird.f32 %v7172
        %vm7180 = vmor %vm7178, %vm7179
        %v7181 = vsel %vm7180, %v7172, %v7177
        %v7182 = vrsqrt.pop %v7157
        %v7183 = vmul.f32 %v7182, %v7157
        %v7184 = vmul.f32 %v7183, %v7182
        %v7185 = vmul.f32 0.5, %v7184
        %v7186 = vsub.f32 1.5, %v7185
        %v7187 = vmul.f32 %v7182, %v7186
        %vm7188 = vweird.f32 %v7157
        %vm7189 = vweird.f32 %v7182
        %vm7190 = vmor %vm7188, %vm7189
        %v7191 = vsel %vm7190, %v7182, %v7187
        %v7192 = vrsqrt.pop %v7158
        %v7193 = vmul.f32 %v7192, %v7158
        %v7194 = vmul.f32 %v7193, %v7192
        %v7195 = vmul.f32 0.5, %v7194
        %v7196 = vsub.f32 1.5, %v7195
        %v7197 = vmul.f32 %v7192, %v7196
        %vm7198 = vweird.f32 %v7158
        %vm7199 = vweird.f32 %v7192
        %vm7200 = vmor %vm7198, %vm7199
        %v7201 = vsel %vm7200, %v7192, %v7197
        %v7202 = vrsqrt.pop %v7159
        %v7203 = vmul.f32 %v7202, %v7159
        %v7204 = vmul.f32 %v7203, %v7202
        %v7205 = vmul.f32 0.5, %v7204
        %v7206 = vsub.f32 1.5, %v7205
        %v7207 = vmul.f32 %v7202, %v7206
        %vm7208 = vweird.f32 %v7159
        %vm7209 = vweird.f32 %v7202
        %vm7210 = vmor %vm7208, %vm7209
        %v7211 = vsel %vm7210, %v7202, %v7207
        %v7212 = vrsqrt.pop %v7160
        %v7213 = vmul.f32 %v7212, %v7160
        %v7214 = vmul.f32 %v7213, %v7212
        %v7215 = vmul.f32 0.5, %v7214
        %v7216 = vsub.f32 1.5, %v7215
        %v7217 = vmul.f32 %v7212, %v7216
        %vm7218 = vweird.f32 %v7160
        %vm7219 = vweird.f32 %v7212
        %vm7220 = vmor %vm7218, %vm7219
        %v7221 = vsel %vm7220, %v7212, %v7217
        %v7222 = vrsqrt.pop %v7161
        %v7223 = vmul.f32 %v7222, %v7161
        %v7224 = vmul.f32 %v7223, %v7222
        %v7225 = vmul.f32 0.5, %v7224
        %v7226 = vsub.f32 1.5, %v7225
        %v7227 = vmul.f32 %v7222, %v7226
        %vm7228 = vweird.f32 %v7161
        %vm7229 = vweird.f32 %v7222
        %vm7230 = vmor %vm7228, %vm7229
        %v7231 = vsel %vm7230, %v7222, %v7227
        %v7232 = vrsqrt.pop %v7162
        %v7233 = vmul.f32 %v7232, %v7162
        %v7234 = vmul.f32 %v7233, %v7232
        %v7235 = vmul.f32 0.5, %v7234
        %v7236 = vsub.f32 1.5, %v7235
        %v7237 = vmul.f32 %v7232, %v7236
        %vm7238 = vweird.f32 %v7162
        %vm7239 = vweird.f32 %v7232
        %vm7240 = vmor %vm7238, %vm7239
        %v7241 = vsel %vm7240, %v7232, %v7237
        %v7242 = vrsqrt.pop %v7163
        %v7243 = vmul.f32 %v7242, %v7163
        %v7244 = vmul.f32 %v7243, %v7242
        %v7245 = vmul.f32 0.5, %v7244
        %v7246 = vsub.f32 1.5, %v7245
        %v7247 = vmul.f32 %v7242, %v7246
        %vm7248 = vweird.f32 %v7163
        %vm7249 = vweird.f32 %v7242
        %vm7250 = vmor %vm7248, %vm7249
        %v7251 = vsel %vm7250, %v7242, %v7247
        %v7252 = vrsqrt.pop %v7164
        %v7253 = vmul.f32 %v7252, %v7164
        %v7254 = vmul.f32 %v7253, %v7252
        %v7255 = vmul.f32 0.5, %v7254
        %v7256 = vsub.f32 1.5, %v7255
        %v7257 = vmul.f32 %v7252, %v7256
        %vm7258 = vweird.f32 %v7164
        %vm7259 = vweird.f32 %v7252
        %vm7260 = vmor %vm7258, %vm7259
        %v7261 = vsel %vm7260, %v7252, %v7257
        %v7262 = vrsqrt.pop %v7165
        %v7263 = vmul.f32 %v7262, %v7165
        %v7264 = vmul.f32 %v7263, %v7262
        %v7265 = vmul.f32 0.5, %v7264
        %v7266 = vsub.f32 1.5, %v7265
        %v7267 = vmul.f32 %v7262, %v7266
        %vm7268 = vweird.f32 %v7165
        %vm7269 = vweird.f32 %v7262
        %vm7270 = vmor %vm7268, %vm7269
        %v7271 = vsel %vm7270, %v7262, %v7267
        %v7272 = vrsqrt.pop %v7166
        %v7273 = vmul.f32 %v7272, %v7166
        %v7274 = vmul.f32 %v7273, %v7272
        %v7275 = vmul.f32 0.5, %v7274
        %v7276 = vsub.f32 1.5, %v7275
        %v7277 = vmul.f32 %v7272, %v7276
        %vm7278 = vweird.f32 %v7166
        %vm7279 = vweird.f32 %v7272
        %vm7280 = vmor %vm7278, %vm7279
        %v7281 = vsel %vm7280, %v7272, %v7277
        %v7282 = vrsqrt.pop %v7167
        %v7283 = vmul.f32 %v7282, %v7167
        %v7284 = vmul.f32 %v7283, %v7282
        %v7285 = vmul.f32 0.5, %v7284
        %v7286 = vsub.f32 1.5, %v7285
        %v7287 = vmul.f32 %v7282, %v7286
        %vm7288 = vweird.f32 %v7167
        %vm7289 = vweird.f32 %v7282
        %vm7290 = vmor %vm7288, %vm7289
        %v7291 = vsel %vm7290, %v7282, %v7287
        %v7292 = vrsqrt.pop %v7168
        %v7293 = vmul.f32 %v7292, %v7168
        %v7294 = vmul.f32 %v7293, %v7292
        %v7295 = vmul.f32 0.5, %v7294
        %v7296 = vsub.f32 1.5, %v7295
        %v7297 = vmul.f32 %v7292, %v7296
        %vm7298 = vweird.f32 %v7168
        %vm7299 = vweird.f32 %v7292
        %vm7300 = vmor %vm7298, %vm7299
        %v7301 = vsel %vm7300, %v7292, %v7297
        %v7302 = vrsqrt.pop %v7169
        %v7303 = vmul.f32 %v7302, %v7169
        %v7304 = vmul.f32 %v7303, %v7302
        %v7305 = vmul.f32 0.5, %v7304
        %v7306 = vsub.f32 1.5, %v7305
        %v7307 = vmul.f32 %v7302, %v7306
        %vm7308 = vweird.f32 %v7169
        %vm7309 = vweird.f32 %v7302
        %vm7310 = vmor %vm7308, %vm7309
        %v7311 = vsel %vm7310, %v7302, %v7307
        %v7312 = vrsqrt.pop %v7170
        %v7313 = vmul.f32 %v7312, %v7170
        %v7314 = vmul.f32 %v7313, %v7312
        %v7315 = vmul.f32 0.5, %v7314
        %v7316 = vsub.f32 1.5, %v7315
        %v7317 = vmul.f32 %v7312, %v7316
        %vm7318 = vweird.f32 %v7170
        %vm7319 = vweird.f32 %v7312
        %vm7320 = vmor %vm7318, %vm7319
        %v7321 = vsel %vm7320, %v7312, %v7317
        %v7322 = vrsqrt.pop %v7171
        %v7323 = vmul.f32 %v7322, %v7171
        %v7324 = vmul.f32 %v7323, %v7322
        %v7325 = vmul.f32 0.5, %v7324
        %v7326 = vsub.f32 1.5, %v7325
        %v7327 = vmul.f32 %v7322, %v7326
        %vm7328 = vweird.f32 %v7171
        %vm7329 = vweird.f32 %v7322
        %vm7330 = vmor %vm7328, %vm7329
        %v7331 = vsel %vm7330, %v7322, %v7327
        %v7332 = vmul.f32 %v7060, %v7181
        %v7333 = vmul.f32 %v7061, %v7191
        %v7334 = vmul.f32 %v7062, %v7201
        %v7335 = vmul.f32 %v7063, %v7211
        %v7336 = vmul.f32 %v7064, %v7221
        %v7337 = vmul.f32 %v7065, %v7231
        %v7338 = vmul.f32 %v7066, %v7241
        %v7339 = vmul.f32 %v7067, %v7251
        %v7340 = vmul.f32 %v7068, %v7261
        %v7341 = vmul.f32 %v7069, %v7271
        %v7342 = vmul.f32 %v7070, %v7281
        %v7343 = vmul.f32 %v7071, %v7291
        %v7344 = vmul.f32 %v7072, %v7301
        %v7345 = vmul.f32 %v7073, %v7311
        %v7346 = vmul.f32 %v7074, %v7321
        %v7347 = vmul.f32 %v7075, %v7331
        %v7348 = vld [vmem:[%s632] sm:$0x1]
        %v7350 = vperm.slane %v7348, 0
        %v7352 = vmul.f32 %v7332, %v7350
        %v7353 = vmul.f32 %v7333, %v7350
        %v7354 = vmul.f32 %v7334, %v7350
        %v7355 = vmul.f32 %v7335, %v7350
        %v7356 = vmul.f32 %v7336, %v7350
        %v7357 = vmul.f32 %v7337, %v7350
        %v7358 = vmul.f32 %v7338, %v7350
        %v7359 = vmul.f32 %v7339, %v7350
        %v7360 = vmul.f32 %v7340, %v7350
        %v7361 = vmul.f32 %v7341, %v7350
        %v7362 = vmul.f32 %v7342, %v7350
        %v7363 = vmul.f32 %v7343, %v7350
        %v7364 = vmul.f32 %v7344, %v7350
        %v7365 = vmul.f32 %v7345, %v7350
        %v7366 = vmul.f32 %v7346, %v7350
        %v7367 = vmul.f32 %v7347, %v7350
        %v7368 = vld [vmem:[%s635] sm:$0x1]
        %v7370 = vperm.slane %v7368, 0
        %v7372 = vadd.f32 %v7352, %v7370
        %v7373 = vadd.f32 %v7353, %v7370
        %v7374 = vadd.f32 %v7354, %v7370
        %v7375 = vadd.f32 %v7355, %v7370
        %v7376 = vadd.f32 %v7356, %v7370
        %v7377 = vadd.f32 %v7357, %v7370
        %v7378 = vadd.f32 %v7358, %v7370
        %v7379 = vadd.f32 %v7359, %v7370
        %v7380 = vadd.f32 %v7360, %v7370
        %v7381 = vadd.f32 %v7361, %v7370
        %v7382 = vadd.f32 %v7362, %v7370
        %v7383 = vadd.f32 %v7363, %v7370
        %v7384 = vadd.f32 %v7364, %v7370
        %v7385 = vadd.f32 %v7365, %v7370
        %v7386 = vadd.f32 %v7366, %v7370
        %v7387 = vadd.f32 %v7367, %v7370
        %v7388 = vld [vmem:[%s13] sm:$0xff]
        %v7389 = vld [vmem:[%s13 + $0x8] sm:$0xff]
        %v7390 = vld [vmem:[%s13 + $0x10] sm:$0xff]
        %v7391 = vld [vmem:[%s13 + $0x18] sm:$0xff]
        %v7392 = vld [vmem:[%s13 + $0x20] sm:$0xff]
        %v7393 = vld [vmem:[%s13 + $0x28] sm:$0xff]
        %v7394 = vld [vmem:[%s13 + $0x30] sm:$0xff]
        %v7395 = vld [vmem:[%s13 + $0x38] sm:$0xff]
        %v7396 = vld [vmem:[%s13 + $0x40] sm:$0xff]
        %v7397 = vld [vmem:[%s13 + $0x48] sm:$0xff]
        %v7398 = vld [vmem:[%s13 + $0x50] sm:$0xff]
        %v7399 = vld [vmem:[%s13 + $0x58] sm:$0xff]
        %v7400 = vld [vmem:[%s13 + $0x60] sm:$0xff]
        %v7401 = vld [vmem:[%s13 + $0x68] sm:$0xff]
        %v7402 = vld [vmem:[%s13 + $0x70] sm:$0xff]
        %v7403 = vld [vmem:[%s13 + $0x78] sm:$0xff]
        %v7404 = vld [vmem:[%s594] sm:$0xff]
        %v7405 = vld [vmem:[%s594 + $0x8] sm:$0xff]
        %v7406 = vld [vmem:[%s594 + $0x10] sm:$0xff]
        %v7407 = vld [vmem:[%s594 + $0x18] sm:$0xff]
        %v7408 = vld [vmem:[%s594 + $0x20] sm:$0xff]
        %v7409 = vld [vmem:[%s594 + $0x28] sm:$0xff]
        %v7410 = vld [vmem:[%s594 + $0x30] sm:$0xff]
        %v7411 = vld [vmem:[%s594 + $0x38] sm:$0xff]
        %v7412 = vld [vmem:[%s594 + $0x40] sm:$0xff]
        %v7413 = vld [vmem:[%s594 + $0x48] sm:$0xff]
        %v7414 = vld [vmem:[%s594 + $0x50] sm:$0xff]
        %v7415 = vld [vmem:[%s594 + $0x58] sm:$0xff]
        %v7416 = vld [vmem:[%s594 + $0x60] sm:$0xff]
        %v7417 = vld [vmem:[%s594 + $0x68] sm:$0xff]
        %v7418 = vld [vmem:[%s594 + $0x70] sm:$0xff]
        %v7419 = vld [vmem:[%s594 + $0x78] sm:$0xff]
        %7420 = vmatpush.msra.mxu0 %v7387
        %7421 = vmatpush.msra.mxu0 %v7386
        %7422 = vmatpush.msra.mxu0 %v7385
        %7423 = vmatpush.msra.mxu0 %v7384
        %7424 = vmatpush.msra.mxu0 %v7383
        %7425 = vmatpush.msra.mxu0 %v7382
        %7426 = vmatpush.msra.mxu0 %v7381
        %7427 = vmatpush.msra.mxu0 %v7380
        %7428 = vmatpush.msra.mxu0 %v7379
        %7429 = vmatpush.msra.mxu0 %v7378
        %7430 = vmatpush.msra.mxu0 %v7377
        %7431 = vmatpush.msra.mxu0 %v7376
        %7432 = vmatpush.msra.mxu0 %v7375
        %7433 = vmatpush.msra.mxu0 %v7374
        %7434 = vmatpush.msra.mxu0 %v7373
        %7435 = vmatpush.msra.mxu0 %v7372
        %7436 = vmatmul.f32.gmra.mxu0 %v7404
        %v7437 = vpop.f32.mrf.mxu0
        %v7438 = vadd.f32 0.0, %v7437
        %7439 = vmatmul.f32.gmra.mxu0 %v7405
        %v7440 = vpop.f32.mrf.mxu0
        %v7441 = vadd.f32 0.0, %v7440
        %7442 = vmatmul.f32.gmra.mxu0 %v7406
        %v7443 = vpop.f32.mrf.mxu0
        %v7444 = vadd.f32 0.0, %v7443
        %7445 = vmatmul.f32.gmra.mxu0 %v7407
        %v7446 = vpop.f32.mrf.mxu0
        %v7447 = vadd.f32 0.0, %v7446
        %7448 = vmatmul.f32.gmra.mxu0 %v7408
        %v7449 = vpop.f32.mrf.mxu0
        %v7450 = vadd.f32 0.0, %v7449
        %7451 = vmatmul.f32.gmra.mxu0 %v7409
        %v7452 = vpop.f32.mrf.mxu0
        %v7453 = vadd.f32 0.0, %v7452
        %7454 = vmatmul.f32.gmra.mxu0 %v7410
        %v7455 = vpop.f32.mrf.mxu0
        %v7456 = vadd.f32 0.0, %v7455
        %7457 = vmatmul.f32.gmra.mxu0 %v7411
        %v7458 = vpop.f32.mrf.mxu0
        %v7459 = vadd.f32 0.0, %v7458
        %7460 = vmatmul.f32.gmra.mxu0 %v7412
        %v7461 = vpop.f32.mrf.mxu0
        %v7462 = vadd.f32 0.0, %v7461
        %7463 = vmatmul.f32.gmra.mxu0 %v7413
        %v7464 = vpop.f32.mrf.mxu0
        %v7465 = vadd.f32 0.0, %v7464
        %7466 = vmatmul.f32.gmra.mxu0 %v7414
        %v7467 = vpop.f32.mrf.mxu0
        %v7468 = vadd.f32 0.0, %v7467
        %7469 = vmatmul.f32.gmra.mxu0 %v7415
        %v7470 = vpop.f32.mrf.mxu0
        %v7471 = vadd.f32 0.0, %v7470
        %7472 = vmatmul.f32.gmra.mxu0 %v7416
        %v7473 = vpop.f32.mrf.mxu0
        %v7474 = vadd.f32 0.0, %v7473
        %7475 = vmatmul.f32.gmra.mxu0 %v7417
        %v7476 = vpop.f32.mrf.mxu0
        %v7477 = vadd.f32 0.0, %v7476
        %7478 = vmatmul.f32.gmra.mxu0 %v7418
        %v7479 = vpop.f32.mrf.mxu0
        %v7480 = vadd.f32 0.0, %v7479
        %7481 = vmatmul.f32.gmra.mxu0 %v7419
        %v7482 = vpop.f32.mrf.mxu0
        %v7483 = vadd.f32 0.0, %v7482
        %7484 = vdwg.mxu0
        %v7485 = vadd.f32 %v7388, %v7438
        %v7486 = vadd.f32 %v7389, %v7441
        %v7487 = vadd.f32 %v7390, %v7444
        %v7488 = vadd.f32 %v7391, %v7447
        %v7489 = vadd.f32 %v7392, %v7450
        %v7490 = vadd.f32 %v7393, %v7453
        %v7491 = vadd.f32 %v7394, %v7456
        %v7492 = vadd.f32 %v7395, %v7459
        %v7493 = vadd.f32 %v7396, %v7462
        %v7494 = vadd.f32 %v7397, %v7465
        %v7495 = vadd.f32 %v7398, %v7468
        %v7496 = vadd.f32 %v7399, %v7471
        %v7497 = vadd.f32 %v7400, %v7474
        %v7498 = vadd.f32 %v7401, %v7477
        %v7499 = vadd.f32 %v7402, %v7480
        %v7500 = vadd.f32 %v7403, %v7483
        %7501 = vst.msk [vmem:[%s13] sm:$0xff] %vm775, %v7485
        %7502 = vst.msk [vmem:[%s13 + $0x8] sm:$0xff] %vm775, %v7486
        %7503 = vst.msk [vmem:[%s13 + $0x10] sm:$0xff] %vm775, %v7487
        %7504 = vst.msk [vmem:[%s13 + $0x18] sm:$0xff] %vm775, %v7488
        %7505 = vst.msk [vmem:[%s13 + $0x20] sm:$0xff] %vm775, %v7489
        %7506 = vst.msk [vmem:[%s13 + $0x28] sm:$0xff] %vm775, %v7490
        %7507 = vst.msk [vmem:[%s13 + $0x30] sm:$0xff] %vm775, %v7491
        %7508 = vst.msk [vmem:[%s13 + $0x38] sm:$0xff] %vm775, %v7492
        %7509 = vst.msk [vmem:[%s13 + $0x40] sm:$0xff] %vm775, %v7493
        %7510 = vst.msk [vmem:[%s13 + $0x48] sm:$0xff] %vm775, %v7494
        %7511 = vst.msk [vmem:[%s13 + $0x50] sm:$0xff] %vm775, %v7495
        %7512 = vst.msk [vmem:[%s13 + $0x58] sm:$0xff] %vm775, %v7496
        %7513 = vst.msk [vmem:[%s13 + $0x60] sm:$0xff] %vm775, %v7497
        %7514 = vst.msk [vmem:[%s13 + $0x68] sm:$0xff] %vm775, %v7498
        %7515 = vst.msk [vmem:[%s13 + $0x70] sm:$0xff] %vm775, %v7499
        %7516 = vst.msk [vmem:[%s13 + $0x78] sm:$0xff] %vm775, %v7500
        // Predicated region
        $region77: #{mixtral_sparse_moe_forward.1} parent=67 // pred_check
          %p7517 = pneg %p361
        $region78: #{mixtral_sparse_moe_forward.1} parent=67 // pred_check_branch
          %7519 = sbr.rel (%p7517) target = $region80
        $region79: #{mixtral_sparse_moe_forward.1} parent=67 // pred_region
          _
        $region80: #{mixtral_sparse_moe_forward.1} parent=67 // pred_fallthru
          _
        // Predicated region
        $region81: #{mixtral_sparse_moe_forward.1} parent=67 // pred_check
          %p7520 = pneg %p361
        $region82: #{mixtral_sparse_moe_forward.1} parent=67 // pred_check_branch
          %7522 = sbr.rel (%p7520) target = $region84
        $region83: #{mixtral_sparse_moe_forward.1} parent=67 // pred_region
          _
        $region84: #{mixtral_sparse_moe_forward.1} parent=67 // pred_fallthru
          _
      $region68: #{mixtral_sparse_moe_forward.1} parent=5 // pred_fallthru
        _
      %p7523 = scmp.le.s32.totalorder 2, %s30
      // Predicated region
      $region85: #{mixtral_sparse_moe_forward.1} parent=5 // pred_check
        %p7524 = pneg %p7523
      $region86: #{mixtral_sparse_moe_forward.1} parent=5 // pred_check_branch
        %7526 = sbr.rel (%p7524) target = $region88
      $region87: #{mixtral_sparse_moe_forward.1} parent=5 // pred_region
        %s7527 = ssub.s32 %s30, 2
      $region88: #{mixtral_sparse_moe_forward.1} parent=5 // pred_fallthru
        _
    $region6: #{mixtral_sparse_moe_forward.1} parent=1 // loop_footer
      %s34 = sadd.s32 1, %s30
    $region7: #{mixtral_sparse_moe_forward.1} parent=1 // loop_footer_branch
      %29 = sbr.rel target = $region3
    $region8: #{mixtral_sparse_moe_forward.1} parent=1 // loop_exit
      _
    %7528 = vsyncpa [#allocation5], 1
    %s7529 = scalar_lea.sflag [#allocation5], 1
    %7530 = vsyncpa %s7529, 1

</llo_original>
